<compile_context>
chip_gen: v7x
topology: tpu7x:2x2x1
jax: 0.10.0
libtpu: 0.0.40
codegen_flags: <defaults>
</compile_context>

<pallas_src>
import functools
import math

import jax
import jax.numpy as jnp
from jax import lax
from jax.experimental import pallas as pl
from jax.experimental.pallas import tpu as pltpu


# ---------------------------------------------------------------------------
# Stage 1: Q/K/V input projections (each token projected exactly once).
# ---------------------------------------------------------------------------

def _proj_qkv_fused_kernel(x_ref, w_ref, b_ref, q_ref, k_ref, v_ref,
                           *, d_model, sm_scale):
    """Self-attention path: one (ts, D) @ (D, 3D) matmul, split into q/k/v."""
    y = jnp.dot(x_ref[0], w_ref[...],
                preferred_element_type=jnp.float32) + b_ref[...]      # (ts, 3D) f32
    q_ref[0] = (y[:, :d_model] * sm_scale).astype(q_ref.dtype)        # fold 1/sqrt(d_k)
    k_ref[0] = y[:, d_model:2 * d_model].astype(k_ref.dtype)
    v_ref[0] = y[:, 2 * d_model:].astype(v_ref.dtype)


def _proj_qkv_kernel(xq_ref, xk_ref, xv_ref,
                     wq_ref, bq_ref, wk_ref, bk_ref, wv_ref, bv_ref,
                     q_ref, k_ref, v_ref, *, sm_scale):
    """General (cross-attention) path: three separate projections."""
    q = jnp.dot(xq_ref[0], wq_ref[...],
                preferred_element_type=jnp.float32) + bq_ref[...]
    q_ref[0] = (q * sm_scale).astype(q_ref.dtype)
    k = jnp.dot(xk_ref[0], wk_ref[...],
                preferred_element_type=jnp.float32) + bk_ref[...]
    k_ref[0] = k.astype(k_ref.dtype)
    v = jnp.dot(xv_ref[0], wv_ref[...],
                preferred_element_type=jnp.float32) + bv_ref[...]
    v_ref[0] = v.astype(v_ref.dtype)


def _project_qkv(query, key, value, params, *, sm_scale, ts):
    """Returns bf16 projected (q, k, v), each (B, S, D). q is pre-scaled by 1/sqrt(d_k)."""
    B, S, D = query.shape
    bf = jnp.bfloat16
    n_s = S // ts

    x_spec = pl.BlockSpec((1, ts, D), lambda b, si: (b, si, 0))
    out_specs = (pl.BlockSpec((1, ts, D), lambda b, si: (b, si, 0)),) * 3
    out_shapes = (jax.ShapeDtypeStruct((B, S, D), bf),) * 3
    self_attention = (query is key) and (key is value)

    if self_attention:
        # Fuse wq/wk/wv into one (D, 3D) matmul per tile.
        w_qkv = jnp.concatenate(
            [params['wq'], params['wk'], params['wv']], axis=1).astype(bf)
        b_qkv = jnp.concatenate(
            [params['bq'], params['bk'], params['bv']], axis=1)        # f32 (1, 3D)
        kernel = functools.partial(_proj_qkv_fused_kernel,
                                   d_model=D, sm_scale=sm_scale)
        return pl.pallas_call(
            kernel,
            out_shape=out_shapes,
            grid_spec=pltpu.PrefetchScalarGridSpec(
                num_scalar_prefetch=0,
                grid=(B, n_s),
                in_specs=[x_spec,
                          pl.BlockSpec((D, 3 * D), lambda b, si: (0, 0)),
                          pl.BlockSpec((1, 3 * D), lambda b, si: (0, 0))],
                out_specs=out_specs),
            compiler_params=pltpu.CompilerParams(
                dimension_semantics=("parallel", "parallel")),
        )(query.astype(bf), w_qkv, b_qkv)

    w_spec = pl.BlockSpec((D, D), lambda b, si: (0, 0))
    b_spec = pl.BlockSpec((1, D), lambda b, si: (0, 0))
    kernel = functools.partial(_proj_qkv_kernel, sm_scale=sm_scale)
    return pl.pallas_call(
        kernel,
        out_shape=out_shapes,
        grid_spec=pltpu.PrefetchScalarGridSpec(
            num_scalar_prefetch=0,
            grid=(B, n_s),
            in_specs=[x_spec, x_spec, x_spec,
                      w_spec, b_spec, w_spec, b_spec, w_spec, b_spec],
            out_specs=out_specs),
        compiler_params=pltpu.CompilerParams(
            dimension_semantics=("parallel", "parallel")),
    )(query.astype(bf), key.astype(bf), value.astype(bf),
      params['wq'].astype(bf), params['bq'],
      params['wk'].astype(bf), params['bk'],
      params['wv'].astype(bf), params['bv'])


# ---------------------------------------------------------------------------
# Stage 2: flash-style per-head attention + output projection.
# ---------------------------------------------------------------------------

def _attn_kernel(q_ref, k_ref, v_ref, wo_ref, bo_ref, out_ref,
                 acc_s, m_s, l_s, *, h, d_k):
    ki = pl.program_id(2)
    n_kv = pl.num_programs(2)

    @pl.when(ki == 0)
    def _init():
        acc_s[...] = jnp.zeros(acc_s.shape, acc_s.dtype)
        m_s[...] = jnp.full(m_s.shape, -jnp.inf, dtype=m_s.dtype)
        l_s[...] = jnp.zeros(l_s.shape, l_s.dtype)

    qt = q_ref[0]                                   # (tq, D) bf16, already 1/sqrt(d_k)-scaled
    kt = k_ref[0]                                   # (tk, D) bf16
    vt = v_ref[0]                                   # (tk, D) bf16

    # Per-head attention via static lane slices: no transposes, no (h, S, S) tensor.
    # Note: the Q*K^T dot_general (contract dim 1 of both operands) lowers to the MXU's
    # native transposed-RHS matmul; no per-head XLU transpose is inserted.
    for hd in range(h):
        sl = slice(hd * d_k, (hd + 1) * d_k)
        qh = qt[:, sl]                              # (tq, d_k)
        kh = kt[:, sl]                              # (tk, d_k)
        vh = vt[:, sl]                              # (tk, d_k)
        s = lax.dot_general(qh, kh, (((1,), (1,)), ((), ())),
                            preferred_element_type=jnp.float32)   # (tq, tk)
        m_prev = m_s[hd]                            # (tq, 1)
        m_new = jnp.maximum(m_prev, jnp.max(s, axis=-1, keepdims=True))
        alpha = jnp.exp(m_prev - m_new)
        p = jnp.exp(s - m_new)                      # f32 softmax numerator
        l_s[hd] = alpha * l_s[hd] + jnp.sum(p, axis=-1, keepdims=True)
        m_s[hd] = m_new
        acc_s[:, sl] = alpha * acc_s[:, sl] + jnp.dot(
            p.astype(jnp.bfloat16), vh, preferred_element_type=jnp.float32)

    @pl.when(ki == n_kv - 1)
    def _finalize():
        # Normalize each head in place, then apply the output projection.
        for hd in range(h):
            sl = slice(hd * d_k, (hd + 1) * d_k)
            acc_s[:, sl] = acc_s[:, sl] * pl.reciprocal(l_s[hd], approx=True)
        ctx = acc_s[...].astype(jnp.bfloat16)       # (tq, D) == concat of heads
        out = jnp.dot(ctx, wo_ref[...],
                      preferred_element_type=jnp.float32) + bo_ref[...]
        out_ref[0] = out.astype(out_ref.dtype)


def multi_headed_attention(query, key, value, params, *, h,
                           tq=256, tk=256, ts=256, out_dtype=jnp.bfloat16):
    """query/key/value: (B, S, d_model) f32. params: dict of f32 weights/biases.

    tq/tk default to 256 for the 2x256x256 MXUs on v6e/v7x; use 128 on v5e.
    out_dtype defaults to bf16 (internals are bf16-precision anyway); pass
    jnp.float32 to match the PyTorch module's output dtype exactly.
    """
    B, S, D = query.shape
    assert D % h == 0
    d_k = D // h
    tq, tk, ts = min(tq, S), min(tk, S), min(ts, S)
    assert S % tq == 0 and S % tk == 0 and S % ts == 0
    n_q, n_kv = S // tq, S // tk

    # Stage 1: project q/k/v (each token once), bf16 out, 1/sqrt(d_k) folded into q.
    q_p, k_p, v_p = _project_qkv(query, key, value, params,
                                 sm_scale=1.0 / math.sqrt(d_k), ts=ts)

    bf = jnp.bfloat16
    wo = params['wo'].astype(bf)
    bo = params['bo']                                # f32 (1, D)

    q_spec = pl.BlockSpec((1, tq, D), lambda b, qi, ki: (b, qi, 0))
    kv_spec = pl.BlockSpec((1, tk, D), lambda b, qi, ki: (b, ki, 0))
    wo_spec = pl.BlockSpec((D, D), lambda b, qi, ki: (0, 0))
    bo_spec = pl.BlockSpec((1, D), lambda b, qi, ki: (0, 0))
    out_spec = pl.BlockSpec((1, tq, D), lambda b, qi, ki: (b, qi, 0))

    kernel = functools.partial(_attn_kernel, h=h, d_k=d_k)

    # Note for v7x: megacore sharding uses the (B, n_q) parallel axes; for B=1 and
    # n_q=1 consider splitting q-tiles or heads explicitly across the two cores.
    return pl.pallas_call(
        kernel,
        out_shape=jax.ShapeDtypeStruct((B, S, D), out_dtype),
        grid_spec=pltpu.PrefetchScalarGridSpec(
            num_scalar_prefetch=0,
            grid=(B, n_q, n_kv),
            in_specs=[q_spec, kv_spec, kv_spec, wo_spec, bo_spec],
            out_specs=out_spec,
            scratch_shapes=[
                pltpu.VMEM((tq, D), jnp.float32),      # acc_s : per-head ctx accumulators
                pltpu.VMEM((h, tq, 1), jnp.float32),   # m_s   : running row max per head
                pltpu.VMEM((h, tq, 1), jnp.float32),   # l_s   : running denom per head
            ]),
        compiler_params=pltpu.CompilerParams(
            dimension_semantics=("parallel", "parallel", "arbitrary"),
            vmem_limit_bytes=32 * 1024 * 1024),
    )(q_p, k_p, v_p, wo, bo)


# ---------------------------------------------------------------------------
# Pure-JAX f32 reference mirroring the PyTorch forward (eval mode, mask=None).
# ---------------------------------------------------------------------------

def _reference_mha(query, key, value, params, *, h):
    B, S, D = query.shape
    d_k = D // h

    def lin(x, w, b):
        return x @ w + b

    q = lin(query, params['wq'], params['bq']).reshape(B, S, h, d_k).transpose(0, 2, 1, 3)
    k = lin(key, params['wk'], params['bk']).reshape(B, S, h, d_k).transpose(0, 2, 1, 3)
    v = lin(value, params['wv'], params['bv']).reshape(B, S, h, d_k).transpose(0, 2, 1, 3)

    scores = jnp.einsum('bhqd,bhkd->bhqk', q, k) / math.sqrt(d_k)
    p = jax.nn.softmax(scores, axis=-1)
    ctx = jnp.einsum('bhqk,bhkd->bhqd', p, v)
    concat = ctx.transpose(0, 2, 1, 3).reshape(B, S, D)
    return lin(concat, params['wo'], params['bo'])


if __name__ == "__main__":
    # d_k = 128 -> every MXU matmul has lane-dense (>=128) contraction/output dims.
    # S = 512 exercises multi-tile q (n_q=2) and the online-softmax kv loop (n_kv=2).
    B, S, D, H = 2, 512, 512, 4

    key0 = jax.random.PRNGKey(0)
    keys = jax.random.split(key0, 12)

    # Deterministic synthetic parameters; weights stored as (in, out).
    scale = 1.0 / math.sqrt(D)
    params = {
        'wq': jax.random.normal(keys[0], (D, D), jnp.float32) * scale,
        'bq': jax.random.normal(keys[1], (1, D), jnp.float32) * 0.1,
        'wk': jax.random.normal(keys[2], (D, D), jnp.float32) * scale,
        'bk': jax.random.normal(keys[3], (1, D), jnp.float32) * 0.1,
        'wv': jax.random.normal(keys[4], (D, D), jnp.float32) * scale,
        'bv': jax.random.normal(keys[5], (1, D), jnp.float32) * 0.1,
        'wo': jax.random.normal(keys[6], (D, D), jnp.float32) * scale,
        'bo': jax.random.normal(keys[7], (1, D), jnp.float32) * 0.1,
    }

    query = jax.random.normal(keys[8], (B, S, D), jnp.float32)
    key_in = jax.random.normal(keys[9], (B, S, D), jnp.float32)
    value = jax.random.normal(keys[10], (B, S, D), jnp.float32)

    # Cross-attention path (three separate projections).
    out = multi_headed_attention(query, key_in, value, params, h=H)
    out = jax.block_until_ready(out)
    ref = _reference_mha(query, key_in, value, params, h=H)
    assert out.shape == (B, S, D)
    # bf16 MXU inputs / bf16 output with f32 accumulation -> looser tolerance than f32.
    assert jnp.allclose(out.astype(jnp.float32), ref, atol=3e-2, rtol=3e-2), \
        "cross-attention mismatch vs reference"

    # Self-attention path (fused (D, 3D) QKV projection).
    out_sa = multi_headed_attention(query, query, query, params, h=H)
    out_sa = jax.block_until_ready(out_sa)
    ref_sa = _reference_mha(query, query, query, params, h=H)
    assert jnp.allclose(out_sa.astype(jnp.float32), ref_sa, atol=3e-2, rtol=3e-2), \
        "self-attention mismatch vs reference"

    print("KERNEL_OK")
</pallas_src>

<mosaic_0001>
module attributes {stable_mosaic.version = 11 : i64} {
  func.func @_proj_qkv_kernel(%arg0: i32, %arg1: i32, %arg2: memref<1x256x512xbf16, #tpu.memory_space<vmem>>, %arg3: memref<1x256x512xbf16, #tpu.memory_space<vmem>>, %arg4: memref<1x256x512xbf16, #tpu.memory_space<vmem>>, %arg5: memref<512x512xbf16, #tpu.memory_space<vmem>>, %arg6: memref<1x512xf32, #tpu.memory_space<vmem>>, %arg7: memref<512x512xbf16, #tpu.memory_space<vmem>>, %arg8: memref<1x512xf32, #tpu.memory_space<vmem>>, %arg9: memref<512x512xbf16, #tpu.memory_space<vmem>>, %arg10: memref<1x512xf32, #tpu.memory_space<vmem>>, %arg11: memref<1x256x512xbf16, #tpu.memory_space<vmem>>, %arg12: memref<1x256x512xbf16, #tpu.memory_space<vmem>>, %arg13: memref<1x256x512xbf16, #tpu.memory_space<vmem>>) attributes {dimension_semantics = [#tpu.dimension_semantics<parallel>, #tpu.dimension_semantics<parallel>], iteration_bounds = array<i64: 2, 2>, scalar_prefetch = 0 : i64, scratch_operands = 0 : i64, tpu.core_type = #tpu.core_type<tc>, window_params = [{transform_indices = @transform_0, window_bounds = array<i64: 1, 256, 512>}, {transform_indices = @transform_1, window_bounds = array<i64: 1, 256, 512>}, {transform_indices = @transform_2, window_bounds = array<i64: 1, 256, 512>}, {pipeline_mode = #tpu.pipeline_mode<synchronous>, transform_indices = @transform_3, window_bounds = array<i64: 512, 512>}, {pipeline_mode = #tpu.pipeline_mode<synchronous>, transform_indices = @transform_4, window_bounds = array<i64: 1, 512>}, {pipeline_mode = #tpu.pipeline_mode<synchronous>, transform_indices = @transform_5, window_bounds = array<i64: 512, 512>}, {pipeline_mode = #tpu.pipeline_mode<synchronous>, transform_indices = @transform_6, window_bounds = array<i64: 1, 512>}, {pipeline_mode = #tpu.pipeline_mode<synchronous>, transform_indices = @transform_7, window_bounds = array<i64: 512, 512>}, {pipeline_mode = #tpu.pipeline_mode<synchronous>, transform_indices = @transform_8, window_bounds = array<i64: 1, 512>}, {transform_indices = @transform_9, window_bounds = array<i64: 1, 256, 512>}, {transform_indices = @transform_10, window_bounds = array<i64: 1, 256, 512>}, {transform_indices = @transform_11, window_bounds = array<i64: 1, 256, 512>}]} {
    %c0 = arith.constant 0 : index
    %c0_0 = arith.constant 0 : index
    %c0_1 = arith.constant 0 : index
    %0 = vector.load %arg2[%c0, %c0_0, %c0_1] : memref<1x256x512xbf16, #tpu.memory_space<vmem>>, vector<1x256x512xbf16>
    %1 = vector.shape_cast %0 : vector<1x256x512xbf16> to vector<256x512xbf16>
    %c0_2 = arith.constant 0 : index
    %c0_3 = arith.constant 0 : index
    %2 = vector.load %arg5[%c0_2, %c0_3] : memref<512x512xbf16, #tpu.memory_space<vmem>>, vector<512x512xbf16>
    %cst = arith.constant dense<0.000000e+00> : vector<256x512xf32>
    %3 = tpu.matmul %1, %2, %cst {dimension_numbers = #tpu.dot_dimension_numbers<[1], [0], [0], [1], [0, 0, 1, 1], [], []>} : vector<256x512xbf16>, vector<512x512xbf16>, vector<256x512xf32> -> vector<256x512xf32>
    %c0_4 = arith.constant 0 : index
    %c0_5 = arith.constant 0 : index
    %4 = vector.load %arg6[%c0_4, %c0_5] : memref<1x512xf32, #tpu.memory_space<vmem>>, vector<1x512xf32>
    %5 = vector.broadcast %4 : vector<1x512xf32> to vector<256x512xf32>
    %6 = arith.addf %3, %5 : vector<256x512xf32>
    %cst_6 = arith.constant 0.0883883461 : f32
    %7 = vector.broadcast %cst_6 : f32 to vector<256x512xf32>
    %8 = arith.mulf %6, %7 : vector<256x512xf32>
    %9 = arith.truncf %8 : vector<256x512xf32> to vector<256x512xbf16>
    %c0_7 = arith.constant 0 : index
    %c0_8 = arith.constant 0 : index
    %c0_9 = arith.constant 0 : index
    %10 = vector.load %arg11[%c0_7, %c0_8, %c0_9] : memref<1x256x512xbf16, #tpu.memory_space<vmem>>, vector<1x256x512xbf16>
    %11 = vector.shape_cast %10 : vector<1x256x512xbf16> to vector<256x512xbf16>
    %12 = vector.shape_cast %9 : vector<256x512xbf16> to vector<1x256x512xbf16>
    tpu.vector_store %arg11[%c0_7, %c0_8, %c0_9], %12 {strides = array<i32>} : memref<1x256x512xbf16, #tpu.memory_space<vmem>>, vector<1x256x512xbf16>,
    %c0_10 = arith.constant 0 : index
    %c0_11 = arith.constant 0 : index
    %c0_12 = arith.constant 0 : index
    %13 = vector.load %arg3[%c0_10, %c0_11, %c0_12] : memref<1x256x512xbf16, #tpu.memory_space<vmem>>, vector<1x256x512xbf16>
    %14 = vector.shape_cast %13 : vector<1x256x512xbf16> to vector<256x512xbf16>
    %c0_13 = arith.constant 0 : index
    %c0_14 = arith.constant 0 : index
    %15 = vector.load %arg7[%c0_13, %c0_14] : memref<512x512xbf16, #tpu.memory_space<vmem>>, vector<512x512xbf16>
    %cst_15 = arith.constant dense<0.000000e+00> : vector<256x512xf32>
    %16 = tpu.matmul %14, %15, %cst_15 {dimension_numbers = #tpu.dot_dimension_numbers<[1], [0], [0], [1], [0, 0, 1, 1], [], []>} : vector<256x512xbf16>, vector<512x512xbf16>, vector<256x512xf32> -> vector<256x512xf32>
    %c0_16 = arith.constant 0 : index
    %c0_17 = arith.constant 0 : index
    %17 = vector.load %arg8[%c0_16, %c0_17] : memref<1x512xf32, #tpu.memory_space<vmem>>, vector<1x512xf32>
    %18 = vector.broadcast %17 : vector<1x512xf32> to vector<256x512xf32>
    %19 = arith.addf %16, %18 : vector<256x512xf32>
    %20 = arith.truncf %19 : vector<256x512xf32> to vector<256x512xbf16>
    %c0_18 = arith.constant 0 : index
    %c0_19 = arith.constant 0 : index
    %c0_20 = arith.constant 0 : index
    %21 = vector.load %arg12[%c0_18, %c0_19, %c0_20] : memref<1x256x512xbf16, #tpu.memory_space<vmem>>, vector<1x256x512xbf16>
    %22 = vector.shape_cast %21 : vector<1x256x512xbf16> to vector<256x512xbf16>
    %23 = vector.shape_cast %20 : vector<256x512xbf16> to vector<1x256x512xbf16>
    tpu.vector_store %arg12[%c0_18, %c0_19, %c0_20], %23 {strides = array<i32>} : memref<1x256x512xbf16, #tpu.memory_space<vmem>>, vector<1x256x512xbf16>,
    %c0_21 = arith.constant 0 : index
    %c0_22 = arith.constant 0 : index
    %c0_23 = arith.constant 0 : index
    %24 = vector.load %arg4[%c0_21, %c0_22, %c0_23] : memref<1x256x512xbf16, #tpu.memory_space<vmem>>, vector<1x256x512xbf16>
    %25 = vector.shape_cast %24 : vector<1x256x512xbf16> to vector<256x512xbf16>
    %c0_24 = arith.constant 0 : index
    %c0_25 = arith.constant 0 : index
    %26 = vector.load %arg9[%c0_24, %c0_25] : memref<512x512xbf16, #tpu.memory_space<vmem>>, vector<512x512xbf16>
    %cst_26 = arith.constant dense<0.000000e+00> : vector<256x512xf32>
    %27 = tpu.matmul %25, %26, %cst_26 {dimension_numbers = #tpu.dot_dimension_numbers<[1], [0], [0], [1], [0, 0, 1, 1], [], []>} : vector<256x512xbf16>, vector<512x512xbf16>, vector<256x512xf32> -> vector<256x512xf32>
    %c0_27 = arith.constant 0 : index
    %c0_28 = arith.constant 0 : index
    %28 = vector.load %arg10[%c0_27, %c0_28] : memref<1x512xf32, #tpu.memory_space<vmem>>, vector<1x512xf32>
    %29 = vector.broadcast %28 : vector<1x512xf32> to vector<256x512xf32>
    %30 = arith.addf %27, %29 : vector<256x512xf32>
    %31 = arith.truncf %30 : vector<256x512xf32> to vector<256x512xbf16>
    %c0_29 = arith.constant 0 : index
    %c0_30 = arith.constant 0 : index
    %c0_31 = arith.constant 0 : index
    %32 = vector.load %arg13[%c0_29, %c0_30, %c0_31] : memref<1x256x512xbf16, #tpu.memory_space<vmem>>, vector<1x256x512xbf16>
    %33 = vector.shape_cast %32 : vector<1x256x512xbf16> to vector<256x512xbf16>
    %34 = vector.shape_cast %31 : vector<256x512xbf16> to vector<1x256x512xbf16>
    tpu.vector_store %arg13[%c0_29, %c0_30, %c0_31], %34 {strides = array<i32>} : memref<1x256x512xbf16, #tpu.memory_space<vmem>>, vector<1x256x512xbf16>,
    return
  }
  func.func @transform_0(%arg0: i32, %arg1: i32) -> (i32, i32, i32) {
    %c0_i32 = arith.constant 0 : i32
    %c0_i32_0 = arith.constant 0 : i32
    return %arg0, %arg1, %c0_i32 : i32, i32, i32
  }
  func.func @transform_1(%arg0: i32, %arg1: i32) -> (i32, i32, i32) {
    %c0_i32 = arith.constant 0 : i32
    %c0_i32_0 = arith.constant 0 : i32
    return %arg0, %arg1, %c0_i32 : i32, i32, i32
  }
  func.func @transform_2(%arg0: i32, %arg1: i32) -> (i32, i32, i32) {
    %c0_i32 = arith.constant 0 : i32
    %c0_i32_0 = arith.constant 0 : i32
    return %arg0, %arg1, %c0_i32 : i32, i32, i32
  }
  func.func @transform_3(%arg0: i32, %arg1: i32) -> (i32, i32) {
    %c0_i32 = arith.constant 0 : i32
    %c0_i32_0 = arith.constant 0 : i32
    %c0_i32_1 = arith.constant 0 : i32
    return %c0_i32, %c0_i32_0 : i32, i32
  }
  func.func @transform_4(%arg0: i32, %arg1: i32) -> (i32, i32) {
    %c0_i32 = arith.constant 0 : i32
    %c0_i32_0 = arith.constant 0 : i32
    %c0_i32_1 = arith.constant 0 : i32
    return %c0_i32, %c0_i32_0 : i32, i32
  }
  func.func @transform_5(%arg0: i32, %arg1: i32) -> (i32, i32) {
    %c0_i32 = arith.constant 0 : i32
    %c0_i32_0 = arith.constant 0 : i32
    %c0_i32_1 = arith.constant 0 : i32
    return %c0_i32, %c0_i32_0 : i32, i32
  }
  func.func @transform_6(%arg0: i32, %arg1: i32) -> (i32, i32) {
    %c0_i32 = arith.constant 0 : i32
    %c0_i32_0 = arith.constant 0 : i32
    %c0_i32_1 = arith.constant 0 : i32
    return %c0_i32, %c0_i32_0 : i32, i32
  }
  func.func @transform_7(%arg0: i32, %arg1: i32) -> (i32, i32) {
    %c0_i32 = arith.constant 0 : i32
    %c0_i32_0 = arith.constant 0 : i32
    %c0_i32_1 = arith.constant 0 : i32
    return %c0_i32, %c0_i32_0 : i32, i32
  }
  func.func @transform_8(%arg0: i32, %arg1: i32) -> (i32, i32) {
    %c0_i32 = arith.constant 0 : i32
    %c0_i32_0 = arith.constant 0 : i32
    %c0_i32_1 = arith.constant 0 : i32
    return %c0_i32, %c0_i32_0 : i32, i32
  }
  func.func @transform_9(%arg0: i32, %arg1: i32) -> (i32, i32, i32) {
    %c0_i32 = arith.constant 0 : i32
    %c0_i32_0 = arith.constant 0 : i32
    return %arg0, %arg1, %c0_i32 : i32, i32, i32
  }
  func.func @transform_10(%arg0: i32, %arg1: i32) -> (i32, i32, i32) {
    %c0_i32 = arith.constant 0 : i32
    %c0_i32_0 = arith.constant 0 : i32
    return %arg0, %arg1, %c0_i32 : i32, i32, i32
  }
  func.func @transform_11(%arg0: i32, %arg1: i32) -> (i32, i32, i32) {
    %c0_i32 = arith.constant 0 : i32
    %c0_i32_0 = arith.constant 0 : i32
    return %arg0, %arg1, %c0_i32 : i32, i32, i32
  }
}

</mosaic_0001>

<llo_original>
// kernel: tpu_custom_call.1
$region0: #{tpu_custom_call.1}
  #allocation0 [shape = 'u32[]', space=smem, size = 0x4, offset = 0x4, fixed_abs, tag = 'smem constant byte address 0x4 - core index']
  #allocation1 [shape = 'u32[144,128]{1,0:T(1,128)}', space=vmem, size = 0x12000, scoped, tag = 'internal scratch']
  %s0 = inlined_call_operand.hbm [shape: bf16[2,512,512], index: 0, kind: input, shape index: {}]
  %s1 = inlined_call_operand.hbm [shape: bf16[2,512,512], index: 1, kind: input, shape index: {}]
  %s2 = inlined_call_operand.hbm [shape: bf16[2,512,512], index: 2, kind: input, shape index: {}]
  %s3 = inlined_call_operand.hbm [shape: bf16[512,512], index: 3, kind: input, shape index: {}]
  %s4 = inlined_call_operand.vmem [shape: f32[1,512], index: 4, kind: input, shape index: {}]
  %s5 = inlined_call_operand.hbm [shape: bf16[512,512], index: 5, kind: input, shape index: {}]
  %s6 = inlined_call_operand.vmem [shape: f32[1,512], index: 6, kind: input, shape index: {}]
  %s7 = inlined_call_operand.hbm [shape: bf16[512,512], index: 7, kind: input, shape index: {}]
  %s8 = inlined_call_operand.vmem [shape: f32[1,512], index: 8, kind: input, shape index: {}]
  %s9 = inlined_call_operand.hbm [shape: bf16[2,512,512], index: 9, kind: output, shape index: {0}]
  %s10 = inlined_call_operand.hbm [shape: bf16[2,512,512], index: 10, kind: output, shape index: {1}]
  %s11 = inlined_call_operand.hbm [shape: bf16[2,512,512], index: 11, kind: output, shape index: {2}]
  %12 = xla_tuple %s9, %s10, %s11
  %s13 = sld [smem:[#allocation0]]
  $region109: #{tpu_custom_call.1} parent=0
    _
  %s15 = ssub.s32 1, %s13
  %s16 = scalar_select 0, %s15, %s13
  $region1: #{tpu_custom_call.1} parent=0
    #allocation2 [shape = 'u8[524288]{0}', space=vmem, size = 0x80000, scoped, tag = 'input window, operand 0']
    #allocation3 [shape = 's32[2]{0}', space=sflag, size = 0x8, scoped, tag = 'scoped memory for tpu_custom_call.1']
    #allocation4 [shape = 's32[2]{0}', space=sflag, size = 0x8, scoped, tag = 'scoped memory for tpu_custom_call.1']
    #allocation5 [shape = 'u8[524288]{0}', space=vmem, size = 0x80000, scoped, tag = 'input window, operand 1']
    #allocation6 [shape = 's32[2]{0}', space=sflag, size = 0x8, scoped, tag = 'scoped memory for tpu_custom_call.1']
    #allocation7 [shape = 'u8[524288]{0}', space=vmem, size = 0x80000, scoped, tag = 'input window, operand 2']
    #allocation8 [shape = 'u8[524288]{0}', space=vmem, size = 0x80000, scoped, tag = 'input window, operand 3, single buffered']
    #allocation9 [shape = 's32[1]{0}', space=sflag, size = 0x4, scoped, tag = 'scoped memory for tpu_custom_call.1']
    #allocation10 [shape = 'u8[524288]{0}', space=vmem, size = 0x80000, scoped, tag = 'input window, operand 5, single buffered']
    #allocation11 [shape = 'u8[524288]{0}', space=vmem, size = 0x80000, scoped, tag = 'input window, operand 7, single buffered']
    #allocation12 [shape = 's32[1]{0}', space=sflag, size = 0x4, scoped, tag = 'scoped memory for tpu_custom_call.1']
    #allocation13 [shape = 'u8[524288]{0}', space=vmem, size = 0x80000, scoped, tag = 'output window, operand 0']
    #allocation14 [shape = 'u8[524288]{0}', space=vmem, size = 0x80000, scoped, tag = 'output window, operand 1']
    #allocation15 [shape = 's32[2]{0}', space=sflag, size = 0x8, scoped, tag = 'scoped memory for tpu_custom_call.1']
    #allocation16 [shape = 'u8[524288]{0}', space=vmem, size = 0x80000, scoped, tag = 'output window, operand 2']
    %17 = vsyncpa [#allocation3], 0
    %s18 = scalar_lea.sflag [#allocation3], 1
    %19 = vsyncpa %s18, 0
    %20 = vsyncpa [#allocation6], 0
    %s21 = scalar_lea.sflag [#allocation6], 1
    %22 = vsyncpa %s21, 0
    %23 = vsyncpa [#allocation9], 0
    %24 = vsyncpa [#allocation12], 0
    %25 = vsyncpa [#allocation4], 0
    %s26 = scalar_lea.sflag [#allocation4], 1
    %27 = vsyncpa %s26, 0
    %28 = vsyncpa [#allocation15], 0
    %s29 = scalar_lea.sflag [#allocation15], 1
    %30 = vsyncpa %s29, 0
    loop: start=0, step=1, limit=6
    $region2: #{tpu_custom_call.1} parent=1 // loop_pre_header
      _
    $region3: #{tpu_custom_call.1} parent=1 // loop_header
      %s32 = sphi 0, %s36
      %p33 = scmp.ge.s32.totalorder %s32, 6
      %s39 = sphi 0, %s51
      %s40 = sphi 0, %s47
      %s41 = sphi 0, %s39
      %s42 = sphi 0, %s40
      %s43 = sphi 0, %s41
      %s44 = sphi 0, %s42
      %s56 = sphi 0, %s58
      %s59 = sphi 0, %s56
      %s60 = sphi 0, %s59
      %s76 = sphi 0, %s60
      %s84 = sphi 0, %s86
      %s87 = sphi 0, %s84
      %s88 = sphi 0, %s87
      %s104 = sphi 0, %s88
      %s112 = sphi 0, %s114
      %s115 = sphi 0, %s112
      %s116 = sphi 0, %s115
      %s132 = sphi 0, %s116
      %s136 = sphi 0, %s136
      %s138 = sphi 0, %s136
      %s139 = sphi 0, %s138
      %s153 = sphi 0, %s139
      %s157 = sphi 0, %s157
      %s159 = sphi 0, %s157
      %s160 = sphi 0, %s159
      %s174 = sphi 0, %s160
      %s178 = sphi 0, %s178
      %s180 = sphi 0, %s178
      %s181 = sphi 0, %s180
      %s195 = sphi 0, %s181
      %s199 = sphi 0, %s199
      %s201 = sphi 0, %s199
      %s202 = sphi 0, %s201
      %s216 = sphi 0, %s202
      %s220 = sphi 0, %s220
      %s222 = sphi 0, %s220
      %s223 = sphi 0, %s222
      %s237 = sphi 0, %s223
      %s241 = sphi 0, %s241
      %s243 = sphi 0, %s241
      %s244 = sphi 0, %s243
      %s258 = sphi 0, %s244
      %s266 = sphi 0, %s268
      %s269 = sphi 0, %s266
      %s270 = sphi 0, %s269
      %s286 = sphi 0, %s270
      %s294 = sphi 0, %s296
      %s297 = sphi 0, %s294
      %s298 = sphi 0, %s297
      %s314 = sphi 0, %s298
      %s322 = sphi 0, %s324
      %s325 = sphi 0, %s322
      %s326 = sphi 0, %s325
      %s342 = sphi 0, %s326
    $region4: #{tpu_custom_call.1} parent=1 // loop_header_branch
      %35 = sbr.rel (%p33) target = $region8
    $region5: #{tpu_custom_call.1} parent=1 // loop_body
      %s37 = ssub.s32 %s32, 1
      %s38 = ssub.s32 %s32, 2
      %s45 = sadd.s32 1, %s40
      %p46 = scmp.ge.s32.totalorder %s45, 2
      %s47 = scalar_select %p46, 0, %s45
      %s48 = sadd.s32 1, %s39
      %s49 = scalar_select %p46, %s48, %s39
      %p50 = scmp.ge.s32.totalorder %s49, 2
      %s51 = scalar_select %p50, 0, %s49
      %s52 = ssub.s32 %s39, %s51
      %s53 = ssub.s32 %s40, %s47
      %s54 = sor.u32 %s52, %s53
      %p55 = scmp.eq.s32.totalorder %s54, 0
      %s57 = sadd.s32 %s56, 1
      %s58 = scalar_select %p55, %s56, %s57
      %p61 = pneg %p55
      %p62 = scmp.eq.s32.totalorder %s32, 3
      %p63 = por %p61, %p62
      %p64 = scmp.ne.s32.totalorder %s56, %s59
      %p65 = scmp.eq.s32.totalorder %s32, 0
      %p66 = por %p64, %p65
      %p67 = scmp.ne.s32.totalorder %s56, %s59
      %p68 = scmp.eq.s32.totalorder %s37, 3
      %p69 = por %p67, %p68
      %p70 = scmp.ne.s32.totalorder %s59, %s60
      %p71 = scmp.eq.s32.totalorder %s37, 0
      %p72 = por %p70, %p71
      %p73 = scmp.ne.s32.totalorder %s59, %s60
      %p74 = scmp.eq.s32.totalorder %s38, 3
      %p75 = por %p73, %p74
      %p77 = scmp.ne.s32.totalorder %s60, %s76
      %p78 = scmp.eq.s32.totalorder %s38, 0
      %p79 = por %p77, %p78
      %s80 = ssub.s32 %s39, %s51
      %s81 = ssub.s32 %s40, %s47
      %s82 = sor.u32 %s80, %s81
      %p83 = scmp.eq.s32.totalorder %s82, 0
      %s85 = sadd.s32 %s84, 1
      %s86 = scalar_select %p83, %s84, %s85
      %p89 = pneg %p83
      %p90 = scmp.eq.s32.totalorder %s32, 3
      %p91 = por %p89, %p90
      %p92 = scmp.ne.s32.totalorder %s84, %s87
      %p93 = scmp.eq.s32.totalorder %s32, 0
      %p94 = por %p92, %p93
      %p95 = scmp.ne.s32.totalorder %s84, %s87
      %p96 = scmp.eq.s32.totalorder %s37, 3
      %p97 = por %p95, %p96
      %p98 = scmp.ne.s32.totalorder %s87, %s88
      %p99 = scmp.eq.s32.totalorder %s37, 0
      %p100 = por %p98, %p99
      %p101 = scmp.ne.s32.totalorder %s87, %s88
      %p102 = scmp.eq.s32.totalorder %s38, 3
      %p103 = por %p101, %p102
      %p105 = scmp.ne.s32.totalorder %s88, %s104
      %p106 = scmp.eq.s32.totalorder %s38, 0
      %p107 = por %p105, %p106
      %s108 = ssub.s32 %s39, %s51
      %s109 = ssub.s32 %s40, %s47
      %s110 = sor.u32 %s108, %s109
      %p111 = scmp.eq.s32.totalorder %s110, 0
      %s113 = sadd.s32 %s112, 1
      %s114 = scalar_select %p111, %s112, %s113
      %p117 = pneg %p111
      %p118 = scmp.eq.s32.totalorder %s32, 3
      %p119 = por %p117, %p118
      %p120 = scmp.ne.s32.totalorder %s112, %s115
      %p121 = scmp.eq.s32.totalorder %s32, 0
      %p122 = por %p120, %p121
      %p123 = scmp.ne.s32.totalorder %s112, %s115
      %p124 = scmp.eq.s32.totalorder %s37, 3
      %p125 = por %p123, %p124
      %p126 = scmp.ne.s32.totalorder %s115, %s116
      %p127 = scmp.eq.s32.totalorder %s37, 0
      %p128 = por %p126, %p127
      %p129 = scmp.ne.s32.totalorder %s115, %s116
      %p130 = scmp.eq.s32.totalorder %s38, 3
      %p131 = por %p129, %p130
      %p133 = scmp.ne.s32.totalorder %s116, %s132
      %p134 = scmp.eq.s32.totalorder %s38, 0
      %p135 = por %p133, %p134
      %s137 = sadd.s32 %s136, 1
      %p140 = scmp.eq.s32.totalorder %s32, 3
      %p141 = scmp.ne.s32.totalorder %s136, %s138
      %p142 = scmp.eq.s32.totalorder %s32, 0
      %p143 = por %p141, %p142
      %p144 = scmp.ne.s32.totalorder %s136, %s138
      %p145 = scmp.eq.s32.totalorder %s37, 3
      %p146 = por %p144, %p145
      %p147 = scmp.ne.s32.totalorder %s138, %s139
      %p148 = scmp.eq.s32.totalorder %s37, 0
      %p149 = por %p147, %p148
      %p150 = scmp.ne.s32.totalorder %s138, %s139
      %p151 = scmp.eq.s32.totalorder %s38, 3
      %p152 = por %p150, %p151
      %p154 = scmp.ne.s32.totalorder %s139, %s153
      %p155 = scmp.eq.s32.totalorder %s38, 0
      %p156 = por %p154, %p155
      %s158 = sadd.s32 %s157, 1
      %p161 = scmp.eq.s32.totalorder %s32, 3
      %p162 = scmp.ne.s32.totalorder %s157, %s159
      %p163 = scmp.eq.s32.totalorder %s32, 0
      %p164 = por %p162, %p163
      %p165 = scmp.ne.s32.totalorder %s157, %s159
      %p166 = scmp.eq.s32.totalorder %s37, 3
      %p167 = por %p165, %p166
      %p168 = scmp.ne.s32.totalorder %s159, %s160
      %p169 = scmp.eq.s32.totalorder %s37, 0
      %p170 = por %p168, %p169
      %p171 = scmp.ne.s32.totalorder %s159, %s160
      %p172 = scmp.eq.s32.totalorder %s38, 3
      %p173 = por %p171, %p172
      %p175 = scmp.ne.s32.totalorder %s160, %s174
      %p176 = scmp.eq.s32.totalorder %s38, 0
      %p177 = por %p175, %p176
      %s179 = sadd.s32 %s178, 1
      %p182 = scmp.eq.s32.totalorder %s32, 3
      %p183 = scmp.ne.s32.totalorder %s178, %s180
      %p184 = scmp.eq.s32.totalorder %s32, 0
      %p185 = por %p183, %p184
      %p186 = scmp.ne.s32.totalorder %s178, %s180
      %p187 = scmp.eq.s32.totalorder %s37, 3
      %p188 = por %p186, %p187
      %p189 = scmp.ne.s32.totalorder %s180, %s181
      %p190 = scmp.eq.s32.totalorder %s37, 0
      %p191 = por %p189, %p190
      %p192 = scmp.ne.s32.totalorder %s180, %s181
      %p193 = scmp.eq.s32.totalorder %s38, 3
      %p194 = por %p192, %p193
      %p196 = scmp.ne.s32.totalorder %s181, %s195
      %p197 = scmp.eq.s32.totalorder %s38, 0
      %p198 = por %p196, %p197
      %s200 = sadd.s32 %s199, 1
      %p203 = scmp.eq.s32.totalorder %s32, 3
      %p204 = scmp.ne.s32.totalorder %s199, %s201
      %p205 = scmp.eq.s32.totalorder %s32, 0
      %p206 = por %p204, %p205
      %p207 = scmp.ne.s32.totalorder %s199, %s201
      %p208 = scmp.eq.s32.totalorder %s37, 3
      %p209 = por %p207, %p208
      %p210 = scmp.ne.s32.totalorder %s201, %s202
      %p211 = scmp.eq.s32.totalorder %s37, 0
      %p212 = por %p210, %p211
      %p213 = scmp.ne.s32.totalorder %s201, %s202
      %p214 = scmp.eq.s32.totalorder %s38, 3
      %p215 = por %p213, %p214
      %p217 = scmp.ne.s32.totalorder %s202, %s216
      %p218 = scmp.eq.s32.totalorder %s38, 0
      %p219 = por %p217, %p218
      %s221 = sadd.s32 %s220, 1
      %p224 = scmp.eq.s32.totalorder %s32, 3
      %p225 = scmp.ne.s32.totalorder %s220, %s222
      %p226 = scmp.eq.s32.totalorder %s32, 0
      %p227 = por %p225, %p226
      %p228 = scmp.ne.s32.totalorder %s220, %s222
      %p229 = scmp.eq.s32.totalorder %s37, 3
      %p230 = por %p228, %p229
      %p231 = scmp.ne.s32.totalorder %s222, %s223
      %p232 = scmp.eq.s32.totalorder %s37, 0
      %p233 = por %p231, %p232
      %p234 = scmp.ne.s32.totalorder %s222, %s223
      %p235 = scmp.eq.s32.totalorder %s38, 3
      %p236 = por %p234, %p235
      %p238 = scmp.ne.s32.totalorder %s223, %s237
      %p239 = scmp.eq.s32.totalorder %s38, 0
      %p240 = por %p238, %p239
      %s242 = sadd.s32 %s241, 1
      %p245 = scmp.eq.s32.totalorder %s32, 3
      %p246 = scmp.ne.s32.totalorder %s241, %s243
      %p247 = scmp.eq.s32.totalorder %s32, 0
      %p248 = por %p246, %p247
      %p249 = scmp.ne.s32.totalorder %s241, %s243
      %p250 = scmp.eq.s32.totalorder %s37, 3
      %p251 = por %p249, %p250
      %p252 = scmp.ne.s32.totalorder %s243, %s244
      %p253 = scmp.eq.s32.totalorder %s37, 0
      %p254 = por %p252, %p253
      %p255 = scmp.ne.s32.totalorder %s243, %s244
      %p256 = scmp.eq.s32.totalorder %s38, 3
      %p257 = por %p255, %p256
      %p259 = scmp.ne.s32.totalorder %s244, %s258
      %p260 = scmp.eq.s32.totalorder %s38, 0
      %p261 = por %p259, %p260
      %s262 = ssub.s32 %s39, %s51
      %s263 = ssub.s32 %s40, %s47
      %s264 = sor.u32 %s262, %s263
      %p265 = scmp.eq.s32.totalorder %s264, 0
      %s267 = sadd.s32 %s266, 1
      %s268 = scalar_select %p265, %s266, %s267
      %p271 = pneg %p265
      %p272 = scmp.eq.s32.totalorder %s32, 3
      %p273 = por %p271, %p272
      %p274 = scmp.ne.s32.totalorder %s266, %s269
      %p275 = scmp.eq.s32.totalorder %s32, 0
      %p276 = por %p274, %p275
      %p277 = scmp.ne.s32.totalorder %s266, %s269
      %p278 = scmp.eq.s32.totalorder %s37, 3
      %p279 = por %p277, %p278
      %p280 = scmp.ne.s32.totalorder %s269, %s270
      %p281 = scmp.eq.s32.totalorder %s37, 0
      %p282 = por %p280, %p281
      %p283 = scmp.ne.s32.totalorder %s269, %s270
      %p284 = scmp.eq.s32.totalorder %s38, 3
      %p285 = por %p283, %p284
      %p287 = scmp.ne.s32.totalorder %s270, %s286
      %p288 = scmp.eq.s32.totalorder %s38, 0
      %p289 = por %p287, %p288
      %s290 = ssub.s32 %s39, %s51
      %s291 = ssub.s32 %s40, %s47
      %s292 = sor.u32 %s290, %s291
      %p293 = scmp.eq.s32.totalorder %s292, 0
      %s295 = sadd.s32 %s294, 1
      %s296 = scalar_select %p293, %s294, %s295
      %p299 = pneg %p293
      %p300 = scmp.eq.s32.totalorder %s32, 3
      %p301 = por %p299, %p300
      %p302 = scmp.ne.s32.totalorder %s294, %s297
      %p303 = scmp.eq.s32.totalorder %s32, 0
      %p304 = por %p302, %p303
      %p305 = scmp.ne.s32.totalorder %s294, %s297
      %p306 = scmp.eq.s32.totalorder %s37, 3
      %p307 = por %p305, %p306
      %p308 = scmp.ne.s32.totalorder %s297, %s298
      %p309 = scmp.eq.s32.totalorder %s37, 0
      %p310 = por %p308, %p309
      %p311 = scmp.ne.s32.totalorder %s297, %s298
      %p312 = scmp.eq.s32.totalorder %s38, 3
      %p313 = por %p311, %p312
      %p315 = scmp.ne.s32.totalorder %s298, %s314
      %p316 = scmp.eq.s32.totalorder %s38, 0
      %p317 = por %p315, %p316
      %s318 = ssub.s32 %s39, %s51
      %s319 = ssub.s32 %s40, %s47
      %s320 = sor.u32 %s318, %s319
      %p321 = scmp.eq.s32.totalorder %s320, 0
      %s323 = sadd.s32 %s322, 1
      %s324 = scalar_select %p321, %s322, %s323
      %p327 = pneg %p321
      %p328 = scmp.eq.s32.totalorder %s32, 3
      %p329 = por %p327, %p328
      %p330 = scmp.ne.s32.totalorder %s322, %s325
      %p331 = scmp.eq.s32.totalorder %s32, 0
      %p332 = por %p330, %p331
      %p333 = scmp.ne.s32.totalorder %s322, %s325
      %p334 = scmp.eq.s32.totalorder %s37, 3
      %p335 = por %p333, %p334
      %p336 = scmp.ne.s32.totalorder %s325, %s326
      %p337 = scmp.eq.s32.totalorder %s37, 0
      %p338 = por %p336, %p337
      %p339 = scmp.ne.s32.totalorder %s325, %s326
      %p340 = scmp.eq.s32.totalorder %s38, 3
      %p341 = por %p339, %p340
      %p343 = scmp.ne.s32.totalorder %s326, %s342
      %p344 = scmp.eq.s32.totalorder %s38, 0
      %p345 = por %p343, %p344
      %p346 = scmp.le.s32.totalorder 1, %s32
      %p347 = scmp.lt.s32.totalorder %s32, 5
      %p348 = pnand %p346, %p347
      %p349 = pneg %p348
      // Predicated region
      $region9: #{tpu_custom_call.1} parent=5 // pred_check
        _
      $region10: #{tpu_custom_call.1} parent=5 // pred_check_branch
        %351 = sbr.rel (%p348) target = $region12
      $region11: #{tpu_custom_call.1} parent=5 // pred_region
        %s352 = ssub.s32 %s32, 1
        // Predicated region
        $region13: #{tpu_custom_call.1} parent=11 // pred_check
          %p353 = pneg %p149
        $region14: #{tpu_custom_call.1} parent=11 // pred_check_branch
          %355 = sbr.rel (%p353) target = $region16
        $region15: #{tpu_custom_call.1} parent=11 // pred_region
          %s357 = ssub.s32 16384, 16384
          %358 = vsyncadd [#allocation9], %s357
          %s359 = sshll.u32 [#allocation8], 4
          %s360 = int_to_ptr.vmem [resolvable:$true] %s359
          %365 = dma.hbm_to_vmem [thread:$0]  %s3, 16384, %s360, [#allocation9], 256, 256, 16
        $region16: #{tpu_custom_call.1} parent=11 // pred_fallthru
          _
        // Predicated region
        $region17: #{tpu_custom_call.1} parent=11 // pred_check
          %p366 = pneg %p170
        $region18: #{tpu_custom_call.1} parent=11 // pred_check_branch
          %368 = sbr.rel (%p366) target = $region20
        $region19: #{tpu_custom_call.1} parent=11 // pred_region
          _
        $region20: #{tpu_custom_call.1} parent=11 // pred_fallthru
          _
        // Predicated region
        $region21: #{tpu_custom_call.1} parent=11 // pred_check
          %p369 = pneg %p191
        $region22: #{tpu_custom_call.1} parent=11 // pred_check_branch
          %371 = sbr.rel (%p369) target = $region24
        $region23: #{tpu_custom_call.1} parent=11 // pred_region
          %s373 = ssub.s32 16384, 16384
          %374 = vsyncadd [#allocation9], %s373
          %s375 = sshll.u32 [#allocation10], 4
          %s376 = int_to_ptr.vmem [resolvable:$true] %s375
          %381 = dma.hbm_to_vmem [thread:$0]  %s5, 16384, %s376, [#allocation9], 256, 256, 16
        $region24: #{tpu_custom_call.1} parent=11 // pred_fallthru
          _
        // Predicated region
        $region25: #{tpu_custom_call.1} parent=11 // pred_check
          %p382 = pneg %p212
        $region26: #{tpu_custom_call.1} parent=11 // pred_check_branch
          %384 = sbr.rel (%p382) target = $region28
        $region27: #{tpu_custom_call.1} parent=11 // pred_region
          _
        $region28: #{tpu_custom_call.1} parent=11 // pred_fallthru
          _
        // Predicated region
        $region29: #{tpu_custom_call.1} parent=11 // pred_check
          %p385 = pneg %p233
        $region30: #{tpu_custom_call.1} parent=11 // pred_check_branch
          %387 = sbr.rel (%p385) target = $region32
        $region31: #{tpu_custom_call.1} parent=11 // pred_region
          %s389 = ssub.s32 16384, 16384
          %390 = vsyncadd [#allocation12], %s389
          %s391 = sshll.u32 [#allocation11], 4
          %s392 = int_to_ptr.vmem [resolvable:$true] %s391
          %397 = dma.hbm_to_vmem [thread:$0]  %s7, 16384, %s392, [#allocation12], 256, 256, 16
        $region32: #{tpu_custom_call.1} parent=11 // pred_fallthru
          _
        // Predicated region
        $region33: #{tpu_custom_call.1} parent=11 // pred_check
          %p398 = pneg %p254
        $region34: #{tpu_custom_call.1} parent=11 // pred_check_branch
          %400 = sbr.rel (%p398) target = $region36
        $region35: #{tpu_custom_call.1} parent=11 // pred_region
          _
        $region36: #{tpu_custom_call.1} parent=11 // pred_fallthru
          _
      $region12: #{tpu_custom_call.1} parent=5 // pred_fallthru
        _
      %p401 = scmp.lt.s32.totalorder %s32, 4
      // Predicated region
      $region37: #{tpu_custom_call.1} parent=5 // pred_check
        %p402 = pneg %p401
      $region38: #{tpu_custom_call.1} parent=5 // pred_check_branch
        %404 = sbr.rel (%p402) target = $region40
      $region39: #{tpu_custom_call.1} parent=5 // pred_region
        // Predicated region
        $region41: #{tpu_custom_call.1} parent=39 // pred_check
          %p405 = pneg %p66
        $region42: #{tpu_custom_call.1} parent=39 // pred_check_branch
          %407 = sbr.rel (%p405) target = $region44
        $region43: #{tpu_custom_call.1} parent=39 // pred_region
          %s408 = sand.u32 %s56, 1
          %s409 = scalar_lea.sflag [#allocation3], %s408
          %s410 = sand.u32 %s56, 1
          %s411 = smul.addr %s410, 512
          %s412 = scalar_lea.vmem [#allocation2], %s411
          %s413 = smul.u32 32, %s40
          %s415 = ssub.s32 8192, 8192
          %416 = vsyncadd %s409, %s415
          %s417 = smul.addr %s413, 4
          %s418 = smul.addr %s39, 256
          %s419 = sadd.s32 %s417, %s418
          %s420 = smul.addr %s419, 64
          %s421 = scalar_lea.hbm %s0, %s420
          %s422 = sshll.u32 %s412, 4
          %s423 = int_to_ptr.vmem [resolvable:$true] %s422
          %428 = dma.hbm_to_vmem [thread:$0]  %s421, 8192, %s423, %s409, 256, 256, 16
        $region44: #{tpu_custom_call.1} parent=39 // pred_fallthru
          _
        // Predicated region
        $region45: #{tpu_custom_call.1} parent=39 // pred_check
          %p429 = pneg %p94
        $region46: #{tpu_custom_call.1} parent=39 // pred_check_branch
          %431 = sbr.rel (%p429) target = $region48
        $region47: #{tpu_custom_call.1} parent=39 // pred_region
          %s432 = sand.u32 %s32, 1
          %s433 = scalar_lea.sflag [#allocation6], %s432
          %s434 = sand.u32 %s84, 1
          %s435 = smul.addr %s434, 512
          %s436 = scalar_lea.vmem [#allocation5], %s435
          %s437 = smul.u32 32, %s40
          %s439 = ssub.s32 8192, 8192
          %440 = vsyncadd %s433, %s439
          %s441 = smul.addr %s437, 4
          %s442 = smul.addr %s39, 256
          %s443 = sadd.s32 %s441, %s442
          %s444 = smul.addr %s443, 64
          %s445 = scalar_lea.hbm %s1, %s444
          %s446 = sshll.u32 %s436, 4
          %s447 = int_to_ptr.vmem [resolvable:$true] %s446
          %452 = dma.hbm_to_vmem [thread:$0]  %s445, 8192, %s447, %s433, 256, 256, 16
        $region48: #{tpu_custom_call.1} parent=39 // pred_fallthru
          _
        // Predicated region
        $region49: #{tpu_custom_call.1} parent=39 // pred_check
          %p453 = pneg %p122
        $region50: #{tpu_custom_call.1} parent=39 // pred_check_branch
          %455 = sbr.rel (%p453) target = $region52
        $region51: #{tpu_custom_call.1} parent=39 // pred_region
          %s456 = sand.u32 %s32, 1
          %s457 = scalar_lea.sflag [#allocation6], %s456
          %s458 = sand.u32 %s112, 1
          %s459 = smul.addr %s458, 512
          %s460 = scalar_lea.vmem [#allocation7], %s459
          %s461 = smul.u32 32, %s40
          %s463 = ssub.s32 8192, 8192
          %464 = vsyncadd %s457, %s463
          %s465 = smul.addr %s461, 4
          %s466 = smul.addr %s39, 256
          %s467 = sadd.s32 %s465, %s466
          %s468 = smul.addr %s467, 64
          %s469 = scalar_lea.hbm %s2, %s468
          %s470 = sshll.u32 %s460, 4
          %s471 = int_to_ptr.vmem [resolvable:$true] %s470
          %476 = dma.hbm_to_vmem [thread:$0]  %s469, 8192, %s471, %s457, 256, 256, 16
        $region52: #{tpu_custom_call.1} parent=39 // pred_fallthru
          _
      $region40: #{tpu_custom_call.1} parent=5 // pred_fallthru
        _
      %p477 = scmp.le.s32.totalorder 1, %s32
      %p478 = scmp.lt.s32.totalorder %s32, 5
      %p479 = pnand %p477, %p478
      %p480 = pneg %p479
      // Predicated region
      $region53: #{tpu_custom_call.1} parent=5 // pred_check
        _
      $region54: #{tpu_custom_call.1} parent=5 // pred_check_branch
        %482 = sbr.rel (%p479) target = $region56
      $region55: #{tpu_custom_call.1} parent=5 // pred_region
        %s483 = ssub.s32 %s32, 1
        %s484 = sand.u32 %s59, 1
        %s485 = scalar_lea.sflag [#allocation3], %s484
        %s486 = sand.u32 %s59, 1
        %s487 = smul.addr %s486, 512
        %s488 = scalar_lea.vmem [#allocation2], %s487
        // Predicated region
        $region57: #{tpu_custom_call.1} parent=55 // pred_check
          %p489 = pneg %p72
        $region58: #{tpu_custom_call.1} parent=55 // pred_check_branch
          %491 = sbr.rel (%p489) target = $region60
        $region59: #{tpu_custom_call.1} parent=55 // pred_region
          %492 = dma.done %s485, 8192
        $region60: #{tpu_custom_call.1} parent=55 // pred_fallthru
          _
        %s493 = sand.u32 %s37, 1
        %s494 = scalar_lea.sflag [#allocation6], %s493
        %s495 = sand.u32 %s87, 1
        %s496 = smul.addr %s495, 512
        %s497 = scalar_lea.vmem [#allocation5], %s496
        // Predicated region
        $region61: #{tpu_custom_call.1} parent=55 // pred_check
          %p498 = pneg %p100
        $region62: #{tpu_custom_call.1} parent=55 // pred_check_branch
          %500 = sbr.rel (%p498) target = $region64
        $region63: #{tpu_custom_call.1} parent=55 // pred_region
          %501 = dma.done %s494, 8192
        $region64: #{tpu_custom_call.1} parent=55 // pred_fallthru
          _
        %s502 = sand.u32 %s37, 1
        %s503 = scalar_lea.sflag [#allocation6], %s502
        %s504 = sand.u32 %s115, 1
        %s505 = smul.addr %s504, 512
        %s506 = scalar_lea.vmem [#allocation7], %s505
        // Predicated region
        $region65: #{tpu_custom_call.1} parent=55 // pred_check
          %p507 = pneg %p128
        $region66: #{tpu_custom_call.1} parent=55 // pred_check_branch
          %509 = sbr.rel (%p507) target = $region68
        $region67: #{tpu_custom_call.1} parent=55 // pred_region
          %510 = dma.done %s503, 8192
        $region68: #{tpu_custom_call.1} parent=55 // pred_fallthru
          _
        // Predicated region
        $region69: #{tpu_custom_call.1} parent=55 // pred_check
          %p511 = pneg %p149
        $region70: #{tpu_custom_call.1} parent=55 // pred_check_branch
          %513 = sbr.rel (%p511) target = $region72
        $region71: #{tpu_custom_call.1} parent=55 // pred_region
          %514 = dma.done [#allocation9], 16384
        $region72: #{tpu_custom_call.1} parent=55 // pred_fallthru
          _
        // Predicated region
        $region73: #{tpu_custom_call.1} parent=55 // pred_check
          %p515 = pneg %p191
        $region74: #{tpu_custom_call.1} parent=55 // pred_check_branch
          %517 = sbr.rel (%p515) target = $region76
        $region75: #{tpu_custom_call.1} parent=55 // pred_region
          %518 = dma.done [#allocation9], 16384
        $region76: #{tpu_custom_call.1} parent=55 // pred_fallthru
          _
        // Predicated region
        $region77: #{tpu_custom_call.1} parent=55 // pred_check
          %p519 = pneg %p233
        $region78: #{tpu_custom_call.1} parent=55 // pred_check_branch
          %521 = sbr.rel (%p519) target = $region80
        $region79: #{tpu_custom_call.1} parent=55 // pred_region
          %522 = dma.done [#allocation12], 16384
        $region80: #{tpu_custom_call.1} parent=55 // pred_fallthru
          _
        %s523 = sand.u32 %s59, 1
        %s524 = scalar_lea.sflag [#allocation3], %s523
        %s525 = sand.u32 %s59, 1
        %s526 = smul.addr %s525, 512
        %s527 = scalar_lea.vmem [#allocation2], %s526
        %p528 = pneg %p72
        %p529 = pneg %p69
        %s530 = sand.u32 %s37, 1
        %s531 = scalar_lea.sflag [#allocation6], %s530
        %s532 = sand.u32 %s87, 1
        %s533 = smul.addr %s532, 512
        %s534 = scalar_lea.vmem [#allocation5], %s533
        %p535 = pneg %p100
        %p536 = pneg %p97
        %s537 = sand.u32 %s37, 1
        %s538 = scalar_lea.sflag [#allocation6], %s537
        %s539 = sand.u32 %s115, 1
        %s540 = smul.addr %s539, 512
        %s541 = scalar_lea.vmem [#allocation7], %s540
        %p542 = pneg %p128
        %p543 = pneg %p125
        %p544 = pneg %p149
        %p545 = pneg %p146
        %p546 = pneg %p170
        %p547 = pneg %p167
        %p548 = pneg %p191
        %p549 = pneg %p188
        %p550 = pneg %p212
        %p551 = pneg %p209
        %p552 = pneg %p233
        %p553 = pneg %p230
        %p554 = pneg %p254
        %p555 = pneg %p251
        %p556 = pneg %p282
        %p557 = pneg %p279
        %s558 = sand.u32 %s269, 1
        %s559 = scalar_lea.sflag [#allocation4], %s558
        %s560 = sand.u32 %s269, 1
        %s561 = smul.addr %s560, 512
        %s562 = scalar_lea.vmem [#allocation13], %s561
        %p563 = pneg %p310
        %p564 = pneg %p307
        %s565 = sand.u32 %s37, 1
        %s566 = scalar_lea.sflag [#allocation15], %s565
        %s567 = sand.u32 %s297, 1
        %s568 = smul.addr %s567, 512
        %s569 = scalar_lea.vmem [#allocation14], %s568
        %p570 = pneg %p338
        %p571 = pneg %p335
        %s572 = sand.u32 %s37, 1
        %s573 = scalar_lea.sflag [#allocation15], %s572
        %s574 = sand.u32 %s325, 1
        %s575 = smul.addr %s574, 512
        %s576 = scalar_lea.vmem [#allocation16], %s575
        %s577 = smul.u32 32, %s42
        %s578 = smul.u32 32, %s42
        %s579 = smul.u32 32, %s42
        %s580 = smul.u32 32, %s42
        %s581 = smul.u32 32, %s42
        %s582 = smul.u32 32, %s42
        %v583 = vld [vmem:[%s488] sm:$0xff]
        %v584 = vld [vmem:[%s488 + $0x8] sm:$0xff]
        %v585 = vld [vmem:[%s488 + $0x10] sm:$0xff]
        %v586 = vld [vmem:[%s488 + $0x18] sm:$0xff]
        %v587 = vld [vmem:[%s488 + $0x20] sm:$0xff]
        %v588 = vld [vmem:[%s488 + $0x28] sm:$0xff]
        %v589 = vld [vmem:[%s488 + $0x30] sm:$0xff]
        %v590 = vld [vmem:[%s488 + $0x38] sm:$0xff]
        %v591 = vld [vmem:[%s488 + $0x40] sm:$0xff]
        %v592 = vld [vmem:[%s488 + $0x48] sm:$0xff]
        %v593 = vld [vmem:[%s488 + $0x50] sm:$0xff]
        %v594 = vld [vmem:[%s488 + $0x58] sm:$0xff]
        %v595 = vld [vmem:[%s488 + $0x60] sm:$0xff]
        %v596 = vld [vmem:[%s488 + $0x68] sm:$0xff]
        %v597 = vld [vmem:[%s488 + $0x70] sm:$0xff]
        %v598 = vld [vmem:[%s488 + $0x78] sm:$0xff]
        %v599 = vld [vmem:[%s488 + $0x80] sm:$0xff]
        %v600 = vld [vmem:[%s488 + $0x88] sm:$0xff]
        %v601 = vld [vmem:[%s488 + $0x90] sm:$0xff]
        %v602 = vld [vmem:[%s488 + $0x98] sm:$0xff]
        %v603 = vld [vmem:[%s488 + $0xa0] sm:$0xff]
        %v604 = vld [vmem:[%s488 + $0xa8] sm:$0xff]
        %v605 = vld [vmem:[%s488 + $0xb0] sm:$0xff]
        %v606 = vld [vmem:[%s488 + $0xb8] sm:$0xff]
        %v607 = vld [vmem:[%s488 + $0xc0] sm:$0xff]
        %v608 = vld [vmem:[%s488 + $0xc8] sm:$0xff]
        %v609 = vld [vmem:[%s488 + $0xd0] sm:$0xff]
        %v610 = vld [vmem:[%s488 + $0xd8] sm:$0xff]
        %v611 = vld [vmem:[%s488 + $0xe0] sm:$0xff]
        %v612 = vld [vmem:[%s488 + $0xe8] sm:$0xff]
        %v613 = vld [vmem:[%s488 + $0xf0] sm:$0xff]
        %v614 = vld [vmem:[%s488 + $0xf8] sm:$0xff]
        %v615 = vld [vmem:[%s488 + $0x100] sm:$0xff]
        %v616 = vld [vmem:[%s488 + $0x108] sm:$0xff]
        %v617 = vld [vmem:[%s488 + $0x110] sm:$0xff]
        %v618 = vld [vmem:[%s488 + $0x118] sm:$0xff]
        %v619 = vld [vmem:[%s488 + $0x120] sm:$0xff]
        %v620 = vld [vmem:[%s488 + $0x128] sm:$0xff]
        %v621 = vld [vmem:[%s488 + $0x130] sm:$0xff]
        %v622 = vld [vmem:[%s488 + $0x138] sm:$0xff]
        %v623 = vld [vmem:[%s488 + $0x140] sm:$0xff]
        %v624 = vld [vmem:[%s488 + $0x148] sm:$0xff]
        %v625 = vld [vmem:[%s488 + $0x150] sm:$0xff]
        %v626 = vld [vmem:[%s488 + $0x158] sm:$0xff]
        %v627 = vld [vmem:[%s488 + $0x160] sm:$0xff]
        %v628 = vld [vmem:[%s488 + $0x168] sm:$0xff]
        %v629 = vld [vmem:[%s488 + $0x170] sm:$0xff]
        %v630 = vld [vmem:[%s488 + $0x178] sm:$0xff]
        %v631 = vld [vmem:[%s488 + $0x180] sm:$0xff]
        %v632 = vld [vmem:[%s488 + $0x188] sm:$0xff]
        %v633 = vld [vmem:[%s488 + $0x190] sm:$0xff]
        %v634 = vld [vmem:[%s488 + $0x198] sm:$0xff]
        %v635 = vld [vmem:[%s488 + $0x1a0] sm:$0xff]
        %v636 = vld [vmem:[%s488 + $0x1a8] sm:$0xff]
        %v637 = vld [vmem:[%s488 + $0x1b0] sm:$0xff]
        %v638 = vld [vmem:[%s488 + $0x1b8] sm:$0xff]
        %v639 = vld [vmem:[%s488 + $0x1c0] sm:$0xff]
        %v640 = vld [vmem:[%s488 + $0x1c8] sm:$0xff]
        %v641 = vld [vmem:[%s488 + $0x1d0] sm:$0xff]
        %v642 = vld [vmem:[%s488 + $0x1d8] sm:$0xff]
        %v643 = vld [vmem:[%s488 + $0x1e0] sm:$0xff]
        %v644 = vld [vmem:[%s488 + $0x1e8] sm:$0xff]
        %v645 = vld [vmem:[%s488 + $0x1f0] sm:$0xff]
        %v646 = vld [vmem:[%s488 + $0x1f8] sm:$0xff]
        %v647 = vld [vmem:[#allocation8] sm:$0xff]
        %v648 = vld [vmem:[#allocation8 + $0x8] sm:$0xff]
        %v649 = vld [vmem:[#allocation8 + $0x10] sm:$0xff]
        %v650 = vld [vmem:[#allocation8 + $0x18] sm:$0xff]
        %v651 = vld [vmem:[#allocation8 + $0x20] sm:$0xff]
        %v652 = vld [vmem:[#allocation8 + $0x28] sm:$0xff]
        %v653 = vld [vmem:[#allocation8 + $0x30] sm:$0xff]
        %v654 = vld [vmem:[#allocation8 + $0x38] sm:$0xff]
        %v655 = vld [vmem:[#allocation8 + $0x40] sm:$0xff]
        %v656 = vld [vmem:[#allocation8 + $0x48] sm:$0xff]
        %v657 = vld [vmem:[#allocation8 + $0x50] sm:$0xff]
        %v658 = vld [vmem:[#allocation8 + $0x58] sm:$0xff]
        %v659 = vld [vmem:[#allocation8 + $0x60] sm:$0xff]
        %v660 = vld [vmem:[#allocation8 + $0x68] sm:$0xff]
        %v661 = vld [vmem:[#allocation8 + $0x70] sm:$0xff]
        %v662 = vld [vmem:[#allocation8 + $0x78] sm:$0xff]
        %v663 = vld [vmem:[#allocation8 + $0x80] sm:$0xff]
        %v664 = vld [vmem:[#allocation8 + $0x88] sm:$0xff]
        %v665 = vld [vmem:[#allocation8 + $0x90] sm:$0xff]
        %v666 = vld [vmem:[#allocation8 + $0x98] sm:$0xff]
        %v667 = vld [vmem:[#allocation8 + $0xa0] sm:$0xff]
        %v668 = vld [vmem:[#allocation8 + $0xa8] sm:$0xff]
        %v669 = vld [vmem:[#allocation8 + $0xb0] sm:$0xff]
        %v670 = vld [vmem:[#allocation8 + $0xb8] sm:$0xff]
        %v671 = vld [vmem:[#allocation8 + $0xc0] sm:$0xff]
        %v672 = vld [vmem:[#allocation8 + $0xc8] sm:$0xff]
        %v673 = vld [vmem:[#allocation8 + $0xd0] sm:$0xff]
        %v674 = vld [vmem:[#allocation8 + $0xd8] sm:$0xff]
        %v675 = vld [vmem:[#allocation8 + $0xe0] sm:$0xff]
        %v676 = vld [vmem:[#allocation8 + $0xe8] sm:$0xff]
        %v677 = vld [vmem:[#allocation8 + $0xf0] sm:$0xff]
        %v678 = vld [vmem:[#allocation8 + $0xf8] sm:$0xff]
        %v679 = vld [vmem:[#allocation8 + $0x100] sm:$0xff]
        %v680 = vld [vmem:[#allocation8 + $0x108] sm:$0xff]
        %v681 = vld [vmem:[#allocation8 + $0x110] sm:$0xff]
        %v682 = vld [vmem:[#allocation8 + $0x118] sm:$0xff]
        %v683 = vld [vmem:[#allocation8 + $0x120] sm:$0xff]
        %v684 = vld [vmem:[#allocation8 + $0x128] sm:$0xff]
        %v685 = vld [vmem:[#allocation8 + $0x130] sm:$0xff]
        %v686 = vld [vmem:[#allocation8 + $0x138] sm:$0xff]
        %v687 = vld [vmem:[#allocation8 + $0x140] sm:$0xff]
        %v688 = vld [vmem:[#allocation8 + $0x148] sm:$0xff]
        %v689 = vld [vmem:[#allocation8 + $0x150] sm:$0xff]
        %v690 = vld [vmem:[#allocation8 + $0x158] sm:$0xff]
        %v691 = vld [vmem:[#allocation8 + $0x160] sm:$0xff]
        %v692 = vld [vmem:[#allocation8 + $0x168] sm:$0xff]
        %v693 = vld [vmem:[#allocation8 + $0x170] sm:$0xff]
        %v694 = vld [vmem:[#allocation8 + $0x178] sm:$0xff]
        %v695 = vld [vmem:[#allocation8 + $0x180] sm:$0xff]
        %v696 = vld [vmem:[#allocation8 + $0x188] sm:$0xff]
        %v697 = vld [vmem:[#allocation8 + $0x190] sm:$0xff]
        %v698 = vld [vmem:[#allocation8 + $0x198] sm:$0xff]
        %v699 = vld [vmem:[#allocation8 + $0x1a0] sm:$0xff]
        %v700 = vld [vmem:[#allocation8 + $0x1a8] sm:$0xff]
        %v701 = vld [vmem:[#allocation8 + $0x1b0] sm:$0xff]
        %v702 = vld [vmem:[#allocation8 + $0x1b8] sm:$0xff]
        %v703 = vld [vmem:[#allocation8 + $0x1c0] sm:$0xff]
        %v704 = vld [vmem:[#allocation8 + $0x1c8] sm:$0xff]
        %v705 = vld [vmem:[#allocation8 + $0x1d0] sm:$0xff]
        %v706 = vld [vmem:[#allocation8 + $0x1d8] sm:$0xff]
        %v707 = vld [vmem:[#allocation8 + $0x1e0] sm:$0xff]
        %v708 = vld [vmem:[#allocation8 + $0x1e8] sm:$0xff]
        %v709 = vld [vmem:[#allocation8 + $0x1f0] sm:$0xff]
        %v710 = vld [vmem:[#allocation8 + $0x1f8] sm:$0xff]
        %v711 = vld [vmem:[#allocation8 + $0x200] sm:$0xff]
        %v712 = vld [vmem:[#allocation8 + $0x208] sm:$0xff]
        %v713 = vld [vmem:[#allocation8 + $0x210] sm:$0xff]
        %v714 = vld [vmem:[#allocation8 + $0x218] sm:$0xff]
        %v715 = vld [vmem:[#allocation8 + $0x220] sm:$0xff]
        %v716 = vld [vmem:[#allocation8 + $0x228] sm:$0xff]
        %v717 = vld [vmem:[#allocation8 + $0x230] sm:$0xff]
        %v718 = vld [vmem:[#allocation8 + $0x238] sm:$0xff]
        %v719 = vld [vmem:[#allocation8 + $0x240] sm:$0xff]
        %v720 = vld [vmem:[#allocation8 + $0x248] sm:$0xff]
        %v721 = vld [vmem:[#allocation8 + $0x250] sm:$0xff]
        %v722 = vld [vmem:[#allocation8 + $0x258] sm:$0xff]
        %v723 = vld [vmem:[#allocation8 + $0x260] sm:$0xff]
        %v724 = vld [vmem:[#allocation8 + $0x268] sm:$0xff]
        %v725 = vld [vmem:[#allocation8 + $0x270] sm:$0xff]
        %v726 = vld [vmem:[#allocation8 + $0x278] sm:$0xff]
        %v727 = vld [vmem:[#allocation8 + $0x280] sm:$0xff]
        %v728 = vld [vmem:[#allocation8 + $0x288] sm:$0xff]
        %v729 = vld [vmem:[#allocation8 + $0x290] sm:$0xff]
        %v730 = vld [vmem:[#allocation8 + $0x298] sm:$0xff]
        %v731 = vld [vmem:[#allocation8 + $0x2a0] sm:$0xff]
        %v732 = vld [vmem:[#allocation8 + $0x2a8] sm:$0xff]
        %v733 = vld [vmem:[#allocation8 + $0x2b0] sm:$0xff]
        %v734 = vld [vmem:[#allocation8 + $0x2b8] sm:$0xff]
        %v735 = vld [vmem:[#allocation8 + $0x2c0] sm:$0xff]
        %v736 = vld [vmem:[#allocation8 + $0x2c8] sm:$0xff]
        %v737 = vld [vmem:[#allocation8 + $0x2d0] sm:$0xff]
        %v738 = vld [vmem:[#allocation8 + $0x2d8] sm:$0xff]
        %v739 = vld [vmem:[#allocation8 + $0x2e0] sm:$0xff]
        %v740 = vld [vmem:[#allocation8 + $0x2e8] sm:$0xff]
        %v741 = vld [vmem:[#allocation8 + $0x2f0] sm:$0xff]
        %v742 = vld [vmem:[#allocation8 + $0x2f8] sm:$0xff]
        %v743 = vld [vmem:[#allocation8 + $0x300] sm:$0xff]
        %v744 = vld [vmem:[#allocation8 + $0x308] sm:$0xff]
        %v745 = vld [vmem:[#allocation8 + $0x310] sm:$0xff]
        %v746 = vld [vmem:[#allocation8 + $0x318] sm:$0xff]
        %v747 = vld [vmem:[#allocation8 + $0x320] sm:$0xff]
        %v748 = vld [vmem:[#allocation8 + $0x328] sm:$0xff]
        %v749 = vld [vmem:[#allocation8 + $0x330] sm:$0xff]
        %v750 = vld [vmem:[#allocation8 + $0x338] sm:$0xff]
        %v751 = vld [vmem:[#allocation8 + $0x340] sm:$0xff]
        %v752 = vld [vmem:[#allocation8 + $0x348] sm:$0xff]
        %v753 = vld [vmem:[#allocation8 + $0x350] sm:$0xff]
        %v754 = vld [vmem:[#allocation8 + $0x358] sm:$0xff]
        %v755 = vld [vmem:[#allocation8 + $0x360] sm:$0xff]
        %v756 = vld [vmem:[#allocation8 + $0x368] sm:$0xff]
        %v757 = vld [vmem:[#allocation8 + $0x370] sm:$0xff]
        %v758 = vld [vmem:[#allocation8 + $0x378] sm:$0xff]
        %v759 = vld [vmem:[#allocation8 + $0x380] sm:$0xff]
        %v760 = vld [vmem:[#allocation8 + $0x388] sm:$0xff]
        %v761 = vld [vmem:[#allocation8 + $0x390] sm:$0xff]
        %v762 = vld [vmem:[#allocation8 + $0x398] sm:$0xff]
        %v763 = vld [vmem:[#allocation8 + $0x3a0] sm:$0xff]
        %v764 = vld [vmem:[#allocation8 + $0x3a8] sm:$0xff]
        %v765 = vld [vmem:[#allocation8 + $0x3b0] sm:$0xff]
        %v766 = vld [vmem:[#allocation8 + $0x3b8] sm:$0xff]
        %v767 = vld [vmem:[#allocation8 + $0x3c0] sm:$0xff]
        %v768 = vld [vmem:[#allocation8 + $0x3c8] sm:$0xff]
        %v769 = vld [vmem:[#allocation8 + $0x3d0] sm:$0xff]
        %v770 = vld [vmem:[#allocation8 + $0x3d8] sm:$0xff]
        %v771 = vld [vmem:[#allocation8 + $0x3e0] sm:$0xff]
        %v772 = vld [vmem:[#allocation8 + $0x3e8] sm:$0xff]
        %v773 = vld [vmem:[#allocation8 + $0x3f0] sm:$0xff]
        %v774 = vld [vmem:[#allocation8 + $0x3f8] sm:$0xff]
        %v775 = vld [vmem:[%s4] sm:$0xf]
        %v777 = vlaneseq
        %v778 = vshrl.u32 %v777, 7
        %v779 = vsub.s32 0, %v778
        %v780 = vrot.slane %v775, %v779
        %v781 = vlaneseq
        %v782 = vshrl.u32 %v781, 7
        %v783 = vsub.s32 1, %v782
        %v784 = vrot.slane %v775, %v783
        %v785 = vlaneseq
        %v786 = vshrl.u32 %v785, 7
        %v787 = vsub.s32 2, %v786
        %v788 = vrot.slane %v775, %v787
        %v789 = vlaneseq
        %v790 = vshrl.u32 %v789, 7
        %v791 = vsub.s32 3, %v790
        %v792 = vrot.slane %v775, %v791
        %v861 = vunpack.c.l.b16 %v583
        %v862 = vunpack.c.h.b16 %v583
        %v863 = vunpack.c.l.b16 %v584
        %v864 = vunpack.c.h.b16 %v584
        %v865 = vunpack.c.l.b16 %v585
        %v866 = vunpack.c.h.b16 %v585
        %v867 = vunpack.c.l.b16 %v586
        %v868 = vunpack.c.h.b16 %v586
        %v869 = vunpack.c.l.b16 %v587
        %v870 = vunpack.c.h.b16 %v587
        %v871 = vunpack.c.l.b16 %v588
        %v872 = vunpack.c.h.b16 %v588
        %v873 = vunpack.c.l.b16 %v589
        %v874 = vunpack.c.h.b16 %v589
        %v875 = vunpack.c.l.b16 %v590
        %v876 = vunpack.c.h.b16 %v590
        %v877 = vunpack.c.l.b16 %v591
        %v878 = vunpack.c.h.b16 %v591
        %v879 = vunpack.c.l.b16 %v592
        %v880 = vunpack.c.h.b16 %v592
        %v881 = vunpack.c.l.b16 %v593
        %v882 = vunpack.c.h.b16 %v593
        %v883 = vunpack.c.l.b16 %v594
        %v884 = vunpack.c.h.b16 %v594
        %v885 = vunpack.c.l.b16 %v595
        %v886 = vunpack.c.h.b16 %v595
        %v887 = vunpack.c.l.b16 %v596
        %v888 = vunpack.c.h.b16 %v596
        %v889 = vunpack.c.l.b16 %v597
        %v890 = vunpack.c.h.b16 %v597
        %v891 = vunpack.c.l.b16 %v598
        %v892 = vunpack.c.h.b16 %v598
        %v893 = vunpack.c.l.b16 %v599
        %v894 = vunpack.c.h.b16 %v599
        %v895 = vunpack.c.l.b16 %v600
        %v896 = vunpack.c.h.b16 %v600
        %v897 = vunpack.c.l.b16 %v601
        %v898 = vunpack.c.h.b16 %v601
        %v899 = vunpack.c.l.b16 %v602
        %v900 = vunpack.c.h.b16 %v602
        %v901 = vunpack.c.l.b16 %v603
        %v902 = vunpack.c.h.b16 %v603
        %v903 = vunpack.c.l.b16 %v604
        %v904 = vunpack.c.h.b16 %v604
        %v905 = vunpack.c.l.b16 %v605
        %v906 = vunpack.c.h.b16 %v605
        %v907 = vunpack.c.l.b16 %v606
        %v908 = vunpack.c.h.b16 %v606
        %v909 = vunpack.c.l.b16 %v607
        %v910 = vunpack.c.h.b16 %v607
        %v911 = vunpack.c.l.b16 %v608
        %v912 = vunpack.c.h.b16 %v608
        %v913 = vunpack.c.l.b16 %v609
        %v914 = vunpack.c.h.b16 %v609
        %v915 = vunpack.c.l.b16 %v610
        %v916 = vunpack.c.h.b16 %v610
        %v917 = vunpack.c.l.b16 %v611
        %v918 = vunpack.c.h.b16 %v611
        %v919 = vunpack.c.l.b16 %v612
        %v920 = vunpack.c.h.b16 %v612
        %v921 = vunpack.c.l.b16 %v613
        %v922 = vunpack.c.h.b16 %v613
        %v923 = vunpack.c.l.b16 %v614
        %v924 = vunpack.c.h.b16 %v614
        %v925 = vunpack.c.l.b16 %v615
        %v926 = vunpack.c.h.b16 %v615
        %v927 = vunpack.c.l.b16 %v616
        %v928 = vunpack.c.h.b16 %v616
        %v929 = vunpack.c.l.b16 %v617
        %v930 = vunpack.c.h.b16 %v617
        %v931 = vunpack.c.l.b16 %v618
        %v932 = vunpack.c.h.b16 %v618
        %v933 = vunpack.c.l.b16 %v619
        %v934 = vunpack.c.h.b16 %v619
        %v935 = vunpack.c.l.b16 %v620
        %v936 = vunpack.c.h.b16 %v620
        %v937 = vunpack.c.l.b16 %v621
        %v938 = vunpack.c.h.b16 %v621
        %v939 = vunpack.c.l.b16 %v622
        %v940 = vunpack.c.h.b16 %v622
        %v941 = vunpack.c.l.b16 %v623
        %v942 = vunpack.c.h.b16 %v623
        %v943 = vunpack.c.l.b16 %v624
        %v944 = vunpack.c.h.b16 %v624
        %v945 = vunpack.c.l.b16 %v625
        %v946 = vunpack.c.h.b16 %v625
        %v947 = vunpack.c.l.b16 %v626
        %v948 = vunpack.c.h.b16 %v626
        %v949 = vunpack.c.l.b16 %v627
        %v950 = vunpack.c.h.b16 %v627
        %v951 = vunpack.c.l.b16 %v628
        %v952 = vunpack.c.h.b16 %v628
        %v953 = vunpack.c.l.b16 %v629
        %v954 = vunpack.c.h.b16 %v629
        %v955 = vunpack.c.l.b16 %v630
        %v956 = vunpack.c.h.b16 %v630
        %v957 = vunpack.c.l.b16 %v631
        %v958 = vunpack.c.h.b16 %v631
        %v959 = vunpack.c.l.b16 %v632
        %v960 = vunpack.c.h.b16 %v632
        %v961 = vunpack.c.l.b16 %v633
        %v962 = vunpack.c.h.b16 %v633
        %v963 = vunpack.c.l.b16 %v634
        %v964 = vunpack.c.h.b16 %v634
        %v965 = vunpack.c.l.b16 %v635
        %v966 = vunpack.c.h.b16 %v635
        %v967 = vunpack.c.l.b16 %v636
        %v968 = vunpack.c.h.b16 %v636
        %v969 = vunpack.c.l.b16 %v637
        %v970 = vunpack.c.h.b16 %v637
        %v971 = vunpack.c.l.b16 %v638
        %v972 = vunpack.c.h.b16 %v638
        %v973 = vunpack.c.l.b16 %v639
        %v974 = vunpack.c.h.b16 %v639
        %v975 = vunpack.c.l.b16 %v640
        %v976 = vunpack.c.h.b16 %v640
        %v977 = vunpack.c.l.b16 %v641
        %v978 = vunpack.c.h.b16 %v641
        %v979 = vunpack.c.l.b16 %v642
        %v980 = vunpack.c.h.b16 %v642
        %v981 = vunpack.c.l.b16 %v643
        %v982 = vunpack.c.h.b16 %v643
        %v983 = vunpack.c.l.b16 %v644
        %v984 = vunpack.c.h.b16 %v644
        %v985 = vunpack.c.l.b16 %v645
        %v986 = vunpack.c.h.b16 %v645
        %v987 = vunpack.c.l.b16 %v646
        %v988 = vunpack.c.h.b16 %v646
        %v989 = vpack.c.b16 %v865, %v861
        %v990 = vpack.c.b16 %v866, %v862
        %v991 = vpack.c.b16 %v867, %v863
        %v992 = vpack.c.b16 %v868, %v864
        %v993 = vpack.c.b16 %v873, %v869
        %v994 = vpack.c.b16 %v874, %v870
        %v995 = vpack.c.b16 %v875, %v871
        %v996 = vpack.c.b16 %v876, %v872
        %v997 = vpack.c.b16 %v881, %v877
        %v998 = vpack.c.b16 %v882, %v878
        %v999 = vpack.c.b16 %v883, %v879
        %v1000 = vpack.c.b16 %v884, %v880
        %v1001 = vpack.c.b16 %v889, %v885
        %v1002 = vpack.c.b16 %v890, %v886
        %v1003 = vpack.c.b16 %v891, %v887
        %v1004 = vpack.c.b16 %v892, %v888
        %v1005 = vpack.c.b16 %v897, %v893
        %v1006 = vpack.c.b16 %v898, %v894
        %v1007 = vpack.c.b16 %v899, %v895
        %v1008 = vpack.c.b16 %v900, %v896
        %v1009 = vpack.c.b16 %v905, %v901
        %v1010 = vpack.c.b16 %v906, %v902
        %v1011 = vpack.c.b16 %v907, %v903
        %v1012 = vpack.c.b16 %v908, %v904
        %v1013 = vpack.c.b16 %v913, %v909
        %v1014 = vpack.c.b16 %v914, %v910
        %v1015 = vpack.c.b16 %v915, %v911
        %v1016 = vpack.c.b16 %v916, %v912
        %v1017 = vpack.c.b16 %v921, %v917
        %v1018 = vpack.c.b16 %v922, %v918
        %v1019 = vpack.c.b16 %v923, %v919
        %v1020 = vpack.c.b16 %v924, %v920
        %v1021 = vpack.c.b16 %v929, %v925
        %v1022 = vpack.c.b16 %v930, %v926
        %v1023 = vpack.c.b16 %v931, %v927
        %v1024 = vpack.c.b16 %v932, %v928
        %v1025 = vpack.c.b16 %v937, %v933
        %v1026 = vpack.c.b16 %v938, %v934
        %v1027 = vpack.c.b16 %v939, %v935
        %v1028 = vpack.c.b16 %v940, %v936
        %v1029 = vpack.c.b16 %v945, %v941
        %v1030 = vpack.c.b16 %v946, %v942
        %v1031 = vpack.c.b16 %v947, %v943
        %v1032 = vpack.c.b16 %v948, %v944
        %v1033 = vpack.c.b16 %v953, %v949
        %v1034 = vpack.c.b16 %v954, %v950
        %v1035 = vpack.c.b16 %v955, %v951
        %v1036 = vpack.c.b16 %v956, %v952
        %v1037 = vpack.c.b16 %v961, %v957
        %v1038 = vpack.c.b16 %v962, %v958
        %v1039 = vpack.c.b16 %v963, %v959
        %v1040 = vpack.c.b16 %v964, %v960
        %v1041 = vpack.c.b16 %v969, %v965
        %v1042 = vpack.c.b16 %v970, %v966
        %v1043 = vpack.c.b16 %v971, %v967
        %v1044 = vpack.c.b16 %v972, %v968
        %v1045 = vpack.c.b16 %v977, %v973
        %v1046 = vpack.c.b16 %v978, %v974
        %v1047 = vpack.c.b16 %v979, %v975
        %v1048 = vpack.c.b16 %v980, %v976
        %v1049 = vpack.c.b16 %v985, %v981
        %v1050 = vpack.c.b16 %v986, %v982
        %v1051 = vpack.c.b16 %v987, %v983
        %v1052 = vpack.c.b16 %v988, %v984
        %v1245 = vunpack.c.l.b16 %v647
        %v1246 = vunpack.c.h.b16 %v647
        %v1247 = vunpack.c.l.b16 %v648
        %v1248 = vunpack.c.h.b16 %v648
        %v1249 = vunpack.c.l.b16 %v649
        %v1250 = vunpack.c.h.b16 %v649
        %v1251 = vunpack.c.l.b16 %v650
        %v1252 = vunpack.c.h.b16 %v650
        %v1253 = vunpack.c.l.b16 %v651
        %v1254 = vunpack.c.h.b16 %v651
        %v1255 = vunpack.c.l.b16 %v652
        %v1256 = vunpack.c.h.b16 %v652
        %v1257 = vunpack.c.l.b16 %v653
        %v1258 = vunpack.c.h.b16 %v653
        %v1259 = vunpack.c.l.b16 %v654
        %v1260 = vunpack.c.h.b16 %v654
        %v1261 = vunpack.c.l.b16 %v655
        %v1262 = vunpack.c.h.b16 %v655
        %v1263 = vunpack.c.l.b16 %v656
        %v1264 = vunpack.c.h.b16 %v656
        %v1265 = vunpack.c.l.b16 %v657
        %v1266 = vunpack.c.h.b16 %v657
        %v1267 = vunpack.c.l.b16 %v658
        %v1268 = vunpack.c.h.b16 %v658
        %v1269 = vunpack.c.l.b16 %v659
        %v1270 = vunpack.c.h.b16 %v659
        %v1271 = vunpack.c.l.b16 %v660
        %v1272 = vunpack.c.h.b16 %v660
        %v1273 = vunpack.c.l.b16 %v661
        %v1274 = vunpack.c.h.b16 %v661
        %v1275 = vunpack.c.l.b16 %v662
        %v1276 = vunpack.c.h.b16 %v662
        %v1277 = vunpack.c.l.b16 %v663
        %v1278 = vunpack.c.h.b16 %v663
        %v1279 = vunpack.c.l.b16 %v664
        %v1280 = vunpack.c.h.b16 %v664
        %v1281 = vunpack.c.l.b16 %v665
        %v1282 = vunpack.c.h.b16 %v665
        %v1283 = vunpack.c.l.b16 %v666
        %v1284 = vunpack.c.h.b16 %v666
        %v1285 = vunpack.c.l.b16 %v667
        %v1286 = vunpack.c.h.b16 %v667
        %v1287 = vunpack.c.l.b16 %v668
        %v1288 = vunpack.c.h.b16 %v668
        %v1289 = vunpack.c.l.b16 %v669
        %v1290 = vunpack.c.h.b16 %v669
        %v1291 = vunpack.c.l.b16 %v670
        %v1292 = vunpack.c.h.b16 %v670
        %v1293 = vunpack.c.l.b16 %v671
        %v1294 = vunpack.c.h.b16 %v671
        %v1295 = vunpack.c.l.b16 %v672
        %v1296 = vunpack.c.h.b16 %v672
        %v1297 = vunpack.c.l.b16 %v673
        %v1298 = vunpack.c.h.b16 %v673
        %v1299 = vunpack.c.l.b16 %v674
        %v1300 = vunpack.c.h.b16 %v674
        %v1301 = vunpack.c.l.b16 %v675
        %v1302 = vunpack.c.h.b16 %v675
        %v1303 = vunpack.c.l.b16 %v676
        %v1304 = vunpack.c.h.b16 %v676
        %v1305 = vunpack.c.l.b16 %v677
        %v1306 = vunpack.c.h.b16 %v677
        %v1307 = vunpack.c.l.b16 %v678
        %v1308 = vunpack.c.h.b16 %v678
        %v1309 = vunpack.c.l.b16 %v679
        %v1310 = vunpack.c.h.b16 %v679
        %v1311 = vunpack.c.l.b16 %v680
        %v1312 = vunpack.c.h.b16 %v680
        %v1313 = vunpack.c.l.b16 %v681
        %v1314 = vunpack.c.h.b16 %v681
        %v1315 = vunpack.c.l.b16 %v682
        %v1316 = vunpack.c.h.b16 %v682
        %v1317 = vunpack.c.l.b16 %v683
        %v1318 = vunpack.c.h.b16 %v683
        %v1319 = vunpack.c.l.b16 %v684
        %v1320 = vunpack.c.h.b16 %v684
        %v1321 = vunpack.c.l.b16 %v685
        %v1322 = vunpack.c.h.b16 %v685
        %v1323 = vunpack.c.l.b16 %v686
        %v1324 = vunpack.c.h.b16 %v686
        %v1325 = vunpack.c.l.b16 %v687
        %v1326 = vunpack.c.h.b16 %v687
        %v1327 = vunpack.c.l.b16 %v688
        %v1328 = vunpack.c.h.b16 %v688
        %v1329 = vunpack.c.l.b16 %v689
        %v1330 = vunpack.c.h.b16 %v689
        %v1331 = vunpack.c.l.b16 %v690
        %v1332 = vunpack.c.h.b16 %v690
        %v1333 = vunpack.c.l.b16 %v691
        %v1334 = vunpack.c.h.b16 %v691
        %v1335 = vunpack.c.l.b16 %v692
        %v1336 = vunpack.c.h.b16 %v692
        %v1337 = vunpack.c.l.b16 %v693
        %v1338 = vunpack.c.h.b16 %v693
        %v1339 = vunpack.c.l.b16 %v694
        %v1340 = vunpack.c.h.b16 %v694
        %v1341 = vunpack.c.l.b16 %v695
        %v1342 = vunpack.c.h.b16 %v695
        %v1343 = vunpack.c.l.b16 %v696
        %v1344 = vunpack.c.h.b16 %v696
        %v1345 = vunpack.c.l.b16 %v697
        %v1346 = vunpack.c.h.b16 %v697
        %v1347 = vunpack.c.l.b16 %v698
        %v1348 = vunpack.c.h.b16 %v698
        %v1349 = vunpack.c.l.b16 %v699
        %v1350 = vunpack.c.h.b16 %v699
        %v1351 = vunpack.c.l.b16 %v700
        %v1352 = vunpack.c.h.b16 %v700
        %v1353 = vunpack.c.l.b16 %v701
        %v1354 = vunpack.c.h.b16 %v701
        %v1355 = vunpack.c.l.b16 %v702
        %v1356 = vunpack.c.h.b16 %v702
        %v1357 = vunpack.c.l.b16 %v703
        %v1358 = vunpack.c.h.b16 %v703
        %v1359 = vunpack.c.l.b16 %v704
        %v1360 = vunpack.c.h.b16 %v704
        %v1361 = vunpack.c.l.b16 %v705
        %v1362 = vunpack.c.h.b16 %v705
        %v1363 = vunpack.c.l.b16 %v706
        %v1364 = vunpack.c.h.b16 %v706
        %v1365 = vunpack.c.l.b16 %v707
        %v1366 = vunpack.c.h.b16 %v707
        %v1367 = vunpack.c.l.b16 %v708
        %v1368 = vunpack.c.h.b16 %v708
        %v1369 = vunpack.c.l.b16 %v709
        %v1370 = vunpack.c.h.b16 %v709
        %v1371 = vunpack.c.l.b16 %v710
        %v1372 = vunpack.c.h.b16 %v710
        %v1373 = vunpack.c.l.b16 %v711
        %v1374 = vunpack.c.h.b16 %v711
        %v1375 = vunpack.c.l.b16 %v712
        %v1376 = vunpack.c.h.b16 %v712
        %v1377 = vunpack.c.l.b16 %v713
        %v1378 = vunpack.c.h.b16 %v713
        %v1379 = vunpack.c.l.b16 %v714
        %v1380 = vunpack.c.h.b16 %v714
        %v1381 = vunpack.c.l.b16 %v715
        %v1382 = vunpack.c.h.b16 %v715
        %v1383 = vunpack.c.l.b16 %v716
        %v1384 = vunpack.c.h.b16 %v716
        %v1385 = vunpack.c.l.b16 %v717
        %v1386 = vunpack.c.h.b16 %v717
        %v1387 = vunpack.c.l.b16 %v718
        %v1388 = vunpack.c.h.b16 %v718
        %v1389 = vunpack.c.l.b16 %v719
        %v1390 = vunpack.c.h.b16 %v719
        %v1391 = vunpack.c.l.b16 %v720
        %v1392 = vunpack.c.h.b16 %v720
        %v1393 = vunpack.c.l.b16 %v721
        %v1394 = vunpack.c.h.b16 %v721
        %v1395 = vunpack.c.l.b16 %v722
        %v1396 = vunpack.c.h.b16 %v722
        %v1397 = vunpack.c.l.b16 %v723
        %v1398 = vunpack.c.h.b16 %v723
        %v1399 = vunpack.c.l.b16 %v724
        %v1400 = vunpack.c.h.b16 %v724
        %v1401 = vunpack.c.l.b16 %v725
        %v1402 = vunpack.c.h.b16 %v725
        %v1403 = vunpack.c.l.b16 %v726
        %v1404 = vunpack.c.h.b16 %v726
        %v1405 = vunpack.c.l.b16 %v727
        %v1406 = vunpack.c.h.b16 %v727
        %v1407 = vunpack.c.l.b16 %v728
        %v1408 = vunpack.c.h.b16 %v728
        %v1409 = vunpack.c.l.b16 %v729
        %v1410 = vunpack.c.h.b16 %v729
        %v1411 = vunpack.c.l.b16 %v730
        %v1412 = vunpack.c.h.b16 %v730
        %v1413 = vunpack.c.l.b16 %v731
        %v1414 = vunpack.c.h.b16 %v731
        %v1415 = vunpack.c.l.b16 %v732
        %v1416 = vunpack.c.h.b16 %v732
        %v1417 = vunpack.c.l.b16 %v733
        %v1418 = vunpack.c.h.b16 %v733
        %v1419 = vunpack.c.l.b16 %v734
        %v1420 = vunpack.c.h.b16 %v734
        %v1421 = vunpack.c.l.b16 %v735
        %v1422 = vunpack.c.h.b16 %v735
        %v1423 = vunpack.c.l.b16 %v736
        %v1424 = vunpack.c.h.b16 %v736
        %v1425 = vunpack.c.l.b16 %v737
        %v1426 = vunpack.c.h.b16 %v737
        %v1427 = vunpack.c.l.b16 %v738
        %v1428 = vunpack.c.h.b16 %v738
        %v1429 = vunpack.c.l.b16 %v739
        %v1430 = vunpack.c.h.b16 %v739
        %v1431 = vunpack.c.l.b16 %v740
        %v1432 = vunpack.c.h.b16 %v740
        %v1433 = vunpack.c.l.b16 %v741
        %v1434 = vunpack.c.h.b16 %v741
        %v1435 = vunpack.c.l.b16 %v742
        %v1436 = vunpack.c.h.b16 %v742
        %v1437 = vunpack.c.l.b16 %v743
        %v1438 = vunpack.c.h.b16 %v743
        %v1439 = vunpack.c.l.b16 %v744
        %v1440 = vunpack.c.h.b16 %v744
        %v1441 = vunpack.c.l.b16 %v745
        %v1442 = vunpack.c.h.b16 %v745
        %v1443 = vunpack.c.l.b16 %v746
        %v1444 = vunpack.c.h.b16 %v746
        %v1445 = vunpack.c.l.b16 %v747
        %v1446 = vunpack.c.h.b16 %v747
        %v1447 = vunpack.c.l.b16 %v748
        %v1448 = vunpack.c.h.b16 %v748
        %v1449 = vunpack.c.l.b16 %v749
        %v1450 = vunpack.c.h.b16 %v749
        %v1451 = vunpack.c.l.b16 %v750
        %v1452 = vunpack.c.h.b16 %v750
        %v1453 = vunpack.c.l.b16 %v751
        %v1454 = vunpack.c.h.b16 %v751
        %v1455 = vunpack.c.l.b16 %v752
        %v1456 = vunpack.c.h.b16 %v752
        %v1457 = vunpack.c.l.b16 %v753
        %v1458 = vunpack.c.h.b16 %v753
        %v1459 = vunpack.c.l.b16 %v754
        %v1460 = vunpack.c.h.b16 %v754
        %v1461 = vunpack.c.l.b16 %v755
        %v1462 = vunpack.c.h.b16 %v755
        %v1463 = vunpack.c.l.b16 %v756
        %v1464 = vunpack.c.h.b16 %v756
        %v1465 = vunpack.c.l.b16 %v757
        %v1466 = vunpack.c.h.b16 %v757
        %v1467 = vunpack.c.l.b16 %v758
        %v1468 = vunpack.c.h.b16 %v758
        %v1469 = vunpack.c.l.b16 %v759
        %v1470 = vunpack.c.h.b16 %v759
        %v1471 = vunpack.c.l.b16 %v760
        %v1472 = vunpack.c.h.b16 %v760
        %v1473 = vunpack.c.l.b16 %v761
        %v1474 = vunpack.c.h.b16 %v761
        %v1475 = vunpack.c.l.b16 %v762
        %v1476 = vunpack.c.h.b16 %v762
        %v1477 = vunpack.c.l.b16 %v763
        %v1478 = vunpack.c.h.b16 %v763
        %v1479 = vunpack.c.l.b16 %v764
        %v1480 = vunpack.c.h.b16 %v764
        %v1481 = vunpack.c.l.b16 %v765
        %v1482 = vunpack.c.h.b16 %v765
        %v1483 = vunpack.c.l.b16 %v766
        %v1484 = vunpack.c.h.b16 %v766
        %v1485 = vunpack.c.l.b16 %v767
        %v1486 = vunpack.c.h.b16 %v767
        %v1487 = vunpack.c.l.b16 %v768
        %v1488 = vunpack.c.h.b16 %v768
        %v1489 = vunpack.c.l.b16 %v769
        %v1490 = vunpack.c.h.b16 %v769
        %v1491 = vunpack.c.l.b16 %v770
        %v1492 = vunpack.c.h.b16 %v770
        %v1493 = vunpack.c.l.b16 %v771
        %v1494 = vunpack.c.h.b16 %v771
        %v1495 = vunpack.c.l.b16 %v772
        %v1496 = vunpack.c.h.b16 %v772
        %v1497 = vunpack.c.l.b16 %v773
        %v1498 = vunpack.c.h.b16 %v773
        %v1499 = vunpack.c.l.b16 %v774
        %v1500 = vunpack.c.h.b16 %v774
        %v1501 = vpack.c.b16 %v1249, %v1245
        %v1502 = vpack.c.b16 %v1250, %v1246
        %v1503 = vpack.c.b16 %v1251, %v1247
        %v1504 = vpack.c.b16 %v1252, %v1248
        %v1505 = vpack.c.b16 %v1257, %v1253
        %v1506 = vpack.c.b16 %v1258, %v1254
        %v1507 = vpack.c.b16 %v1259, %v1255
        %v1508 = vpack.c.b16 %v1260, %v1256
        %v1509 = vpack.c.b16 %v1265, %v1261
        %v1510 = vpack.c.b16 %v1266, %v1262
        %v1511 = vpack.c.b16 %v1267, %v1263
        %v1512 = vpack.c.b16 %v1268, %v1264
        %v1513 = vpack.c.b16 %v1273, %v1269
        %v1514 = vpack.c.b16 %v1274, %v1270
        %v1515 = vpack.c.b16 %v1275, %v1271
        %v1516 = vpack.c.b16 %v1276, %v1272
        %v1517 = vpack.c.b16 %v1281, %v1277
        %v1518 = vpack.c.b16 %v1282, %v1278
        %v1519 = vpack.c.b16 %v1283, %v1279
        %v1520 = vpack.c.b16 %v1284, %v1280
        %v1521 = vpack.c.b16 %v1289, %v1285
        %v1522 = vpack.c.b16 %v1290, %v1286
        %v1523 = vpack.c.b16 %v1291, %v1287
        %v1524 = vpack.c.b16 %v1292, %v1288
        %v1525 = vpack.c.b16 %v1297, %v1293
        %v1526 = vpack.c.b16 %v1298, %v1294
        %v1527 = vpack.c.b16 %v1299, %v1295
        %v1528 = vpack.c.b16 %v1300, %v1296
        %v1529 = vpack.c.b16 %v1305, %v1301
        %v1530 = vpack.c.b16 %v1306, %v1302
        %v1531 = vpack.c.b16 %v1307, %v1303
        %v1532 = vpack.c.b16 %v1308, %v1304
        %v1533 = vpack.c.b16 %v1313, %v1309
        %v1534 = vpack.c.b16 %v1314, %v1310
        %v1535 = vpack.c.b16 %v1315, %v1311
        %v1536 = vpack.c.b16 %v1316, %v1312
        %v1537 = vpack.c.b16 %v1321, %v1317
        %v1538 = vpack.c.b16 %v1322, %v1318
        %v1539 = vpack.c.b16 %v1323, %v1319
        %v1540 = vpack.c.b16 %v1324, %v1320
        %v1541 = vpack.c.b16 %v1329, %v1325
        %v1542 = vpack.c.b16 %v1330, %v1326
        %v1543 = vpack.c.b16 %v1331, %v1327
        %v1544 = vpack.c.b16 %v1332, %v1328
        %v1545 = vpack.c.b16 %v1337, %v1333
        %v1546 = vpack.c.b16 %v1338, %v1334
        %v1547 = vpack.c.b16 %v1339, %v1335
        %v1548 = vpack.c.b16 %v1340, %v1336
        %v1549 = vpack.c.b16 %v1345, %v1341
        %v1550 = vpack.c.b16 %v1346, %v1342
        %v1551 = vpack.c.b16 %v1347, %v1343
        %v1552 = vpack.c.b16 %v1348, %v1344
        %v1553 = vpack.c.b16 %v1353, %v1349
        %v1554 = vpack.c.b16 %v1354, %v1350
        %v1555 = vpack.c.b16 %v1355, %v1351
        %v1556 = vpack.c.b16 %v1356, %v1352
        %v1557 = vpack.c.b16 %v1361, %v1357
        %v1558 = vpack.c.b16 %v1362, %v1358
        %v1559 = vpack.c.b16 %v1363, %v1359
        %v1560 = vpack.c.b16 %v1364, %v1360
        %v1561 = vpack.c.b16 %v1369, %v1365
        %v1562 = vpack.c.b16 %v1370, %v1366
        %v1563 = vpack.c.b16 %v1371, %v1367
        %v1564 = vpack.c.b16 %v1372, %v1368
        %v1565 = vpack.c.b16 %v1377, %v1373
        %v1566 = vpack.c.b16 %v1378, %v1374
        %v1567 = vpack.c.b16 %v1379, %v1375
        %v1568 = vpack.c.b16 %v1380, %v1376
        %v1569 = vpack.c.b16 %v1385, %v1381
        %v1570 = vpack.c.b16 %v1386, %v1382
        %v1571 = vpack.c.b16 %v1387, %v1383
        %v1572 = vpack.c.b16 %v1388, %v1384
        %v1573 = vpack.c.b16 %v1393, %v1389
        %v1574 = vpack.c.b16 %v1394, %v1390
        %v1575 = vpack.c.b16 %v1395, %v1391
        %v1576 = vpack.c.b16 %v1396, %v1392
        %v1577 = vpack.c.b16 %v1401, %v1397
        %v1578 = vpack.c.b16 %v1402, %v1398
        %v1579 = vpack.c.b16 %v1403, %v1399
        %v1580 = vpack.c.b16 %v1404, %v1400
        %v1581 = vpack.c.b16 %v1409, %v1405
        %v1582 = vpack.c.b16 %v1410, %v1406
        %v1583 = vpack.c.b16 %v1411, %v1407
        %v1584 = vpack.c.b16 %v1412, %v1408
        %v1585 = vpack.c.b16 %v1417, %v1413
        %v1586 = vpack.c.b16 %v1418, %v1414
        %v1587 = vpack.c.b16 %v1419, %v1415
        %v1588 = vpack.c.b16 %v1420, %v1416
        %v1589 = vpack.c.b16 %v1425, %v1421
        %v1590 = vpack.c.b16 %v1426, %v1422
        %v1591 = vpack.c.b16 %v1427, %v1423
        %v1592 = vpack.c.b16 %v1428, %v1424
        %v1593 = vpack.c.b16 %v1433, %v1429
        %v1594 = vpack.c.b16 %v1434, %v1430
        %v1595 = vpack.c.b16 %v1435, %v1431
        %v1596 = vpack.c.b16 %v1436, %v1432
        %v1597 = vpack.c.b16 %v1441, %v1437
        %v1598 = vpack.c.b16 %v1442, %v1438
        %v1599 = vpack.c.b16 %v1443, %v1439
        %v1600 = vpack.c.b16 %v1444, %v1440
        %v1601 = vpack.c.b16 %v1449, %v1445
        %v1602 = vpack.c.b16 %v1450, %v1446
        %v1603 = vpack.c.b16 %v1451, %v1447
        %v1604 = vpack.c.b16 %v1452, %v1448
        %v1605 = vpack.c.b16 %v1457, %v1453
        %v1606 = vpack.c.b16 %v1458, %v1454
        %v1607 = vpack.c.b16 %v1459, %v1455
        %v1608 = vpack.c.b16 %v1460, %v1456
        %v1609 = vpack.c.b16 %v1465, %v1461
        %v1610 = vpack.c.b16 %v1466, %v1462
        %v1611 = vpack.c.b16 %v1467, %v1463
        %v1612 = vpack.c.b16 %v1468, %v1464
        %v1613 = vpack.c.b16 %v1473, %v1469
        %v1614 = vpack.c.b16 %v1474, %v1470
        %v1615 = vpack.c.b16 %v1475, %v1471
        %v1616 = vpack.c.b16 %v1476, %v1472
        %v1617 = vpack.c.b16 %v1481, %v1477
        %v1618 = vpack.c.b16 %v1482, %v1478
        %v1619 = vpack.c.b16 %v1483, %v1479
        %v1620 = vpack.c.b16 %v1484, %v1480
        %v1621 = vpack.c.b16 %v1489, %v1485
        %v1622 = vpack.c.b16 %v1490, %v1486
        %v1623 = vpack.c.b16 %v1491, %v1487
        %v1624 = vpack.c.b16 %v1492, %v1488
        %v1625 = vpack.c.b16 %v1497, %v1493
        %v1626 = vpack.c.b16 %v1498, %v1494
        %v1627 = vpack.c.b16 %v1499, %v1495
        %v1628 = vpack.c.b16 %v1500, %v1496
        %1757 = vmatprep.subr.bf16.mxu0 %v1502
        %1758 = vmatpush1.bf16.msra.mxu0 %v1501
        %1759 = vmatprep.subr.bf16.mxu0 %v1506
        %1760 = vmatpush1.bf16.msra.mxu0 %v1505
        %1761 = vmatprep.subr.bf16.mxu0 %v1510
        %1762 = vmatpush1.bf16.msra.mxu0 %v1509
        %1763 = vmatprep.subr.bf16.mxu0 %v1514
        %1764 = vmatpush1.bf16.msra.mxu0 %v1513
        %1765 = vmatprep.subr.bf16.mxu0 %v1518
        %1766 = vmatpush1.bf16.msra.mxu0 %v1517
        %1767 = vmatprep.subr.bf16.mxu0 %v1522
        %1768 = vmatpush1.bf16.msra.mxu0 %v1521
        %1769 = vmatprep.subr.bf16.mxu0 %v1526
        %1770 = vmatpush1.bf16.msra.mxu0 %v1525
        %1771 = vmatprep.subr.bf16.mxu0 %v1530
        %1772 = vmatpush1.bf16.msra.mxu0 %v1529
        %1773 = vmatprep.subr.bf16.mxu0 %v1534
        %1774 = vmatpush1.bf16.msra.mxu0 %v1533
        %1775 = vmatprep.subr.bf16.mxu0 %v1538
        %1776 = vmatpush1.bf16.msra.mxu0 %v1537
        %1777 = vmatprep.subr.bf16.mxu0 %v1542
        %1778 = vmatpush1.bf16.msra.mxu0 %v1541
        %1779 = vmatprep.subr.bf16.mxu0 %v1546
        %1780 = vmatpush1.bf16.msra.mxu0 %v1545
        %1781 = vmatprep.subr.bf16.mxu0 %v1550
        %1782 = vmatpush1.bf16.msra.mxu0 %v1549
        %1783 = vmatprep.subr.bf16.mxu0 %v1554
        %1784 = vmatpush1.bf16.msra.mxu0 %v1553
        %1785 = vmatprep.subr.bf16.mxu0 %v1558
        %1786 = vmatpush1.bf16.msra.mxu0 %v1557
        %1787 = vmatprep.subr.bf16.mxu0 %v1562
        %1788 = vmatpush1.bf16.msra.mxu0 %v1561
        %1789 = vmatprep.mubr.bf16.mxu0 %v990
        %1790 = vmatmul.mubr.bf16.gmra.mrb[0].mxu0 %v989
        %v1791 = vpop.f32.mrb[0].mxu0
        %v1792 = vadd.f32 %v780, %v1791
        %v1793 = vpop.f32.mrb[0].mxu0
        %v1794 = vadd.f32 %v784, %v1793
        %v1795 = vpop.f32.mrb[0].mxu0
        %v1796 = vadd.f32 %v780, %v1795
        %v1797 = vpop.f32.mrb[0].mxu0
        %v1798 = vadd.f32 %v784, %v1797
        %1799 = vmatprep.mubr.bf16.mxu0 %v994
        %1800 = vmatmul.mubr.bf16.gmra.mrb[0].mxu0 %v993
        %v1801 = vpop.f32.mrb[0].mxu0
        %v1802 = vadd.f32 %v780, %v1801
        %v1803 = vpop.f32.mrb[0].mxu0
        %v1804 = vadd.f32 %v784, %v1803
        %v1805 = vpop.f32.mrb[0].mxu0
        %v1806 = vadd.f32 %v780, %v1805
        %v1807 = vpop.f32.mrb[0].mxu0
        %v1808 = vadd.f32 %v784, %v1807
        %1809 = vmatprep.mubr.bf16.mxu0 %v998
        %1810 = vmatmul.mubr.bf16.gmra.mrb[0].mxu0 %v997
        %v1811 = vpop.f32.mrb[0].mxu0
        %v1812 = vadd.f32 %v780, %v1811
        %v1813 = vpop.f32.mrb[0].mxu0
        %v1814 = vadd.f32 %v784, %v1813
        %v1815 = vpop.f32.mrb[0].mxu0
        %v1816 = vadd.f32 %v780, %v1815
        %v1817 = vpop.f32.mrb[0].mxu0
        %v1818 = vadd.f32 %v784, %v1817
        %1819 = vmatprep.mubr.bf16.mxu0 %v1002
        %1820 = vmatmul.mubr.bf16.gmra.mrb[0].mxu0 %v1001
        %v1821 = vpop.f32.mrb[0].mxu0
        %v1822 = vadd.f32 %v780, %v1821
        %v1823 = vpop.f32.mrb[0].mxu0
        %v1824 = vadd.f32 %v784, %v1823
        %v1825 = vpop.f32.mrb[0].mxu0
        %v1826 = vadd.f32 %v780, %v1825
        %v1827 = vpop.f32.mrb[0].mxu0
        %v1828 = vadd.f32 %v784, %v1827
        %1829 = vmatprep.mubr.bf16.mxu0 %v1006
        %1830 = vmatmul.mubr.bf16.gmra.mrb[0].mxu0 %v1005
        %v1831 = vpop.f32.mrb[0].mxu0
        %v1832 = vadd.f32 %v780, %v1831
        %v1833 = vpop.f32.mrb[0].mxu0
        %v1834 = vadd.f32 %v784, %v1833
        %v1835 = vpop.f32.mrb[0].mxu0
        %v1836 = vadd.f32 %v780, %v1835
        %v1837 = vpop.f32.mrb[0].mxu0
        %v1838 = vadd.f32 %v784, %v1837
        %1839 = vmatprep.mubr.bf16.mxu0 %v1010
        %1840 = vmatmul.mubr.bf16.gmra.mrb[0].mxu0 %v1009
        %v1841 = vpop.f32.mrb[0].mxu0
        %v1842 = vadd.f32 %v780, %v1841
        %v1843 = vpop.f32.mrb[0].mxu0
        %v1844 = vadd.f32 %v784, %v1843
        %v1845 = vpop.f32.mrb[0].mxu0
        %v1846 = vadd.f32 %v780, %v1845
        %v1847 = vpop.f32.mrb[0].mxu0
        %v1848 = vadd.f32 %v784, %v1847
        %1849 = vmatprep.mubr.bf16.mxu0 %v1014
        %1850 = vmatmul.mubr.bf16.gmra.mrb[0].mxu0 %v1013
        %v1851 = vpop.f32.mrb[0].mxu0
        %v1852 = vadd.f32 %v780, %v1851
        %v1853 = vpop.f32.mrb[0].mxu0
        %v1854 = vadd.f32 %v784, %v1853
        %v1855 = vpop.f32.mrb[0].mxu0
        %v1856 = vadd.f32 %v780, %v1855
        %v1857 = vpop.f32.mrb[0].mxu0
        %v1858 = vadd.f32 %v784, %v1857
        %1859 = vmatprep.mubr.bf16.mxu0 %v1018
        %1860 = vmatmul.mubr.bf16.gmra.mrb[0].mxu0 %v1017
        %v1861 = vpop.f32.mrb[0].mxu0
        %v1862 = vadd.f32 %v780, %v1861
        %v1863 = vpop.f32.mrb[0].mxu0
        %v1864 = vadd.f32 %v784, %v1863
        %v1865 = vpop.f32.mrb[0].mxu0
        %v1866 = vadd.f32 %v780, %v1865
        %v1867 = vpop.f32.mrb[0].mxu0
        %v1868 = vadd.f32 %v784, %v1867
        %1869 = vmatprep.mubr.bf16.mxu0 %v1022
        %1870 = vmatmul.mubr.bf16.gmra.mrb[0].mxu0 %v1021
        %v1871 = vpop.f32.mrb[0].mxu0
        %v1872 = vadd.f32 %v780, %v1871
        %v1873 = vpop.f32.mrb[0].mxu0
        %v1874 = vadd.f32 %v784, %v1873
        %v1875 = vpop.f32.mrb[0].mxu0
        %v1876 = vadd.f32 %v780, %v1875
        %v1877 = vpop.f32.mrb[0].mxu0
        %v1878 = vadd.f32 %v784, %v1877
        %1879 = vmatprep.mubr.bf16.mxu0 %v1026
        %1880 = vmatmul.mubr.bf16.gmra.mrb[0].mxu0 %v1025
        %v1881 = vpop.f32.mrb[0].mxu0
        %v1882 = vadd.f32 %v780, %v1881
        %v1883 = vpop.f32.mrb[0].mxu0
        %v1884 = vadd.f32 %v784, %v1883
        %v1885 = vpop.f32.mrb[0].mxu0
        %v1886 = vadd.f32 %v780, %v1885
        %v1887 = vpop.f32.mrb[0].mxu0
        %v1888 = vadd.f32 %v784, %v1887
        %1889 = vmatprep.mubr.bf16.mxu0 %v1030
        %1890 = vmatmul.mubr.bf16.gmra.mrb[0].mxu0 %v1029
        %v1891 = vpop.f32.mrb[0].mxu0
        %v1892 = vadd.f32 %v780, %v1891
        %v1893 = vpop.f32.mrb[0].mxu0
        %v1894 = vadd.f32 %v784, %v1893
        %v1895 = vpop.f32.mrb[0].mxu0
        %v1896 = vadd.f32 %v780, %v1895
        %v1897 = vpop.f32.mrb[0].mxu0
        %v1898 = vadd.f32 %v784, %v1897
        %1899 = vmatprep.mubr.bf16.mxu0 %v1034
        %1900 = vmatmul.mubr.bf16.gmra.mrb[0].mxu0 %v1033
        %v1901 = vpop.f32.mrb[0].mxu0
        %v1902 = vadd.f32 %v780, %v1901
        %v1903 = vpop.f32.mrb[0].mxu0
        %v1904 = vadd.f32 %v784, %v1903
        %v1905 = vpop.f32.mrb[0].mxu0
        %v1906 = vadd.f32 %v780, %v1905
        %v1907 = vpop.f32.mrb[0].mxu0
        %v1908 = vadd.f32 %v784, %v1907
        %1909 = vmatprep.mubr.bf16.mxu0 %v1038
        %1910 = vmatmul.mubr.bf16.gmra.mrb[0].mxu0 %v1037
        %v1911 = vpop.f32.mrb[0].mxu0
        %v1912 = vadd.f32 %v780, %v1911
        %v1913 = vpop.f32.mrb[0].mxu0
        %v1914 = vadd.f32 %v784, %v1913
        %v1915 = vpop.f32.mrb[0].mxu0
        %v1916 = vadd.f32 %v780, %v1915
        %v1917 = vpop.f32.mrb[0].mxu0
        %v1918 = vadd.f32 %v784, %v1917
        %1919 = vmatprep.mubr.bf16.mxu0 %v1042
        %1920 = vmatmul.mubr.bf16.gmra.mrb[0].mxu0 %v1041
        %v1921 = vpop.f32.mrb[0].mxu0
        %v1922 = vadd.f32 %v780, %v1921
        %v1923 = vpop.f32.mrb[0].mxu0
        %v1924 = vadd.f32 %v784, %v1923
        %v1925 = vpop.f32.mrb[0].mxu0
        %v1926 = vadd.f32 %v780, %v1925
        %v1927 = vpop.f32.mrb[0].mxu0
        %v1928 = vadd.f32 %v784, %v1927
        %1929 = vmatprep.mubr.bf16.mxu0 %v1046
        %1930 = vmatmul.mubr.bf16.gmra.mrb[0].mxu0 %v1045
        %v1931 = vpop.f32.mrb[0].mxu0
        %v1932 = vadd.f32 %v780, %v1931
        %v1933 = vpop.f32.mrb[0].mxu0
        %v1934 = vadd.f32 %v784, %v1933
        %v1935 = vpop.f32.mrb[0].mxu0
        %v1936 = vadd.f32 %v780, %v1935
        %v1937 = vpop.f32.mrb[0].mxu0
        %v1938 = vadd.f32 %v784, %v1937
        %1939 = vmatprep.mubr.bf16.mxu0 %v1050
        %1940 = vmatmul.mubr.bf16.gmra.mrb[0].mxu0 %v1049
        %v1941 = vpop.f32.mrb[0].mxu0
        %v1942 = vadd.f32 %v780, %v1941
        %v1943 = vpop.f32.mrb[0].mxu0
        %v1944 = vadd.f32 %v784, %v1943
        %v1945 = vpop.f32.mrb[0].mxu0
        %v1946 = vadd.f32 %v780, %v1945
        %v1947 = vpop.f32.mrb[0].mxu0
        %v1948 = vadd.f32 %v784, %v1947
        %1949 = vdwg.mxu0
        %1950 = vmatprep.subr.bf16.mxu0 %v1566
        %1951 = vmatpush1.bf16.msra.mxu0 %v1565
        %1952 = vmatprep.subr.bf16.mxu0 %v1570
        %1953 = vmatpush1.bf16.msra.mxu0 %v1569
        %1954 = vmatprep.subr.bf16.mxu0 %v1574
        %1955 = vmatpush1.bf16.msra.mxu0 %v1573
        %1956 = vmatprep.subr.bf16.mxu0 %v1578
        %1957 = vmatpush1.bf16.msra.mxu0 %v1577
        %1958 = vmatprep.subr.bf16.mxu0 %v1582
        %1959 = vmatpush1.bf16.msra.mxu0 %v1581
        %1960 = vmatprep.subr.bf16.mxu0 %v1586
        %1961 = vmatpush1.bf16.msra.mxu0 %v1585
        %1962 = vmatprep.subr.bf16.mxu0 %v1590
        %1963 = vmatpush1.bf16.msra.mxu0 %v1589
        %1964 = vmatprep.subr.bf16.mxu0 %v1594
        %1965 = vmatpush1.bf16.msra.mxu0 %v1593
        %1966 = vmatprep.subr.bf16.mxu0 %v1598
        %1967 = vmatpush1.bf16.msra.mxu0 %v1597
        %1968 = vmatprep.subr.bf16.mxu0 %v1602
        %1969 = vmatpush1.bf16.msra.mxu0 %v1601
        %1970 = vmatprep.subr.bf16.mxu0 %v1606
        %1971 = vmatpush1.bf16.msra.mxu0 %v1605
        %1972 = vmatprep.subr.bf16.mxu0 %v1610
        %1973 = vmatpush1.bf16.msra.mxu0 %v1609
        %1974 = vmatprep.subr.bf16.mxu0 %v1614
        %1975 = vmatpush1.bf16.msra.mxu0 %v1613
        %1976 = vmatprep.subr.bf16.mxu0 %v1618
        %1977 = vmatpush1.bf16.msra.mxu0 %v1617
        %1978 = vmatprep.subr.bf16.mxu0 %v1622
        %1979 = vmatpush1.bf16.msra.mxu0 %v1621
        %1980 = vmatprep.subr.bf16.mxu0 %v1626
        %1981 = vmatpush1.bf16.msra.mxu0 %v1625
        %1982 = vmatprep.mubr.bf16.mxu0 %v992
        %1983 = vmatmul.mubr.bf16.gmra.mrb[0].mxu0 %v991
        %v1984 = vpop.f32.mrb[0].mxu0
        %v1985 = vadd.f32 %v1792, %v1984
        %v1986 = vpop.f32.mrb[0].mxu0
        %v1987 = vadd.f32 %v1794, %v1986
        %v1988 = vpop.f32.mrb[0].mxu0
        %v1989 = vadd.f32 %v1796, %v1988
        %v1990 = vpop.f32.mrb[0].mxu0
        %v1991 = vadd.f32 %v1798, %v1990
        %1992 = vmatprep.mubr.bf16.mxu0 %v996
        %1993 = vmatmul.mubr.bf16.gmra.mrb[0].mxu0 %v995
        %v1994 = vpop.f32.mrb[0].mxu0
        %v1995 = vadd.f32 %v1802, %v1994
        %v1996 = vpop.f32.mrb[0].mxu0
        %v1997 = vadd.f32 %v1804, %v1996
        %v1998 = vpop.f32.mrb[0].mxu0
        %v1999 = vadd.f32 %v1806, %v1998
        %v2000 = vpop.f32.mrb[0].mxu0
        %v2001 = vadd.f32 %v1808, %v2000
        %2002 = vmatprep.mubr.bf16.mxu0 %v1000
        %2003 = vmatmul.mubr.bf16.gmra.mrb[0].mxu0 %v999
        %v2004 = vpop.f32.mrb[0].mxu0
        %v2005 = vadd.f32 %v1812, %v2004
        %v2006 = vpop.f32.mrb[0].mxu0
        %v2007 = vadd.f32 %v1814, %v2006
        %v2008 = vpop.f32.mrb[0].mxu0
        %v2009 = vadd.f32 %v1816, %v2008
        %v2010 = vpop.f32.mrb[0].mxu0
        %v2011 = vadd.f32 %v1818, %v2010
        %2012 = vmatprep.mubr.bf16.mxu0 %v1004
        %2013 = vmatmul.mubr.bf16.gmra.mrb[0].mxu0 %v1003
        %v2014 = vpop.f32.mrb[0].mxu0
        %v2015 = vadd.f32 %v1822, %v2014
        %v2016 = vpop.f32.mrb[0].mxu0
        %v2017 = vadd.f32 %v1824, %v2016
        %v2018 = vpop.f32.mrb[0].mxu0
        %v2019 = vadd.f32 %v1826, %v2018
        %v2020 = vpop.f32.mrb[0].mxu0
        %v2021 = vadd.f32 %v1828, %v2020
        %2022 = vmatprep.mubr.bf16.mxu0 %v1008
        %2023 = vmatmul.mubr.bf16.gmra.mrb[0].mxu0 %v1007
        %v2024 = vpop.f32.mrb[0].mxu0
        %v2025 = vadd.f32 %v1832, %v2024
        %v2026 = vpop.f32.mrb[0].mxu0
        %v2027 = vadd.f32 %v1834, %v2026
        %v2028 = vpop.f32.mrb[0].mxu0
        %v2029 = vadd.f32 %v1836, %v2028
        %v2030 = vpop.f32.mrb[0].mxu0
        %v2031 = vadd.f32 %v1838, %v2030
        %2032 = vmatprep.mubr.bf16.mxu0 %v1012
        %2033 = vmatmul.mubr.bf16.gmra.mrb[0].mxu0 %v1011
        %v2034 = vpop.f32.mrb[0].mxu0
        %v2035 = vadd.f32 %v1842, %v2034
        %v2036 = vpop.f32.mrb[0].mxu0
        %v2037 = vadd.f32 %v1844, %v2036
        %v2038 = vpop.f32.mrb[0].mxu0
        %v2039 = vadd.f32 %v1846, %v2038
        %v2040 = vpop.f32.mrb[0].mxu0
        %v2041 = vadd.f32 %v1848, %v2040
        %2042 = vmatprep.mubr.bf16.mxu0 %v1016
        %2043 = vmatmul.mubr.bf16.gmra.mrb[0].mxu0 %v1015
        %v2044 = vpop.f32.mrb[0].mxu0
        %v2045 = vadd.f32 %v1852, %v2044
        %v2046 = vpop.f32.mrb[0].mxu0
        %v2047 = vadd.f32 %v1854, %v2046
        %v2048 = vpop.f32.mrb[0].mxu0
        %v2049 = vadd.f32 %v1856, %v2048
        %v2050 = vpop.f32.mrb[0].mxu0
        %v2051 = vadd.f32 %v1858, %v2050
        %2052 = vmatprep.mubr.bf16.mxu0 %v1020
        %2053 = vmatmul.mubr.bf16.gmra.mrb[0].mxu0 %v1019
        %v2054 = vpop.f32.mrb[0].mxu0
        %v2055 = vadd.f32 %v1862, %v2054
        %v2056 = vpop.f32.mrb[0].mxu0
        %v2057 = vadd.f32 %v1864, %v2056
        %v2058 = vpop.f32.mrb[0].mxu0
        %v2059 = vadd.f32 %v1866, %v2058
        %v2060 = vpop.f32.mrb[0].mxu0
        %v2061 = vadd.f32 %v1868, %v2060
        %2062 = vmatprep.mubr.bf16.mxu0 %v1024
        %2063 = vmatmul.mubr.bf16.gmra.mrb[0].mxu0 %v1023
        %v2064 = vpop.f32.mrb[0].mxu0
        %v2065 = vadd.f32 %v1872, %v2064
        %v2066 = vpop.f32.mrb[0].mxu0
        %v2067 = vadd.f32 %v1874, %v2066
        %v2068 = vpop.f32.mrb[0].mxu0
        %v2069 = vadd.f32 %v1876, %v2068
        %v2070 = vpop.f32.mrb[0].mxu0
        %v2071 = vadd.f32 %v1878, %v2070
        %2072 = vmatprep.mubr.bf16.mxu0 %v1028
        %2073 = vmatmul.mubr.bf16.gmra.mrb[0].mxu0 %v1027
        %v2074 = vpop.f32.mrb[0].mxu0
        %v2075 = vadd.f32 %v1882, %v2074
        %v2076 = vpop.f32.mrb[0].mxu0
        %v2077 = vadd.f32 %v1884, %v2076
        %v2078 = vpop.f32.mrb[0].mxu0
        %v2079 = vadd.f32 %v1886, %v2078
        %v2080 = vpop.f32.mrb[0].mxu0
        %v2081 = vadd.f32 %v1888, %v2080
        %2082 = vmatprep.mubr.bf16.mxu0 %v1032
        %2083 = vmatmul.mubr.bf16.gmra.mrb[0].mxu0 %v1031
        %v2084 = vpop.f32.mrb[0].mxu0
        %v2085 = vadd.f32 %v1892, %v2084
        %v2086 = vpop.f32.mrb[0].mxu0
        %v2087 = vadd.f32 %v1894, %v2086
        %v2088 = vpop.f32.mrb[0].mxu0
        %v2089 = vadd.f32 %v1896, %v2088
        %v2090 = vpop.f32.mrb[0].mxu0
        %v2091 = vadd.f32 %v1898, %v2090
        %2092 = vmatprep.mubr.bf16.mxu0 %v1036
        %2093 = vmatmul.mubr.bf16.gmra.mrb[0].mxu0 %v1035
        %v2094 = vpop.f32.mrb[0].mxu0
        %v2095 = vadd.f32 %v1902, %v2094
        %v2096 = vpop.f32.mrb[0].mxu0
        %v2097 = vadd.f32 %v1904, %v2096
        %v2098 = vpop.f32.mrb[0].mxu0
        %v2099 = vadd.f32 %v1906, %v2098
        %v2100 = vpop.f32.mrb[0].mxu0
        %v2101 = vadd.f32 %v1908, %v2100
        %2102 = vmatprep.mubr.bf16.mxu0 %v1040
        %2103 = vmatmul.mubr.bf16.gmra.mrb[0].mxu0 %v1039
        %v2104 = vpop.f32.mrb[0].mxu0
        %v2105 = vadd.f32 %v1912, %v2104
        %v2106 = vpop.f32.mrb[0].mxu0
        %v2107 = vadd.f32 %v1914, %v2106
        %v2108 = vpop.f32.mrb[0].mxu0
        %v2109 = vadd.f32 %v1916, %v2108
        %v2110 = vpop.f32.mrb[0].mxu0
        %v2111 = vadd.f32 %v1918, %v2110
        %2112 = vmatprep.mubr.bf16.mxu0 %v1044
        %2113 = vmatmul.mubr.bf16.gmra.mrb[0].mxu0 %v1043
        %v2114 = vpop.f32.mrb[0].mxu0
        %v2115 = vadd.f32 %v1922, %v2114
        %v2116 = vpop.f32.mrb[0].mxu0
        %v2117 = vadd.f32 %v1924, %v2116
        %v2118 = vpop.f32.mrb[0].mxu0
        %v2119 = vadd.f32 %v1926, %v2118
        %v2120 = vpop.f32.mrb[0].mxu0
        %v2121 = vadd.f32 %v1928, %v2120
        %2122 = vmatprep.mubr.bf16.mxu0 %v1048
        %2123 = vmatmul.mubr.bf16.gmra.mrb[0].mxu0 %v1047
        %v2124 = vpop.f32.mrb[0].mxu0
        %v2125 = vadd.f32 %v1932, %v2124
        %v2126 = vpop.f32.mrb[0].mxu0
        %v2127 = vadd.f32 %v1934, %v2126
        %v2128 = vpop.f32.mrb[0].mxu0
        %v2129 = vadd.f32 %v1936, %v2128
        %v2130 = vpop.f32.mrb[0].mxu0
        %v2131 = vadd.f32 %v1938, %v2130
        %2132 = vmatprep.mubr.bf16.mxu0 %v1052
        %2133 = vmatmul.mubr.bf16.gmra.mrb[0].mxu0 %v1051
        %v2134 = vpop.f32.mrb[0].mxu0
        %v2135 = vadd.f32 %v1942, %v2134
        %v2136 = vpop.f32.mrb[0].mxu0
        %v2137 = vadd.f32 %v1944, %v2136
        %v2138 = vpop.f32.mrb[0].mxu0
        %v2139 = vadd.f32 %v1946, %v2138
        %v2140 = vpop.f32.mrb[0].mxu0
        %v2141 = vadd.f32 %v1948, %v2140
        %2142 = vdwg.mxu0
        %2143 = vmatprep.subr.bf16.mxu0 %v1504
        %2144 = vmatpush1.bf16.msra.mxu0 %v1503
        %2145 = vmatprep.subr.bf16.mxu0 %v1508
        %2146 = vmatpush1.bf16.msra.mxu0 %v1507
        %2147 = vmatprep.subr.bf16.mxu0 %v1512
        %2148 = vmatpush1.bf16.msra.mxu0 %v1511
        %2149 = vmatprep.subr.bf16.mxu0 %v1516
        %2150 = vmatpush1.bf16.msra.mxu0 %v1515
        %2151 = vmatprep.subr.bf16.mxu0 %v1520
        %2152 = vmatpush1.bf16.msra.mxu0 %v1519
        %2153 = vmatprep.subr.bf16.mxu0 %v1524
        %2154 = vmatpush1.bf16.msra.mxu0 %v1523
        %2155 = vmatprep.subr.bf16.mxu0 %v1528
        %2156 = vmatpush1.bf16.msra.mxu0 %v1527
        %2157 = vmatprep.subr.bf16.mxu0 %v1532
        %2158 = vmatpush1.bf16.msra.mxu0 %v1531
        %2159 = vmatprep.subr.bf16.mxu0 %v1536
        %2160 = vmatpush1.bf16.msra.mxu0 %v1535
        %2161 = vmatprep.subr.bf16.mxu0 %v1540
        %2162 = vmatpush1.bf16.msra.mxu0 %v1539
        %2163 = vmatprep.subr.bf16.mxu0 %v1544
        %2164 = vmatpush1.bf16.msra.mxu0 %v1543
        %2165 = vmatprep.subr.bf16.mxu0 %v1548
        %2166 = vmatpush1.bf16.msra.mxu0 %v1547
        %2167 = vmatprep.subr.bf16.mxu0 %v1552
        %2168 = vmatpush1.bf16.msra.mxu0 %v1551
        %2169 = vmatprep.subr.bf16.mxu0 %v1556
        %2170 = vmatpush1.bf16.msra.mxu0 %v1555
        %2171 = vmatprep.subr.bf16.mxu0 %v1560
        %2172 = vmatpush1.bf16.msra.mxu0 %v1559
        %2173 = vmatprep.subr.bf16.mxu0 %v1564
        %2174 = vmatpush1.bf16.msra.mxu0 %v1563
        %2175 = vmatprep.mubr.bf16.mxu0 %v990
        %2176 = vmatmul.mubr.bf16.gmra.mrb[0].mxu0 %v989
        %v2177 = vpop.f32.mrb[0].mxu0
        %v2178 = vadd.f32 %v788, %v2177
        %v2179 = vpop.f32.mrb[0].mxu0
        %v2180 = vadd.f32 %v792, %v2179
        %v2181 = vpop.f32.mrb[0].mxu0
        %v2182 = vadd.f32 %v788, %v2181
        %v2183 = vpop.f32.mrb[0].mxu0
        %v2184 = vadd.f32 %v792, %v2183
        %2185 = vmatprep.mubr.bf16.mxu0 %v994
        %2186 = vmatmul.mubr.bf16.gmra.mrb[0].mxu0 %v993
        %v2187 = vpop.f32.mrb[0].mxu0
        %v2188 = vadd.f32 %v788, %v2187
        %v2189 = vpop.f32.mrb[0].mxu0
        %v2190 = vadd.f32 %v792, %v2189
        %v2191 = vpop.f32.mrb[0].mxu0
        %v2192 = vadd.f32 %v788, %v2191
        %v2193 = vpop.f32.mrb[0].mxu0
        %v2194 = vadd.f32 %v792, %v2193
        %2195 = vmatprep.mubr.bf16.mxu0 %v998
        %2196 = vmatmul.mubr.bf16.gmra.mrb[0].mxu0 %v997
        %v2197 = vpop.f32.mrb[0].mxu0
        %v2198 = vadd.f32 %v788, %v2197
        %v2199 = vpop.f32.mrb[0].mxu0
        %v2200 = vadd.f32 %v792, %v2199
        %v2201 = vpop.f32.mrb[0].mxu0
        %v2202 = vadd.f32 %v788, %v2201
        %v2203 = vpop.f32.mrb[0].mxu0
        %v2204 = vadd.f32 %v792, %v2203
        %2205 = vmatprep.mubr.bf16.mxu0 %v1002
        %2206 = vmatmul.mubr.bf16.gmra.mrb[0].mxu0 %v1001
        %v2207 = vpop.f32.mrb[0].mxu0
        %v2208 = vadd.f32 %v788, %v2207
        %v2209 = vpop.f32.mrb[0].mxu0
        %v2210 = vadd.f32 %v792, %v2209
        %v2211 = vpop.f32.mrb[0].mxu0
        %v2212 = vadd.f32 %v788, %v2211
        %v2213 = vpop.f32.mrb[0].mxu0
        %v2214 = vadd.f32 %v792, %v2213
        %2215 = vmatprep.mubr.bf16.mxu0 %v1006
        %2216 = vmatmul.mubr.bf16.gmra.mrb[0].mxu0 %v1005
        %v2217 = vpop.f32.mrb[0].mxu0
        %v2218 = vadd.f32 %v788, %v2217
        %v2219 = vpop.f32.mrb[0].mxu0
        %v2220 = vadd.f32 %v792, %v2219
        %v2221 = vpop.f32.mrb[0].mxu0
        %v2222 = vadd.f32 %v788, %v2221
        %v2223 = vpop.f32.mrb[0].mxu0
        %v2224 = vadd.f32 %v792, %v2223
        %2225 = vmatprep.mubr.bf16.mxu0 %v1010
        %2226 = vmatmul.mubr.bf16.gmra.mrb[0].mxu0 %v1009
        %v2227 = vpop.f32.mrb[0].mxu0
        %v2228 = vadd.f32 %v788, %v2227
        %v2229 = vpop.f32.mrb[0].mxu0
        %v2230 = vadd.f32 %v792, %v2229
        %v2231 = vpop.f32.mrb[0].mxu0
        %v2232 = vadd.f32 %v788, %v2231
        %v2233 = vpop.f32.mrb[0].mxu0
        %v2234 = vadd.f32 %v792, %v2233
        %2235 = vmatprep.mubr.bf16.mxu0 %v1014
        %2236 = vmatmul.mubr.bf16.gmra.mrb[0].mxu0 %v1013
        %v2237 = vpop.f32.mrb[0].mxu0
        %v2238 = vadd.f32 %v788, %v2237
        %v2239 = vpop.f32.mrb[0].mxu0
        %v2240 = vadd.f32 %v792, %v2239
        %v2241 = vpop.f32.mrb[0].mxu0
        %v2242 = vadd.f32 %v788, %v2241
        %v2243 = vpop.f32.mrb[0].mxu0
        %v2244 = vadd.f32 %v792, %v2243
        %2245 = vmatprep.mubr.bf16.mxu0 %v1018
        %2246 = vmatmul.mubr.bf16.gmra.mrb[0].mxu0 %v1017
        %v2247 = vpop.f32.mrb[0].mxu0
        %v2248 = vadd.f32 %v788, %v2247
        %v2249 = vpop.f32.mrb[0].mxu0
        %v2250 = vadd.f32 %v792, %v2249
        %v2251 = vpop.f32.mrb[0].mxu0
        %v2252 = vadd.f32 %v788, %v2251
        %v2253 = vpop.f32.mrb[0].mxu0
        %v2254 = vadd.f32 %v792, %v2253
        %2255 = vmatprep.mubr.bf16.mxu0 %v1022
        %2256 = vmatmul.mubr.bf16.gmra.mrb[0].mxu0 %v1021
        %v2257 = vpop.f32.mrb[0].mxu0
        %v2258 = vadd.f32 %v788, %v2257
        %v2259 = vpop.f32.mrb[0].mxu0
        %v2260 = vadd.f32 %v792, %v2259
        %v2261 = vpop.f32.mrb[0].mxu0
        %v2262 = vadd.f32 %v788, %v2261
        %v2263 = vpop.f32.mrb[0].mxu0
        %v2264 = vadd.f32 %v792, %v2263
        %2265 = vmatprep.mubr.bf16.mxu0 %v1026
        %2266 = vmatmul.mubr.bf16.gmra.mrb[0].mxu0 %v1025
        %v2267 = vpop.f32.mrb[0].mxu0
        %v2268 = vadd.f32 %v788, %v2267
        %v2269 = vpop.f32.mrb[0].mxu0
        %v2270 = vadd.f32 %v792, %v2269
        %v2271 = vpop.f32.mrb[0].mxu0
        %v2272 = vadd.f32 %v788, %v2271
        %v2273 = vpop.f32.mrb[0].mxu0
        %v2274 = vadd.f32 %v792, %v2273
        %2275 = vmatprep.mubr.bf16.mxu0 %v1030
        %2276 = vmatmul.mubr.bf16.gmra.mrb[0].mxu0 %v1029
        %v2277 = vpop.f32.mrb[0].mxu0
        %v2278 = vadd.f32 %v788, %v2277
        %v2279 = vpop.f32.mrb[0].mxu0
        %v2280 = vadd.f32 %v792, %v2279
        %v2281 = vpop.f32.mrb[0].mxu0
        %v2282 = vadd.f32 %v788, %v2281
        %v2283 = vpop.f32.mrb[0].mxu0
        %v2284 = vadd.f32 %v792, %v2283
        %2285 = vmatprep.mubr.bf16.mxu0 %v1034
        %2286 = vmatmul.mubr.bf16.gmra.mrb[0].mxu0 %v1033
        %v2287 = vpop.f32.mrb[0].mxu0
        %v2288 = vadd.f32 %v788, %v2287
        %v2289 = vpop.f32.mrb[0].mxu0
        %v2290 = vadd.f32 %v792, %v2289
        %v2291 = vpop.f32.mrb[0].mxu0
        %v2292 = vadd.f32 %v788, %v2291
        %v2293 = vpop.f32.mrb[0].mxu0
        %v2294 = vadd.f32 %v792, %v2293
        %2295 = vmatprep.mubr.bf16.mxu0 %v1038
        %2296 = vmatmul.mubr.bf16.gmra.mrb[0].mxu0 %v1037
        %v2297 = vpop.f32.mrb[0].mxu0
        %v2298 = vadd.f32 %v788, %v2297
        %v2299 = vpop.f32.mrb[0].mxu0
        %v2300 = vadd.f32 %v792, %v2299
        %v2301 = vpop.f32.mrb[0].mxu0
        %v2302 = vadd.f32 %v788, %v2301
        %v2303 = vpop.f32.mrb[0].mxu0
        %v2304 = vadd.f32 %v792, %v2303
        %2305 = vmatprep.mubr.bf16.mxu0 %v1042
        %2306 = vmatmul.mubr.bf16.gmra.mrb[0].mxu0 %v1041
        %v2307 = vpop.f32.mrb[0].mxu0
        %v2308 = vadd.f32 %v788, %v2307
        %v2309 = vpop.f32.mrb[0].mxu0
        %v2310 = vadd.f32 %v792, %v2309
        %v2311 = vpop.f32.mrb[0].mxu0
        %v2312 = vadd.f32 %v788, %v2311
        %v2313 = vpop.f32.mrb[0].mxu0
        %v2314 = vadd.f32 %v792, %v2313
        %2315 = vmatprep.mubr.bf16.mxu0 %v1046
        %2316 = vmatmul.mubr.bf16.gmra.mrb[0].mxu0 %v1045
        %v2317 = vpop.f32.mrb[0].mxu0
        %v2318 = vadd.f32 %v788, %v2317
        %v2319 = vpop.f32.mrb[0].mxu0
        %v2320 = vadd.f32 %v792, %v2319
        %v2321 = vpop.f32.mrb[0].mxu0
        %v2322 = vadd.f32 %v788, %v2321
        %v2323 = vpop.f32.mrb[0].mxu0
        %v2324 = vadd.f32 %v792, %v2323
        %2325 = vmatprep.mubr.bf16.mxu0 %v1050
        %2326 = vmatmul.mubr.bf16.gmra.mrb[0].mxu0 %v1049
        %v2327 = vpop.f32.mrb[0].mxu0
        %v2328 = vadd.f32 %v788, %v2327
        %v2329 = vpop.f32.mrb[0].mxu0
        %v2330 = vadd.f32 %v792, %v2329
        %v2331 = vpop.f32.mrb[0].mxu0
        %v2332 = vadd.f32 %v788, %v2331
        %v2333 = vpop.f32.mrb[0].mxu0
        %v2334 = vadd.f32 %v792, %v2333
        %2335 = vdwg.mxu0
        %2336 = vmatprep.subr.bf16.mxu0 %v1568
        %2337 = vmatpush1.bf16.msra.mxu0 %v1567
        %2338 = vmatprep.subr.bf16.mxu0 %v1572
        %2339 = vmatpush1.bf16.msra.mxu0 %v1571
        %2340 = vmatprep.subr.bf16.mxu0 %v1576
        %2341 = vmatpush1.bf16.msra.mxu0 %v1575
        %2342 = vmatprep.subr.bf16.mxu0 %v1580
        %2343 = vmatpush1.bf16.msra.mxu0 %v1579
        %2344 = vmatprep.subr.bf16.mxu0 %v1584
        %2345 = vmatpush1.bf16.msra.mxu0 %v1583
        %2346 = vmatprep.subr.bf16.mxu0 %v1588
        %2347 = vmatpush1.bf16.msra.mxu0 %v1587
        %2348 = vmatprep.subr.bf16.mxu0 %v1592
        %2349 = vmatpush1.bf16.msra.mxu0 %v1591
        %2350 = vmatprep.subr.bf16.mxu0 %v1596
        %2351 = vmatpush1.bf16.msra.mxu0 %v1595
        %2352 = vmatprep.subr.bf16.mxu0 %v1600
        %2353 = vmatpush1.bf16.msra.mxu0 %v1599
        %2354 = vmatprep.subr.bf16.mxu0 %v1604
        %2355 = vmatpush1.bf16.msra.mxu0 %v1603
        %2356 = vmatprep.subr.bf16.mxu0 %v1608
        %2357 = vmatpush1.bf16.msra.mxu0 %v1607
        %2358 = vmatprep.subr.bf16.mxu0 %v1612
        %2359 = vmatpush1.bf16.msra.mxu0 %v1611
        %2360 = vmatprep.subr.bf16.mxu0 %v1616
        %2361 = vmatpush1.bf16.msra.mxu0 %v1615
        %2362 = vmatprep.subr.bf16.mxu0 %v1620
        %2363 = vmatpush1.bf16.msra.mxu0 %v1619
        %2364 = vmatprep.subr.bf16.mxu0 %v1624
        %2365 = vmatpush1.bf16.msra.mxu0 %v1623
        %2366 = vmatprep.subr.bf16.mxu0 %v1628
        %2367 = vmatpush1.bf16.msra.mxu0 %v1627
        %2368 = vmatprep.mubr.bf16.mxu0 %v992
        %2369 = vmatmul.mubr.bf16.gmra.mrb[0].mxu0 %v991
        %v2370 = vpop.f32.mrb[0].mxu0
        %v2371 = vadd.f32 %v2178, %v2370
        %v2372 = vpop.f32.mrb[0].mxu0
        %v2373 = vadd.f32 %v2180, %v2372
        %v2374 = vpop.f32.mrb[0].mxu0
        %v2375 = vadd.f32 %v2182, %v2374
        %v2376 = vpop.f32.mrb[0].mxu0
        %v2377 = vadd.f32 %v2184, %v2376
        %2378 = vmatprep.mubr.bf16.mxu0 %v996
        %2379 = vmatmul.mubr.bf16.gmra.mrb[0].mxu0 %v995
        %v2380 = vpop.f32.mrb[0].mxu0
        %v2381 = vadd.f32 %v2188, %v2380
        %v2382 = vpop.f32.mrb[0].mxu0
        %v2383 = vadd.f32 %v2190, %v2382
        %v2384 = vpop.f32.mrb[0].mxu0
        %v2385 = vadd.f32 %v2192, %v2384
        %v2386 = vpop.f32.mrb[0].mxu0
        %v2387 = vadd.f32 %v2194, %v2386
        %2388 = vmatprep.mubr.bf16.mxu0 %v1000
        %2389 = vmatmul.mubr.bf16.gmra.mrb[0].mxu0 %v999
        %v2390 = vpop.f32.mrb[0].mxu0
        %v2391 = vadd.f32 %v2198, %v2390
        %v2392 = vpop.f32.mrb[0].mxu0
        %v2393 = vadd.f32 %v2200, %v2392
        %v2394 = vpop.f32.mrb[0].mxu0
        %v2395 = vadd.f32 %v2202, %v2394
        %v2396 = vpop.f32.mrb[0].mxu0
        %v2397 = vadd.f32 %v2204, %v2396
        %2398 = vmatprep.mubr.bf16.mxu0 %v1004
        %2399 = vmatmul.mubr.bf16.gmra.mrb[0].mxu0 %v1003
        %v2400 = vpop.f32.mrb[0].mxu0
        %v2401 = vadd.f32 %v2208, %v2400
        %v2402 = vpop.f32.mrb[0].mxu0
        %v2403 = vadd.f32 %v2210, %v2402
        %v2404 = vpop.f32.mrb[0].mxu0
        %v2405 = vadd.f32 %v2212, %v2404
        %v2406 = vpop.f32.mrb[0].mxu0
        %v2407 = vadd.f32 %v2214, %v2406
        %2408 = vmatprep.mubr.bf16.mxu0 %v1008
        %2409 = vmatmul.mubr.bf16.gmra.mrb[0].mxu0 %v1007
        %v2410 = vpop.f32.mrb[0].mxu0
        %v2411 = vadd.f32 %v2218, %v2410
        %v2412 = vpop.f32.mrb[0].mxu0
        %v2413 = vadd.f32 %v2220, %v2412
        %v2414 = vpop.f32.mrb[0].mxu0
        %v2415 = vadd.f32 %v2222, %v2414
        %v2416 = vpop.f32.mrb[0].mxu0
        %v2417 = vadd.f32 %v2224, %v2416
        %2418 = vmatprep.mubr.bf16.mxu0 %v1012
        %2419 = vmatmul.mubr.bf16.gmra.mrb[0].mxu0 %v1011
        %v2420 = vpop.f32.mrb[0].mxu0
        %v2421 = vadd.f32 %v2228, %v2420
        %v2422 = vpop.f32.mrb[0].mxu0
        %v2423 = vadd.f32 %v2230, %v2422
        %v2424 = vpop.f32.mrb[0].mxu0
        %v2425 = vadd.f32 %v2232, %v2424
        %v2426 = vpop.f32.mrb[0].mxu0
        %v2427 = vadd.f32 %v2234, %v2426
        %2428 = vmatprep.mubr.bf16.mxu0 %v1016
        %2429 = vmatmul.mubr.bf16.gmra.mrb[0].mxu0 %v1015
        %v2430 = vpop.f32.mrb[0].mxu0
        %v2431 = vadd.f32 %v2238, %v2430
        %v2432 = vpop.f32.mrb[0].mxu0
        %v2433 = vadd.f32 %v2240, %v2432
        %v2434 = vpop.f32.mrb[0].mxu0
        %v2435 = vadd.f32 %v2242, %v2434
        %v2436 = vpop.f32.mrb[0].mxu0
        %v2437 = vadd.f32 %v2244, %v2436
        %2438 = vmatprep.mubr.bf16.mxu0 %v1020
        %2439 = vmatmul.mubr.bf16.gmra.mrb[0].mxu0 %v1019
        %v2440 = vpop.f32.mrb[0].mxu0
        %v2441 = vadd.f32 %v2248, %v2440
        %v2442 = vpop.f32.mrb[0].mxu0
        %v2443 = vadd.f32 %v2250, %v2442
        %v2444 = vpop.f32.mrb[0].mxu0
        %v2445 = vadd.f32 %v2252, %v2444
        %v2446 = vpop.f32.mrb[0].mxu0
        %v2447 = vadd.f32 %v2254, %v2446
        %2448 = vmatprep.mubr.bf16.mxu0 %v1024
        %2449 = vmatmul.mubr.bf16.gmra.mrb[0].mxu0 %v1023
        %v2450 = vpop.f32.mrb[0].mxu0
        %v2451 = vadd.f32 %v2258, %v2450
        %v2452 = vpop.f32.mrb[0].mxu0
        %v2453 = vadd.f32 %v2260, %v2452
        %v2454 = vpop.f32.mrb[0].mxu0
        %v2455 = vadd.f32 %v2262, %v2454
        %v2456 = vpop.f32.mrb[0].mxu0
        %v2457 = vadd.f32 %v2264, %v2456
        %2458 = vmatprep.mubr.bf16.mxu0 %v1028
        %2459 = vmatmul.mubr.bf16.gmra.mrb[0].mxu0 %v1027
        %v2460 = vpop.f32.mrb[0].mxu0
        %v2461 = vadd.f32 %v2268, %v2460
        %v2462 = vpop.f32.mrb[0].mxu0
        %v2463 = vadd.f32 %v2270, %v2462
        %v2464 = vpop.f32.mrb[0].mxu0
        %v2465 = vadd.f32 %v2272, %v2464
        %v2466 = vpop.f32.mrb[0].mxu0
        %v2467 = vadd.f32 %v2274, %v2466
        %2468 = vmatprep.mubr.bf16.mxu0 %v1032
        %2469 = vmatmul.mubr.bf16.gmra.mrb[0].mxu0 %v1031
        %v2470 = vpop.f32.mrb[0].mxu0
        %v2471 = vadd.f32 %v2278, %v2470
        %v2472 = vpop.f32.mrb[0].mxu0
        %v2473 = vadd.f32 %v2280, %v2472
        %v2474 = vpop.f32.mrb[0].mxu0
        %v2475 = vadd.f32 %v2282, %v2474
        %v2476 = vpop.f32.mrb[0].mxu0
        %v2477 = vadd.f32 %v2284, %v2476
        %2478 = vmatprep.mubr.bf16.mxu0 %v1036
        %2479 = vmatmul.mubr.bf16.gmra.mrb[0].mxu0 %v1035
        %v2480 = vpop.f32.mrb[0].mxu0
        %v2481 = vadd.f32 %v2288, %v2480
        %v2482 = vpop.f32.mrb[0].mxu0
        %v2483 = vadd.f32 %v2290, %v2482
        %v2484 = vpop.f32.mrb[0].mxu0
        %v2485 = vadd.f32 %v2292, %v2484
        %v2486 = vpop.f32.mrb[0].mxu0
        %v2487 = vadd.f32 %v2294, %v2486
        %2488 = vmatprep.mubr.bf16.mxu0 %v1040
        %2489 = vmatmul.mubr.bf16.gmra.mrb[0].mxu0 %v1039
        %v2490 = vpop.f32.mrb[0].mxu0
        %v2491 = vadd.f32 %v2298, %v2490
        %v2492 = vpop.f32.mrb[0].mxu0
        %v2493 = vadd.f32 %v2300, %v2492
        %v2494 = vpop.f32.mrb[0].mxu0
        %v2495 = vadd.f32 %v2302, %v2494
        %v2496 = vpop.f32.mrb[0].mxu0
        %v2497 = vadd.f32 %v2304, %v2496
        %2498 = vmatprep.mubr.bf16.mxu0 %v1044
        %2499 = vmatmul.mubr.bf16.gmra.mrb[0].mxu0 %v1043
        %v2500 = vpop.f32.mrb[0].mxu0
        %v2501 = vadd.f32 %v2308, %v2500
        %v2502 = vpop.f32.mrb[0].mxu0
        %v2503 = vadd.f32 %v2310, %v2502
        %v2504 = vpop.f32.mrb[0].mxu0
        %v2505 = vadd.f32 %v2312, %v2504
        %v2506 = vpop.f32.mrb[0].mxu0
        %v2507 = vadd.f32 %v2314, %v2506
        %2508 = vmatprep.mubr.bf16.mxu0 %v1048
        %2509 = vmatmul.mubr.bf16.gmra.mrb[0].mxu0 %v1047
        %v2510 = vpop.f32.mrb[0].mxu0
        %v2511 = vadd.f32 %v2318, %v2510
        %v2512 = vpop.f32.mrb[0].mxu0
        %v2513 = vadd.f32 %v2320, %v2512
        %v2514 = vpop.f32.mrb[0].mxu0
        %v2515 = vadd.f32 %v2322, %v2514
        %v2516 = vpop.f32.mrb[0].mxu0
        %v2517 = vadd.f32 %v2324, %v2516
        %2518 = vmatprep.mubr.bf16.mxu0 %v1052
        %2519 = vmatmul.mubr.bf16.gmra.mrb[0].mxu0 %v1051
        %v2520 = vpop.f32.mrb[0].mxu0
        %v2521 = vadd.f32 %v2328, %v2520
        %v2522 = vpop.f32.mrb[0].mxu0
        %v2523 = vadd.f32 %v2330, %v2522
        %v2524 = vpop.f32.mrb[0].mxu0
        %v2525 = vadd.f32 %v2332, %v2524
        %v2526 = vpop.f32.mrb[0].mxu0
        %v2527 = vadd.f32 %v2334, %v2526
        %2528 = vdwg.mxu0
        %v2529 = vmul.f32 %v1985, 0.088388346
        %v2530 = vmul.f32 %v1987, 0.088388346
        %v2531 = vmul.f32 %v2371, 0.088388346
        %v2532 = vmul.f32 %v2373, 0.088388346
        %v2533 = vmul.f32 %v1989, 0.088388346
        %v2534 = vmul.f32 %v1991, 0.088388346
        %v2535 = vmul.f32 %v2375, 0.088388346
        %v2536 = vmul.f32 %v2377, 0.088388346
        %v2537 = vmul.f32 %v1995, 0.088388346
        %v2538 = vmul.f32 %v1997, 0.088388346
        %v2539 = vmul.f32 %v2381, 0.088388346
        %v2540 = vmul.f32 %v2383, 0.088388346
        %v2541 = vmul.f32 %v1999, 0.088388346
        %v2542 = vmul.f32 %v2001, 0.088388346
        %v2543 = vmul.f32 %v2385, 0.088388346
        %v2544 = vmul.f32 %v2387, 0.088388346
        %v2545 = vmul.f32 %v2005, 0.088388346
        %v2546 = vmul.f32 %v2007, 0.088388346
        %v2547 = vmul.f32 %v2391, 0.088388346
        %v2548 = vmul.f32 %v2393, 0.088388346
        %v2549 = vmul.f32 %v2009, 0.088388346
        %v2550 = vmul.f32 %v2011, 0.088388346
        %v2551 = vmul.f32 %v2395, 0.088388346
        %v2552 = vmul.f32 %v2397, 0.088388346
        %v2553 = vmul.f32 %v2015, 0.088388346
        %v2554 = vmul.f32 %v2017, 0.088388346
        %v2555 = vmul.f32 %v2401, 0.088388346
        %v2556 = vmul.f32 %v2403, 0.088388346
        %v2557 = vmul.f32 %v2019, 0.088388346
        %v2558 = vmul.f32 %v2021, 0.088388346
        %v2559 = vmul.f32 %v2405, 0.088388346
        %v2560 = vmul.f32 %v2407, 0.088388346
        %v2561 = vmul.f32 %v2025, 0.088388346
        %v2562 = vmul.f32 %v2027, 0.088388346
        %v2563 = vmul.f32 %v2411, 0.088388346
        %v2564 = vmul.f32 %v2413, 0.088388346
        %v2565 = vmul.f32 %v2029, 0.088388346
        %v2566 = vmul.f32 %v2031, 0.088388346
        %v2567 = vmul.f32 %v2415, 0.088388346
        %v2568 = vmul.f32 %v2417, 0.088388346
        %v2569 = vmul.f32 %v2035, 0.088388346
        %v2570 = vmul.f32 %v2037, 0.088388346
        %v2571 = vmul.f32 %v2421, 0.088388346
        %v2572 = vmul.f32 %v2423, 0.088388346
        %v2573 = vmul.f32 %v2039, 0.088388346
        %v2574 = vmul.f32 %v2041, 0.088388346
        %v2575 = vmul.f32 %v2425, 0.088388346
        %v2576 = vmul.f32 %v2427, 0.088388346
        %v2577 = vmul.f32 %v2045, 0.088388346
        %v2578 = vmul.f32 %v2047, 0.088388346
        %v2579 = vmul.f32 %v2431, 0.088388346
        %v2580 = vmul.f32 %v2433, 0.088388346
        %v2581 = vmul.f32 %v2049, 0.088388346
        %v2582 = vmul.f32 %v2051, 0.088388346
        %v2583 = vmul.f32 %v2435, 0.088388346
        %v2584 = vmul.f32 %v2437, 0.088388346
        %v2585 = vmul.f32 %v2055, 0.088388346
        %v2586 = vmul.f32 %v2057, 0.088388346
        %v2587 = vmul.f32 %v2441, 0.088388346
        %v2588 = vmul.f32 %v2443, 0.088388346
        %v2589 = vmul.f32 %v2059, 0.088388346
        %v2590 = vmul.f32 %v2061, 0.088388346
        %v2591 = vmul.f32 %v2445, 0.088388346
        %v2592 = vmul.f32 %v2447, 0.088388346
        %v2593 = vmul.f32 %v2065, 0.088388346
        %v2594 = vmul.f32 %v2067, 0.088388346
        %v2595 = vmul.f32 %v2451, 0.088388346
        %v2596 = vmul.f32 %v2453, 0.088388346
        %v2597 = vmul.f32 %v2069, 0.088388346
        %v2598 = vmul.f32 %v2071, 0.088388346
        %v2599 = vmul.f32 %v2455, 0.088388346
        %v2600 = vmul.f32 %v2457, 0.088388346
        %v2601 = vmul.f32 %v2075, 0.088388346
        %v2602 = vmul.f32 %v2077, 0.088388346
        %v2603 = vmul.f32 %v2461, 0.088388346
        %v2604 = vmul.f32 %v2463, 0.088388346
        %v2605 = vmul.f32 %v2079, 0.088388346
        %v2606 = vmul.f32 %v2081, 0.088388346
        %v2607 = vmul.f32 %v2465, 0.088388346
        %v2608 = vmul.f32 %v2467, 0.088388346
        %v2609 = vmul.f32 %v2085, 0.088388346
        %v2610 = vmul.f32 %v2087, 0.088388346
        %v2611 = vmul.f32 %v2471, 0.088388346
        %v2612 = vmul.f32 %v2473, 0.088388346
        %v2613 = vmul.f32 %v2089, 0.088388346
        %v2614 = vmul.f32 %v2091, 0.088388346
        %v2615 = vmul.f32 %v2475, 0.088388346
        %v2616 = vmul.f32 %v2477, 0.088388346
        %v2617 = vmul.f32 %v2095, 0.088388346
        %v2618 = vmul.f32 %v2097, 0.088388346
        %v2619 = vmul.f32 %v2481, 0.088388346
        %v2620 = vmul.f32 %v2483, 0.088388346
        %v2621 = vmul.f32 %v2099, 0.088388346
        %v2622 = vmul.f32 %v2101, 0.088388346
        %v2623 = vmul.f32 %v2485, 0.088388346
        %v2624 = vmul.f32 %v2487, 0.088388346
        %v2625 = vmul.f32 %v2105, 0.088388346
        %v2626 = vmul.f32 %v2107, 0.088388346
        %v2627 = vmul.f32 %v2491, 0.088388346
        %v2628 = vmul.f32 %v2493, 0.088388346
        %v2629 = vmul.f32 %v2109, 0.088388346
        %v2630 = vmul.f32 %v2111, 0.088388346
        %v2631 = vmul.f32 %v2495, 0.088388346
        %v2632 = vmul.f32 %v2497, 0.088388346
        %v2633 = vmul.f32 %v2115, 0.088388346
        %v2634 = vmul.f32 %v2117, 0.088388346
        %v2635 = vmul.f32 %v2501, 0.088388346
        %v2636 = vmul.f32 %v2503, 0.088388346
        %v2637 = vmul.f32 %v2119, 0.088388346
        %v2638 = vmul.f32 %v2121, 0.088388346
        %v2639 = vmul.f32 %v2505, 0.088388346
        %v2640 = vmul.f32 %v2507, 0.088388346
        %v2641 = vmul.f32 %v2125, 0.088388346
        %v2642 = vmul.f32 %v2127, 0.088388346
        %v2643 = vmul.f32 %v2511, 0.088388346
        %v2644 = vmul.f32 %v2513, 0.088388346
        %v2645 = vmul.f32 %v2129, 0.088388346
        %v2646 = vmul.f32 %v2131, 0.088388346
        %v2647 = vmul.f32 %v2515, 0.088388346
        %v2648 = vmul.f32 %v2517, 0.088388346
        %v2649 = vmul.f32 %v2135, 0.088388346
        %v2650 = vmul.f32 %v2137, 0.088388346
        %v2651 = vmul.f32 %v2521, 0.088388346
        %v2652 = vmul.f32 %v2523, 0.088388346
        %v2653 = vmul.f32 %v2139, 0.088388346
        %v2654 = vmul.f32 %v2141, 0.088388346
        %v2655 = vmul.f32 %v2525, 0.088388346
        %v2656 = vmul.f32 %v2527, 0.088388346
        %v2657 = vpack.c.bf16 %v2533, %v2529
        %v2658 = vpack.c.bf16 %v2534, %v2530
        %v2659 = vpack.c.bf16 %v2535, %v2531
        %v2660 = vpack.c.bf16 %v2536, %v2532
        %v2661 = vpack.c.bf16 %v2541, %v2537
        %v2662 = vpack.c.bf16 %v2542, %v2538
        %v2663 = vpack.c.bf16 %v2543, %v2539
        %v2664 = vpack.c.bf16 %v2544, %v2540
        %v2665 = vpack.c.bf16 %v2549, %v2545
        %v2666 = vpack.c.bf16 %v2550, %v2546
        %v2667 = vpack.c.bf16 %v2551, %v2547
        %v2668 = vpack.c.bf16 %v2552, %v2548
        %v2669 = vpack.c.bf16 %v2557, %v2553
        %v2670 = vpack.c.bf16 %v2558, %v2554
        %v2671 = vpack.c.bf16 %v2559, %v2555
        %v2672 = vpack.c.bf16 %v2560, %v2556
        %v2673 = vpack.c.bf16 %v2565, %v2561
        %v2674 = vpack.c.bf16 %v2566, %v2562
        %v2675 = vpack.c.bf16 %v2567, %v2563
        %v2676 = vpack.c.bf16 %v2568, %v2564
        %v2677 = vpack.c.bf16 %v2573, %v2569
        %v2678 = vpack.c.bf16 %v2574, %v2570
        %v2679 = vpack.c.bf16 %v2575, %v2571
        %v2680 = vpack.c.bf16 %v2576, %v2572
        %v2681 = vpack.c.bf16 %v2581, %v2577
        %v2682 = vpack.c.bf16 %v2582, %v2578
        %v2683 = vpack.c.bf16 %v2583, %v2579
        %v2684 = vpack.c.bf16 %v2584, %v2580
        %v2685 = vpack.c.bf16 %v2589, %v2585
        %v2686 = vpack.c.bf16 %v2590, %v2586
        %v2687 = vpack.c.bf16 %v2591, %v2587
        %v2688 = vpack.c.bf16 %v2592, %v2588
        %v2689 = vpack.c.bf16 %v2597, %v2593
        %v2690 = vpack.c.bf16 %v2598, %v2594
        %v2691 = vpack.c.bf16 %v2599, %v2595
        %v2692 = vpack.c.bf16 %v2600, %v2596
        %v2693 = vpack.c.bf16 %v2605, %v2601
        %v2694 = vpack.c.bf16 %v2606, %v2602
        %v2695 = vpack.c.bf16 %v2607, %v2603
        %v2696 = vpack.c.bf16 %v2608, %v2604
        %v2697 = vpack.c.bf16 %v2613, %v2609
        %v2698 = vpack.c.bf16 %v2614, %v2610
        %v2699 = vpack.c.bf16 %v2615, %v2611
        %v2700 = vpack.c.bf16 %v2616, %v2612
        %v2701 = vpack.c.bf16 %v2621, %v2617
        %v2702 = vpack.c.bf16 %v2622, %v2618
        %v2703 = vpack.c.bf16 %v2623, %v2619
        %v2704 = vpack.c.bf16 %v2624, %v2620
        %v2705 = vpack.c.bf16 %v2629, %v2625
        %v2706 = vpack.c.bf16 %v2630, %v2626
        %v2707 = vpack.c.bf16 %v2631, %v2627
        %v2708 = vpack.c.bf16 %v2632, %v2628
        %v2709 = vpack.c.bf16 %v2637, %v2633
        %v2710 = vpack.c.bf16 %v2638, %v2634
        %v2711 = vpack.c.bf16 %v2639, %v2635
        %v2712 = vpack.c.bf16 %v2640, %v2636
        %v2713 = vpack.c.bf16 %v2645, %v2641
        %v2714 = vpack.c.bf16 %v2646, %v2642
        %v2715 = vpack.c.bf16 %v2647, %v2643
        %v2716 = vpack.c.bf16 %v2648, %v2644
        %v2717 = vpack.c.bf16 %v2653, %v2649
        %v2718 = vpack.c.bf16 %v2654, %v2650
        %v2719 = vpack.c.bf16 %v2655, %v2651
        %v2720 = vpack.c.bf16 %v2656, %v2652
        %v2785 = vunpack.c.l.b16 %v2657
        %v2786 = vunpack.c.l.b16 %v2658
        %v2787 = vunpack.c.l.b16 %v2659
        %v2788 = vunpack.c.l.b16 %v2660
        %v2789 = vunpack.c.h.b16 %v2657
        %v2790 = vunpack.c.h.b16 %v2658
        %v2791 = vunpack.c.h.b16 %v2659
        %v2792 = vunpack.c.h.b16 %v2660
        %v2793 = vunpack.c.l.b16 %v2661
        %v2794 = vunpack.c.l.b16 %v2662
        %v2795 = vunpack.c.l.b16 %v2663
        %v2796 = vunpack.c.l.b16 %v2664
        %v2797 = vunpack.c.h.b16 %v2661
        %v2798 = vunpack.c.h.b16 %v2662
        %v2799 = vunpack.c.h.b16 %v2663
        %v2800 = vunpack.c.h.b16 %v2664
        %v2801 = vunpack.c.l.b16 %v2665
        %v2802 = vunpack.c.l.b16 %v2666
        %v2803 = vunpack.c.l.b16 %v2667
        %v2804 = vunpack.c.l.b16 %v2668
        %v2805 = vunpack.c.h.b16 %v2665
        %v2806 = vunpack.c.h.b16 %v2666
        %v2807 = vunpack.c.h.b16 %v2667
        %v2808 = vunpack.c.h.b16 %v2668
        %v2809 = vunpack.c.l.b16 %v2669
        %v2810 = vunpack.c.l.b16 %v2670
        %v2811 = vunpack.c.l.b16 %v2671
        %v2812 = vunpack.c.l.b16 %v2672
        %v2813 = vunpack.c.h.b16 %v2669
        %v2814 = vunpack.c.h.b16 %v2670
        %v2815 = vunpack.c.h.b16 %v2671
        %v2816 = vunpack.c.h.b16 %v2672
        %v2817 = vunpack.c.l.b16 %v2673
        %v2818 = vunpack.c.l.b16 %v2674
        %v2819 = vunpack.c.l.b16 %v2675
        %v2820 = vunpack.c.l.b16 %v2676
        %v2821 = vunpack.c.h.b16 %v2673
        %v2822 = vunpack.c.h.b16 %v2674
        %v2823 = vunpack.c.h.b16 %v2675
        %v2824 = vunpack.c.h.b16 %v2676
        %v2825 = vunpack.c.l.b16 %v2677
        %v2826 = vunpack.c.l.b16 %v2678
        %v2827 = vunpack.c.l.b16 %v2679
        %v2828 = vunpack.c.l.b16 %v2680
        %v2829 = vunpack.c.h.b16 %v2677
        %v2830 = vunpack.c.h.b16 %v2678
        %v2831 = vunpack.c.h.b16 %v2679
        %v2832 = vunpack.c.h.b16 %v2680
        %v2833 = vunpack.c.l.b16 %v2681
        %v2834 = vunpack.c.l.b16 %v2682
        %v2835 = vunpack.c.l.b16 %v2683
        %v2836 = vunpack.c.l.b16 %v2684
        %v2837 = vunpack.c.h.b16 %v2681
        %v2838 = vunpack.c.h.b16 %v2682
        %v2839 = vunpack.c.h.b16 %v2683
        %v2840 = vunpack.c.h.b16 %v2684
        %v2841 = vunpack.c.l.b16 %v2685
        %v2842 = vunpack.c.l.b16 %v2686
        %v2843 = vunpack.c.l.b16 %v2687
        %v2844 = vunpack.c.l.b16 %v2688
        %v2845 = vunpack.c.h.b16 %v2685
        %v2846 = vunpack.c.h.b16 %v2686
        %v2847 = vunpack.c.h.b16 %v2687
        %v2848 = vunpack.c.h.b16 %v2688
        %v2849 = vunpack.c.l.b16 %v2689
        %v2850 = vunpack.c.l.b16 %v2690
        %v2851 = vunpack.c.l.b16 %v2691
        %v2852 = vunpack.c.l.b16 %v2692
        %v2853 = vunpack.c.h.b16 %v2689
        %v2854 = vunpack.c.h.b16 %v2690
        %v2855 = vunpack.c.h.b16 %v2691
        %v2856 = vunpack.c.h.b16 %v2692
        %v2857 = vunpack.c.l.b16 %v2693
        %v2858 = vunpack.c.l.b16 %v2694
        %v2859 = vunpack.c.l.b16 %v2695
        %v2860 = vunpack.c.l.b16 %v2696
        %v2861 = vunpack.c.h.b16 %v2693
        %v2862 = vunpack.c.h.b16 %v2694
        %v2863 = vunpack.c.h.b16 %v2695
        %v2864 = vunpack.c.h.b16 %v2696
        %v2865 = vunpack.c.l.b16 %v2697
        %v2866 = vunpack.c.l.b16 %v2698
        %v2867 = vunpack.c.l.b16 %v2699
        %v2868 = vunpack.c.l.b16 %v2700
        %v2869 = vunpack.c.h.b16 %v2697
        %v2870 = vunpack.c.h.b16 %v2698
        %v2871 = vunpack.c.h.b16 %v2699
        %v2872 = vunpack.c.h.b16 %v2700
        %v2873 = vunpack.c.l.b16 %v2701
        %v2874 = vunpack.c.l.b16 %v2702
        %v2875 = vunpack.c.l.b16 %v2703
        %v2876 = vunpack.c.l.b16 %v2704
        %v2877 = vunpack.c.h.b16 %v2701
        %v2878 = vunpack.c.h.b16 %v2702
        %v2879 = vunpack.c.h.b16 %v2703
        %v2880 = vunpack.c.h.b16 %v2704
        %v2881 = vunpack.c.l.b16 %v2705
        %v2882 = vunpack.c.l.b16 %v2706
        %v2883 = vunpack.c.l.b16 %v2707
        %v2884 = vunpack.c.l.b16 %v2708
        %v2885 = vunpack.c.h.b16 %v2705
        %v2886 = vunpack.c.h.b16 %v2706
        %v2887 = vunpack.c.h.b16 %v2707
        %v2888 = vunpack.c.h.b16 %v2708
        %v2889 = vunpack.c.l.b16 %v2709
        %v2890 = vunpack.c.l.b16 %v2710
        %v2891 = vunpack.c.l.b16 %v2711
        %v2892 = vunpack.c.l.b16 %v2712
        %v2893 = vunpack.c.h.b16 %v2709
        %v2894 = vunpack.c.h.b16 %v2710
        %v2895 = vunpack.c.h.b16 %v2711
        %v2896 = vunpack.c.h.b16 %v2712
        %v2897 = vunpack.c.l.b16 %v2713
        %v2898 = vunpack.c.l.b16 %v2714
        %v2899 = vunpack.c.l.b16 %v2715
        %v2900 = vunpack.c.l.b16 %v2716
        %v2901 = vunpack.c.h.b16 %v2713
        %v2902 = vunpack.c.h.b16 %v2714
        %v2903 = vunpack.c.h.b16 %v2715
        %v2904 = vunpack.c.h.b16 %v2716
        %v2905 = vunpack.c.l.b16 %v2717
        %v2906 = vunpack.c.l.b16 %v2718
        %v2907 = vunpack.c.l.b16 %v2719
        %v2908 = vunpack.c.l.b16 %v2720
        %v2909 = vunpack.c.h.b16 %v2717
        %v2910 = vunpack.c.h.b16 %v2718
        %v2911 = vunpack.c.h.b16 %v2719
        %v2912 = vunpack.c.h.b16 %v2720
        %v2913 = vpack.c.b16 %v2786, %v2785
        %v2914 = vpack.c.b16 %v2788, %v2787
        %v2915 = vpack.c.b16 %v2790, %v2789
        %v2916 = vpack.c.b16 %v2792, %v2791
        %v2917 = vpack.c.b16 %v2794, %v2793
        %v2918 = vpack.c.b16 %v2796, %v2795
        %v2919 = vpack.c.b16 %v2798, %v2797
        %v2920 = vpack.c.b16 %v2800, %v2799
        %v2921 = vpack.c.b16 %v2802, %v2801
        %v2922 = vpack.c.b16 %v2804, %v2803
        %v2923 = vpack.c.b16 %v2806, %v2805
        %v2924 = vpack.c.b16 %v2808, %v2807
        %v2925 = vpack.c.b16 %v2810, %v2809
        %v2926 = vpack.c.b16 %v2812, %v2811
        %v2927 = vpack.c.b16 %v2814, %v2813
        %v2928 = vpack.c.b16 %v2816, %v2815
        %v2929 = vpack.c.b16 %v2818, %v2817
        %v2930 = vpack.c.b16 %v2820, %v2819
        %v2931 = vpack.c.b16 %v2822, %v2821
        %v2932 = vpack.c.b16 %v2824, %v2823
        %v2933 = vpack.c.b16 %v2826, %v2825
        %v2934 = vpack.c.b16 %v2828, %v2827
        %v2935 = vpack.c.b16 %v2830, %v2829
        %v2936 = vpack.c.b16 %v2832, %v2831
        %v2937 = vpack.c.b16 %v2834, %v2833
        %v2938 = vpack.c.b16 %v2836, %v2835
        %v2939 = vpack.c.b16 %v2838, %v2837
        %v2940 = vpack.c.b16 %v2840, %v2839
        %v2941 = vpack.c.b16 %v2842, %v2841
        %v2942 = vpack.c.b16 %v2844, %v2843
        %v2943 = vpack.c.b16 %v2846, %v2845
        %v2944 = vpack.c.b16 %v2848, %v2847
        %v2945 = vpack.c.b16 %v2850, %v2849
        %v2946 = vpack.c.b16 %v2852, %v2851
        %v2947 = vpack.c.b16 %v2854, %v2853
        %v2948 = vpack.c.b16 %v2856, %v2855
        %v2949 = vpack.c.b16 %v2858, %v2857
        %v2950 = vpack.c.b16 %v2860, %v2859
        %v2951 = vpack.c.b16 %v2862, %v2861
        %v2952 = vpack.c.b16 %v2864, %v2863
        %v2953 = vpack.c.b16 %v2866, %v2865
        %v2954 = vpack.c.b16 %v2868, %v2867
        %v2955 = vpack.c.b16 %v2870, %v2869
        %v2956 = vpack.c.b16 %v2872, %v2871
        %v2957 = vpack.c.b16 %v2874, %v2873
        %v2958 = vpack.c.b16 %v2876, %v2875
        %v2959 = vpack.c.b16 %v2878, %v2877
        %v2960 = vpack.c.b16 %v2880, %v2879
        %v2961 = vpack.c.b16 %v2882, %v2881
        %v2962 = vpack.c.b16 %v2884, %v2883
        %v2963 = vpack.c.b16 %v2886, %v2885
        %v2964 = vpack.c.b16 %v2888, %v2887
        %v2965 = vpack.c.b16 %v2890, %v2889
        %v2966 = vpack.c.b16 %v2892, %v2891
        %v2967 = vpack.c.b16 %v2894, %v2893
        %v2968 = vpack.c.b16 %v2896, %v2895
        %v2969 = vpack.c.b16 %v2898, %v2897
        %v2970 = vpack.c.b16 %v2900, %v2899
        %v2971 = vpack.c.b16 %v2902, %v2901
        %v2972 = vpack.c.b16 %v2904, %v2903
        %v2973 = vpack.c.b16 %v2906, %v2905
        %v2974 = vpack.c.b16 %v2908, %v2907
        %v2975 = vpack.c.b16 %v2910, %v2909
        %v2976 = vpack.c.b16 %v2912, %v2911
        %3041 = vst [vmem:[%s562] sm:$0xff] %v2913
        %3042 = vst [vmem:[%s562 + $0x8] sm:$0xff] %v2914
        %3043 = vst [vmem:[%s562 + $0x10] sm:$0xff] %v2915
        %3044 = vst [vmem:[%s562 + $0x18] sm:$0xff] %v2916
        %3045 = vst [vmem:[%s562 + $0x20] sm:$0xff] %v2917
        %3046 = vst [vmem:[%s562 + $0x28] sm:$0xff] %v2918
        %3047 = vst [vmem:[%s562 + $0x30] sm:$0xff] %v2919
        %3048 = vst [vmem:[%s562 + $0x38] sm:$0xff] %v2920
        %3049 = vst [vmem:[%s562 + $0x40] sm:$0xff] %v2921
        %3050 = vst [vmem:[%s562 + $0x48] sm:$0xff] %v2922
        %3051 = vst [vmem:[%s562 + $0x50] sm:$0xff] %v2923
        %3052 = vst [vmem:[%s562 + $0x58] sm:$0xff] %v2924
        %3053 = vst [vmem:[%s562 + $0x60] sm:$0xff] %v2925
        %3054 = vst [vmem:[%s562 + $0x68] sm:$0xff] %v2926
        %3055 = vst [vmem:[%s562 + $0x70] sm:$0xff] %v2927
        %3056 = vst [vmem:[%s562 + $0x78] sm:$0xff] %v2928
        %3057 = vst [vmem:[%s562 + $0x80] sm:$0xff] %v2929
        %3058 = vst [vmem:[%s562 + $0x88] sm:$0xff] %v2930
        %3059 = vst [vmem:[%s562 + $0x90] sm:$0xff] %v2931
        %3060 = vst [vmem:[%s562 + $0x98] sm:$0xff] %v2932
        %3061 = vst [vmem:[%s562 + $0xa0] sm:$0xff] %v2933
        %3062 = vst [vmem:[%s562 + $0xa8] sm:$0xff] %v2934
        %3063 = vst [vmem:[%s562 + $0xb0] sm:$0xff] %v2935
        %3064 = vst [vmem:[%s562 + $0xb8] sm:$0xff] %v2936
        %3065 = vst [vmem:[%s562 + $0xc0] sm:$0xff] %v2937
        %3066 = vst [vmem:[%s562 + $0xc8] sm:$0xff] %v2938
        %3067 = vst [vmem:[%s562 + $0xd0] sm:$0xff] %v2939
        %3068 = vst [vmem:[%s562 + $0xd8] sm:$0xff] %v2940
        %3069 = vst [vmem:[%s562 + $0xe0] sm:$0xff] %v2941
        %3070 = vst [vmem:[%s562 + $0xe8] sm:$0xff] %v2942
        %3071 = vst [vmem:[%s562 + $0xf0] sm:$0xff] %v2943
        %3072 = vst [vmem:[%s562 + $0xf8] sm:$0xff] %v2944
        %3073 = vst [vmem:[%s562 + $0x100] sm:$0xff] %v2945
        %3074 = vst [vmem:[%s562 + $0x108] sm:$0xff] %v2946
        %3075 = vst [vmem:[%s562 + $0x110] sm:$0xff] %v2947
        %3076 = vst [vmem:[%s562 + $0x118] sm:$0xff] %v2948
        %3077 = vst [vmem:[%s562 + $0x120] sm:$0xff] %v2949
        %3078 = vst [vmem:[%s562 + $0x128] sm:$0xff] %v2950
        %3079 = vst [vmem:[%s562 + $0x130] sm:$0xff] %v2951
        %3080 = vst [vmem:[%s562 + $0x138] sm:$0xff] %v2952
        %3081 = vst [vmem:[%s562 + $0x140] sm:$0xff] %v2953
        %3082 = vst [vmem:[%s562 + $0x148] sm:$0xff] %v2954
        %3083 = vst [vmem:[%s562 + $0x150] sm:$0xff] %v2955
        %3084 = vst [vmem:[%s562 + $0x158] sm:$0xff] %v2956
        %3085 = vst [vmem:[%s562 + $0x160] sm:$0xff] %v2957
        %3086 = vst [vmem:[%s562 + $0x168] sm:$0xff] %v2958
        %3087 = vst [vmem:[%s562 + $0x170] sm:$0xff] %v2959
        %3088 = vst [vmem:[%s562 + $0x178] sm:$0xff] %v2960
        %3089 = vst [vmem:[%s562 + $0x180] sm:$0xff] %v2961
        %3090 = vst [vmem:[%s562 + $0x188] sm:$0xff] %v2962
        %3091 = vst [vmem:[%s562 + $0x190] sm:$0xff] %v2963
        %3092 = vst [vmem:[%s562 + $0x198] sm:$0xff] %v2964
        %3093 = vst [vmem:[%s562 + $0x1a0] sm:$0xff] %v2965
        %3094 = vst [vmem:[%s562 + $0x1a8] sm:$0xff] %v2966
        %3095 = vst [vmem:[%s562 + $0x1b0] sm:$0xff] %v2967
        %3096 = vst [vmem:[%s562 + $0x1b8] sm:$0xff] %v2968
        %3097 = vst [vmem:[%s562 + $0x1c0] sm:$0xff] %v2969
        %3098 = vst [vmem:[%s562 + $0x1c8] sm:$0xff] %v2970
        %3099 = vst [vmem:[%s562 + $0x1d0] sm:$0xff] %v2971
        %3100 = vst [vmem:[%s562 + $0x1d8] sm:$0xff] %v2972
        %3101 = vst [vmem:[%s562 + $0x1e0] sm:$0xff] %v2973
        %3102 = vst [vmem:[%s562 + $0x1e8] sm:$0xff] %v2974
        %3103 = vst [vmem:[%s562 + $0x1f0] sm:$0xff] %v2975
        %3104 = vst [vmem:[%s562 + $0x1f8] sm:$0xff] %v2976
        %v3105 = vld [vmem:[%s497] sm:$0xff]
        %v3106 = vld [vmem:[%s497 + $0x8] sm:$0xff]
        %v3107 = vld [vmem:[%s497 + $0x10] sm:$0xff]
        %v3108 = vld [vmem:[%s497 + $0x18] sm:$0xff]
        %v3109 = vld [vmem:[%s497 + $0x20] sm:$0xff]
        %v3110 = vld [vmem:[%s497 + $0x28] sm:$0xff]
        %v3111 = vld [vmem:[%s497 + $0x30] sm:$0xff]
        %v3112 = vld [vmem:[%s497 + $0x38] sm:$0xff]
        %v3113 = vld [vmem:[%s497 + $0x40] sm:$0xff]
        %v3114 = vld [vmem:[%s497 + $0x48] sm:$0xff]
        %v3115 = vld [vmem:[%s497 + $0x50] sm:$0xff]
        %v3116 = vld [vmem:[%s497 + $0x58] sm:$0xff]
        %v3117 = vld [vmem:[%s497 + $0x60] sm:$0xff]
        %v3118 = vld [vmem:[%s497 + $0x68] sm:$0xff]
        %v3119 = vld [vmem:[%s497 + $0x70] sm:$0xff]
        %v3120 = vld [vmem:[%s497 + $0x78] sm:$0xff]
        %v3121 = vld [vmem:[%s497 + $0x80] sm:$0xff]
        %v3122 = vld [vmem:[%s497 + $0x88] sm:$0xff]
        %v3123 = vld [vmem:[%s497 + $0x90] sm:$0xff]
        %v3124 = vld [vmem:[%s497 + $0x98] sm:$0xff]
        %v3125 = vld [vmem:[%s497 + $0xa0] sm:$0xff]
        %v3126 = vld [vmem:[%s497 + $0xa8] sm:$0xff]
        %v3127 = vld [vmem:[%s497 + $0xb0] sm:$0xff]
        %v3128 = vld [vmem:[%s497 + $0xb8] sm:$0xff]
        %v3129 = vld [vmem:[%s497 + $0xc0] sm:$0xff]
        %v3130 = vld [vmem:[%s497 + $0xc8] sm:$0xff]
        %v3131 = vld [vmem:[%s497 + $0xd0] sm:$0xff]
        %v3132 = vld [vmem:[%s497 + $0xd8] sm:$0xff]
        %v3133 = vld [vmem:[%s497 + $0xe0] sm:$0xff]
        %v3134 = vld [vmem:[%s497 + $0xe8] sm:$0xff]
        %v3135 = vld [vmem:[%s497 + $0xf0] sm:$0xff]
        %v3136 = vld [vmem:[%s497 + $0xf8] sm:$0xff]
        %v3137 = vld [vmem:[%s497 + $0x100] sm:$0xff]
        %v3138 = vld [vmem:[%s497 + $0x108] sm:$0xff]
        %v3139 = vld [vmem:[%s497 + $0x110] sm:$0xff]
        %v3140 = vld [vmem:[%s497 + $0x118] sm:$0xff]
        %v3141 = vld [vmem:[%s497 + $0x120] sm:$0xff]
        %v3142 = vld [vmem:[%s497 + $0x128] sm:$0xff]
        %v3143 = vld [vmem:[%s497 + $0x130] sm:$0xff]
        %v3144 = vld [vmem:[%s497 + $0x138] sm:$0xff]
        %v3145 = vld [vmem:[%s497 + $0x140] sm:$0xff]
        %v3146 = vld [vmem:[%s497 + $0x148] sm:$0xff]
        %v3147 = vld [vmem:[%s497 + $0x150] sm:$0xff]
        %v3148 = vld [vmem:[%s497 + $0x158] sm:$0xff]
        %v3149 = vld [vmem:[%s497 + $0x160] sm:$0xff]
        %v3150 = vld [vmem:[%s497 + $0x168] sm:$0xff]
        %v3151 = vld [vmem:[%s497 + $0x170] sm:$0xff]
        %v3152 = vld [vmem:[%s497 + $0x178] sm:$0xff]
        %v3153 = vld [vmem:[%s497 + $0x180] sm:$0xff]
        %v3154 = vld [vmem:[%s497 + $0x188] sm:$0xff]
        %v3155 = vld [vmem:[%s497 + $0x190] sm:$0xff]
        %v3156 = vld [vmem:[%s497 + $0x198] sm:$0xff]
        %v3157 = vld [vmem:[%s497 + $0x1a0] sm:$0xff]
        %v3158 = vld [vmem:[%s497 + $0x1a8] sm:$0xff]
        %v3159 = vld [vmem:[%s497 + $0x1b0] sm:$0xff]
        %v3160 = vld [vmem:[%s497 + $0x1b8] sm:$0xff]
        %v3161 = vld [vmem:[%s497 + $0x1c0] sm:$0xff]
        %v3162 = vld [vmem:[%s497 + $0x1c8] sm:$0xff]
        %v3163 = vld [vmem:[%s497 + $0x1d0] sm:$0xff]
        %v3164 = vld [vmem:[%s497 + $0x1d8] sm:$0xff]
        %v3165 = vld [vmem:[%s497 + $0x1e0] sm:$0xff]
        %v3166 = vld [vmem:[%s497 + $0x1e8] sm:$0xff]
        %v3167 = vld [vmem:[%s497 + $0x1f0] sm:$0xff]
        %v3168 = vld [vmem:[%s497 + $0x1f8] sm:$0xff]
        %v3169 = vld [vmem:[#allocation10] sm:$0xff]
        %v3170 = vld [vmem:[#allocation10 + $0x8] sm:$0xff]
        %v3171 = vld [vmem:[#allocation10 + $0x10] sm:$0xff]
        %v3172 = vld [vmem:[#allocation10 + $0x18] sm:$0xff]
        %v3173 = vld [vmem:[#allocation10 + $0x20] sm:$0xff]
        %v3174 = vld [vmem:[#allocation10 + $0x28] sm:$0xff]
        %v3175 = vld [vmem:[#allocation10 + $0x30] sm:$0xff]
        %v3176 = vld [vmem:[#allocation10 + $0x38] sm:$0xff]
        %v3177 = vld [vmem:[#allocation10 + $0x40] sm:$0xff]
        %v3178 = vld [vmem:[#allocation10 + $0x48] sm:$0xff]
        %v3179 = vld [vmem:[#allocation10 + $0x50] sm:$0xff]
        %v3180 = vld [vmem:[#allocation10 + $0x58] sm:$0xff]
        %v3181 = vld [vmem:[#allocation10 + $0x60] sm:$0xff]
        %v3182 = vld [vmem:[#allocation10 + $0x68] sm:$0xff]
        %v3183 = vld [vmem:[#allocation10 + $0x70] sm:$0xff]
        %v3184 = vld [vmem:[#allocation10 + $0x78] sm:$0xff]
        %v3185 = vld [vmem:[#allocation10 + $0x80] sm:$0xff]
        %v3186 = vld [vmem:[#allocation10 + $0x88] sm:$0xff]
        %v3187 = vld [vmem:[#allocation10 + $0x90] sm:$0xff]
        %v3188 = vld [vmem:[#allocation10 + $0x98] sm:$0xff]
        %v3189 = vld [vmem:[#allocation10 + $0xa0] sm:$0xff]
        %v3190 = vld [vmem:[#allocation10 + $0xa8] sm:$0xff]
        %v3191 = vld [vmem:[#allocation10 + $0xb0] sm:$0xff]
        %v3192 = vld [vmem:[#allocation10 + $0xb8] sm:$0xff]
        %v3193 = vld [vmem:[#allocation10 + $0xc0] sm:$0xff]
        %v3194 = vld [vmem:[#allocation10 + $0xc8] sm:$0xff]
        %v3195 = vld [vmem:[#allocation10 + $0xd0] sm:$0xff]
        %v3196 = vld [vmem:[#allocation10 + $0xd8] sm:$0xff]
        %v3197 = vld [vmem:[#allocation10 + $0xe0] sm:$0xff]
        %v3198 = vld [vmem:[#allocation10 + $0xe8] sm:$0xff]
        %v3199 = vld [vmem:[#allocation10 + $0xf0] sm:$0xff]
        %v3200 = vld [vmem:[#allocation10 + $0xf8] sm:$0xff]
        %v3201 = vld [vmem:[#allocation10 + $0x100] sm:$0xff]
        %v3202 = vld [vmem:[#allocation10 + $0x108] sm:$0xff]
        %v3203 = vld [vmem:[#allocation10 + $0x110] sm:$0xff]
        %v3204 = vld [vmem:[#allocation10 + $0x118] sm:$0xff]
        %v3205 = vld [vmem:[#allocation10 + $0x120] sm:$0xff]
        %v3206 = vld [vmem:[#allocation10 + $0x128] sm:$0xff]
        %v3207 = vld [vmem:[#allocation10 + $0x130] sm:$0xff]
        %v3208 = vld [vmem:[#allocation10 + $0x138] sm:$0xff]
        %v3209 = vld [vmem:[#allocation10 + $0x140] sm:$0xff]
        %v3210 = vld [vmem:[#allocation10 + $0x148] sm:$0xff]
        %v3211 = vld [vmem:[#allocation10 + $0x150] sm:$0xff]
        %v3212 = vld [vmem:[#allocation10 + $0x158] sm:$0xff]
        %v3213 = vld [vmem:[#allocation10 + $0x160] sm:$0xff]
        %v3214 = vld [vmem:[#allocation10 + $0x168] sm:$0xff]
        %v3215 = vld [vmem:[#allocation10 + $0x170] sm:$0xff]
        %v3216 = vld [vmem:[#allocation10 + $0x178] sm:$0xff]
        %v3217 = vld [vmem:[#allocation10 + $0x180] sm:$0xff]
        %v3218 = vld [vmem:[#allocation10 + $0x188] sm:$0xff]
        %v3219 = vld [vmem:[#allocation10 + $0x190] sm:$0xff]
        %v3220 = vld [vmem:[#allocation10 + $0x198] sm:$0xff]
        %v3221 = vld [vmem:[#allocation10 + $0x1a0] sm:$0xff]
        %v3222 = vld [vmem:[#allocation10 + $0x1a8] sm:$0xff]
        %v3223 = vld [vmem:[#allocation10 + $0x1b0] sm:$0xff]
        %v3224 = vld [vmem:[#allocation10 + $0x1b8] sm:$0xff]
        %v3225 = vld [vmem:[#allocation10 + $0x1c0] sm:$0xff]
        %v3226 = vld [vmem:[#allocation10 + $0x1c8] sm:$0xff]
        %v3227 = vld [vmem:[#allocation10 + $0x1d0] sm:$0xff]
        %v3228 = vld [vmem:[#allocation10 + $0x1d8] sm:$0xff]
        %v3229 = vld [vmem:[#allocation10 + $0x1e0] sm:$0xff]
        %v3230 = vld [vmem:[#allocation10 + $0x1e8] sm:$0xff]
        %v3231 = vld [vmem:[#allocation10 + $0x1f0] sm:$0xff]
        %v3232 = vld [vmem:[#allocation10 + $0x1f8] sm:$0xff]
        %v3233 = vld [vmem:[#allocation10 + $0x200] sm:$0xff]
        %v3234 = vld [vmem:[#allocation10 + $0x208] sm:$0xff]
        %v3235 = vld [vmem:[#allocation10 + $0x210] sm:$0xff]
        %v3236 = vld [vmem:[#allocation10 + $0x218] sm:$0xff]
        %v3237 = vld [vmem:[#allocation10 + $0x220] sm:$0xff]
        %v3238 = vld [vmem:[#allocation10 + $0x228] sm:$0xff]
        %v3239 = vld [vmem:[#allocation10 + $0x230] sm:$0xff]
        %v3240 = vld [vmem:[#allocation10 + $0x238] sm:$0xff]
        %v3241 = vld [vmem:[#allocation10 + $0x240] sm:$0xff]
        %v3242 = vld [vmem:[#allocation10 + $0x248] sm:$0xff]
        %v3243 = vld [vmem:[#allocation10 + $0x250] sm:$0xff]
        %v3244 = vld [vmem:[#allocation10 + $0x258] sm:$0xff]
        %v3245 = vld [vmem:[#allocation10 + $0x260] sm:$0xff]
        %v3246 = vld [vmem:[#allocation10 + $0x268] sm:$0xff]
        %v3247 = vld [vmem:[#allocation10 + $0x270] sm:$0xff]
        %v3248 = vld [vmem:[#allocation10 + $0x278] sm:$0xff]
        %v3249 = vld [vmem:[#allocation10 + $0x280] sm:$0xff]
        %v3250 = vld [vmem:[#allocation10 + $0x288] sm:$0xff]
        %v3251 = vld [vmem:[#allocation10 + $0x290] sm:$0xff]
        %v3252 = vld [vmem:[#allocation10 + $0x298] sm:$0xff]
        %v3253 = vld [vmem:[#allocation10 + $0x2a0] sm:$0xff]
        %v3254 = vld [vmem:[#allocation10 + $0x2a8] sm:$0xff]
        %v3255 = vld [vmem:[#allocation10 + $0x2b0] sm:$0xff]
        %v3256 = vld [vmem:[#allocation10 + $0x2b8] sm:$0xff]
        %v3257 = vld [vmem:[#allocation10 + $0x2c0] sm:$0xff]
        %v3258 = vld [vmem:[#allocation10 + $0x2c8] sm:$0xff]
        %v3259 = vld [vmem:[#allocation10 + $0x2d0] sm:$0xff]
        %v3260 = vld [vmem:[#allocation10 + $0x2d8] sm:$0xff]
        %v3261 = vld [vmem:[#allocation10 + $0x2e0] sm:$0xff]
        %v3262 = vld [vmem:[#allocation10 + $0x2e8] sm:$0xff]
        %v3263 = vld [vmem:[#allocation10 + $0x2f0] sm:$0xff]
        %v3264 = vld [vmem:[#allocation10 + $0x2f8] sm:$0xff]
        %v3265 = vld [vmem:[#allocation10 + $0x300] sm:$0xff]
        %v3266 = vld [vmem:[#allocation10 + $0x308] sm:$0xff]
        %v3267 = vld [vmem:[#allocation10 + $0x310] sm:$0xff]
        %v3268 = vld [vmem:[#allocation10 + $0x318] sm:$0xff]
        %v3269 = vld [vmem:[#allocation10 + $0x320] sm:$0xff]
        %v3270 = vld [vmem:[#allocation10 + $0x328] sm:$0xff]
        %v3271 = vld [vmem:[#allocation10 + $0x330] sm:$0xff]
        %v3272 = vld [vmem:[#allocation10 + $0x338] sm:$0xff]
        %v3273 = vld [vmem:[#allocation10 + $0x340] sm:$0xff]
        %v3274 = vld [vmem:[#allocation10 + $0x348] sm:$0xff]
        %v3275 = vld [vmem:[#allocation10 + $0x350] sm:$0xff]
        %v3276 = vld [vmem:[#allocation10 + $0x358] sm:$0xff]
        %v3277 = vld [vmem:[#allocation10 + $0x360] sm:$0xff]
        %v3278 = vld [vmem:[#allocation10 + $0x368] sm:$0xff]
        %v3279 = vld [vmem:[#allocation10 + $0x370] sm:$0xff]
        %v3280 = vld [vmem:[#allocation10 + $0x378] sm:$0xff]
        %v3281 = vld [vmem:[#allocation10 + $0x380] sm:$0xff]
        %v3282 = vld [vmem:[#allocation10 + $0x388] sm:$0xff]
        %v3283 = vld [vmem:[#allocation10 + $0x390] sm:$0xff]
        %v3284 = vld [vmem:[#allocation10 + $0x398] sm:$0xff]
        %v3285 = vld [vmem:[#allocation10 + $0x3a0] sm:$0xff]
        %v3286 = vld [vmem:[#allocation10 + $0x3a8] sm:$0xff]
        %v3287 = vld [vmem:[#allocation10 + $0x3b0] sm:$0xff]
        %v3288 = vld [vmem:[#allocation10 + $0x3b8] sm:$0xff]
        %v3289 = vld [vmem:[#allocation10 + $0x3c0] sm:$0xff]
        %v3290 = vld [vmem:[#allocation10 + $0x3c8] sm:$0xff]
        %v3291 = vld [vmem:[#allocation10 + $0x3d0] sm:$0xff]
        %v3292 = vld [vmem:[#allocation10 + $0x3d8] sm:$0xff]
        %v3293 = vld [vmem:[#allocation10 + $0x3e0] sm:$0xff]
        %v3294 = vld [vmem:[#allocation10 + $0x3e8] sm:$0xff]
        %v3295 = vld [vmem:[#allocation10 + $0x3f0] sm:$0xff]
        %v3296 = vld [vmem:[#allocation10 + $0x3f8] sm:$0xff]
        %v3297 = vld [vmem:[%s6] sm:$0xf]
        %v3299 = vlaneseq
        %v3300 = vshrl.u32 %v3299, 7
        %v3301 = vsub.s32 0, %v3300
        %v3302 = vrot.slane %v3297, %v3301
        %v3303 = vlaneseq
        %v3304 = vshrl.u32 %v3303, 7
        %v3305 = vsub.s32 1, %v3304
        %v3306 = vrot.slane %v3297, %v3305
        %v3307 = vlaneseq
        %v3308 = vshrl.u32 %v3307, 7
        %v3309 = vsub.s32 2, %v3308
        %v3310 = vrot.slane %v3297, %v3309
        %v3311 = vlaneseq
        %v3312 = vshrl.u32 %v3311, 7
        %v3313 = vsub.s32 3, %v3312
        %v3314 = vrot.slane %v3297, %v3313
        %v3383 = vunpack.c.l.b16 %v3105
        %v3384 = vunpack.c.h.b16 %v3105
        %v3385 = vunpack.c.l.b16 %v3106
        %v3386 = vunpack.c.h.b16 %v3106
        %v3387 = vunpack.c.l.b16 %v3107
        %v3388 = vunpack.c.h.b16 %v3107
        %v3389 = vunpack.c.l.b16 %v3108
        %v3390 = vunpack.c.h.b16 %v3108
        %v3391 = vunpack.c.l.b16 %v3109
        %v3392 = vunpack.c.h.b16 %v3109
        %v3393 = vunpack.c.l.b16 %v3110
        %v3394 = vunpack.c.h.b16 %v3110
        %v3395 = vunpack.c.l.b16 %v3111
        %v3396 = vunpack.c.h.b16 %v3111
        %v3397 = vunpack.c.l.b16 %v3112
        %v3398 = vunpack.c.h.b16 %v3112
        %v3399 = vunpack.c.l.b16 %v3113
        %v3400 = vunpack.c.h.b16 %v3113
        %v3401 = vunpack.c.l.b16 %v3114
        %v3402 = vunpack.c.h.b16 %v3114
        %v3403 = vunpack.c.l.b16 %v3115
        %v3404 = vunpack.c.h.b16 %v3115
        %v3405 = vunpack.c.l.b16 %v3116
        %v3406 = vunpack.c.h.b16 %v3116
        %v3407 = vunpack.c.l.b16 %v3117
        %v3408 = vunpack.c.h.b16 %v3117
        %v3409 = vunpack.c.l.b16 %v3118
        %v3410 = vunpack.c.h.b16 %v3118
        %v3411 = vunpack.c.l.b16 %v3119
        %v3412 = vunpack.c.h.b16 %v3119
        %v3413 = vunpack.c.l.b16 %v3120
        %v3414 = vunpack.c.h.b16 %v3120
        %v3415 = vunpack.c.l.b16 %v3121
        %v3416 = vunpack.c.h.b16 %v3121
        %v3417 = vunpack.c.l.b16 %v3122
        %v3418 = vunpack.c.h.b16 %v3122
        %v3419 = vunpack.c.l.b16 %v3123
        %v3420 = vunpack.c.h.b16 %v3123
        %v3421 = vunpack.c.l.b16 %v3124
        %v3422 = vunpack.c.h.b16 %v3124
        %v3423 = vunpack.c.l.b16 %v3125
        %v3424 = vunpack.c.h.b16 %v3125
        %v3425 = vunpack.c.l.b16 %v3126
        %v3426 = vunpack.c.h.b16 %v3126
        %v3427 = vunpack.c.l.b16 %v3127
        %v3428 = vunpack.c.h.b16 %v3127
        %v3429 = vunpack.c.l.b16 %v3128
        %v3430 = vunpack.c.h.b16 %v3128
        %v3431 = vunpack.c.l.b16 %v3129
        %v3432 = vunpack.c.h.b16 %v3129
        %v3433 = vunpack.c.l.b16 %v3130
        %v3434 = vunpack.c.h.b16 %v3130
        %v3435 = vunpack.c.l.b16 %v3131
        %v3436 = vunpack.c.h.b16 %v3131
        %v3437 = vunpack.c.l.b16 %v3132
        %v3438 = vunpack.c.h.b16 %v3132
        %v3439 = vunpack.c.l.b16 %v3133
        %v3440 = vunpack.c.h.b16 %v3133
        %v3441 = vunpack.c.l.b16 %v3134
        %v3442 = vunpack.c.h.b16 %v3134
        %v3443 = vunpack.c.l.b16 %v3135
        %v3444 = vunpack.c.h.b16 %v3135
        %v3445 = vunpack.c.l.b16 %v3136
        %v3446 = vunpack.c.h.b16 %v3136
        %v3447 = vunpack.c.l.b16 %v3137
        %v3448 = vunpack.c.h.b16 %v3137
        %v3449 = vunpack.c.l.b16 %v3138
        %v3450 = vunpack.c.h.b16 %v3138
        %v3451 = vunpack.c.l.b16 %v3139
        %v3452 = vunpack.c.h.b16 %v3139
        %v3453 = vunpack.c.l.b16 %v3140
        %v3454 = vunpack.c.h.b16 %v3140
        %v3455 = vunpack.c.l.b16 %v3141
        %v3456 = vunpack.c.h.b16 %v3141
        %v3457 = vunpack.c.l.b16 %v3142
        %v3458 = vunpack.c.h.b16 %v3142
        %v3459 = vunpack.c.l.b16 %v3143
        %v3460 = vunpack.c.h.b16 %v3143
        %v3461 = vunpack.c.l.b16 %v3144
        %v3462 = vunpack.c.h.b16 %v3144
        %v3463 = vunpack.c.l.b16 %v3145
        %v3464 = vunpack.c.h.b16 %v3145
        %v3465 = vunpack.c.l.b16 %v3146
        %v3466 = vunpack.c.h.b16 %v3146
        %v3467 = vunpack.c.l.b16 %v3147
        %v3468 = vunpack.c.h.b16 %v3147
        %v3469 = vunpack.c.l.b16 %v3148
        %v3470 = vunpack.c.h.b16 %v3148
        %v3471 = vunpack.c.l.b16 %v3149
        %v3472 = vunpack.c.h.b16 %v3149
        %v3473 = vunpack.c.l.b16 %v3150
        %v3474 = vunpack.c.h.b16 %v3150
        %v3475 = vunpack.c.l.b16 %v3151
        %v3476 = vunpack.c.h.b16 %v3151
        %v3477 = vunpack.c.l.b16 %v3152
        %v3478 = vunpack.c.h.b16 %v3152
        %v3479 = vunpack.c.l.b16 %v3153
        %v3480 = vunpack.c.h.b16 %v3153
        %v3481 = vunpack.c.l.b16 %v3154
        %v3482 = vunpack.c.h.b16 %v3154
        %v3483 = vunpack.c.l.b16 %v3155
        %v3484 = vunpack.c.h.b16 %v3155
        %v3485 = vunpack.c.l.b16 %v3156
        %v3486 = vunpack.c.h.b16 %v3156
        %v3487 = vunpack.c.l.b16 %v3157
        %v3488 = vunpack.c.h.b16 %v3157
        %v3489 = vunpack.c.l.b16 %v3158
        %v3490 = vunpack.c.h.b16 %v3158
        %v3491 = vunpack.c.l.b16 %v3159
        %v3492 = vunpack.c.h.b16 %v3159
        %v3493 = vunpack.c.l.b16 %v3160
        %v3494 = vunpack.c.h.b16 %v3160
        %v3495 = vunpack.c.l.b16 %v3161
        %v3496 = vunpack.c.h.b16 %v3161
        %v3497 = vunpack.c.l.b16 %v3162
        %v3498 = vunpack.c.h.b16 %v3162
        %v3499 = vunpack.c.l.b16 %v3163
        %v3500 = vunpack.c.h.b16 %v3163
        %v3501 = vunpack.c.l.b16 %v3164
        %v3502 = vunpack.c.h.b16 %v3164
        %v3503 = vunpack.c.l.b16 %v3165
        %v3504 = vunpack.c.h.b16 %v3165
        %v3505 = vunpack.c.l.b16 %v3166
        %v3506 = vunpack.c.h.b16 %v3166
        %v3507 = vunpack.c.l.b16 %v3167
        %v3508 = vunpack.c.h.b16 %v3167
        %v3509 = vunpack.c.l.b16 %v3168
        %v3510 = vunpack.c.h.b16 %v3168
        %v3511 = vpack.c.b16 %v3387, %v3383
        %v3512 = vpack.c.b16 %v3388, %v3384
        %v3513 = vpack.c.b16 %v3389, %v3385
        %v3514 = vpack.c.b16 %v3390, %v3386
        %v3515 = vpack.c.b16 %v3395, %v3391
        %v3516 = vpack.c.b16 %v3396, %v3392
        %v3517 = vpack.c.b16 %v3397, %v3393
        %v3518 = vpack.c.b16 %v3398, %v3394
        %v3519 = vpack.c.b16 %v3403, %v3399
        %v3520 = vpack.c.b16 %v3404, %v3400
        %v3521 = vpack.c.b16 %v3405, %v3401
        %v3522 = vpack.c.b16 %v3406, %v3402
        %v3523 = vpack.c.b16 %v3411, %v3407
        %v3524 = vpack.c.b16 %v3412, %v3408
        %v3525 = vpack.c.b16 %v3413, %v3409
        %v3526 = vpack.c.b16 %v3414, %v3410
        %v3527 = vpack.c.b16 %v3419, %v3415
        %v3528 = vpack.c.b16 %v3420, %v3416
        %v3529 = vpack.c.b16 %v3421, %v3417
        %v3530 = vpack.c.b16 %v3422, %v3418
        %v3531 = vpack.c.b16 %v3427, %v3423
        %v3532 = vpack.c.b16 %v3428, %v3424
        %v3533 = vpack.c.b16 %v3429, %v3425
        %v3534 = vpack.c.b16 %v3430, %v3426
        %v3535 = vpack.c.b16 %v3435, %v3431
        %v3536 = vpack.c.b16 %v3436, %v3432
        %v3537 = vpack.c.b16 %v3437, %v3433
        %v3538 = vpack.c.b16 %v3438, %v3434
        %v3539 = vpack.c.b16 %v3443, %v3439
        %v3540 = vpack.c.b16 %v3444, %v3440
        %v3541 = vpack.c.b16 %v3445, %v3441
        %v3542 = vpack.c.b16 %v3446, %v3442
        %v3543 = vpack.c.b16 %v3451, %v3447
        %v3544 = vpack.c.b16 %v3452, %v3448
        %v3545 = vpack.c.b16 %v3453, %v3449
        %v3546 = vpack.c.b16 %v3454, %v3450
        %v3547 = vpack.c.b16 %v3459, %v3455
        %v3548 = vpack.c.b16 %v3460, %v3456
        %v3549 = vpack.c.b16 %v3461, %v3457
        %v3550 = vpack.c.b16 %v3462, %v3458
        %v3551 = vpack.c.b16 %v3467, %v3463
        %v3552 = vpack.c.b16 %v3468, %v3464
        %v3553 = vpack.c.b16 %v3469, %v3465
        %v3554 = vpack.c.b16 %v3470, %v3466
        %v3555 = vpack.c.b16 %v3475, %v3471
        %v3556 = vpack.c.b16 %v3476, %v3472
        %v3557 = vpack.c.b16 %v3477, %v3473
        %v3558 = vpack.c.b16 %v3478, %v3474
        %v3559 = vpack.c.b16 %v3483, %v3479
        %v3560 = vpack.c.b16 %v3484, %v3480
        %v3561 = vpack.c.b16 %v3485, %v3481
        %v3562 = vpack.c.b16 %v3486, %v3482
        %v3563 = vpack.c.b16 %v3491, %v3487
        %v3564 = vpack.c.b16 %v3492, %v3488
        %v3565 = vpack.c.b16 %v3493, %v3489
        %v3566 = vpack.c.b16 %v3494, %v3490
        %v3567 = vpack.c.b16 %v3499, %v3495
        %v3568 = vpack.c.b16 %v3500, %v3496
        %v3569 = vpack.c.b16 %v3501, %v3497
        %v3570 = vpack.c.b16 %v3502, %v3498
        %v3571 = vpack.c.b16 %v3507, %v3503
        %v3572 = vpack.c.b16 %v3508, %v3504
        %v3573 = vpack.c.b16 %v3509, %v3505
        %v3574 = vpack.c.b16 %v3510, %v3506
        %v3767 = vunpack.c.l.b16 %v3169
        %v3768 = vunpack.c.h.b16 %v3169
        %v3769 = vunpack.c.l.b16 %v3170
        %v3770 = vunpack.c.h.b16 %v3170
        %v3771 = vunpack.c.l.b16 %v3171
        %v3772 = vunpack.c.h.b16 %v3171
        %v3773 = vunpack.c.l.b16 %v3172
        %v3774 = vunpack.c.h.b16 %v3172
        %v3775 = vunpack.c.l.b16 %v3173
        %v3776 = vunpack.c.h.b16 %v3173
        %v3777 = vunpack.c.l.b16 %v3174
        %v3778 = vunpack.c.h.b16 %v3174
        %v3779 = vunpack.c.l.b16 %v3175
        %v3780 = vunpack.c.h.b16 %v3175
        %v3781 = vunpack.c.l.b16 %v3176
        %v3782 = vunpack.c.h.b16 %v3176
        %v3783 = vunpack.c.l.b16 %v3177
        %v3784 = vunpack.c.h.b16 %v3177
        %v3785 = vunpack.c.l.b16 %v3178
        %v3786 = vunpack.c.h.b16 %v3178
        %v3787 = vunpack.c.l.b16 %v3179
        %v3788 = vunpack.c.h.b16 %v3179
        %v3789 = vunpack.c.l.b16 %v3180
        %v3790 = vunpack.c.h.b16 %v3180
        %v3791 = vunpack.c.l.b16 %v3181
        %v3792 = vunpack.c.h.b16 %v3181
        %v3793 = vunpack.c.l.b16 %v3182
        %v3794 = vunpack.c.h.b16 %v3182
        %v3795 = vunpack.c.l.b16 %v3183
        %v3796 = vunpack.c.h.b16 %v3183
        %v3797 = vunpack.c.l.b16 %v3184
        %v3798 = vunpack.c.h.b16 %v3184
        %v3799 = vunpack.c.l.b16 %v3185
        %v3800 = vunpack.c.h.b16 %v3185
        %v3801 = vunpack.c.l.b16 %v3186
        %v3802 = vunpack.c.h.b16 %v3186
        %v3803 = vunpack.c.l.b16 %v3187
        %v3804 = vunpack.c.h.b16 %v3187
        %v3805 = vunpack.c.l.b16 %v3188
        %v3806 = vunpack.c.h.b16 %v3188
        %v3807 = vunpack.c.l.b16 %v3189
        %v3808 = vunpack.c.h.b16 %v3189
        %v3809 = vunpack.c.l.b16 %v3190
        %v3810 = vunpack.c.h.b16 %v3190
        %v3811 = vunpack.c.l.b16 %v3191
        %v3812 = vunpack.c.h.b16 %v3191
        %v3813 = vunpack.c.l.b16 %v3192
        %v3814 = vunpack.c.h.b16 %v3192
        %v3815 = vunpack.c.l.b16 %v3193
        %v3816 = vunpack.c.h.b16 %v3193
        %v3817 = vunpack.c.l.b16 %v3194
        %v3818 = vunpack.c.h.b16 %v3194
        %v3819 = vunpack.c.l.b16 %v3195
        %v3820 = vunpack.c.h.b16 %v3195
        %v3821 = vunpack.c.l.b16 %v3196
        %v3822 = vunpack.c.h.b16 %v3196
        %v3823 = vunpack.c.l.b16 %v3197
        %v3824 = vunpack.c.h.b16 %v3197
        %v3825 = vunpack.c.l.b16 %v3198
        %v3826 = vunpack.c.h.b16 %v3198
        %v3827 = vunpack.c.l.b16 %v3199
        %v3828 = vunpack.c.h.b16 %v3199
        %v3829 = vunpack.c.l.b16 %v3200
        %v3830 = vunpack.c.h.b16 %v3200
        %v3831 = vunpack.c.l.b16 %v3201
        %v3832 = vunpack.c.h.b16 %v3201
        %v3833 = vunpack.c.l.b16 %v3202
        %v3834 = vunpack.c.h.b16 %v3202
        %v3835 = vunpack.c.l.b16 %v3203
        %v3836 = vunpack.c.h.b16 %v3203
        %v3837 = vunpack.c.l.b16 %v3204
        %v3838 = vunpack.c.h.b16 %v3204
        %v3839 = vunpack.c.l.b16 %v3205
        %v3840 = vunpack.c.h.b16 %v3205
        %v3841 = vunpack.c.l.b16 %v3206
        %v3842 = vunpack.c.h.b16 %v3206
        %v3843 = vunpack.c.l.b16 %v3207
        %v3844 = vunpack.c.h.b16 %v3207
        %v3845 = vunpack.c.l.b16 %v3208
        %v3846 = vunpack.c.h.b16 %v3208
        %v3847 = vunpack.c.l.b16 %v3209
        %v3848 = vunpack.c.h.b16 %v3209
        %v3849 = vunpack.c.l.b16 %v3210
        %v3850 = vunpack.c.h.b16 %v3210
        %v3851 = vunpack.c.l.b16 %v3211
        %v3852 = vunpack.c.h.b16 %v3211
        %v3853 = vunpack.c.l.b16 %v3212
        %v3854 = vunpack.c.h.b16 %v3212
        %v3855 = vunpack.c.l.b16 %v3213
        %v3856 = vunpack.c.h.b16 %v3213
        %v3857 = vunpack.c.l.b16 %v3214
        %v3858 = vunpack.c.h.b16 %v3214
        %v3859 = vunpack.c.l.b16 %v3215
        %v3860 = vunpack.c.h.b16 %v3215
        %v3861 = vunpack.c.l.b16 %v3216
        %v3862 = vunpack.c.h.b16 %v3216
        %v3863 = vunpack.c.l.b16 %v3217
        %v3864 = vunpack.c.h.b16 %v3217
        %v3865 = vunpack.c.l.b16 %v3218
        %v3866 = vunpack.c.h.b16 %v3218
        %v3867 = vunpack.c.l.b16 %v3219
        %v3868 = vunpack.c.h.b16 %v3219
        %v3869 = vunpack.c.l.b16 %v3220
        %v3870 = vunpack.c.h.b16 %v3220
        %v3871 = vunpack.c.l.b16 %v3221
        %v3872 = vunpack.c.h.b16 %v3221
        %v3873 = vunpack.c.l.b16 %v3222
        %v3874 = vunpack.c.h.b16 %v3222
        %v3875 = vunpack.c.l.b16 %v3223
        %v3876 = vunpack.c.h.b16 %v3223
        %v3877 = vunpack.c.l.b16 %v3224
        %v3878 = vunpack.c.h.b16 %v3224
        %v3879 = vunpack.c.l.b16 %v3225
        %v3880 = vunpack.c.h.b16 %v3225
        %v3881 = vunpack.c.l.b16 %v3226
        %v3882 = vunpack.c.h.b16 %v3226
        %v3883 = vunpack.c.l.b16 %v3227
        %v3884 = vunpack.c.h.b16 %v3227
        %v3885 = vunpack.c.l.b16 %v3228
        %v3886 = vunpack.c.h.b16 %v3228
        %v3887 = vunpack.c.l.b16 %v3229
        %v3888 = vunpack.c.h.b16 %v3229
        %v3889 = vunpack.c.l.b16 %v3230
        %v3890 = vunpack.c.h.b16 %v3230
        %v3891 = vunpack.c.l.b16 %v3231
        %v3892 = vunpack.c.h.b16 %v3231
        %v3893 = vunpack.c.l.b16 %v3232
        %v3894 = vunpack.c.h.b16 %v3232
        %v3895 = vunpack.c.l.b16 %v3233
        %v3896 = vunpack.c.h.b16 %v3233
        %v3897 = vunpack.c.l.b16 %v3234
        %v3898 = vunpack.c.h.b16 %v3234
        %v3899 = vunpack.c.l.b16 %v3235
        %v3900 = vunpack.c.h.b16 %v3235
        %v3901 = vunpack.c.l.b16 %v3236
        %v3902 = vunpack.c.h.b16 %v3236
        %v3903 = vunpack.c.l.b16 %v3237
        %v3904 = vunpack.c.h.b16 %v3237
        %v3905 = vunpack.c.l.b16 %v3238
        %v3906 = vunpack.c.h.b16 %v3238
        %v3907 = vunpack.c.l.b16 %v3239
        %v3908 = vunpack.c.h.b16 %v3239
        %v3909 = vunpack.c.l.b16 %v3240
        %v3910 = vunpack.c.h.b16 %v3240
        %v3911 = vunpack.c.l.b16 %v3241
        %v3912 = vunpack.c.h.b16 %v3241
        %v3913 = vunpack.c.l.b16 %v3242
        %v3914 = vunpack.c.h.b16 %v3242
        %v3915 = vunpack.c.l.b16 %v3243
        %v3916 = vunpack.c.h.b16 %v3243
        %v3917 = vunpack.c.l.b16 %v3244
        %v3918 = vunpack.c.h.b16 %v3244
        %v3919 = vunpack.c.l.b16 %v3245
        %v3920 = vunpack.c.h.b16 %v3245
        %v3921 = vunpack.c.l.b16 %v3246
        %v3922 = vunpack.c.h.b16 %v3246
        %v3923 = vunpack.c.l.b16 %v3247
        %v3924 = vunpack.c.h.b16 %v3247
        %v3925 = vunpack.c.l.b16 %v3248
        %v3926 = vunpack.c.h.b16 %v3248
        %v3927 = vunpack.c.l.b16 %v3249
        %v3928 = vunpack.c.h.b16 %v3249
        %v3929 = vunpack.c.l.b16 %v3250
        %v3930 = vunpack.c.h.b16 %v3250
        %v3931 = vunpack.c.l.b16 %v3251
        %v3932 = vunpack.c.h.b16 %v3251
        %v3933 = vunpack.c.l.b16 %v3252
        %v3934 = vunpack.c.h.b16 %v3252
        %v3935 = vunpack.c.l.b16 %v3253
        %v3936 = vunpack.c.h.b16 %v3253
        %v3937 = vunpack.c.l.b16 %v3254
        %v3938 = vunpack.c.h.b16 %v3254
        %v3939 = vunpack.c.l.b16 %v3255
        %v3940 = vunpack.c.h.b16 %v3255
        %v3941 = vunpack.c.l.b16 %v3256
        %v3942 = vunpack.c.h.b16 %v3256
        %v3943 = vunpack.c.l.b16 %v3257
        %v3944 = vunpack.c.h.b16 %v3257
        %v3945 = vunpack.c.l.b16 %v3258
        %v3946 = vunpack.c.h.b16 %v3258
        %v3947 = vunpack.c.l.b16 %v3259
        %v3948 = vunpack.c.h.b16 %v3259
        %v3949 = vunpack.c.l.b16 %v3260
        %v3950 = vunpack.c.h.b16 %v3260
        %v3951 = vunpack.c.l.b16 %v3261
        %v3952 = vunpack.c.h.b16 %v3261
        %v3953 = vunpack.c.l.b16 %v3262
        %v3954 = vunpack.c.h.b16 %v3262
        %v3955 = vunpack.c.l.b16 %v3263
        %v3956 = vunpack.c.h.b16 %v3263
        %v3957 = vunpack.c.l.b16 %v3264
        %v3958 = vunpack.c.h.b16 %v3264
        %v3959 = vunpack.c.l.b16 %v3265
        %v3960 = vunpack.c.h.b16 %v3265
        %v3961 = vunpack.c.l.b16 %v3266
        %v3962 = vunpack.c.h.b16 %v3266
        %v3963 = vunpack.c.l.b16 %v3267
        %v3964 = vunpack.c.h.b16 %v3267
        %v3965 = vunpack.c.l.b16 %v3268
        %v3966 = vunpack.c.h.b16 %v3268
        %v3967 = vunpack.c.l.b16 %v3269
        %v3968 = vunpack.c.h.b16 %v3269
        %v3969 = vunpack.c.l.b16 %v3270
        %v3970 = vunpack.c.h.b16 %v3270
        %v3971 = vunpack.c.l.b16 %v3271
        %v3972 = vunpack.c.h.b16 %v3271
        %v3973 = vunpack.c.l.b16 %v3272
        %v3974 = vunpack.c.h.b16 %v3272
        %v3975 = vunpack.c.l.b16 %v3273
        %v3976 = vunpack.c.h.b16 %v3273
        %v3977 = vunpack.c.l.b16 %v3274
        %v3978 = vunpack.c.h.b16 %v3274
        %v3979 = vunpack.c.l.b16 %v3275
        %v3980 = vunpack.c.h.b16 %v3275
        %v3981 = vunpack.c.l.b16 %v3276
        %v3982 = vunpack.c.h.b16 %v3276
        %v3983 = vunpack.c.l.b16 %v3277
        %v3984 = vunpack.c.h.b16 %v3277
        %v3985 = vunpack.c.l.b16 %v3278
        %v3986 = vunpack.c.h.b16 %v3278
        %v3987 = vunpack.c.l.b16 %v3279
        %v3988 = vunpack.c.h.b16 %v3279
        %v3989 = vunpack.c.l.b16 %v3280
        %v3990 = vunpack.c.h.b16 %v3280
        %v3991 = vunpack.c.l.b16 %v3281
        %v3992 = vunpack.c.h.b16 %v3281
        %v3993 = vunpack.c.l.b16 %v3282
        %v3994 = vunpack.c.h.b16 %v3282
        %v3995 = vunpack.c.l.b16 %v3283
        %v3996 = vunpack.c.h.b16 %v3283
        %v3997 = vunpack.c.l.b16 %v3284
        %v3998 = vunpack.c.h.b16 %v3284
        %v3999 = vunpack.c.l.b16 %v3285
        %v4000 = vunpack.c.h.b16 %v3285
        %v4001 = vunpack.c.l.b16 %v3286
        %v4002 = vunpack.c.h.b16 %v3286
        %v4003 = vunpack.c.l.b16 %v3287
        %v4004 = vunpack.c.h.b16 %v3287
        %v4005 = vunpack.c.l.b16 %v3288
        %v4006 = vunpack.c.h.b16 %v3288
        %v4007 = vunpack.c.l.b16 %v3289
        %v4008 = vunpack.c.h.b16 %v3289
        %v4009 = vunpack.c.l.b16 %v3290
        %v4010 = vunpack.c.h.b16 %v3290
        %v4011 = vunpack.c.l.b16 %v3291
        %v4012 = vunpack.c.h.b16 %v3291
        %v4013 = vunpack.c.l.b16 %v3292
        %v4014 = vunpack.c.h.b16 %v3292
        %v4015 = vunpack.c.l.b16 %v3293
        %v4016 = vunpack.c.h.b16 %v3293
        %v4017 = vunpack.c.l.b16 %v3294
        %v4018 = vunpack.c.h.b16 %v3294
        %v4019 = vunpack.c.l.b16 %v3295
        %v4020 = vunpack.c.h.b16 %v3295
        %v4021 = vunpack.c.l.b16 %v3296
        %v4022 = vunpack.c.h.b16 %v3296
        %v4023 = vpack.c.b16 %v3771, %v3767
        %v4024 = vpack.c.b16 %v3772, %v3768
        %v4025 = vpack.c.b16 %v3773, %v3769
        %v4026 = vpack.c.b16 %v3774, %v3770
        %v4027 = vpack.c.b16 %v3779, %v3775
        %v4028 = vpack.c.b16 %v3780, %v3776
        %v4029 = vpack.c.b16 %v3781, %v3777
        %v4030 = vpack.c.b16 %v3782, %v3778
        %v4031 = vpack.c.b16 %v3787, %v3783
        %v4032 = vpack.c.b16 %v3788, %v3784
        %v4033 = vpack.c.b16 %v3789, %v3785
        %v4034 = vpack.c.b16 %v3790, %v3786
        %v4035 = vpack.c.b16 %v3795, %v3791
        %v4036 = vpack.c.b16 %v3796, %v3792
        %v4037 = vpack.c.b16 %v3797, %v3793
        %v4038 = vpack.c.b16 %v3798, %v3794
        %v4039 = vpack.c.b16 %v3803, %v3799
        %v4040 = vpack.c.b16 %v3804, %v3800
        %v4041 = vpack.c.b16 %v3805, %v3801
        %v4042 = vpack.c.b16 %v3806, %v3802
        %v4043 = vpack.c.b16 %v3811, %v3807
        %v4044 = vpack.c.b16 %v3812, %v3808
        %v4045 = vpack.c.b16 %v3813, %v3809
        %v4046 = vpack.c.b16 %v3814, %v3810
        %v4047 = vpack.c.b16 %v3819, %v3815
        %v4048 = vpack.c.b16 %v3820, %v3816
        %v4049 = vpack.c.b16 %v3821, %v3817
        %v4050 = vpack.c.b16 %v3822, %v3818
        %v4051 = vpack.c.b16 %v3827, %v3823
        %v4052 = vpack.c.b16 %v3828, %v3824
        %v4053 = vpack.c.b16 %v3829, %v3825
        %v4054 = vpack.c.b16 %v3830, %v3826
        %v4055 = vpack.c.b16 %v3835, %v3831
        %v4056 = vpack.c.b16 %v3836, %v3832
        %v4057 = vpack.c.b16 %v3837, %v3833
        %v4058 = vpack.c.b16 %v3838, %v3834
        %v4059 = vpack.c.b16 %v3843, %v3839
        %v4060 = vpack.c.b16 %v3844, %v3840
        %v4061 = vpack.c.b16 %v3845, %v3841
        %v4062 = vpack.c.b16 %v3846, %v3842
        %v4063 = vpack.c.b16 %v3851, %v3847
        %v4064 = vpack.c.b16 %v3852, %v3848
        %v4065 = vpack.c.b16 %v3853, %v3849
        %v4066 = vpack.c.b16 %v3854, %v3850
        %v4067 = vpack.c.b16 %v3859, %v3855
        %v4068 = vpack.c.b16 %v3860, %v3856
        %v4069 = vpack.c.b16 %v3861, %v3857
        %v4070 = vpack.c.b16 %v3862, %v3858
        %v4071 = vpack.c.b16 %v3867, %v3863
        %v4072 = vpack.c.b16 %v3868, %v3864
        %v4073 = vpack.c.b16 %v3869, %v3865
        %v4074 = vpack.c.b16 %v3870, %v3866
        %v4075 = vpack.c.b16 %v3875, %v3871
        %v4076 = vpack.c.b16 %v3876, %v3872
        %v4077 = vpack.c.b16 %v3877, %v3873
        %v4078 = vpack.c.b16 %v3878, %v3874
        %v4079 = vpack.c.b16 %v3883, %v3879
        %v4080 = vpack.c.b16 %v3884, %v3880
        %v4081 = vpack.c.b16 %v3885, %v3881
        %v4082 = vpack.c.b16 %v3886, %v3882
        %v4083 = vpack.c.b16 %v3891, %v3887
        %v4084 = vpack.c.b16 %v3892, %v3888
        %v4085 = vpack.c.b16 %v3893, %v3889
        %v4086 = vpack.c.b16 %v3894, %v3890
        %v4087 = vpack.c.b16 %v3899, %v3895
        %v4088 = vpack.c.b16 %v3900, %v3896
        %v4089 = vpack.c.b16 %v3901, %v3897
        %v4090 = vpack.c.b16 %v3902, %v3898
        %v4091 = vpack.c.b16 %v3907, %v3903
        %v4092 = vpack.c.b16 %v3908, %v3904
        %v4093 = vpack.c.b16 %v3909, %v3905
        %v4094 = vpack.c.b16 %v3910, %v3906
        %v4095 = vpack.c.b16 %v3915, %v3911
        %v4096 = vpack.c.b16 %v3916, %v3912
        %v4097 = vpack.c.b16 %v3917, %v3913
        %v4098 = vpack.c.b16 %v3918, %v3914
        %v4099 = vpack.c.b16 %v3923, %v3919
        %v4100 = vpack.c.b16 %v3924, %v3920
        %v4101 = vpack.c.b16 %v3925, %v3921
        %v4102 = vpack.c.b16 %v3926, %v3922
        %v4103 = vpack.c.b16 %v3931, %v3927
        %v4104 = vpack.c.b16 %v3932, %v3928
        %v4105 = vpack.c.b16 %v3933, %v3929
        %v4106 = vpack.c.b16 %v3934, %v3930
        %v4107 = vpack.c.b16 %v3939, %v3935
        %v4108 = vpack.c.b16 %v3940, %v3936
        %v4109 = vpack.c.b16 %v3941, %v3937
        %v4110 = vpack.c.b16 %v3942, %v3938
        %v4111 = vpack.c.b16 %v3947, %v3943
        %v4112 = vpack.c.b16 %v3948, %v3944
        %v4113 = vpack.c.b16 %v3949, %v3945
        %v4114 = vpack.c.b16 %v3950, %v3946
        %v4115 = vpack.c.b16 %v3955, %v3951
        %v4116 = vpack.c.b16 %v3956, %v3952
        %v4117 = vpack.c.b16 %v3957, %v3953
        %v4118 = vpack.c.b16 %v3958, %v3954
        %v4119 = vpack.c.b16 %v3963, %v3959
        %v4120 = vpack.c.b16 %v3964, %v3960
        %v4121 = vpack.c.b16 %v3965, %v3961
        %v4122 = vpack.c.b16 %v3966, %v3962
        %v4123 = vpack.c.b16 %v3971, %v3967
        %v4124 = vpack.c.b16 %v3972, %v3968
        %v4125 = vpack.c.b16 %v3973, %v3969
        %v4126 = vpack.c.b16 %v3974, %v3970
        %v4127 = vpack.c.b16 %v3979, %v3975
        %v4128 = vpack.c.b16 %v3980, %v3976
        %v4129 = vpack.c.b16 %v3981, %v3977
        %v4130 = vpack.c.b16 %v3982, %v3978
        %v4131 = vpack.c.b16 %v3987, %v3983
        %v4132 = vpack.c.b16 %v3988, %v3984
        %v4133 = vpack.c.b16 %v3989, %v3985
        %v4134 = vpack.c.b16 %v3990, %v3986
        %v4135 = vpack.c.b16 %v3995, %v3991
        %v4136 = vpack.c.b16 %v3996, %v3992
        %v4137 = vpack.c.b16 %v3997, %v3993
        %v4138 = vpack.c.b16 %v3998, %v3994
        %v4139 = vpack.c.b16 %v4003, %v3999
        %v4140 = vpack.c.b16 %v4004, %v4000
        %v4141 = vpack.c.b16 %v4005, %v4001
        %v4142 = vpack.c.b16 %v4006, %v4002
        %v4143 = vpack.c.b16 %v4011, %v4007
        %v4144 = vpack.c.b16 %v4012, %v4008
        %v4145 = vpack.c.b16 %v4013, %v4009
        %v4146 = vpack.c.b16 %v4014, %v4010
        %v4147 = vpack.c.b16 %v4019, %v4015
        %v4148 = vpack.c.b16 %v4020, %v4016
        %v4149 = vpack.c.b16 %v4021, %v4017
        %v4150 = vpack.c.b16 %v4022, %v4018
        %4279 = vmatprep.subr.bf16.mxu0 %v4024
        %4280 = vmatpush1.bf16.msra.mxu0 %v4023
        %4281 = vmatprep.subr.bf16.mxu0 %v4028
        %4282 = vmatpush1.bf16.msra.mxu0 %v4027
        %4283 = vmatprep.subr.bf16.mxu0 %v4032
        %4284 = vmatpush1.bf16.msra.mxu0 %v4031
        %4285 = vmatprep.subr.bf16.mxu0 %v4036
        %4286 = vmatpush1.bf16.msra.mxu0 %v4035
        %4287 = vmatprep.subr.bf16.mxu0 %v4040
        %4288 = vmatpush1.bf16.msra.mxu0 %v4039
        %4289 = vmatprep.subr.bf16.mxu0 %v4044
        %4290 = vmatpush1.bf16.msra.mxu0 %v4043
        %4291 = vmatprep.subr.bf16.mxu0 %v4048
        %4292 = vmatpush1.bf16.msra.mxu0 %v4047
        %4293 = vmatprep.subr.bf16.mxu0 %v4052
        %4294 = vmatpush1.bf16.msra.mxu0 %v4051
        %4295 = vmatprep.subr.bf16.mxu0 %v4056
        %4296 = vmatpush1.bf16.msra.mxu0 %v4055
        %4297 = vmatprep.subr.bf16.mxu0 %v4060
        %4298 = vmatpush1.bf16.msra.mxu0 %v4059
        %4299 = vmatprep.subr.bf16.mxu0 %v4064
        %4300 = vmatpush1.bf16.msra.mxu0 %v4063
        %4301 = vmatprep.subr.bf16.mxu0 %v4068
        %4302 = vmatpush1.bf16.msra.mxu0 %v4067
        %4303 = vmatprep.subr.bf16.mxu0 %v4072
        %4304 = vmatpush1.bf16.msra.mxu0 %v4071
        %4305 = vmatprep.subr.bf16.mxu0 %v4076
        %4306 = vmatpush1.bf16.msra.mxu0 %v4075
        %4307 = vmatprep.subr.bf16.mxu0 %v4080
        %4308 = vmatpush1.bf16.msra.mxu0 %v4079
        %4309 = vmatprep.subr.bf16.mxu0 %v4084
        %4310 = vmatpush1.bf16.msra.mxu0 %v4083
        %4311 = vmatprep.mubr.bf16.mxu0 %v3512
        %4312 = vmatmul.mubr.bf16.gmra.mrb[0].mxu0 %v3511
        %v4313 = vpop.f32.mrb[0].mxu0
        %v4314 = vadd.f32 %v3302, %v4313
        %v4315 = vpop.f32.mrb[0].mxu0
        %v4316 = vadd.f32 %v3306, %v4315
        %v4317 = vpop.f32.mrb[0].mxu0
        %v4318 = vadd.f32 %v3302, %v4317
        %v4319 = vpop.f32.mrb[0].mxu0
        %v4320 = vadd.f32 %v3306, %v4319
        %4321 = vmatprep.mubr.bf16.mxu0 %v3516
        %4322 = vmatmul.mubr.bf16.gmra.mrb[0].mxu0 %v3515
        %v4323 = vpop.f32.mrb[0].mxu0
        %v4324 = vadd.f32 %v3302, %v4323
        %v4325 = vpop.f32.mrb[0].mxu0
        %v4326 = vadd.f32 %v3306, %v4325
        %v4327 = vpop.f32.mrb[0].mxu0
        %v4328 = vadd.f32 %v3302, %v4327
        %v4329 = vpop.f32.mrb[0].mxu0
        %v4330 = vadd.f32 %v3306, %v4329
        %4331 = vmatprep.mubr.bf16.mxu0 %v3520
        %4332 = vmatmul.mubr.bf16.gmra.mrb[0].mxu0 %v3519
        %v4333 = vpop.f32.mrb[0].mxu0
        %v4334 = vadd.f32 %v3302, %v4333
        %v4335 = vpop.f32.mrb[0].mxu0
        %v4336 = vadd.f32 %v3306, %v4335
        %v4337 = vpop.f32.mrb[0].mxu0
        %v4338 = vadd.f32 %v3302, %v4337
        %v4339 = vpop.f32.mrb[0].mxu0
        %v4340 = vadd.f32 %v3306, %v4339
        %4341 = vmatprep.mubr.bf16.mxu0 %v3524
        %4342 = vmatmul.mubr.bf16.gmra.mrb[0].mxu0 %v3523
        %v4343 = vpop.f32.mrb[0].mxu0
        %v4344 = vadd.f32 %v3302, %v4343
        %v4345 = vpop.f32.mrb[0].mxu0
        %v4346 = vadd.f32 %v3306, %v4345
        %v4347 = vpop.f32.mrb[0].mxu0
        %v4348 = vadd.f32 %v3302, %v4347
        %v4349 = vpop.f32.mrb[0].mxu0
        %v4350 = vadd.f32 %v3306, %v4349
        %4351 = vmatprep.mubr.bf16.mxu0 %v3528
        %4352 = vmatmul.mubr.bf16.gmra.mrb[0].mxu0 %v3527
        %v4353 = vpop.f32.mrb[0].mxu0
        %v4354 = vadd.f32 %v3302, %v4353
        %v4355 = vpop.f32.mrb[0].mxu0
        %v4356 = vadd.f32 %v3306, %v4355
        %v4357 = vpop.f32.mrb[0].mxu0
        %v4358 = vadd.f32 %v3302, %v4357
        %v4359 = vpop.f32.mrb[0].mxu0
        %v4360 = vadd.f32 %v3306, %v4359
        %4361 = vmatprep.mubr.bf16.mxu0 %v3532
        %4362 = vmatmul.mubr.bf16.gmra.mrb[0].mxu0 %v3531
        %v4363 = vpop.f32.mrb[0].mxu0
        %v4364 = vadd.f32 %v3302, %v4363
        %v4365 = vpop.f32.mrb[0].mxu0
        %v4366 = vadd.f32 %v3306, %v4365
        %v4367 = vpop.f32.mrb[0].mxu0
        %v4368 = vadd.f32 %v3302, %v4367
        %v4369 = vpop.f32.mrb[0].mxu0
        %v4370 = vadd.f32 %v3306, %v4369
        %4371 = vmatprep.mubr.bf16.mxu0 %v3536
        %4372 = vmatmul.mubr.bf16.gmra.mrb[0].mxu0 %v3535
        %v4373 = vpop.f32.mrb[0].mxu0
        %v4374 = vadd.f32 %v3302, %v4373
        %v4375 = vpop.f32.mrb[0].mxu0
        %v4376 = vadd.f32 %v3306, %v4375
        %v4377 = vpop.f32.mrb[0].mxu0
        %v4378 = vadd.f32 %v3302, %v4377
        %v4379 = vpop.f32.mrb[0].mxu0
        %v4380 = vadd.f32 %v3306, %v4379
        %4381 = vmatprep.mubr.bf16.mxu0 %v3540
        %4382 = vmatmul.mubr.bf16.gmra.mrb[0].mxu0 %v3539
        %v4383 = vpop.f32.mrb[0].mxu0
        %v4384 = vadd.f32 %v3302, %v4383
        %v4385 = vpop.f32.mrb[0].mxu0
        %v4386 = vadd.f32 %v3306, %v4385
        %v4387 = vpop.f32.mrb[0].mxu0
        %v4388 = vadd.f32 %v3302, %v4387
        %v4389 = vpop.f32.mrb[0].mxu0
        %v4390 = vadd.f32 %v3306, %v4389
        %4391 = vmatprep.mubr.bf16.mxu0 %v3544
        %4392 = vmatmul.mubr.bf16.gmra.mrb[0].mxu0 %v3543
        %v4393 = vpop.f32.mrb[0].mxu0
        %v4394 = vadd.f32 %v3302, %v4393
        %v4395 = vpop.f32.mrb[0].mxu0
        %v4396 = vadd.f32 %v3306, %v4395
        %v4397 = vpop.f32.mrb[0].mxu0
        %v4398 = vadd.f32 %v3302, %v4397
        %v4399 = vpop.f32.mrb[0].mxu0
        %v4400 = vadd.f32 %v3306, %v4399
        %4401 = vmatprep.mubr.bf16.mxu0 %v3548
        %4402 = vmatmul.mubr.bf16.gmra.mrb[0].mxu0 %v3547
        %v4403 = vpop.f32.mrb[0].mxu0
        %v4404 = vadd.f32 %v3302, %v4403
        %v4405 = vpop.f32.mrb[0].mxu0
        %v4406 = vadd.f32 %v3306, %v4405
        %v4407 = vpop.f32.mrb[0].mxu0
        %v4408 = vadd.f32 %v3302, %v4407
        %v4409 = vpop.f32.mrb[0].mxu0
        %v4410 = vadd.f32 %v3306, %v4409
        %4411 = vmatprep.mubr.bf16.mxu0 %v3552
        %4412 = vmatmul.mubr.bf16.gmra.mrb[0].mxu0 %v3551
        %v4413 = vpop.f32.mrb[0].mxu0
        %v4414 = vadd.f32 %v3302, %v4413
        %v4415 = vpop.f32.mrb[0].mxu0
        %v4416 = vadd.f32 %v3306, %v4415
        %v4417 = vpop.f32.mrb[0].mxu0
        %v4418 = vadd.f32 %v3302, %v4417
        %v4419 = vpop.f32.mrb[0].mxu0
        %v4420 = vadd.f32 %v3306, %v4419
        %4421 = vmatprep.mubr.bf16.mxu0 %v3556
        %4422 = vmatmul.mubr.bf16.gmra.mrb[0].mxu0 %v3555
        %v4423 = vpop.f32.mrb[0].mxu0
        %v4424 = vadd.f32 %v3302, %v4423
        %v4425 = vpop.f32.mrb[0].mxu0
        %v4426 = vadd.f32 %v3306, %v4425
        %v4427 = vpop.f32.mrb[0].mxu0
        %v4428 = vadd.f32 %v3302, %v4427
        %v4429 = vpop.f32.mrb[0].mxu0
        %v4430 = vadd.f32 %v3306, %v4429
        %4431 = vmatprep.mubr.bf16.mxu0 %v3560
        %4432 = vmatmul.mubr.bf16.gmra.mrb[0].mxu0 %v3559
        %v4433 = vpop.f32.mrb[0].mxu0
        %v4434 = vadd.f32 %v3302, %v4433
        %v4435 = vpop.f32.mrb[0].mxu0
        %v4436 = vadd.f32 %v3306, %v4435
        %v4437 = vpop.f32.mrb[0].mxu0
        %v4438 = vadd.f32 %v3302, %v4437
        %v4439 = vpop.f32.mrb[0].mxu0
        %v4440 = vadd.f32 %v3306, %v4439
        %4441 = vmatprep.mubr.bf16.mxu0 %v3564
        %4442 = vmatmul.mubr.bf16.gmra.mrb[0].mxu0 %v3563
        %v4443 = vpop.f32.mrb[0].mxu0
        %v4444 = vadd.f32 %v3302, %v4443
        %v4445 = vpop.f32.mrb[0].mxu0
        %v4446 = vadd.f32 %v3306, %v4445
        %v4447 = vpop.f32.mrb[0].mxu0
        %v4448 = vadd.f32 %v3302, %v4447
        %v4449 = vpop.f32.mrb[0].mxu0
        %v4450 = vadd.f32 %v3306, %v4449
        %4451 = vmatprep.mubr.bf16.mxu0 %v3568
        %4452 = vmatmul.mubr.bf16.gmra.mrb[0].mxu0 %v3567
        %v4453 = vpop.f32.mrb[0].mxu0
        %v4454 = vadd.f32 %v3302, %v4453
        %v4455 = vpop.f32.mrb[0].mxu0
        %v4456 = vadd.f32 %v3306, %v4455
        %v4457 = vpop.f32.mrb[0].mxu0
        %v4458 = vadd.f32 %v3302, %v4457
        %v4459 = vpop.f32.mrb[0].mxu0
        %v4460 = vadd.f32 %v3306, %v4459
        %4461 = vmatprep.mubr.bf16.mxu0 %v3572
        %4462 = vmatmul.mubr.bf16.gmra.mrb[0].mxu0 %v3571
        %v4463 = vpop.f32.mrb[0].mxu0
        %v4464 = vadd.f32 %v3302, %v4463
        %v4465 = vpop.f32.mrb[0].mxu0
        %v4466 = vadd.f32 %v3306, %v4465
        %v4467 = vpop.f32.mrb[0].mxu0
        %v4468 = vadd.f32 %v3302, %v4467
        %v4469 = vpop.f32.mrb[0].mxu0
        %v4470 = vadd.f32 %v3306, %v4469
        %4471 = vdwg.mxu0
        %4472 = vmatprep.subr.bf16.mxu0 %v4088
        %4473 = vmatpush1.bf16.msra.mxu0 %v4087
        %4474 = vmatprep.subr.bf16.mxu0 %v4092
        %4475 = vmatpush1.bf16.msra.mxu0 %v4091
        %4476 = vmatprep.subr.bf16.mxu0 %v4096
        %4477 = vmatpush1.bf16.msra.mxu0 %v4095
        %4478 = vmatprep.subr.bf16.mxu0 %v4100
        %4479 = vmatpush1.bf16.msra.mxu0 %v4099
        %4480 = vmatprep.subr.bf16.mxu0 %v4104
        %4481 = vmatpush1.bf16.msra.mxu0 %v4103
        %4482 = vmatprep.subr.bf16.mxu0 %v4108
        %4483 = vmatpush1.bf16.msra.mxu0 %v4107
        %4484 = vmatprep.subr.bf16.mxu0 %v4112
        %4485 = vmatpush1.bf16.msra.mxu0 %v4111
        %4486 = vmatprep.subr.bf16.mxu0 %v4116
        %4487 = vmatpush1.bf16.msra.mxu0 %v4115
        %4488 = vmatprep.subr.bf16.mxu0 %v4120
        %4489 = vmatpush1.bf16.msra.mxu0 %v4119
        %4490 = vmatprep.subr.bf16.mxu0 %v4124
        %4491 = vmatpush1.bf16.msra.mxu0 %v4123
        %4492 = vmatprep.subr.bf16.mxu0 %v4128
        %4493 = vmatpush1.bf16.msra.mxu0 %v4127
        %4494 = vmatprep.subr.bf16.mxu0 %v4132
        %4495 = vmatpush1.bf16.msra.mxu0 %v4131
        %4496 = vmatprep.subr.bf16.mxu0 %v4136
        %4497 = vmatpush1.bf16.msra.mxu0 %v4135
        %4498 = vmatprep.subr.bf16.mxu0 %v4140
        %4499 = vmatpush1.bf16.msra.mxu0 %v4139
        %4500 = vmatprep.subr.bf16.mxu0 %v4144
        %4501 = vmatpush1.bf16.msra.mxu0 %v4143
        %4502 = vmatprep.subr.bf16.mxu0 %v4148
        %4503 = vmatpush1.bf16.msra.mxu0 %v4147
        %4504 = vmatprep.mubr.bf16.mxu0 %v3514
        %4505 = vmatmul.mubr.bf16.gmra.mrb[0].mxu0 %v3513
        %v4506 = vpop.f32.mrb[0].mxu0
        %v4507 = vadd.f32 %v4314, %v4506
        %v4508 = vpop.f32.mrb[0].mxu0
        %v4509 = vadd.f32 %v4316, %v4508
        %v4510 = vpop.f32.mrb[0].mxu0
        %v4511 = vadd.f32 %v4318, %v4510
        %v4512 = vpop.f32.mrb[0].mxu0
        %v4513 = vadd.f32 %v4320, %v4512
        %4514 = vmatprep.mubr.bf16.mxu0 %v3518
        %4515 = vmatmul.mubr.bf16.gmra.mrb[0].mxu0 %v3517
        %v4516 = vpop.f32.mrb[0].mxu0
        %v4517 = vadd.f32 %v4324, %v4516
        %v4518 = vpop.f32.mrb[0].mxu0
        %v4519 = vadd.f32 %v4326, %v4518
        %v4520 = vpop.f32.mrb[0].mxu0
        %v4521 = vadd.f32 %v4328, %v4520
        %v4522 = vpop.f32.mrb[0].mxu0
        %v4523 = vadd.f32 %v4330, %v4522
        %4524 = vmatprep.mubr.bf16.mxu0 %v3522
        %4525 = vmatmul.mubr.bf16.gmra.mrb[0].mxu0 %v3521
        %v4526 = vpop.f32.mrb[0].mxu0
        %v4527 = vadd.f32 %v4334, %v4526
        %v4528 = vpop.f32.mrb[0].mxu0
        %v4529 = vadd.f32 %v4336, %v4528
        %v4530 = vpop.f32.mrb[0].mxu0
        %v4531 = vadd.f32 %v4338, %v4530
        %v4532 = vpop.f32.mrb[0].mxu0
        %v4533 = vadd.f32 %v4340, %v4532
        %4534 = vmatprep.mubr.bf16.mxu0 %v3526
        %4535 = vmatmul.mubr.bf16.gmra.mrb[0].mxu0 %v3525
        %v4536 = vpop.f32.mrb[0].mxu0
        %v4537 = vadd.f32 %v4344, %v4536
        %v4538 = vpop.f32.mrb[0].mxu0
        %v4539 = vadd.f32 %v4346, %v4538
        %v4540 = vpop.f32.mrb[0].mxu0
        %v4541 = vadd.f32 %v4348, %v4540
        %v4542 = vpop.f32.mrb[0].mxu0
        %v4543 = vadd.f32 %v4350, %v4542
        %4544 = vmatprep.mubr.bf16.mxu0 %v3530
        %4545 = vmatmul.mubr.bf16.gmra.mrb[0].mxu0 %v3529
        %v4546 = vpop.f32.mrb[0].mxu0
        %v4547 = vadd.f32 %v4354, %v4546
        %v4548 = vpop.f32.mrb[0].mxu0
        %v4549 = vadd.f32 %v4356, %v4548
        %v4550 = vpop.f32.mrb[0].mxu0
        %v4551 = vadd.f32 %v4358, %v4550
        %v4552 = vpop.f32.mrb[0].mxu0
        %v4553 = vadd.f32 %v4360, %v4552
        %4554 = vmatprep.mubr.bf16.mxu0 %v3534
        %4555 = vmatmul.mubr.bf16.gmra.mrb[0].mxu0 %v3533
        %v4556 = vpop.f32.mrb[0].mxu0
        %v4557 = vadd.f32 %v4364, %v4556
        %v4558 = vpop.f32.mrb[0].mxu0
        %v4559 = vadd.f32 %v4366, %v4558
        %v4560 = vpop.f32.mrb[0].mxu0
        %v4561 = vadd.f32 %v4368, %v4560
        %v4562 = vpop.f32.mrb[0].mxu0
        %v4563 = vadd.f32 %v4370, %v4562
        %4564 = vmatprep.mubr.bf16.mxu0 %v3538
        %4565 = vmatmul.mubr.bf16.gmra.mrb[0].mxu0 %v3537
        %v4566 = vpop.f32.mrb[0].mxu0
        %v4567 = vadd.f32 %v4374, %v4566
        %v4568 = vpop.f32.mrb[0].mxu0
        %v4569 = vadd.f32 %v4376, %v4568
        %v4570 = vpop.f32.mrb[0].mxu0
        %v4571 = vadd.f32 %v4378, %v4570
        %v4572 = vpop.f32.mrb[0].mxu0
        %v4573 = vadd.f32 %v4380, %v4572
        %4574 = vmatprep.mubr.bf16.mxu0 %v3542
        %4575 = vmatmul.mubr.bf16.gmra.mrb[0].mxu0 %v3541
        %v4576 = vpop.f32.mrb[0].mxu0
        %v4577 = vadd.f32 %v4384, %v4576
        %v4578 = vpop.f32.mrb[0].mxu0
        %v4579 = vadd.f32 %v4386, %v4578
        %v4580 = vpop.f32.mrb[0].mxu0
        %v4581 = vadd.f32 %v4388, %v4580
        %v4582 = vpop.f32.mrb[0].mxu0
        %v4583 = vadd.f32 %v4390, %v4582
        %4584 = vmatprep.mubr.bf16.mxu0 %v3546
        %4585 = vmatmul.mubr.bf16.gmra.mrb[0].mxu0 %v3545
        %v4586 = vpop.f32.mrb[0].mxu0
        %v4587 = vadd.f32 %v4394, %v4586
        %v4588 = vpop.f32.mrb[0].mxu0
        %v4589 = vadd.f32 %v4396, %v4588
        %v4590 = vpop.f32.mrb[0].mxu0
        %v4591 = vadd.f32 %v4398, %v4590
        %v4592 = vpop.f32.mrb[0].mxu0
        %v4593 = vadd.f32 %v4400, %v4592
        %4594 = vmatprep.mubr.bf16.mxu0 %v3550
        %4595 = vmatmul.mubr.bf16.gmra.mrb[0].mxu0 %v3549
        %v4596 = vpop.f32.mrb[0].mxu0
        %v4597 = vadd.f32 %v4404, %v4596
        %v4598 = vpop.f32.mrb[0].mxu0
        %v4599 = vadd.f32 %v4406, %v4598
        %v4600 = vpop.f32.mrb[0].mxu0
        %v4601 = vadd.f32 %v4408, %v4600
        %v4602 = vpop.f32.mrb[0].mxu0
        %v4603 = vadd.f32 %v4410, %v4602
        %4604 = vmatprep.mubr.bf16.mxu0 %v3554
        %4605 = vmatmul.mubr.bf16.gmra.mrb[0].mxu0 %v3553
        %v4606 = vpop.f32.mrb[0].mxu0
        %v4607 = vadd.f32 %v4414, %v4606
        %v4608 = vpop.f32.mrb[0].mxu0
        %v4609 = vadd.f32 %v4416, %v4608
        %v4610 = vpop.f32.mrb[0].mxu0
        %v4611 = vadd.f32 %v4418, %v4610
        %v4612 = vpop.f32.mrb[0].mxu0
        %v4613 = vadd.f32 %v4420, %v4612
        %4614 = vmatprep.mubr.bf16.mxu0 %v3558
        %4615 = vmatmul.mubr.bf16.gmra.mrb[0].mxu0 %v3557
        %v4616 = vpop.f32.mrb[0].mxu0
        %v4617 = vadd.f32 %v4424, %v4616
        %v4618 = vpop.f32.mrb[0].mxu0
        %v4619 = vadd.f32 %v4426, %v4618
        %v4620 = vpop.f32.mrb[0].mxu0
        %v4621 = vadd.f32 %v4428, %v4620
        %v4622 = vpop.f32.mrb[0].mxu0
        %v4623 = vadd.f32 %v4430, %v4622
        %4624 = vmatprep.mubr.bf16.mxu0 %v3562
        %4625 = vmatmul.mubr.bf16.gmra.mrb[0].mxu0 %v3561
        %v4626 = vpop.f32.mrb[0].mxu0
        %v4627 = vadd.f32 %v4434, %v4626
        %v4628 = vpop.f32.mrb[0].mxu0
        %v4629 = vadd.f32 %v4436, %v4628
        %v4630 = vpop.f32.mrb[0].mxu0
        %v4631 = vadd.f32 %v4438, %v4630
        %v4632 = vpop.f32.mrb[0].mxu0
        %v4633 = vadd.f32 %v4440, %v4632
        %4634 = vmatprep.mubr.bf16.mxu0 %v3566
        %4635 = vmatmul.mubr.bf16.gmra.mrb[0].mxu0 %v3565
        %v4636 = vpop.f32.mrb[0].mxu0
        %v4637 = vadd.f32 %v4444, %v4636
        %v4638 = vpop.f32.mrb[0].mxu0
        %v4639 = vadd.f32 %v4446, %v4638
        %v4640 = vpop.f32.mrb[0].mxu0
        %v4641 = vadd.f32 %v4448, %v4640
        %v4642 = vpop.f32.mrb[0].mxu0
        %v4643 = vadd.f32 %v4450, %v4642
        %4644 = vmatprep.mubr.bf16.mxu0 %v3570
        %4645 = vmatmul.mubr.bf16.gmra.mrb[0].mxu0 %v3569
        %v4646 = vpop.f32.mrb[0].mxu0
        %v4647 = vadd.f32 %v4454, %v4646
        %v4648 = vpop.f32.mrb[0].mxu0
        %v4649 = vadd.f32 %v4456, %v4648
        %v4650 = vpop.f32.mrb[0].mxu0
        %v4651 = vadd.f32 %v4458, %v4650
        %v4652 = vpop.f32.mrb[0].mxu0
        %v4653 = vadd.f32 %v4460, %v4652
        %4654 = vmatprep.mubr.bf16.mxu0 %v3574
        %4655 = vmatmul.mubr.bf16.gmra.mrb[0].mxu0 %v3573
        %v4656 = vpop.f32.mrb[0].mxu0
        %v4657 = vadd.f32 %v4464, %v4656
        %v4658 = vpop.f32.mrb[0].mxu0
        %v4659 = vadd.f32 %v4466, %v4658
        %v4660 = vpop.f32.mrb[0].mxu0
        %v4661 = vadd.f32 %v4468, %v4660
        %v4662 = vpop.f32.mrb[0].mxu0
        %v4663 = vadd.f32 %v4470, %v4662
        %4664 = vdwg.mxu0
        %4665 = vmatprep.subr.bf16.mxu0 %v4026
        %4666 = vmatpush1.bf16.msra.mxu0 %v4025
        %4667 = vmatprep.subr.bf16.mxu0 %v4030
        %4668 = vmatpush1.bf16.msra.mxu0 %v4029
        %4669 = vmatprep.subr.bf16.mxu0 %v4034
        %4670 = vmatpush1.bf16.msra.mxu0 %v4033
        %4671 = vmatprep.subr.bf16.mxu0 %v4038
        %4672 = vmatpush1.bf16.msra.mxu0 %v4037
        %4673 = vmatprep.subr.bf16.mxu0 %v4042
        %4674 = vmatpush1.bf16.msra.mxu0 %v4041
        %4675 = vmatprep.subr.bf16.mxu0 %v4046
        %4676 = vmatpush1.bf16.msra.mxu0 %v4045
        %4677 = vmatprep.subr.bf16.mxu0 %v4050
        %4678 = vmatpush1.bf16.msra.mxu0 %v4049
        %4679 = vmatprep.subr.bf16.mxu0 %v4054
        %4680 = vmatpush1.bf16.msra.mxu0 %v4053
        %4681 = vmatprep.subr.bf16.mxu0 %v4058
        %4682 = vmatpush1.bf16.msra.mxu0 %v4057
        %4683 = vmatprep.subr.bf16.mxu0 %v4062
        %4684 = vmatpush1.bf16.msra.mxu0 %v4061
        %4685 = vmatprep.subr.bf16.mxu0 %v4066
        %4686 = vmatpush1.bf16.msra.mxu0 %v4065
        %4687 = vmatprep.subr.bf16.mxu0 %v4070
        %4688 = vmatpush1.bf16.msra.mxu0 %v4069
        %4689 = vmatprep.subr.bf16.mxu0 %v4074
        %4690 = vmatpush1.bf16.msra.mxu0 %v4073
        %4691 = vmatprep.subr.bf16.mxu0 %v4078
        %4692 = vmatpush1.bf16.msra.mxu0 %v4077
        %4693 = vmatprep.subr.bf16.mxu0 %v4082
        %4694 = vmatpush1.bf16.msra.mxu0 %v4081
        %4695 = vmatprep.subr.bf16.mxu0 %v4086
        %4696 = vmatpush1.bf16.msra.mxu0 %v4085
        %4697 = vmatprep.mubr.bf16.mxu0 %v3512
        %4698 = vmatmul.mubr.bf16.gmra.mrb[0].mxu0 %v3511
        %v4699 = vpop.f32.mrb[0].mxu0
        %v4700 = vadd.f32 %v3310, %v4699
        %v4701 = vpop.f32.mrb[0].mxu0
        %v4702 = vadd.f32 %v3314, %v4701
        %v4703 = vpop.f32.mrb[0].mxu0
        %v4704 = vadd.f32 %v3310, %v4703
        %v4705 = vpop.f32.mrb[0].mxu0
        %v4706 = vadd.f32 %v3314, %v4705
        %4707 = vmatprep.mubr.bf16.mxu0 %v3516
        %4708 = vmatmul.mubr.bf16.gmra.mrb[0].mxu0 %v3515
        %v4709 = vpop.f32.mrb[0].mxu0
        %v4710 = vadd.f32 %v3310, %v4709
        %v4711 = vpop.f32.mrb[0].mxu0
        %v4712 = vadd.f32 %v3314, %v4711
        %v4713 = vpop.f32.mrb[0].mxu0
        %v4714 = vadd.f32 %v3310, %v4713
        %v4715 = vpop.f32.mrb[0].mxu0
        %v4716 = vadd.f32 %v3314, %v4715
        %4717 = vmatprep.mubr.bf16.mxu0 %v3520
        %4718 = vmatmul.mubr.bf16.gmra.mrb[0].mxu0 %v3519
        %v4719 = vpop.f32.mrb[0].mxu0
        %v4720 = vadd.f32 %v3310, %v4719
        %v4721 = vpop.f32.mrb[0].mxu0
        %v4722 = vadd.f32 %v3314, %v4721
        %v4723 = vpop.f32.mrb[0].mxu0
        %v4724 = vadd.f32 %v3310, %v4723
        %v4725 = vpop.f32.mrb[0].mxu0
        %v4726 = vadd.f32 %v3314, %v4725
        %4727 = vmatprep.mubr.bf16.mxu0 %v3524
        %4728 = vmatmul.mubr.bf16.gmra.mrb[0].mxu0 %v3523
        %v4729 = vpop.f32.mrb[0].mxu0
        %v4730 = vadd.f32 %v3310, %v4729
        %v4731 = vpop.f32.mrb[0].mxu0
        %v4732 = vadd.f32 %v3314, %v4731
        %v4733 = vpop.f32.mrb[0].mxu0
        %v4734 = vadd.f32 %v3310, %v4733
        %v4735 = vpop.f32.mrb[0].mxu0
        %v4736 = vadd.f32 %v3314, %v4735
        %4737 = vmatprep.mubr.bf16.mxu0 %v3528
        %4738 = vmatmul.mubr.bf16.gmra.mrb[0].mxu0 %v3527
        %v4739 = vpop.f32.mrb[0].mxu0
        %v4740 = vadd.f32 %v3310, %v4739
        %v4741 = vpop.f32.mrb[0].mxu0
        %v4742 = vadd.f32 %v3314, %v4741
        %v4743 = vpop.f32.mrb[0].mxu0
        %v4744 = vadd.f32 %v3310, %v4743
        %v4745 = vpop.f32.mrb[0].mxu0
        %v4746 = vadd.f32 %v3314, %v4745
        %4747 = vmatprep.mubr.bf16.mxu0 %v3532
        %4748 = vmatmul.mubr.bf16.gmra.mrb[0].mxu0 %v3531
        %v4749 = vpop.f32.mrb[0].mxu0
        %v4750 = vadd.f32 %v3310, %v4749
        %v4751 = vpop.f32.mrb[0].mxu0
        %v4752 = vadd.f32 %v3314, %v4751
        %v4753 = vpop.f32.mrb[0].mxu0
        %v4754 = vadd.f32 %v3310, %v4753
        %v4755 = vpop.f32.mrb[0].mxu0
        %v4756 = vadd.f32 %v3314, %v4755
        %4757 = vmatprep.mubr.bf16.mxu0 %v3536
        %4758 = vmatmul.mubr.bf16.gmra.mrb[0].mxu0 %v3535
        %v4759 = vpop.f32.mrb[0].mxu0
        %v4760 = vadd.f32 %v3310, %v4759
        %v4761 = vpop.f32.mrb[0].mxu0
        %v4762 = vadd.f32 %v3314, %v4761
        %v4763 = vpop.f32.mrb[0].mxu0
        %v4764 = vadd.f32 %v3310, %v4763
        %v4765 = vpop.f32.mrb[0].mxu0
        %v4766 = vadd.f32 %v3314, %v4765
        %4767 = vmatprep.mubr.bf16.mxu0 %v3540
        %4768 = vmatmul.mubr.bf16.gmra.mrb[0].mxu0 %v3539
        %v4769 = vpop.f32.mrb[0].mxu0
        %v4770 = vadd.f32 %v3310, %v4769
        %v4771 = vpop.f32.mrb[0].mxu0
        %v4772 = vadd.f32 %v3314, %v4771
        %v4773 = vpop.f32.mrb[0].mxu0
        %v4774 = vadd.f32 %v3310, %v4773
        %v4775 = vpop.f32.mrb[0].mxu0
        %v4776 = vadd.f32 %v3314, %v4775
        %4777 = vmatprep.mubr.bf16.mxu0 %v3544
        %4778 = vmatmul.mubr.bf16.gmra.mrb[0].mxu0 %v3543
        %v4779 = vpop.f32.mrb[0].mxu0
        %v4780 = vadd.f32 %v3310, %v4779
        %v4781 = vpop.f32.mrb[0].mxu0
        %v4782 = vadd.f32 %v3314, %v4781
        %v4783 = vpop.f32.mrb[0].mxu0
        %v4784 = vadd.f32 %v3310, %v4783
        %v4785 = vpop.f32.mrb[0].mxu0
        %v4786 = vadd.f32 %v3314, %v4785
        %4787 = vmatprep.mubr.bf16.mxu0 %v3548
        %4788 = vmatmul.mubr.bf16.gmra.mrb[0].mxu0 %v3547
        %v4789 = vpop.f32.mrb[0].mxu0
        %v4790 = vadd.f32 %v3310, %v4789
        %v4791 = vpop.f32.mrb[0].mxu0
        %v4792 = vadd.f32 %v3314, %v4791
        %v4793 = vpop.f32.mrb[0].mxu0
        %v4794 = vadd.f32 %v3310, %v4793
        %v4795 = vpop.f32.mrb[0].mxu0
        %v4796 = vadd.f32 %v3314, %v4795
        %4797 = vmatprep.mubr.bf16.mxu0 %v3552
        %4798 = vmatmul.mubr.bf16.gmra.mrb[0].mxu0 %v3551
        %v4799 = vpop.f32.mrb[0].mxu0
        %v4800 = vadd.f32 %v3310, %v4799
        %v4801 = vpop.f32.mrb[0].mxu0
        %v4802 = vadd.f32 %v3314, %v4801
        %v4803 = vpop.f32.mrb[0].mxu0
        %v4804 = vadd.f32 %v3310, %v4803
        %v4805 = vpop.f32.mrb[0].mxu0
        %v4806 = vadd.f32 %v3314, %v4805
        %4807 = vmatprep.mubr.bf16.mxu0 %v3556
        %4808 = vmatmul.mubr.bf16.gmra.mrb[0].mxu0 %v3555
        %v4809 = vpop.f32.mrb[0].mxu0
        %v4810 = vadd.f32 %v3310, %v4809
        %v4811 = vpop.f32.mrb[0].mxu0
        %v4812 = vadd.f32 %v3314, %v4811
        %v4813 = vpop.f32.mrb[0].mxu0
        %v4814 = vadd.f32 %v3310, %v4813
        %v4815 = vpop.f32.mrb[0].mxu0
        %v4816 = vadd.f32 %v3314, %v4815
        %4817 = vmatprep.mubr.bf16.mxu0 %v3560
        %4818 = vmatmul.mubr.bf16.gmra.mrb[0].mxu0 %v3559
        %v4819 = vpop.f32.mrb[0].mxu0
        %v4820 = vadd.f32 %v3310, %v4819
        %v4821 = vpop.f32.mrb[0].mxu0
        %v4822 = vadd.f32 %v3314, %v4821
        %v4823 = vpop.f32.mrb[0].mxu0
        %v4824 = vadd.f32 %v3310, %v4823
        %v4825 = vpop.f32.mrb[0].mxu0
        %v4826 = vadd.f32 %v3314, %v4825
        %4827 = vmatprep.mubr.bf16.mxu0 %v3564
        %4828 = vmatmul.mubr.bf16.gmra.mrb[0].mxu0 %v3563
        %v4829 = vpop.f32.mrb[0].mxu0
        %v4830 = vadd.f32 %v3310, %v4829
        %v4831 = vpop.f32.mrb[0].mxu0
        %v4832 = vadd.f32 %v3314, %v4831
        %v4833 = vpop.f32.mrb[0].mxu0
        %v4834 = vadd.f32 %v3310, %v4833
        %v4835 = vpop.f32.mrb[0].mxu0
        %v4836 = vadd.f32 %v3314, %v4835
        %4837 = vmatprep.mubr.bf16.mxu0 %v3568
        %4838 = vmatmul.mubr.bf16.gmra.mrb[0].mxu0 %v3567
        %v4839 = vpop.f32.mrb[0].mxu0
        %v4840 = vadd.f32 %v3310, %v4839
        %v4841 = vpop.f32.mrb[0].mxu0
        %v4842 = vadd.f32 %v3314, %v4841
        %v4843 = vpop.f32.mrb[0].mxu0
        %v4844 = vadd.f32 %v3310, %v4843
        %v4845 = vpop.f32.mrb[0].mxu0
        %v4846 = vadd.f32 %v3314, %v4845
        %4847 = vmatprep.mubr.bf16.mxu0 %v3572
        %4848 = vmatmul.mubr.bf16.gmra.mrb[0].mxu0 %v3571
        %v4849 = vpop.f32.mrb[0].mxu0
        %v4850 = vadd.f32 %v3310, %v4849
        %v4851 = vpop.f32.mrb[0].mxu0
        %v4852 = vadd.f32 %v3314, %v4851
        %v4853 = vpop.f32.mrb[0].mxu0
        %v4854 = vadd.f32 %v3310, %v4853
        %v4855 = vpop.f32.mrb[0].mxu0
        %v4856 = vadd.f32 %v3314, %v4855
        %4857 = vdwg.mxu0
        %4858 = vmatprep.subr.bf16.mxu0 %v4090
        %4859 = vmatpush1.bf16.msra.mxu0 %v4089
        %4860 = vmatprep.subr.bf16.mxu0 %v4094
        %4861 = vmatpush1.bf16.msra.mxu0 %v4093
        %4862 = vmatprep.subr.bf16.mxu0 %v4098
        %4863 = vmatpush1.bf16.msra.mxu0 %v4097
        %4864 = vmatprep.subr.bf16.mxu0 %v4102
        %4865 = vmatpush1.bf16.msra.mxu0 %v4101
        %4866 = vmatprep.subr.bf16.mxu0 %v4106
        %4867 = vmatpush1.bf16.msra.mxu0 %v4105
        %4868 = vmatprep.subr.bf16.mxu0 %v4110
        %4869 = vmatpush1.bf16.msra.mxu0 %v4109
        %4870 = vmatprep.subr.bf16.mxu0 %v4114
        %4871 = vmatpush1.bf16.msra.mxu0 %v4113
        %4872 = vmatprep.subr.bf16.mxu0 %v4118
        %4873 = vmatpush1.bf16.msra.mxu0 %v4117
        %4874 = vmatprep.subr.bf16.mxu0 %v4122
        %4875 = vmatpush1.bf16.msra.mxu0 %v4121
        %4876 = vmatprep.subr.bf16.mxu0 %v4126
        %4877 = vmatpush1.bf16.msra.mxu0 %v4125
        %4878 = vmatprep.subr.bf16.mxu0 %v4130
        %4879 = vmatpush1.bf16.msra.mxu0 %v4129
        %4880 = vmatprep.subr.bf16.mxu0 %v4134
        %4881 = vmatpush1.bf16.msra.mxu0 %v4133
        %4882 = vmatprep.subr.bf16.mxu0 %v4138
        %4883 = vmatpush1.bf16.msra.mxu0 %v4137
        %4884 = vmatprep.subr.bf16.mxu0 %v4142
        %4885 = vmatpush1.bf16.msra.mxu0 %v4141
        %4886 = vmatprep.subr.bf16.mxu0 %v4146
        %4887 = vmatpush1.bf16.msra.mxu0 %v4145
        %4888 = vmatprep.subr.bf16.mxu0 %v4150
        %4889 = vmatpush1.bf16.msra.mxu0 %v4149
        %4890 = vmatprep.mubr.bf16.mxu0 %v3514
        %4891 = vmatmul.mubr.bf16.gmra.mrb[0].mxu0 %v3513
        %v4892 = vpop.f32.mrb[0].mxu0
        %v4893 = vadd.f32 %v4700, %v4892
        %v4894 = vpop.f32.mrb[0].mxu0
        %v4895 = vadd.f32 %v4702, %v4894
        %v4896 = vpop.f32.mrb[0].mxu0
        %v4897 = vadd.f32 %v4704, %v4896
        %v4898 = vpop.f32.mrb[0].mxu0
        %v4899 = vadd.f32 %v4706, %v4898
        %4900 = vmatprep.mubr.bf16.mxu0 %v3518
        %4901 = vmatmul.mubr.bf16.gmra.mrb[0].mxu0 %v3517
        %v4902 = vpop.f32.mrb[0].mxu0
        %v4903 = vadd.f32 %v4710, %v4902
        %v4904 = vpop.f32.mrb[0].mxu0
        %v4905 = vadd.f32 %v4712, %v4904
        %v4906 = vpop.f32.mrb[0].mxu0
        %v4907 = vadd.f32 %v4714, %v4906
        %v4908 = vpop.f32.mrb[0].mxu0
        %v4909 = vadd.f32 %v4716, %v4908
        %4910 = vmatprep.mubr.bf16.mxu0 %v3522
        %4911 = vmatmul.mubr.bf16.gmra.mrb[0].mxu0 %v3521
        %v4912 = vpop.f32.mrb[0].mxu0
        %v4913 = vadd.f32 %v4720, %v4912
        %v4914 = vpop.f32.mrb[0].mxu0
        %v4915 = vadd.f32 %v4722, %v4914
        %v4916 = vpop.f32.mrb[0].mxu0
        %v4917 = vadd.f32 %v4724, %v4916
        %v4918 = vpop.f32.mrb[0].mxu0
        %v4919 = vadd.f32 %v4726, %v4918
        %4920 = vmatprep.mubr.bf16.mxu0 %v3526
        %4921 = vmatmul.mubr.bf16.gmra.mrb[0].mxu0 %v3525
        %v4922 = vpop.f32.mrb[0].mxu0
        %v4923 = vadd.f32 %v4730, %v4922
        %v4924 = vpop.f32.mrb[0].mxu0
        %v4925 = vadd.f32 %v4732, %v4924
        %v4926 = vpop.f32.mrb[0].mxu0
        %v4927 = vadd.f32 %v4734, %v4926
        %v4928 = vpop.f32.mrb[0].mxu0
        %v4929 = vadd.f32 %v4736, %v4928
        %4930 = vmatprep.mubr.bf16.mxu0 %v3530
        %4931 = vmatmul.mubr.bf16.gmra.mrb[0].mxu0 %v3529
        %v4932 = vpop.f32.mrb[0].mxu0
        %v4933 = vadd.f32 %v4740, %v4932
        %v4934 = vpop.f32.mrb[0].mxu0
        %v4935 = vadd.f32 %v4742, %v4934
        %v4936 = vpop.f32.mrb[0].mxu0
        %v4937 = vadd.f32 %v4744, %v4936
        %v4938 = vpop.f32.mrb[0].mxu0
        %v4939 = vadd.f32 %v4746, %v4938
        %4940 = vmatprep.mubr.bf16.mxu0 %v3534
        %4941 = vmatmul.mubr.bf16.gmra.mrb[0].mxu0 %v3533
        %v4942 = vpop.f32.mrb[0].mxu0
        %v4943 = vadd.f32 %v4750, %v4942
        %v4944 = vpop.f32.mrb[0].mxu0
        %v4945 = vadd.f32 %v4752, %v4944
        %v4946 = vpop.f32.mrb[0].mxu0
        %v4947 = vadd.f32 %v4754, %v4946
        %v4948 = vpop.f32.mrb[0].mxu0
        %v4949 = vadd.f32 %v4756, %v4948
        %4950 = vmatprep.mubr.bf16.mxu0 %v3538
        %4951 = vmatmul.mubr.bf16.gmra.mrb[0].mxu0 %v3537
        %v4952 = vpop.f32.mrb[0].mxu0
        %v4953 = vadd.f32 %v4760, %v4952
        %v4954 = vpop.f32.mrb[0].mxu0
        %v4955 = vadd.f32 %v4762, %v4954
        %v4956 = vpop.f32.mrb[0].mxu0
        %v4957 = vadd.f32 %v4764, %v4956
        %v4958 = vpop.f32.mrb[0].mxu0
        %v4959 = vadd.f32 %v4766, %v4958
        %4960 = vmatprep.mubr.bf16.mxu0 %v3542
        %4961 = vmatmul.mubr.bf16.gmra.mrb[0].mxu0 %v3541
        %v4962 = vpop.f32.mrb[0].mxu0
        %v4963 = vadd.f32 %v4770, %v4962
        %v4964 = vpop.f32.mrb[0].mxu0
        %v4965 = vadd.f32 %v4772, %v4964
        %v4966 = vpop.f32.mrb[0].mxu0
        %v4967 = vadd.f32 %v4774, %v4966
        %v4968 = vpop.f32.mrb[0].mxu0
        %v4969 = vadd.f32 %v4776, %v4968
        %4970 = vmatprep.mubr.bf16.mxu0 %v3546
        %4971 = vmatmul.mubr.bf16.gmra.mrb[0].mxu0 %v3545
        %v4972 = vpop.f32.mrb[0].mxu0
        %v4973 = vadd.f32 %v4780, %v4972
        %v4974 = vpop.f32.mrb[0].mxu0
        %v4975 = vadd.f32 %v4782, %v4974
        %v4976 = vpop.f32.mrb[0].mxu0
        %v4977 = vadd.f32 %v4784, %v4976
        %v4978 = vpop.f32.mrb[0].mxu0
        %v4979 = vadd.f32 %v4786, %v4978
        %4980 = vmatprep.mubr.bf16.mxu0 %v3550
        %4981 = vmatmul.mubr.bf16.gmra.mrb[0].mxu0 %v3549
        %v4982 = vpop.f32.mrb[0].mxu0
        %v4983 = vadd.f32 %v4790, %v4982
        %v4984 = vpop.f32.mrb[0].mxu0
        %v4985 = vadd.f32 %v4792, %v4984
        %v4986 = vpop.f32.mrb[0].mxu0
        %v4987 = vadd.f32 %v4794, %v4986
        %v4988 = vpop.f32.mrb[0].mxu0
        %v4989 = vadd.f32 %v4796, %v4988
        %4990 = vmatprep.mubr.bf16.mxu0 %v3554
        %4991 = vmatmul.mubr.bf16.gmra.mrb[0].mxu0 %v3553
        %v4992 = vpop.f32.mrb[0].mxu0
        %v4993 = vadd.f32 %v4800, %v4992
        %v4994 = vpop.f32.mrb[0].mxu0
        %v4995 = vadd.f32 %v4802, %v4994
        %v4996 = vpop.f32.mrb[0].mxu0
        %v4997 = vadd.f32 %v4804, %v4996
        %v4998 = vpop.f32.mrb[0].mxu0
        %v4999 = vadd.f32 %v4806, %v4998
        %5000 = vmatprep.mubr.bf16.mxu0 %v3558
        %5001 = vmatmul.mubr.bf16.gmra.mrb[0].mxu0 %v3557
        %v5002 = vpop.f32.mrb[0].mxu0
        %v5003 = vadd.f32 %v4810, %v5002
        %v5004 = vpop.f32.mrb[0].mxu0
        %v5005 = vadd.f32 %v4812, %v5004
        %v5006 = vpop.f32.mrb[0].mxu0
        %v5007 = vadd.f32 %v4814, %v5006
        %v5008 = vpop.f32.mrb[0].mxu0
        %v5009 = vadd.f32 %v4816, %v5008
        %5010 = vmatprep.mubr.bf16.mxu0 %v3562
        %5011 = vmatmul.mubr.bf16.gmra.mrb[0].mxu0 %v3561
        %v5012 = vpop.f32.mrb[0].mxu0
        %v5013 = vadd.f32 %v4820, %v5012
        %v5014 = vpop.f32.mrb[0].mxu0
        %v5015 = vadd.f32 %v4822, %v5014
        %v5016 = vpop.f32.mrb[0].mxu0
        %v5017 = vadd.f32 %v4824, %v5016
        %v5018 = vpop.f32.mrb[0].mxu0
        %v5019 = vadd.f32 %v4826, %v5018
        %5020 = vmatprep.mubr.bf16.mxu0 %v3566
        %5021 = vmatmul.mubr.bf16.gmra.mrb[0].mxu0 %v3565
        %v5022 = vpop.f32.mrb[0].mxu0
        %v5023 = vadd.f32 %v4830, %v5022
        %v5024 = vpop.f32.mrb[0].mxu0
        %v5025 = vadd.f32 %v4832, %v5024
        %v5026 = vpop.f32.mrb[0].mxu0
        %v5027 = vadd.f32 %v4834, %v5026
        %v5028 = vpop.f32.mrb[0].mxu0
        %v5029 = vadd.f32 %v4836, %v5028
        %5030 = vmatprep.mubr.bf16.mxu0 %v3570
        %5031 = vmatmul.mubr.bf16.gmra.mrb[0].mxu0 %v3569
        %v5032 = vpop.f32.mrb[0].mxu0
        %v5033 = vadd.f32 %v4840, %v5032
        %v5034 = vpop.f32.mrb[0].mxu0
        %v5035 = vadd.f32 %v4842, %v5034
        %v5036 = vpop.f32.mrb[0].mxu0
        %v5037 = vadd.f32 %v4844, %v5036
        %v5038 = vpop.f32.mrb[0].mxu0
        %v5039 = vadd.f32 %v4846, %v5038
        %5040 = vmatprep.mubr.bf16.mxu0 %v3574
        %5041 = vmatmul.mubr.bf16.gmra.mrb[0].mxu0 %v3573
        %v5042 = vpop.f32.mrb[0].mxu0
        %v5043 = vadd.f32 %v4850, %v5042
        %v5044 = vpop.f32.mrb[0].mxu0
        %v5045 = vadd.f32 %v4852, %v5044
        %v5046 = vpop.f32.mrb[0].mxu0
        %v5047 = vadd.f32 %v4854, %v5046
        %v5048 = vpop.f32.mrb[0].mxu0
        %v5049 = vadd.f32 %v4856, %v5048
        %5050 = vdwg.mxu0
        %v5051 = vpack.c.bf16 %v4511, %v4507
        %v5052 = vpack.c.bf16 %v4513, %v4509
        %v5053 = vpack.c.bf16 %v4897, %v4893
        %v5054 = vpack.c.bf16 %v4899, %v4895
        %v5055 = vpack.c.bf16 %v4521, %v4517
        %v5056 = vpack.c.bf16 %v4523, %v4519
        %v5057 = vpack.c.bf16 %v4907, %v4903
        %v5058 = vpack.c.bf16 %v4909, %v4905
        %v5059 = vpack.c.bf16 %v4531, %v4527
        %v5060 = vpack.c.bf16 %v4533, %v4529
        %v5061 = vpack.c.bf16 %v4917, %v4913
        %v5062 = vpack.c.bf16 %v4919, %v4915
        %v5063 = vpack.c.bf16 %v4541, %v4537
        %v5064 = vpack.c.bf16 %v4543, %v4539
        %v5065 = vpack.c.bf16 %v4927, %v4923
        %v5066 = vpack.c.bf16 %v4929, %v4925
        %v5067 = vpack.c.bf16 %v4551, %v4547
        %v5068 = vpack.c.bf16 %v4553, %v4549
        %v5069 = vpack.c.bf16 %v4937, %v4933
        %v5070 = vpack.c.bf16 %v4939, %v4935
        %v5071 = vpack.c.bf16 %v4561, %v4557
        %v5072 = vpack.c.bf16 %v4563, %v4559
        %v5073 = vpack.c.bf16 %v4947, %v4943
        %v5074 = vpack.c.bf16 %v4949, %v4945
        %v5075 = vpack.c.bf16 %v4571, %v4567
        %v5076 = vpack.c.bf16 %v4573, %v4569
        %v5077 = vpack.c.bf16 %v4957, %v4953
        %v5078 = vpack.c.bf16 %v4959, %v4955
        %v5079 = vpack.c.bf16 %v4581, %v4577
        %v5080 = vpack.c.bf16 %v4583, %v4579
        %v5081 = vpack.c.bf16 %v4967, %v4963
        %v5082 = vpack.c.bf16 %v4969, %v4965
        %v5083 = vpack.c.bf16 %v4591, %v4587
        %v5084 = vpack.c.bf16 %v4593, %v4589
        %v5085 = vpack.c.bf16 %v4977, %v4973
        %v5086 = vpack.c.bf16 %v4979, %v4975
        %v5087 = vpack.c.bf16 %v4601, %v4597
        %v5088 = vpack.c.bf16 %v4603, %v4599
        %v5089 = vpack.c.bf16 %v4987, %v4983
        %v5090 = vpack.c.bf16 %v4989, %v4985
        %v5091 = vpack.c.bf16 %v4611, %v4607
        %v5092 = vpack.c.bf16 %v4613, %v4609
        %v5093 = vpack.c.bf16 %v4997, %v4993
        %v5094 = vpack.c.bf16 %v4999, %v4995
        %v5095 = vpack.c.bf16 %v4621, %v4617
        %v5096 = vpack.c.bf16 %v4623, %v4619
        %v5097 = vpack.c.bf16 %v5007, %v5003
        %v5098 = vpack.c.bf16 %v5009, %v5005
        %v5099 = vpack.c.bf16 %v4631, %v4627
        %v5100 = vpack.c.bf16 %v4633, %v4629
        %v5101 = vpack.c.bf16 %v5017, %v5013
        %v5102 = vpack.c.bf16 %v5019, %v5015
        %v5103 = vpack.c.bf16 %v4641, %v4637
        %v5104 = vpack.c.bf16 %v4643, %v4639
        %v5105 = vpack.c.bf16 %v5027, %v5023
        %v5106 = vpack.c.bf16 %v5029, %v5025
        %v5107 = vpack.c.bf16 %v4651, %v4647
        %v5108 = vpack.c.bf16 %v4653, %v4649
        %v5109 = vpack.c.bf16 %v5037, %v5033
        %v5110 = vpack.c.bf16 %v5039, %v5035
        %v5111 = vpack.c.bf16 %v4661, %v4657
        %v5112 = vpack.c.bf16 %v4663, %v4659
        %v5113 = vpack.c.bf16 %v5047, %v5043
        %v5114 = vpack.c.bf16 %v5049, %v5045
        %v5179 = vunpack.c.l.b16 %v5051
        %v5180 = vunpack.c.l.b16 %v5052
        %v5181 = vunpack.c.l.b16 %v5053
        %v5182 = vunpack.c.l.b16 %v5054
        %v5183 = vunpack.c.h.b16 %v5051
        %v5184 = vunpack.c.h.b16 %v5052
        %v5185 = vunpack.c.h.b16 %v5053
        %v5186 = vunpack.c.h.b16 %v5054
        %v5187 = vunpack.c.l.b16 %v5055
        %v5188 = vunpack.c.l.b16 %v5056
        %v5189 = vunpack.c.l.b16 %v5057
        %v5190 = vunpack.c.l.b16 %v5058
        %v5191 = vunpack.c.h.b16 %v5055
        %v5192 = vunpack.c.h.b16 %v5056
        %v5193 = vunpack.c.h.b16 %v5057
        %v5194 = vunpack.c.h.b16 %v5058
        %v5195 = vunpack.c.l.b16 %v5059
        %v5196 = vunpack.c.l.b16 %v5060
        %v5197 = vunpack.c.l.b16 %v5061
        %v5198 = vunpack.c.l.b16 %v5062
        %v5199 = vunpack.c.h.b16 %v5059
        %v5200 = vunpack.c.h.b16 %v5060
        %v5201 = vunpack.c.h.b16 %v5061
        %v5202 = vunpack.c.h.b16 %v5062
        %v5203 = vunpack.c.l.b16 %v5063
        %v5204 = vunpack.c.l.b16 %v5064
        %v5205 = vunpack.c.l.b16 %v5065
        %v5206 = vunpack.c.l.b16 %v5066
        %v5207 = vunpack.c.h.b16 %v5063
        %v5208 = vunpack.c.h.b16 %v5064
        %v5209 = vunpack.c.h.b16 %v5065
        %v5210 = vunpack.c.h.b16 %v5066
        %v5211 = vunpack.c.l.b16 %v5067
        %v5212 = vunpack.c.l.b16 %v5068
        %v5213 = vunpack.c.l.b16 %v5069
        %v5214 = vunpack.c.l.b16 %v5070
        %v5215 = vunpack.c.h.b16 %v5067
        %v5216 = vunpack.c.h.b16 %v5068
        %v5217 = vunpack.c.h.b16 %v5069
        %v5218 = vunpack.c.h.b16 %v5070
        %v5219 = vunpack.c.l.b16 %v5071
        %v5220 = vunpack.c.l.b16 %v5072
        %v5221 = vunpack.c.l.b16 %v5073
        %v5222 = vunpack.c.l.b16 %v5074
        %v5223 = vunpack.c.h.b16 %v5071
        %v5224 = vunpack.c.h.b16 %v5072
        %v5225 = vunpack.c.h.b16 %v5073
        %v5226 = vunpack.c.h.b16 %v5074
        %v5227 = vunpack.c.l.b16 %v5075
        %v5228 = vunpack.c.l.b16 %v5076
        %v5229 = vunpack.c.l.b16 %v5077
        %v5230 = vunpack.c.l.b16 %v5078
        %v5231 = vunpack.c.h.b16 %v5075
        %v5232 = vunpack.c.h.b16 %v5076
        %v5233 = vunpack.c.h.b16 %v5077
        %v5234 = vunpack.c.h.b16 %v5078
        %v5235 = vunpack.c.l.b16 %v5079
        %v5236 = vunpack.c.l.b16 %v5080
        %v5237 = vunpack.c.l.b16 %v5081
        %v5238 = vunpack.c.l.b16 %v5082
        %v5239 = vunpack.c.h.b16 %v5079
        %v5240 = vunpack.c.h.b16 %v5080
        %v5241 = vunpack.c.h.b16 %v5081
        %v5242 = vunpack.c.h.b16 %v5082
        %v5243 = vunpack.c.l.b16 %v5083
        %v5244 = vunpack.c.l.b16 %v5084
        %v5245 = vunpack.c.l.b16 %v5085
        %v5246 = vunpack.c.l.b16 %v5086
        %v5247 = vunpack.c.h.b16 %v5083
        %v5248 = vunpack.c.h.b16 %v5084
        %v5249 = vunpack.c.h.b16 %v5085
        %v5250 = vunpack.c.h.b16 %v5086
        %v5251 = vunpack.c.l.b16 %v5087
        %v5252 = vunpack.c.l.b16 %v5088
        %v5253 = vunpack.c.l.b16 %v5089
        %v5254 = vunpack.c.l.b16 %v5090
        %v5255 = vunpack.c.h.b16 %v5087
        %v5256 = vunpack.c.h.b16 %v5088
        %v5257 = vunpack.c.h.b16 %v5089
        %v5258 = vunpack.c.h.b16 %v5090
        %v5259 = vunpack.c.l.b16 %v5091
        %v5260 = vunpack.c.l.b16 %v5092
        %v5261 = vunpack.c.l.b16 %v5093
        %v5262 = vunpack.c.l.b16 %v5094
        %v5263 = vunpack.c.h.b16 %v5091
        %v5264 = vunpack.c.h.b16 %v5092
        %v5265 = vunpack.c.h.b16 %v5093
        %v5266 = vunpack.c.h.b16 %v5094
        %v5267 = vunpack.c.l.b16 %v5095
        %v5268 = vunpack.c.l.b16 %v5096
        %v5269 = vunpack.c.l.b16 %v5097
        %v5270 = vunpack.c.l.b16 %v5098
        %v5271 = vunpack.c.h.b16 %v5095
        %v5272 = vunpack.c.h.b16 %v5096
        %v5273 = vunpack.c.h.b16 %v5097
        %v5274 = vunpack.c.h.b16 %v5098
        %v5275 = vunpack.c.l.b16 %v5099
        %v5276 = vunpack.c.l.b16 %v5100
        %v5277 = vunpack.c.l.b16 %v5101
        %v5278 = vunpack.c.l.b16 %v5102
        %v5279 = vunpack.c.h.b16 %v5099
        %v5280 = vunpack.c.h.b16 %v5100
        %v5281 = vunpack.c.h.b16 %v5101
        %v5282 = vunpack.c.h.b16 %v5102
        %v5283 = vunpack.c.l.b16 %v5103
        %v5284 = vunpack.c.l.b16 %v5104
        %v5285 = vunpack.c.l.b16 %v5105
        %v5286 = vunpack.c.l.b16 %v5106
        %v5287 = vunpack.c.h.b16 %v5103
        %v5288 = vunpack.c.h.b16 %v5104
        %v5289 = vunpack.c.h.b16 %v5105
        %v5290 = vunpack.c.h.b16 %v5106
        %v5291 = vunpack.c.l.b16 %v5107
        %v5292 = vunpack.c.l.b16 %v5108
        %v5293 = vunpack.c.l.b16 %v5109
        %v5294 = vunpack.c.l.b16 %v5110
        %v5295 = vunpack.c.h.b16 %v5107
        %v5296 = vunpack.c.h.b16 %v5108
        %v5297 = vunpack.c.h.b16 %v5109
        %v5298 = vunpack.c.h.b16 %v5110
        %v5299 = vunpack.c.l.b16 %v5111
        %v5300 = vunpack.c.l.b16 %v5112
        %v5301 = vunpack.c.l.b16 %v5113
        %v5302 = vunpack.c.l.b16 %v5114
        %v5303 = vunpack.c.h.b16 %v5111
        %v5304 = vunpack.c.h.b16 %v5112
        %v5305 = vunpack.c.h.b16 %v5113
        %v5306 = vunpack.c.h.b16 %v5114
        %v5307 = vpack.c.b16 %v5180, %v5179
        %v5308 = vpack.c.b16 %v5182, %v5181
        %v5309 = vpack.c.b16 %v5184, %v5183
        %v5310 = vpack.c.b16 %v5186, %v5185
        %v5311 = vpack.c.b16 %v5188, %v5187
        %v5312 = vpack.c.b16 %v5190, %v5189
        %v5313 = vpack.c.b16 %v5192, %v5191
        %v5314 = vpack.c.b16 %v5194, %v5193
        %v5315 = vpack.c.b16 %v5196, %v5195
        %v5316 = vpack.c.b16 %v5198, %v5197
        %v5317 = vpack.c.b16 %v5200, %v5199
        %v5318 = vpack.c.b16 %v5202, %v5201
        %v5319 = vpack.c.b16 %v5204, %v5203
        %v5320 = vpack.c.b16 %v5206, %v5205
        %v5321 = vpack.c.b16 %v5208, %v5207
        %v5322 = vpack.c.b16 %v5210, %v5209
        %v5323 = vpack.c.b16 %v5212, %v5211
        %v5324 = vpack.c.b16 %v5214, %v5213
        %v5325 = vpack.c.b16 %v5216, %v5215
        %v5326 = vpack.c.b16 %v5218, %v5217
        %v5327 = vpack.c.b16 %v5220, %v5219
        %v5328 = vpack.c.b16 %v5222, %v5221
        %v5329 = vpack.c.b16 %v5224, %v5223
        %v5330 = vpack.c.b16 %v5226, %v5225
        %v5331 = vpack.c.b16 %v5228, %v5227
        %v5332 = vpack.c.b16 %v5230, %v5229
        %v5333 = vpack.c.b16 %v5232, %v5231
        %v5334 = vpack.c.b16 %v5234, %v5233
        %v5335 = vpack.c.b16 %v5236, %v5235
        %v5336 = vpack.c.b16 %v5238, %v5237
        %v5337 = vpack.c.b16 %v5240, %v5239
        %v5338 = vpack.c.b16 %v5242, %v5241
        %v5339 = vpack.c.b16 %v5244, %v5243
        %v5340 = vpack.c.b16 %v5246, %v5245
        %v5341 = vpack.c.b16 %v5248, %v5247
        %v5342 = vpack.c.b16 %v5250, %v5249
        %v5343 = vpack.c.b16 %v5252, %v5251
        %v5344 = vpack.c.b16 %v5254, %v5253
        %v5345 = vpack.c.b16 %v5256, %v5255
        %v5346 = vpack.c.b16 %v5258, %v5257
        %v5347 = vpack.c.b16 %v5260, %v5259
        %v5348 = vpack.c.b16 %v5262, %v5261
        %v5349 = vpack.c.b16 %v5264, %v5263
        %v5350 = vpack.c.b16 %v5266, %v5265
        %v5351 = vpack.c.b16 %v5268, %v5267
        %v5352 = vpack.c.b16 %v5270, %v5269
        %v5353 = vpack.c.b16 %v5272, %v5271
        %v5354 = vpack.c.b16 %v5274, %v5273
        %v5355 = vpack.c.b16 %v5276, %v5275
        %v5356 = vpack.c.b16 %v5278, %v5277
        %v5357 = vpack.c.b16 %v5280, %v5279
        %v5358 = vpack.c.b16 %v5282, %v5281
        %v5359 = vpack.c.b16 %v5284, %v5283
        %v5360 = vpack.c.b16 %v5286, %v5285
        %v5361 = vpack.c.b16 %v5288, %v5287
        %v5362 = vpack.c.b16 %v5290, %v5289
        %v5363 = vpack.c.b16 %v5292, %v5291
        %v5364 = vpack.c.b16 %v5294, %v5293
        %v5365 = vpack.c.b16 %v5296, %v5295
        %v5366 = vpack.c.b16 %v5298, %v5297
        %v5367 = vpack.c.b16 %v5300, %v5299
        %v5368 = vpack.c.b16 %v5302, %v5301
        %v5369 = vpack.c.b16 %v5304, %v5303
        %v5370 = vpack.c.b16 %v5306, %v5305
        %5435 = vst [vmem:[%s569] sm:$0xff] %v5307
        %5436 = vst [vmem:[%s569 + $0x8] sm:$0xff] %v5308
        %5437 = vst [vmem:[%s569 + $0x10] sm:$0xff] %v5309
        %5438 = vst [vmem:[%s569 + $0x18] sm:$0xff] %v5310
        %5439 = vst [vmem:[%s569 + $0x20] sm:$0xff] %v5311
        %5440 = vst [vmem:[%s569 + $0x28] sm:$0xff] %v5312
        %5441 = vst [vmem:[%s569 + $0x30] sm:$0xff] %v5313
        %5442 = vst [vmem:[%s569 + $0x38] sm:$0xff] %v5314
        %5443 = vst [vmem:[%s569 + $0x40] sm:$0xff] %v5315
        %5444 = vst [vmem:[%s569 + $0x48] sm:$0xff] %v5316
        %5445 = vst [vmem:[%s569 + $0x50] sm:$0xff] %v5317
        %5446 = vst [vmem:[%s569 + $0x58] sm:$0xff] %v5318
        %5447 = vst [vmem:[%s569 + $0x60] sm:$0xff] %v5319
        %5448 = vst [vmem:[%s569 + $0x68] sm:$0xff] %v5320
        %5449 = vst [vmem:[%s569 + $0x70] sm:$0xff] %v5321
        %5450 = vst [vmem:[%s569 + $0x78] sm:$0xff] %v5322
        %5451 = vst [vmem:[%s569 + $0x80] sm:$0xff] %v5323
        %5452 = vst [vmem:[%s569 + $0x88] sm:$0xff] %v5324
        %5453 = vst [vmem:[%s569 + $0x90] sm:$0xff] %v5325
        %5454 = vst [vmem:[%s569 + $0x98] sm:$0xff] %v5326
        %5455 = vst [vmem:[%s569 + $0xa0] sm:$0xff] %v5327
        %5456 = vst [vmem:[%s569 + $0xa8] sm:$0xff] %v5328
        %5457 = vst [vmem:[%s569 + $0xb0] sm:$0xff] %v5329
        %5458 = vst [vmem:[%s569 + $0xb8] sm:$0xff] %v5330
        %5459 = vst [vmem:[%s569 + $0xc0] sm:$0xff] %v5331
        %5460 = vst [vmem:[%s569 + $0xc8] sm:$0xff] %v5332
        %5461 = vst [vmem:[%s569 + $0xd0] sm:$0xff] %v5333
        %5462 = vst [vmem:[%s569 + $0xd8] sm:$0xff] %v5334
        %5463 = vst [vmem:[%s569 + $0xe0] sm:$0xff] %v5335
        %5464 = vst [vmem:[%s569 + $0xe8] sm:$0xff] %v5336
        %5465 = vst [vmem:[%s569 + $0xf0] sm:$0xff] %v5337
        %5466 = vst [vmem:[%s569 + $0xf8] sm:$0xff] %v5338
        %5467 = vst [vmem:[%s569 + $0x100] sm:$0xff] %v5339
        %5468 = vst [vmem:[%s569 + $0x108] sm:$0xff] %v5340
        %5469 = vst [vmem:[%s569 + $0x110] sm:$0xff] %v5341
        %5470 = vst [vmem:[%s569 + $0x118] sm:$0xff] %v5342
        %5471 = vst [vmem:[%s569 + $0x120] sm:$0xff] %v5343
        %5472 = vst [vmem:[%s569 + $0x128] sm:$0xff] %v5344
        %5473 = vst [vmem:[%s569 + $0x130] sm:$0xff] %v5345
        %5474 = vst [vmem:[%s569 + $0x138] sm:$0xff] %v5346
        %5475 = vst [vmem:[%s569 + $0x140] sm:$0xff] %v5347
        %5476 = vst [vmem:[%s569 + $0x148] sm:$0xff] %v5348
        %5477 = vst [vmem:[%s569 + $0x150] sm:$0xff] %v5349
        %5478 = vst [vmem:[%s569 + $0x158] sm:$0xff] %v5350
        %5479 = vst [vmem:[%s569 + $0x160] sm:$0xff] %v5351
        %5480 = vst [vmem:[%s569 + $0x168] sm:$0xff] %v5352
        %5481 = vst [vmem:[%s569 + $0x170] sm:$0xff] %v5353
        %5482 = vst [vmem:[%s569 + $0x178] sm:$0xff] %v5354
        %5483 = vst [vmem:[%s569 + $0x180] sm:$0xff] %v5355
        %5484 = vst [vmem:[%s569 + $0x188] sm:$0xff] %v5356
        %5485 = vst [vmem:[%s569 + $0x190] sm:$0xff] %v5357
        %5486 = vst [vmem:[%s569 + $0x198] sm:$0xff] %v5358
        %5487 = vst [vmem:[%s569 + $0x1a0] sm:$0xff] %v5359
        %5488 = vst [vmem:[%s569 + $0x1a8] sm:$0xff] %v5360
        %5489 = vst [vmem:[%s569 + $0x1b0] sm:$0xff] %v5361
        %5490 = vst [vmem:[%s569 + $0x1b8] sm:$0xff] %v5362
        %5491 = vst [vmem:[%s569 + $0x1c0] sm:$0xff] %v5363
        %5492 = vst [vmem:[%s569 + $0x1c8] sm:$0xff] %v5364
        %5493 = vst [vmem:[%s569 + $0x1d0] sm:$0xff] %v5365
        %5494 = vst [vmem:[%s569 + $0x1d8] sm:$0xff] %v5366
        %5495 = vst [vmem:[%s569 + $0x1e0] sm:$0xff] %v5367
        %5496 = vst [vmem:[%s569 + $0x1e8] sm:$0xff] %v5368
        %5497 = vst [vmem:[%s569 + $0x1f0] sm:$0xff] %v5369
        %5498 = vst [vmem:[%s569 + $0x1f8] sm:$0xff] %v5370
        %v5499 = vld [vmem:[%s506] sm:$0xff]
        %v5500 = vld [vmem:[%s506 + $0x8] sm:$0xff]
        %v5501 = vld [vmem:[%s506 + $0x10] sm:$0xff]
        %v5502 = vld [vmem:[%s506 + $0x18] sm:$0xff]
        %v5503 = vld [vmem:[%s506 + $0x20] sm:$0xff]
        %v5504 = vld [vmem:[%s506 + $0x28] sm:$0xff]
        %v5505 = vld [vmem:[%s506 + $0x30] sm:$0xff]
        %v5506 = vld [vmem:[%s506 + $0x38] sm:$0xff]
        %v5507 = vld [vmem:[%s506 + $0x40] sm:$0xff]
        %v5508 = vld [vmem:[%s506 + $0x48] sm:$0xff]
        %v5509 = vld [vmem:[%s506 + $0x50] sm:$0xff]
        %v5510 = vld [vmem:[%s506 + $0x58] sm:$0xff]
        %v5511 = vld [vmem:[%s506 + $0x60] sm:$0xff]
        %v5512 = vld [vmem:[%s506 + $0x68] sm:$0xff]
        %v5513 = vld [vmem:[%s506 + $0x70] sm:$0xff]
        %v5514 = vld [vmem:[%s506 + $0x78] sm:$0xff]
        %v5515 = vld [vmem:[%s506 + $0x80] sm:$0xff]
        %v5516 = vld [vmem:[%s506 + $0x88] sm:$0xff]
        %v5517 = vld [vmem:[%s506 + $0x90] sm:$0xff]
        %v5518 = vld [vmem:[%s506 + $0x98] sm:$0xff]
        %v5519 = vld [vmem:[%s506 + $0xa0] sm:$0xff]
        %v5520 = vld [vmem:[%s506 + $0xa8] sm:$0xff]
        %v5521 = vld [vmem:[%s506 + $0xb0] sm:$0xff]
        %v5522 = vld [vmem:[%s506 + $0xb8] sm:$0xff]
        %v5523 = vld [vmem:[%s506 + $0xc0] sm:$0xff]
        %v5524 = vld [vmem:[%s506 + $0xc8] sm:$0xff]
        %v5525 = vld [vmem:[%s506 + $0xd0] sm:$0xff]
        %v5526 = vld [vmem:[%s506 + $0xd8] sm:$0xff]
        %v5527 = vld [vmem:[%s506 + $0xe0] sm:$0xff]
        %v5528 = vld [vmem:[%s506 + $0xe8] sm:$0xff]
        %v5529 = vld [vmem:[%s506 + $0xf0] sm:$0xff]
        %v5530 = vld [vmem:[%s506 + $0xf8] sm:$0xff]
        %v5531 = vld [vmem:[%s506 + $0x100] sm:$0xff]
        %v5532 = vld [vmem:[%s506 + $0x108] sm:$0xff]
        %v5533 = vld [vmem:[%s506 + $0x110] sm:$0xff]
        %v5534 = vld [vmem:[%s506 + $0x118] sm:$0xff]
        %v5535 = vld [vmem:[%s506 + $0x120] sm:$0xff]
        %v5536 = vld [vmem:[%s506 + $0x128] sm:$0xff]
        %v5537 = vld [vmem:[%s506 + $0x130] sm:$0xff]
        %v5538 = vld [vmem:[%s506 + $0x138] sm:$0xff]
        %v5539 = vld [vmem:[%s506 + $0x140] sm:$0xff]
        %v5540 = vld [vmem:[%s506 + $0x148] sm:$0xff]
        %v5541 = vld [vmem:[%s506 + $0x150] sm:$0xff]
        %v5542 = vld [vmem:[%s506 + $0x158] sm:$0xff]
        %v5543 = vld [vmem:[%s506 + $0x160] sm:$0xff]
        %v5544 = vld [vmem:[%s506 + $0x168] sm:$0xff]
        %v5545 = vld [vmem:[%s506 + $0x170] sm:$0xff]
        %v5546 = vld [vmem:[%s506 + $0x178] sm:$0xff]
        %v5547 = vld [vmem:[%s506 + $0x180] sm:$0xff]
        %v5548 = vld [vmem:[%s506 + $0x188] sm:$0xff]
        %v5549 = vld [vmem:[%s506 + $0x190] sm:$0xff]
        %v5550 = vld [vmem:[%s506 + $0x198] sm:$0xff]
        %v5551 = vld [vmem:[%s506 + $0x1a0] sm:$0xff]
        %v5552 = vld [vmem:[%s506 + $0x1a8] sm:$0xff]
        %v5553 = vld [vmem:[%s506 + $0x1b0] sm:$0xff]
        %v5554 = vld [vmem:[%s506 + $0x1b8] sm:$0xff]
        %v5555 = vld [vmem:[%s506 + $0x1c0] sm:$0xff]
        %v5556 = vld [vmem:[%s506 + $0x1c8] sm:$0xff]
        %v5557 = vld [vmem:[%s506 + $0x1d0] sm:$0xff]
        %v5558 = vld [vmem:[%s506 + $0x1d8] sm:$0xff]
        %v5559 = vld [vmem:[%s506 + $0x1e0] sm:$0xff]
        %v5560 = vld [vmem:[%s506 + $0x1e8] sm:$0xff]
        %v5561 = vld [vmem:[%s506 + $0x1f0] sm:$0xff]
        %v5562 = vld [vmem:[%s506 + $0x1f8] sm:$0xff]
        %v5563 = vld [vmem:[#allocation11] sm:$0xff]
        %v5564 = vld [vmem:[#allocation11 + $0x8] sm:$0xff]
        %v5565 = vld [vmem:[#allocation11 + $0x10] sm:$0xff]
        %v5566 = vld [vmem:[#allocation11 + $0x18] sm:$0xff]
        %v5567 = vld [vmem:[#allocation11 + $0x20] sm:$0xff]
        %v5568 = vld [vmem:[#allocation11 + $0x28] sm:$0xff]
        %v5569 = vld [vmem:[#allocation11 + $0x30] sm:$0xff]
        %v5570 = vld [vmem:[#allocation11 + $0x38] sm:$0xff]
        %v5571 = vld [vmem:[#allocation11 + $0x40] sm:$0xff]
        %v5572 = vld [vmem:[#allocation11 + $0x48] sm:$0xff]
        %v5573 = vld [vmem:[#allocation11 + $0x50] sm:$0xff]
        %v5574 = vld [vmem:[#allocation11 + $0x58] sm:$0xff]
        %v5575 = vld [vmem:[#allocation11 + $0x60] sm:$0xff]
        %v5576 = vld [vmem:[#allocation11 + $0x68] sm:$0xff]
        %v5577 = vld [vmem:[#allocation11 + $0x70] sm:$0xff]
        %v5578 = vld [vmem:[#allocation11 + $0x78] sm:$0xff]
        %v5579 = vld [vmem:[#allocation11 + $0x80] sm:$0xff]
        %v5580 = vld [vmem:[#allocation11 + $0x88] sm:$0xff]
        %v5581 = vld [vmem:[#allocation11 + $0x90] sm:$0xff]
        %v5582 = vld [vmem:[#allocation11 + $0x98] sm:$0xff]
        %v5583 = vld [vmem:[#allocation11 + $0xa0] sm:$0xff]
        %v5584 = vld [vmem:[#allocation11 + $0xa8] sm:$0xff]
        %v5585 = vld [vmem:[#allocation11 + $0xb0] sm:$0xff]
        %v5586 = vld [vmem:[#allocation11 + $0xb8] sm:$0xff]
        %v5587 = vld [vmem:[#allocation11 + $0xc0] sm:$0xff]
        %v5588 = vld [vmem:[#allocation11 + $0xc8] sm:$0xff]
        %v5589 = vld [vmem:[#allocation11 + $0xd0] sm:$0xff]
        %v5590 = vld [vmem:[#allocation11 + $0xd8] sm:$0xff]
        %v5591 = vld [vmem:[#allocation11 + $0xe0] sm:$0xff]
        %v5592 = vld [vmem:[#allocation11 + $0xe8] sm:$0xff]
        %v5593 = vld [vmem:[#allocation11 + $0xf0] sm:$0xff]
        %v5594 = vld [vmem:[#allocation11 + $0xf8] sm:$0xff]
        %v5595 = vld [vmem:[#allocation11 + $0x100] sm:$0xff]
        %v5596 = vld [vmem:[#allocation11 + $0x108] sm:$0xff]
        %v5597 = vld [vmem:[#allocation11 + $0x110] sm:$0xff]
        %v5598 = vld [vmem:[#allocation11 + $0x118] sm:$0xff]
        %v5599 = vld [vmem:[#allocation11 + $0x120] sm:$0xff]
        %v5600 = vld [vmem:[#allocation11 + $0x128] sm:$0xff]
        %v5601 = vld [vmem:[#allocation11 + $0x130] sm:$0xff]
        %v5602 = vld [vmem:[#allocation11 + $0x138] sm:$0xff]
        %v5603 = vld [vmem:[#allocation11 + $0x140] sm:$0xff]
        %v5604 = vld [vmem:[#allocation11 + $0x148] sm:$0xff]
        %v5605 = vld [vmem:[#allocation11 + $0x150] sm:$0xff]
        %v5606 = vld [vmem:[#allocation11 + $0x158] sm:$0xff]
        %v5607 = vld [vmem:[#allocation11 + $0x160] sm:$0xff]
        %v5608 = vld [vmem:[#allocation11 + $0x168] sm:$0xff]
        %v5609 = vld [vmem:[#allocation11 + $0x170] sm:$0xff]
        %v5610 = vld [vmem:[#allocation11 + $0x178] sm:$0xff]
        %v5611 = vld [vmem:[#allocation11 + $0x180] sm:$0xff]
        %v5612 = vld [vmem:[#allocation11 + $0x188] sm:$0xff]
        %v5613 = vld [vmem:[#allocation11 + $0x190] sm:$0xff]
        %v5614 = vld [vmem:[#allocation11 + $0x198] sm:$0xff]
        %v5615 = vld [vmem:[#allocation11 + $0x1a0] sm:$0xff]
        %v5616 = vld [vmem:[#allocation11 + $0x1a8] sm:$0xff]
        %v5617 = vld [vmem:[#allocation11 + $0x1b0] sm:$0xff]
        %v5618 = vld [vmem:[#allocation11 + $0x1b8] sm:$0xff]
        %v5619 = vld [vmem:[#allocation11 + $0x1c0] sm:$0xff]
        %v5620 = vld [vmem:[#allocation11 + $0x1c8] sm:$0xff]
        %v5621 = vld [vmem:[#allocation11 + $0x1d0] sm:$0xff]
        %v5622 = vld [vmem:[#allocation11 + $0x1d8] sm:$0xff]
        %v5623 = vld [vmem:[#allocation11 + $0x1e0] sm:$0xff]
        %v5624 = vld [vmem:[#allocation11 + $0x1e8] sm:$0xff]
        %v5625 = vld [vmem:[#allocation11 + $0x1f0] sm:$0xff]
        %v5626 = vld [vmem:[#allocation11 + $0x1f8] sm:$0xff]
        %v5627 = vld [vmem:[#allocation11 + $0x200] sm:$0xff]
        %v5628 = vld [vmem:[#allocation11 + $0x208] sm:$0xff]
        %v5629 = vld [vmem:[#allocation11 + $0x210] sm:$0xff]
        %v5630 = vld [vmem:[#allocation11 + $0x218] sm:$0xff]
        %v5631 = vld [vmem:[#allocation11 + $0x220] sm:$0xff]
        %v5632 = vld [vmem:[#allocation11 + $0x228] sm:$0xff]
        %v5633 = vld [vmem:[#allocation11 + $0x230] sm:$0xff]
        %v5634 = vld [vmem:[#allocation11 + $0x238] sm:$0xff]
        %v5635 = vld [vmem:[#allocation11 + $0x240] sm:$0xff]
        %v5636 = vld [vmem:[#allocation11 + $0x248] sm:$0xff]
        %v5637 = vld [vmem:[#allocation11 + $0x250] sm:$0xff]
        %v5638 = vld [vmem:[#allocation11 + $0x258] sm:$0xff]
        %v5639 = vld [vmem:[#allocation11 + $0x260] sm:$0xff]
        %v5640 = vld [vmem:[#allocation11 + $0x268] sm:$0xff]
        %v5641 = vld [vmem:[#allocation11 + $0x270] sm:$0xff]
        %v5642 = vld [vmem:[#allocation11 + $0x278] sm:$0xff]
        %v5643 = vld [vmem:[#allocation11 + $0x280] sm:$0xff]
        %v5644 = vld [vmem:[#allocation11 + $0x288] sm:$0xff]
        %v5645 = vld [vmem:[#allocation11 + $0x290] sm:$0xff]
        %v5646 = vld [vmem:[#allocation11 + $0x298] sm:$0xff]
        %v5647 = vld [vmem:[#allocation11 + $0x2a0] sm:$0xff]
        %v5648 = vld [vmem:[#allocation11 + $0x2a8] sm:$0xff]
        %v5649 = vld [vmem:[#allocation11 + $0x2b0] sm:$0xff]
        %v5650 = vld [vmem:[#allocation11 + $0x2b8] sm:$0xff]
        %v5651 = vld [vmem:[#allocation11 + $0x2c0] sm:$0xff]
        %v5652 = vld [vmem:[#allocation11 + $0x2c8] sm:$0xff]
        %v5653 = vld [vmem:[#allocation11 + $0x2d0] sm:$0xff]
        %v5654 = vld [vmem:[#allocation11 + $0x2d8] sm:$0xff]
        %v5655 = vld [vmem:[#allocation11 + $0x2e0] sm:$0xff]
        %v5656 = vld [vmem:[#allocation11 + $0x2e8] sm:$0xff]
        %v5657 = vld [vmem:[#allocation11 + $0x2f0] sm:$0xff]
        %v5658 = vld [vmem:[#allocation11 + $0x2f8] sm:$0xff]
        %v5659 = vld [vmem:[#allocation11 + $0x300] sm:$0xff]
        %v5660 = vld [vmem:[#allocation11 + $0x308] sm:$0xff]
        %v5661 = vld [vmem:[#allocation11 + $0x310] sm:$0xff]
        %v5662 = vld [vmem:[#allocation11 + $0x318] sm:$0xff]
        %v5663 = vld [vmem:[#allocation11 + $0x320] sm:$0xff]
        %v5664 = vld [vmem:[#allocation11 + $0x328] sm:$0xff]
        %v5665 = vld [vmem:[#allocation11 + $0x330] sm:$0xff]
        %v5666 = vld [vmem:[#allocation11 + $0x338] sm:$0xff]
        %v5667 = vld [vmem:[#allocation11 + $0x340] sm:$0xff]
        %v5668 = vld [vmem:[#allocation11 + $0x348] sm:$0xff]
        %v5669 = vld [vmem:[#allocation11 + $0x350] sm:$0xff]
        %v5670 = vld [vmem:[#allocation11 + $0x358] sm:$0xff]
        %v5671 = vld [vmem:[#allocation11 + $0x360] sm:$0xff]
        %v5672 = vld [vmem:[#allocation11 + $0x368] sm:$0xff]
        %v5673 = vld [vmem:[#allocation11 + $0x370] sm:$0xff]
        %v5674 = vld [vmem:[#allocation11 + $0x378] sm:$0xff]
        %v5675 = vld [vmem:[#allocation11 + $0x380] sm:$0xff]
        %v5676 = vld [vmem:[#allocation11 + $0x388] sm:$0xff]
        %v5677 = vld [vmem:[#allocation11 + $0x390] sm:$0xff]
        %v5678 = vld [vmem:[#allocation11 + $0x398] sm:$0xff]
        %v5679 = vld [vmem:[#allocation11 + $0x3a0] sm:$0xff]
        %v5680 = vld [vmem:[#allocation11 + $0x3a8] sm:$0xff]
        %v5681 = vld [vmem:[#allocation11 + $0x3b0] sm:$0xff]
        %v5682 = vld [vmem:[#allocation11 + $0x3b8] sm:$0xff]
        %v5683 = vld [vmem:[#allocation11 + $0x3c0] sm:$0xff]
        %v5684 = vld [vmem:[#allocation11 + $0x3c8] sm:$0xff]
        %v5685 = vld [vmem:[#allocation11 + $0x3d0] sm:$0xff]
        %v5686 = vld [vmem:[#allocation11 + $0x3d8] sm:$0xff]
        %v5687 = vld [vmem:[#allocation11 + $0x3e0] sm:$0xff]
        %v5688 = vld [vmem:[#allocation11 + $0x3e8] sm:$0xff]
        %v5689 = vld [vmem:[#allocation11 + $0x3f0] sm:$0xff]
        %v5690 = vld [vmem:[#allocation11 + $0x3f8] sm:$0xff]
        %v5691 = vld [vmem:[%s8] sm:$0xf]
        %v5693 = vlaneseq
        %v5694 = vshrl.u32 %v5693, 7
        %v5695 = vsub.s32 0, %v5694
        %v5696 = vrot.slane %v5691, %v5695
        %v5697 = vlaneseq
        %v5698 = vshrl.u32 %v5697, 7
        %v5699 = vsub.s32 1, %v5698
        %v5700 = vrot.slane %v5691, %v5699
        %v5701 = vlaneseq
        %v5702 = vshrl.u32 %v5701, 7
        %v5703 = vsub.s32 2, %v5702
        %v5704 = vrot.slane %v5691, %v5703
        %v5705 = vlaneseq
        %v5706 = vshrl.u32 %v5705, 7
        %v5707 = vsub.s32 3, %v5706
        %v5708 = vrot.slane %v5691, %v5707
        %v5777 = vunpack.c.l.b16 %v5499
        %v5778 = vunpack.c.h.b16 %v5499
        %v5779 = vunpack.c.l.b16 %v5500
        %v5780 = vunpack.c.h.b16 %v5500
        %v5781 = vunpack.c.l.b16 %v5501
        %v5782 = vunpack.c.h.b16 %v5501
        %v5783 = vunpack.c.l.b16 %v5502
        %v5784 = vunpack.c.h.b16 %v5502
        %v5785 = vunpack.c.l.b16 %v5503
        %v5786 = vunpack.c.h.b16 %v5503
        %v5787 = vunpack.c.l.b16 %v5504
        %v5788 = vunpack.c.h.b16 %v5504
        %v5789 = vunpack.c.l.b16 %v5505
        %v5790 = vunpack.c.h.b16 %v5505
        %v5791 = vunpack.c.l.b16 %v5506
        %v5792 = vunpack.c.h.b16 %v5506
        %v5793 = vunpack.c.l.b16 %v5507
        %v5794 = vunpack.c.h.b16 %v5507
        %v5795 = vunpack.c.l.b16 %v5508
        %v5796 = vunpack.c.h.b16 %v5508
        %v5797 = vunpack.c.l.b16 %v5509
        %v5798 = vunpack.c.h.b16 %v5509
        %v5799 = vunpack.c.l.b16 %v5510
        %v5800 = vunpack.c.h.b16 %v5510
        %v5801 = vunpack.c.l.b16 %v5511
        %v5802 = vunpack.c.h.b16 %v5511
        %v5803 = vunpack.c.l.b16 %v5512
        %v5804 = vunpack.c.h.b16 %v5512
        %v5805 = vunpack.c.l.b16 %v5513
        %v5806 = vunpack.c.h.b16 %v5513
        %v5807 = vunpack.c.l.b16 %v5514
        %v5808 = vunpack.c.h.b16 %v5514
        %v5809 = vunpack.c.l.b16 %v5515
        %v5810 = vunpack.c.h.b16 %v5515
        %v5811 = vunpack.c.l.b16 %v5516
        %v5812 = vunpack.c.h.b16 %v5516
        %v5813 = vunpack.c.l.b16 %v5517
        %v5814 = vunpack.c.h.b16 %v5517
        %v5815 = vunpack.c.l.b16 %v5518
        %v5816 = vunpack.c.h.b16 %v5518
        %v5817 = vunpack.c.l.b16 %v5519
        %v5818 = vunpack.c.h.b16 %v5519
        %v5819 = vunpack.c.l.b16 %v5520
        %v5820 = vunpack.c.h.b16 %v5520
        %v5821 = vunpack.c.l.b16 %v5521
        %v5822 = vunpack.c.h.b16 %v5521
        %v5823 = vunpack.c.l.b16 %v5522
        %v5824 = vunpack.c.h.b16 %v5522
        %v5825 = vunpack.c.l.b16 %v5523
        %v5826 = vunpack.c.h.b16 %v5523
        %v5827 = vunpack.c.l.b16 %v5524
        %v5828 = vunpack.c.h.b16 %v5524
        %v5829 = vunpack.c.l.b16 %v5525
        %v5830 = vunpack.c.h.b16 %v5525
        %v5831 = vunpack.c.l.b16 %v5526
        %v5832 = vunpack.c.h.b16 %v5526
        %v5833 = vunpack.c.l.b16 %v5527
        %v5834 = vunpack.c.h.b16 %v5527
        %v5835 = vunpack.c.l.b16 %v5528
        %v5836 = vunpack.c.h.b16 %v5528
        %v5837 = vunpack.c.l.b16 %v5529
        %v5838 = vunpack.c.h.b16 %v5529
        %v5839 = vunpack.c.l.b16 %v5530
        %v5840 = vunpack.c.h.b16 %v5530
        %v5841 = vunpack.c.l.b16 %v5531
        %v5842 = vunpack.c.h.b16 %v5531
        %v5843 = vunpack.c.l.b16 %v5532
        %v5844 = vunpack.c.h.b16 %v5532
        %v5845 = vunpack.c.l.b16 %v5533
        %v5846 = vunpack.c.h.b16 %v5533
        %v5847 = vunpack.c.l.b16 %v5534
        %v5848 = vunpack.c.h.b16 %v5534
        %v5849 = vunpack.c.l.b16 %v5535
        %v5850 = vunpack.c.h.b16 %v5535
        %v5851 = vunpack.c.l.b16 %v5536
        %v5852 = vunpack.c.h.b16 %v5536
        %v5853 = vunpack.c.l.b16 %v5537
        %v5854 = vunpack.c.h.b16 %v5537
        %v5855 = vunpack.c.l.b16 %v5538
        %v5856 = vunpack.c.h.b16 %v5538
        %v5857 = vunpack.c.l.b16 %v5539
        %v5858 = vunpack.c.h.b16 %v5539
        %v5859 = vunpack.c.l.b16 %v5540
        %v5860 = vunpack.c.h.b16 %v5540
        %v5861 = vunpack.c.l.b16 %v5541
        %v5862 = vunpack.c.h.b16 %v5541
        %v5863 = vunpack.c.l.b16 %v5542
        %v5864 = vunpack.c.h.b16 %v5542
        %v5865 = vunpack.c.l.b16 %v5543
        %v5866 = vunpack.c.h.b16 %v5543
        %v5867 = vunpack.c.l.b16 %v5544
        %v5868 = vunpack.c.h.b16 %v5544
        %v5869 = vunpack.c.l.b16 %v5545
        %v5870 = vunpack.c.h.b16 %v5545
        %v5871 = vunpack.c.l.b16 %v5546
        %v5872 = vunpack.c.h.b16 %v5546
        %v5873 = vunpack.c.l.b16 %v5547
        %v5874 = vunpack.c.h.b16 %v5547
        %v5875 = vunpack.c.l.b16 %v5548
        %v5876 = vunpack.c.h.b16 %v5548
        %v5877 = vunpack.c.l.b16 %v5549
        %v5878 = vunpack.c.h.b16 %v5549
        %v5879 = vunpack.c.l.b16 %v5550
        %v5880 = vunpack.c.h.b16 %v5550
        %v5881 = vunpack.c.l.b16 %v5551
        %v5882 = vunpack.c.h.b16 %v5551
        %v5883 = vunpack.c.l.b16 %v5552
        %v5884 = vunpack.c.h.b16 %v5552
        %v5885 = vunpack.c.l.b16 %v5553
        %v5886 = vunpack.c.h.b16 %v5553
        %v5887 = vunpack.c.l.b16 %v5554
        %v5888 = vunpack.c.h.b16 %v5554
        %v5889 = vunpack.c.l.b16 %v5555
        %v5890 = vunpack.c.h.b16 %v5555
        %v5891 = vunpack.c.l.b16 %v5556
        %v5892 = vunpack.c.h.b16 %v5556
        %v5893 = vunpack.c.l.b16 %v5557
        %v5894 = vunpack.c.h.b16 %v5557
        %v5895 = vunpack.c.l.b16 %v5558
        %v5896 = vunpack.c.h.b16 %v5558
        %v5897 = vunpack.c.l.b16 %v5559
        %v5898 = vunpack.c.h.b16 %v5559
        %v5899 = vunpack.c.l.b16 %v5560
        %v5900 = vunpack.c.h.b16 %v5560
        %v5901 = vunpack.c.l.b16 %v5561
        %v5902 = vunpack.c.h.b16 %v5561
        %v5903 = vunpack.c.l.b16 %v5562
        %v5904 = vunpack.c.h.b16 %v5562
        %v5905 = vpack.c.b16 %v5781, %v5777
        %v5906 = vpack.c.b16 %v5782, %v5778
        %v5907 = vpack.c.b16 %v5783, %v5779
        %v5908 = vpack.c.b16 %v5784, %v5780
        %v5909 = vpack.c.b16 %v5789, %v5785
        %v5910 = vpack.c.b16 %v5790, %v5786
        %v5911 = vpack.c.b16 %v5791, %v5787
        %v5912 = vpack.c.b16 %v5792, %v5788
        %v5913 = vpack.c.b16 %v5797, %v5793
        %v5914 = vpack.c.b16 %v5798, %v5794
        %v5915 = vpack.c.b16 %v5799, %v5795
        %v5916 = vpack.c.b16 %v5800, %v5796
        %v5917 = vpack.c.b16 %v5805, %v5801
        %v5918 = vpack.c.b16 %v5806, %v5802
        %v5919 = vpack.c.b16 %v5807, %v5803
        %v5920 = vpack.c.b16 %v5808, %v5804
        %v5921 = vpack.c.b16 %v5813, %v5809
        %v5922 = vpack.c.b16 %v5814, %v5810
        %v5923 = vpack.c.b16 %v5815, %v5811
        %v5924 = vpack.c.b16 %v5816, %v5812
        %v5925 = vpack.c.b16 %v5821, %v5817
        %v5926 = vpack.c.b16 %v5822, %v5818
        %v5927 = vpack.c.b16 %v5823, %v5819
        %v5928 = vpack.c.b16 %v5824, %v5820
        %v5929 = vpack.c.b16 %v5829, %v5825
        %v5930 = vpack.c.b16 %v5830, %v5826
        %v5931 = vpack.c.b16 %v5831, %v5827
        %v5932 = vpack.c.b16 %v5832, %v5828
        %v5933 = vpack.c.b16 %v5837, %v5833
        %v5934 = vpack.c.b16 %v5838, %v5834
        %v5935 = vpack.c.b16 %v5839, %v5835
        %v5936 = vpack.c.b16 %v5840, %v5836
        %v5937 = vpack.c.b16 %v5845, %v5841
        %v5938 = vpack.c.b16 %v5846, %v5842
        %v5939 = vpack.c.b16 %v5847, %v5843
        %v5940 = vpack.c.b16 %v5848, %v5844
        %v5941 = vpack.c.b16 %v5853, %v5849
        %v5942 = vpack.c.b16 %v5854, %v5850
        %v5943 = vpack.c.b16 %v5855, %v5851
        %v5944 = vpack.c.b16 %v5856, %v5852
        %v5945 = vpack.c.b16 %v5861, %v5857
        %v5946 = vpack.c.b16 %v5862, %v5858
        %v5947 = vpack.c.b16 %v5863, %v5859
        %v5948 = vpack.c.b16 %v5864, %v5860
        %v5949 = vpack.c.b16 %v5869, %v5865
        %v5950 = vpack.c.b16 %v5870, %v5866
        %v5951 = vpack.c.b16 %v5871, %v5867
        %v5952 = vpack.c.b16 %v5872, %v5868
        %v5953 = vpack.c.b16 %v5877, %v5873
        %v5954 = vpack.c.b16 %v5878, %v5874
        %v5955 = vpack.c.b16 %v5879, %v5875
        %v5956 = vpack.c.b16 %v5880, %v5876
        %v5957 = vpack.c.b16 %v5885, %v5881
        %v5958 = vpack.c.b16 %v5886, %v5882
        %v5959 = vpack.c.b16 %v5887, %v5883
        %v5960 = vpack.c.b16 %v5888, %v5884
        %v5961 = vpack.c.b16 %v5893, %v5889
        %v5962 = vpack.c.b16 %v5894, %v5890
        %v5963 = vpack.c.b16 %v5895, %v5891
        %v5964 = vpack.c.b16 %v5896, %v5892
        %v5965 = vpack.c.b16 %v5901, %v5897
        %v5966 = vpack.c.b16 %v5902, %v5898
        %v5967 = vpack.c.b16 %v5903, %v5899
        %v5968 = vpack.c.b16 %v5904, %v5900
        %v6161 = vunpack.c.l.b16 %v5563
        %v6162 = vunpack.c.h.b16 %v5563
        %v6163 = vunpack.c.l.b16 %v5564
        %v6164 = vunpack.c.h.b16 %v5564
        %v6165 = vunpack.c.l.b16 %v5565
        %v6166 = vunpack.c.h.b16 %v5565
        %v6167 = vunpack.c.l.b16 %v5566
        %v6168 = vunpack.c.h.b16 %v5566
        %v6169 = vunpack.c.l.b16 %v5567
        %v6170 = vunpack.c.h.b16 %v5567
        %v6171 = vunpack.c.l.b16 %v5568
        %v6172 = vunpack.c.h.b16 %v5568
        %v6173 = vunpack.c.l.b16 %v5569
        %v6174 = vunpack.c.h.b16 %v5569
        %v6175 = vunpack.c.l.b16 %v5570
        %v6176 = vunpack.c.h.b16 %v5570
        %v6177 = vunpack.c.l.b16 %v5571
        %v6178 = vunpack.c.h.b16 %v5571
        %v6179 = vunpack.c.l.b16 %v5572
        %v6180 = vunpack.c.h.b16 %v5572
        %v6181 = vunpack.c.l.b16 %v5573
        %v6182 = vunpack.c.h.b16 %v5573
        %v6183 = vunpack.c.l.b16 %v5574
        %v6184 = vunpack.c.h.b16 %v5574
        %v6185 = vunpack.c.l.b16 %v5575
        %v6186 = vunpack.c.h.b16 %v5575
        %v6187 = vunpack.c.l.b16 %v5576
        %v6188 = vunpack.c.h.b16 %v5576
        %v6189 = vunpack.c.l.b16 %v5577
        %v6190 = vunpack.c.h.b16 %v5577
        %v6191 = vunpack.c.l.b16 %v5578
        %v6192 = vunpack.c.h.b16 %v5578
        %v6193 = vunpack.c.l.b16 %v5579
        %v6194 = vunpack.c.h.b16 %v5579
        %v6195 = vunpack.c.l.b16 %v5580
        %v6196 = vunpack.c.h.b16 %v5580
        %v6197 = vunpack.c.l.b16 %v5581
        %v6198 = vunpack.c.h.b16 %v5581
        %v6199 = vunpack.c.l.b16 %v5582
        %v6200 = vunpack.c.h.b16 %v5582
        %v6201 = vunpack.c.l.b16 %v5583
        %v6202 = vunpack.c.h.b16 %v5583
        %v6203 = vunpack.c.l.b16 %v5584
        %v6204 = vunpack.c.h.b16 %v5584
        %v6205 = vunpack.c.l.b16 %v5585
        %v6206 = vunpack.c.h.b16 %v5585
        %v6207 = vunpack.c.l.b16 %v5586
        %v6208 = vunpack.c.h.b16 %v5586
        %v6209 = vunpack.c.l.b16 %v5587
        %v6210 = vunpack.c.h.b16 %v5587
        %v6211 = vunpack.c.l.b16 %v5588
        %v6212 = vunpack.c.h.b16 %v5588
        %v6213 = vunpack.c.l.b16 %v5589
        %v6214 = vunpack.c.h.b16 %v5589
        %v6215 = vunpack.c.l.b16 %v5590
        %v6216 = vunpack.c.h.b16 %v5590
        %v6217 = vunpack.c.l.b16 %v5591
        %v6218 = vunpack.c.h.b16 %v5591
        %v6219 = vunpack.c.l.b16 %v5592
        %v6220 = vunpack.c.h.b16 %v5592
        %v6221 = vunpack.c.l.b16 %v5593
        %v6222 = vunpack.c.h.b16 %v5593
        %v6223 = vunpack.c.l.b16 %v5594
        %v6224 = vunpack.c.h.b16 %v5594
        %v6225 = vunpack.c.l.b16 %v5595
        %v6226 = vunpack.c.h.b16 %v5595
        %v6227 = vunpack.c.l.b16 %v5596
        %v6228 = vunpack.c.h.b16 %v5596
        %v6229 = vunpack.c.l.b16 %v5597
        %v6230 = vunpack.c.h.b16 %v5597
        %v6231 = vunpack.c.l.b16 %v5598
        %v6232 = vunpack.c.h.b16 %v5598
        %v6233 = vunpack.c.l.b16 %v5599
        %v6234 = vunpack.c.h.b16 %v5599
        %v6235 = vunpack.c.l.b16 %v5600
        %v6236 = vunpack.c.h.b16 %v5600
        %v6237 = vunpack.c.l.b16 %v5601
        %v6238 = vunpack.c.h.b16 %v5601
        %v6239 = vunpack.c.l.b16 %v5602
        %v6240 = vunpack.c.h.b16 %v5602
        %v6241 = vunpack.c.l.b16 %v5603
        %v6242 = vunpack.c.h.b16 %v5603
        %v6243 = vunpack.c.l.b16 %v5604
        %v6244 = vunpack.c.h.b16 %v5604
        %v6245 = vunpack.c.l.b16 %v5605
        %v6246 = vunpack.c.h.b16 %v5605
        %v6247 = vunpack.c.l.b16 %v5606
        %v6248 = vunpack.c.h.b16 %v5606
        %v6249 = vunpack.c.l.b16 %v5607
        %v6250 = vunpack.c.h.b16 %v5607
        %v6251 = vunpack.c.l.b16 %v5608
        %v6252 = vunpack.c.h.b16 %v5608
        %v6253 = vunpack.c.l.b16 %v5609
        %v6254 = vunpack.c.h.b16 %v5609
        %v6255 = vunpack.c.l.b16 %v5610
        %v6256 = vunpack.c.h.b16 %v5610
        %v6257 = vunpack.c.l.b16 %v5611
        %v6258 = vunpack.c.h.b16 %v5611
        %v6259 = vunpack.c.l.b16 %v5612
        %v6260 = vunpack.c.h.b16 %v5612
        %v6261 = vunpack.c.l.b16 %v5613
        %v6262 = vunpack.c.h.b16 %v5613
        %v6263 = vunpack.c.l.b16 %v5614
        %v6264 = vunpack.c.h.b16 %v5614
        %v6265 = vunpack.c.l.b16 %v5615
        %v6266 = vunpack.c.h.b16 %v5615
        %v6267 = vunpack.c.l.b16 %v5616
        %v6268 = vunpack.c.h.b16 %v5616
        %v6269 = vunpack.c.l.b16 %v5617
        %v6270 = vunpack.c.h.b16 %v5617
        %v6271 = vunpack.c.l.b16 %v5618
        %v6272 = vunpack.c.h.b16 %v5618
        %v6273 = vunpack.c.l.b16 %v5619
        %v6274 = vunpack.c.h.b16 %v5619
        %v6275 = vunpack.c.l.b16 %v5620
        %v6276 = vunpack.c.h.b16 %v5620
        %v6277 = vunpack.c.l.b16 %v5621
        %v6278 = vunpack.c.h.b16 %v5621
        %v6279 = vunpack.c.l.b16 %v5622
        %v6280 = vunpack.c.h.b16 %v5622
        %v6281 = vunpack.c.l.b16 %v5623
        %v6282 = vunpack.c.h.b16 %v5623
        %v6283 = vunpack.c.l.b16 %v5624
        %v6284 = vunpack.c.h.b16 %v5624
        %v6285 = vunpack.c.l.b16 %v5625
        %v6286 = vunpack.c.h.b16 %v5625
        %v6287 = vunpack.c.l.b16 %v5626
        %v6288 = vunpack.c.h.b16 %v5626
        %v6289 = vunpack.c.l.b16 %v5627
        %v6290 = vunpack.c.h.b16 %v5627
        %v6291 = vunpack.c.l.b16 %v5628
        %v6292 = vunpack.c.h.b16 %v5628
        %v6293 = vunpack.c.l.b16 %v5629
        %v6294 = vunpack.c.h.b16 %v5629
        %v6295 = vunpack.c.l.b16 %v5630
        %v6296 = vunpack.c.h.b16 %v5630
        %v6297 = vunpack.c.l.b16 %v5631
        %v6298 = vunpack.c.h.b16 %v5631
        %v6299 = vunpack.c.l.b16 %v5632
        %v6300 = vunpack.c.h.b16 %v5632
        %v6301 = vunpack.c.l.b16 %v5633
        %v6302 = vunpack.c.h.b16 %v5633
        %v6303 = vunpack.c.l.b16 %v5634
        %v6304 = vunpack.c.h.b16 %v5634
        %v6305 = vunpack.c.l.b16 %v5635
        %v6306 = vunpack.c.h.b16 %v5635
        %v6307 = vunpack.c.l.b16 %v5636
        %v6308 = vunpack.c.h.b16 %v5636
        %v6309 = vunpack.c.l.b16 %v5637
        %v6310 = vunpack.c.h.b16 %v5637
        %v6311 = vunpack.c.l.b16 %v5638
        %v6312 = vunpack.c.h.b16 %v5638
        %v6313 = vunpack.c.l.b16 %v5639
        %v6314 = vunpack.c.h.b16 %v5639
        %v6315 = vunpack.c.l.b16 %v5640
        %v6316 = vunpack.c.h.b16 %v5640
        %v6317 = vunpack.c.l.b16 %v5641
        %v6318 = vunpack.c.h.b16 %v5641
        %v6319 = vunpack.c.l.b16 %v5642
        %v6320 = vunpack.c.h.b16 %v5642
        %v6321 = vunpack.c.l.b16 %v5643
        %v6322 = vunpack.c.h.b16 %v5643
        %v6323 = vunpack.c.l.b16 %v5644
        %v6324 = vunpack.c.h.b16 %v5644
        %v6325 = vunpack.c.l.b16 %v5645
        %v6326 = vunpack.c.h.b16 %v5645
        %v6327 = vunpack.c.l.b16 %v5646
        %v6328 = vunpack.c.h.b16 %v5646
        %v6329 = vunpack.c.l.b16 %v5647
        %v6330 = vunpack.c.h.b16 %v5647
        %v6331 = vunpack.c.l.b16 %v5648
        %v6332 = vunpack.c.h.b16 %v5648
        %v6333 = vunpack.c.l.b16 %v5649
        %v6334 = vunpack.c.h.b16 %v5649
        %v6335 = vunpack.c.l.b16 %v5650
        %v6336 = vunpack.c.h.b16 %v5650
        %v6337 = vunpack.c.l.b16 %v5651
        %v6338 = vunpack.c.h.b16 %v5651
        %v6339 = vunpack.c.l.b16 %v5652
        %v6340 = vunpack.c.h.b16 %v5652
        %v6341 = vunpack.c.l.b16 %v5653
        %v6342 = vunpack.c.h.b16 %v5653
        %v6343 = vunpack.c.l.b16 %v5654
        %v6344 = vunpack.c.h.b16 %v5654
        %v6345 = vunpack.c.l.b16 %v5655
        %v6346 = vunpack.c.h.b16 %v5655
        %v6347 = vunpack.c.l.b16 %v5656
        %v6348 = vunpack.c.h.b16 %v5656
        %v6349 = vunpack.c.l.b16 %v5657
        %v6350 = vunpack.c.h.b16 %v5657
        %v6351 = vunpack.c.l.b16 %v5658
        %v6352 = vunpack.c.h.b16 %v5658
        %v6353 = vunpack.c.l.b16 %v5659
        %v6354 = vunpack.c.h.b16 %v5659
        %v6355 = vunpack.c.l.b16 %v5660
        %v6356 = vunpack.c.h.b16 %v5660
        %v6357 = vunpack.c.l.b16 %v5661
        %v6358 = vunpack.c.h.b16 %v5661
        %v6359 = vunpack.c.l.b16 %v5662
        %v6360 = vunpack.c.h.b16 %v5662
        %v6361 = vunpack.c.l.b16 %v5663
        %v6362 = vunpack.c.h.b16 %v5663
        %v6363 = vunpack.c.l.b16 %v5664
        %v6364 = vunpack.c.h.b16 %v5664
        %v6365 = vunpack.c.l.b16 %v5665
        %v6366 = vunpack.c.h.b16 %v5665
        %v6367 = vunpack.c.l.b16 %v5666
        %v6368 = vunpack.c.h.b16 %v5666
        %v6369 = vunpack.c.l.b16 %v5667
        %v6370 = vunpack.c.h.b16 %v5667
        %v6371 = vunpack.c.l.b16 %v5668
        %v6372 = vunpack.c.h.b16 %v5668
        %v6373 = vunpack.c.l.b16 %v5669
        %v6374 = vunpack.c.h.b16 %v5669
        %v6375 = vunpack.c.l.b16 %v5670
        %v6376 = vunpack.c.h.b16 %v5670
        %v6377 = vunpack.c.l.b16 %v5671
        %v6378 = vunpack.c.h.b16 %v5671
        %v6379 = vunpack.c.l.b16 %v5672
        %v6380 = vunpack.c.h.b16 %v5672
        %v6381 = vunpack.c.l.b16 %v5673
        %v6382 = vunpack.c.h.b16 %v5673
        %v6383 = vunpack.c.l.b16 %v5674
        %v6384 = vunpack.c.h.b16 %v5674
        %v6385 = vunpack.c.l.b16 %v5675
        %v6386 = vunpack.c.h.b16 %v5675
        %v6387 = vunpack.c.l.b16 %v5676
        %v6388 = vunpack.c.h.b16 %v5676
        %v6389 = vunpack.c.l.b16 %v5677
        %v6390 = vunpack.c.h.b16 %v5677
        %v6391 = vunpack.c.l.b16 %v5678
        %v6392 = vunpack.c.h.b16 %v5678
        %v6393 = vunpack.c.l.b16 %v5679
        %v6394 = vunpack.c.h.b16 %v5679
        %v6395 = vunpack.c.l.b16 %v5680
        %v6396 = vunpack.c.h.b16 %v5680
        %v6397 = vunpack.c.l.b16 %v5681
        %v6398 = vunpack.c.h.b16 %v5681
        %v6399 = vunpack.c.l.b16 %v5682
        %v6400 = vunpack.c.h.b16 %v5682
        %v6401 = vunpack.c.l.b16 %v5683
        %v6402 = vunpack.c.h.b16 %v5683
        %v6403 = vunpack.c.l.b16 %v5684
        %v6404 = vunpack.c.h.b16 %v5684
        %v6405 = vunpack.c.l.b16 %v5685
        %v6406 = vunpack.c.h.b16 %v5685
        %v6407 = vunpack.c.l.b16 %v5686
        %v6408 = vunpack.c.h.b16 %v5686
        %v6409 = vunpack.c.l.b16 %v5687
        %v6410 = vunpack.c.h.b16 %v5687
        %v6411 = vunpack.c.l.b16 %v5688
        %v6412 = vunpack.c.h.b16 %v5688
        %v6413 = vunpack.c.l.b16 %v5689
        %v6414 = vunpack.c.h.b16 %v5689
        %v6415 = vunpack.c.l.b16 %v5690
        %v6416 = vunpack.c.h.b16 %v5690
        %v6417 = vpack.c.b16 %v6165, %v6161
        %v6418 = vpack.c.b16 %v6166, %v6162
        %v6419 = vpack.c.b16 %v6167, %v6163
        %v6420 = vpack.c.b16 %v6168, %v6164
        %v6421 = vpack.c.b16 %v6173, %v6169
        %v6422 = vpack.c.b16 %v6174, %v6170
        %v6423 = vpack.c.b16 %v6175, %v6171
        %v6424 = vpack.c.b16 %v6176, %v6172
        %v6425 = vpack.c.b16 %v6181, %v6177
        %v6426 = vpack.c.b16 %v6182, %v6178
        %v6427 = vpack.c.b16 %v6183, %v6179
        %v6428 = vpack.c.b16 %v6184, %v6180
        %v6429 = vpack.c.b16 %v6189, %v6185
        %v6430 = vpack.c.b16 %v6190, %v6186
        %v6431 = vpack.c.b16 %v6191, %v6187
        %v6432 = vpack.c.b16 %v6192, %v6188
        %v6433 = vpack.c.b16 %v6197, %v6193
        %v6434 = vpack.c.b16 %v6198, %v6194
        %v6435 = vpack.c.b16 %v6199, %v6195
        %v6436 = vpack.c.b16 %v6200, %v6196
        %v6437 = vpack.c.b16 %v6205, %v6201
        %v6438 = vpack.c.b16 %v6206, %v6202
        %v6439 = vpack.c.b16 %v6207, %v6203
        %v6440 = vpack.c.b16 %v6208, %v6204
        %v6441 = vpack.c.b16 %v6213, %v6209
        %v6442 = vpack.c.b16 %v6214, %v6210
        %v6443 = vpack.c.b16 %v6215, %v6211
        %v6444 = vpack.c.b16 %v6216, %v6212
        %v6445 = vpack.c.b16 %v6221, %v6217
        %v6446 = vpack.c.b16 %v6222, %v6218
        %v6447 = vpack.c.b16 %v6223, %v6219
        %v6448 = vpack.c.b16 %v6224, %v6220
        %v6449 = vpack.c.b16 %v6229, %v6225
        %v6450 = vpack.c.b16 %v6230, %v6226
        %v6451 = vpack.c.b16 %v6231, %v6227
        %v6452 = vpack.c.b16 %v6232, %v6228
        %v6453 = vpack.c.b16 %v6237, %v6233
        %v6454 = vpack.c.b16 %v6238, %v6234
        %v6455 = vpack.c.b16 %v6239, %v6235
        %v6456 = vpack.c.b16 %v6240, %v6236
        %v6457 = vpack.c.b16 %v6245, %v6241
        %v6458 = vpack.c.b16 %v6246, %v6242
        %v6459 = vpack.c.b16 %v6247, %v6243
        %v6460 = vpack.c.b16 %v6248, %v6244
        %v6461 = vpack.c.b16 %v6253, %v6249
        %v6462 = vpack.c.b16 %v6254, %v6250
        %v6463 = vpack.c.b16 %v6255, %v6251
        %v6464 = vpack.c.b16 %v6256, %v6252
        %v6465 = vpack.c.b16 %v6261, %v6257
        %v6466 = vpack.c.b16 %v6262, %v6258
        %v6467 = vpack.c.b16 %v6263, %v6259
        %v6468 = vpack.c.b16 %v6264, %v6260
        %v6469 = vpack.c.b16 %v6269, %v6265
        %v6470 = vpack.c.b16 %v6270, %v6266
        %v6471 = vpack.c.b16 %v6271, %v6267
        %v6472 = vpack.c.b16 %v6272, %v6268
        %v6473 = vpack.c.b16 %v6277, %v6273
        %v6474 = vpack.c.b16 %v6278, %v6274
        %v6475 = vpack.c.b16 %v6279, %v6275
        %v6476 = vpack.c.b16 %v6280, %v6276
        %v6477 = vpack.c.b16 %v6285, %v6281
        %v6478 = vpack.c.b16 %v6286, %v6282
        %v6479 = vpack.c.b16 %v6287, %v6283
        %v6480 = vpack.c.b16 %v6288, %v6284
        %v6481 = vpack.c.b16 %v6293, %v6289
        %v6482 = vpack.c.b16 %v6294, %v6290
        %v6483 = vpack.c.b16 %v6295, %v6291
        %v6484 = vpack.c.b16 %v6296, %v6292
        %v6485 = vpack.c.b16 %v6301, %v6297
        %v6486 = vpack.c.b16 %v6302, %v6298
        %v6487 = vpack.c.b16 %v6303, %v6299
        %v6488 = vpack.c.b16 %v6304, %v6300
        %v6489 = vpack.c.b16 %v6309, %v6305
        %v6490 = vpack.c.b16 %v6310, %v6306
        %v6491 = vpack.c.b16 %v6311, %v6307
        %v6492 = vpack.c.b16 %v6312, %v6308
        %v6493 = vpack.c.b16 %v6317, %v6313
        %v6494 = vpack.c.b16 %v6318, %v6314
        %v6495 = vpack.c.b16 %v6319, %v6315
        %v6496 = vpack.c.b16 %v6320, %v6316
        %v6497 = vpack.c.b16 %v6325, %v6321
        %v6498 = vpack.c.b16 %v6326, %v6322
        %v6499 = vpack.c.b16 %v6327, %v6323
        %v6500 = vpack.c.b16 %v6328, %v6324
        %v6501 = vpack.c.b16 %v6333, %v6329
        %v6502 = vpack.c.b16 %v6334, %v6330
        %v6503 = vpack.c.b16 %v6335, %v6331
        %v6504 = vpack.c.b16 %v6336, %v6332
        %v6505 = vpack.c.b16 %v6341, %v6337
        %v6506 = vpack.c.b16 %v6342, %v6338
        %v6507 = vpack.c.b16 %v6343, %v6339
        %v6508 = vpack.c.b16 %v6344, %v6340
        %v6509 = vpack.c.b16 %v6349, %v6345
        %v6510 = vpack.c.b16 %v6350, %v6346
        %v6511 = vpack.c.b16 %v6351, %v6347
        %v6512 = vpack.c.b16 %v6352, %v6348
        %v6513 = vpack.c.b16 %v6357, %v6353
        %v6514 = vpack.c.b16 %v6358, %v6354
        %v6515 = vpack.c.b16 %v6359, %v6355
        %v6516 = vpack.c.b16 %v6360, %v6356
        %v6517 = vpack.c.b16 %v6365, %v6361
        %v6518 = vpack.c.b16 %v6366, %v6362
        %v6519 = vpack.c.b16 %v6367, %v6363
        %v6520 = vpack.c.b16 %v6368, %v6364
        %v6521 = vpack.c.b16 %v6373, %v6369
        %v6522 = vpack.c.b16 %v6374, %v6370
        %v6523 = vpack.c.b16 %v6375, %v6371
        %v6524 = vpack.c.b16 %v6376, %v6372
        %v6525 = vpack.c.b16 %v6381, %v6377
        %v6526 = vpack.c.b16 %v6382, %v6378
        %v6527 = vpack.c.b16 %v6383, %v6379
        %v6528 = vpack.c.b16 %v6384, %v6380
        %v6529 = vpack.c.b16 %v6389, %v6385
        %v6530 = vpack.c.b16 %v6390, %v6386
        %v6531 = vpack.c.b16 %v6391, %v6387
        %v6532 = vpack.c.b16 %v6392, %v6388
        %v6533 = vpack.c.b16 %v6397, %v6393
        %v6534 = vpack.c.b16 %v6398, %v6394
        %v6535 = vpack.c.b16 %v6399, %v6395
        %v6536 = vpack.c.b16 %v6400, %v6396
        %v6537 = vpack.c.b16 %v6405, %v6401
        %v6538 = vpack.c.b16 %v6406, %v6402
        %v6539 = vpack.c.b16 %v6407, %v6403
        %v6540 = vpack.c.b16 %v6408, %v6404
        %v6541 = vpack.c.b16 %v6413, %v6409
        %v6542 = vpack.c.b16 %v6414, %v6410
        %v6543 = vpack.c.b16 %v6415, %v6411
        %v6544 = vpack.c.b16 %v6416, %v6412
        %6673 = vmatprep.subr.bf16.mxu0 %v6418
        %6674 = vmatpush1.bf16.msra.mxu0 %v6417
        %6675 = vmatprep.subr.bf16.mxu0 %v6422
        %6676 = vmatpush1.bf16.msra.mxu0 %v6421
        %6677 = vmatprep.subr.bf16.mxu0 %v6426
        %6678 = vmatpush1.bf16.msra.mxu0 %v6425
        %6679 = vmatprep.subr.bf16.mxu0 %v6430
        %6680 = vmatpush1.bf16.msra.mxu0 %v6429
        %6681 = vmatprep.subr.bf16.mxu0 %v6434
        %6682 = vmatpush1.bf16.msra.mxu0 %v6433
        %6683 = vmatprep.subr.bf16.mxu0 %v6438
        %6684 = vmatpush1.bf16.msra.mxu0 %v6437
        %6685 = vmatprep.subr.bf16.mxu0 %v6442
        %6686 = vmatpush1.bf16.msra.mxu0 %v6441
        %6687 = vmatprep.subr.bf16.mxu0 %v6446
        %6688 = vmatpush1.bf16.msra.mxu0 %v6445
        %6689 = vmatprep.subr.bf16.mxu0 %v6450
        %6690 = vmatpush1.bf16.msra.mxu0 %v6449
        %6691 = vmatprep.subr.bf16.mxu0 %v6454
        %6692 = vmatpush1.bf16.msra.mxu0 %v6453
        %6693 = vmatprep.subr.bf16.mxu0 %v6458
        %6694 = vmatpush1.bf16.msra.mxu0 %v6457
        %6695 = vmatprep.subr.bf16.mxu0 %v6462
        %6696 = vmatpush1.bf16.msra.mxu0 %v6461
        %6697 = vmatprep.subr.bf16.mxu0 %v6466
        %6698 = vmatpush1.bf16.msra.mxu0 %v6465
        %6699 = vmatprep.subr.bf16.mxu0 %v6470
        %6700 = vmatpush1.bf16.msra.mxu0 %v6469
        %6701 = vmatprep.subr.bf16.mxu0 %v6474
        %6702 = vmatpush1.bf16.msra.mxu0 %v6473
        %6703 = vmatprep.subr.bf16.mxu0 %v6478
        %6704 = vmatpush1.bf16.msra.mxu0 %v6477
        %6705 = vmatprep.mubr.bf16.mxu0 %v5906
        %6706 = vmatmul.mubr.bf16.gmra.mrb[0].mxu0 %v5905
        %v6707 = vpop.f32.mrb[0].mxu0
        %v6708 = vadd.f32 %v5696, %v6707
        %v6709 = vpop.f32.mrb[0].mxu0
        %v6710 = vadd.f32 %v5700, %v6709
        %v6711 = vpop.f32.mrb[0].mxu0
        %v6712 = vadd.f32 %v5696, %v6711
        %v6713 = vpop.f32.mrb[0].mxu0
        %v6714 = vadd.f32 %v5700, %v6713
        %6715 = vmatprep.mubr.bf16.mxu0 %v5910
        %6716 = vmatmul.mubr.bf16.gmra.mrb[0].mxu0 %v5909
        %v6717 = vpop.f32.mrb[0].mxu0
        %v6718 = vadd.f32 %v5696, %v6717
        %v6719 = vpop.f32.mrb[0].mxu0
        %v6720 = vadd.f32 %v5700, %v6719
        %v6721 = vpop.f32.mrb[0].mxu0
        %v6722 = vadd.f32 %v5696, %v6721
        %v6723 = vpop.f32.mrb[0].mxu0
        %v6724 = vadd.f32 %v5700, %v6723
        %6725 = vmatprep.mubr.bf16.mxu0 %v5914
        %6726 = vmatmul.mubr.bf16.gmra.mrb[0].mxu0 %v5913
        %v6727 = vpop.f32.mrb[0].mxu0
        %v6728 = vadd.f32 %v5696, %v6727
        %v6729 = vpop.f32.mrb[0].mxu0
        %v6730 = vadd.f32 %v5700, %v6729
        %v6731 = vpop.f32.mrb[0].mxu0
        %v6732 = vadd.f32 %v5696, %v6731
        %v6733 = vpop.f32.mrb[0].mxu0
        %v6734 = vadd.f32 %v5700, %v6733
        %6735 = vmatprep.mubr.bf16.mxu0 %v5918
        %6736 = vmatmul.mubr.bf16.gmra.mrb[0].mxu0 %v5917
        %v6737 = vpop.f32.mrb[0].mxu0
        %v6738 = vadd.f32 %v5696, %v6737
        %v6739 = vpop.f32.mrb[0].mxu0
        %v6740 = vadd.f32 %v5700, %v6739
        %v6741 = vpop.f32.mrb[0].mxu0
        %v6742 = vadd.f32 %v5696, %v6741
        %v6743 = vpop.f32.mrb[0].mxu0
        %v6744 = vadd.f32 %v5700, %v6743
        %6745 = vmatprep.mubr.bf16.mxu0 %v5922
        %6746 = vmatmul.mubr.bf16.gmra.mrb[0].mxu0 %v5921
        %v6747 = vpop.f32.mrb[0].mxu0
        %v6748 = vadd.f32 %v5696, %v6747
        %v6749 = vpop.f32.mrb[0].mxu0
        %v6750 = vadd.f32 %v5700, %v6749
        %v6751 = vpop.f32.mrb[0].mxu0
        %v6752 = vadd.f32 %v5696, %v6751
        %v6753 = vpop.f32.mrb[0].mxu0
        %v6754 = vadd.f32 %v5700, %v6753
        %6755 = vmatprep.mubr.bf16.mxu0 %v5926
        %6756 = vmatmul.mubr.bf16.gmra.mrb[0].mxu0 %v5925
        %v6757 = vpop.f32.mrb[0].mxu0
        %v6758 = vadd.f32 %v5696, %v6757
        %v6759 = vpop.f32.mrb[0].mxu0
        %v6760 = vadd.f32 %v5700, %v6759
        %v6761 = vpop.f32.mrb[0].mxu0
        %v6762 = vadd.f32 %v5696, %v6761
        %v6763 = vpop.f32.mrb[0].mxu0
        %v6764 = vadd.f32 %v5700, %v6763
        %6765 = vmatprep.mubr.bf16.mxu0 %v5930
        %6766 = vmatmul.mubr.bf16.gmra.mrb[0].mxu0 %v5929
        %v6767 = vpop.f32.mrb[0].mxu0
        %v6768 = vadd.f32 %v5696, %v6767
        %v6769 = vpop.f32.mrb[0].mxu0
        %v6770 = vadd.f32 %v5700, %v6769
        %v6771 = vpop.f32.mrb[0].mxu0
        %v6772 = vadd.f32 %v5696, %v6771
        %v6773 = vpop.f32.mrb[0].mxu0
        %v6774 = vadd.f32 %v5700, %v6773
        %6775 = vmatprep.mubr.bf16.mxu0 %v5934
        %6776 = vmatmul.mubr.bf16.gmra.mrb[0].mxu0 %v5933
        %v6777 = vpop.f32.mrb[0].mxu0
        %v6778 = vadd.f32 %v5696, %v6777
        %v6779 = vpop.f32.mrb[0].mxu0
        %v6780 = vadd.f32 %v5700, %v6779
        %v6781 = vpop.f32.mrb[0].mxu0
        %v6782 = vadd.f32 %v5696, %v6781
        %v6783 = vpop.f32.mrb[0].mxu0
        %v6784 = vadd.f32 %v5700, %v6783
        %6785 = vmatprep.mubr.bf16.mxu0 %v5938
        %6786 = vmatmul.mubr.bf16.gmra.mrb[0].mxu0 %v5937
        %v6787 = vpop.f32.mrb[0].mxu0
        %v6788 = vadd.f32 %v5696, %v6787
        %v6789 = vpop.f32.mrb[0].mxu0
        %v6790 = vadd.f32 %v5700, %v6789
        %v6791 = vpop.f32.mrb[0].mxu0
        %v6792 = vadd.f32 %v5696, %v6791
        %v6793 = vpop.f32.mrb[0].mxu0
        %v6794 = vadd.f32 %v5700, %v6793
        %6795 = vmatprep.mubr.bf16.mxu0 %v5942
        %6796 = vmatmul.mubr.bf16.gmra.mrb[0].mxu0 %v5941
        %v6797 = vpop.f32.mrb[0].mxu0
        %v6798 = vadd.f32 %v5696, %v6797
        %v6799 = vpop.f32.mrb[0].mxu0
        %v6800 = vadd.f32 %v5700, %v6799
        %v6801 = vpop.f32.mrb[0].mxu0
        %v6802 = vadd.f32 %v5696, %v6801
        %v6803 = vpop.f32.mrb[0].mxu0
        %v6804 = vadd.f32 %v5700, %v6803
        %6805 = vmatprep.mubr.bf16.mxu0 %v5946
        %6806 = vmatmul.mubr.bf16.gmra.mrb[0].mxu0 %v5945
        %v6807 = vpop.f32.mrb[0].mxu0
        %v6808 = vadd.f32 %v5696, %v6807
        %v6809 = vpop.f32.mrb[0].mxu0
        %v6810 = vadd.f32 %v5700, %v6809
        %v6811 = vpop.f32.mrb[0].mxu0
        %v6812 = vadd.f32 %v5696, %v6811
        %v6813 = vpop.f32.mrb[0].mxu0
        %v6814 = vadd.f32 %v5700, %v6813
        %6815 = vmatprep.mubr.bf16.mxu0 %v5950
        %6816 = vmatmul.mubr.bf16.gmra.mrb[0].mxu0 %v5949
        %v6817 = vpop.f32.mrb[0].mxu0
        %v6818 = vadd.f32 %v5696, %v6817
        %v6819 = vpop.f32.mrb[0].mxu0
        %v6820 = vadd.f32 %v5700, %v6819
        %v6821 = vpop.f32.mrb[0].mxu0
        %v6822 = vadd.f32 %v5696, %v6821
        %v6823 = vpop.f32.mrb[0].mxu0
        %v6824 = vadd.f32 %v5700, %v6823
        %6825 = vmatprep.mubr.bf16.mxu0 %v5954
        %6826 = vmatmul.mubr.bf16.gmra.mrb[0].mxu0 %v5953
        %v6827 = vpop.f32.mrb[0].mxu0
        %v6828 = vadd.f32 %v5696, %v6827
        %v6829 = vpop.f32.mrb[0].mxu0
        %v6830 = vadd.f32 %v5700, %v6829
        %v6831 = vpop.f32.mrb[0].mxu0
        %v6832 = vadd.f32 %v5696, %v6831
        %v6833 = vpop.f32.mrb[0].mxu0
        %v6834 = vadd.f32 %v5700, %v6833
        %6835 = vmatprep.mubr.bf16.mxu0 %v5958
        %6836 = vmatmul.mubr.bf16.gmra.mrb[0].mxu0 %v5957
        %v6837 = vpop.f32.mrb[0].mxu0
        %v6838 = vadd.f32 %v5696, %v6837
        %v6839 = vpop.f32.mrb[0].mxu0
        %v6840 = vadd.f32 %v5700, %v6839
        %v6841 = vpop.f32.mrb[0].mxu0
        %v6842 = vadd.f32 %v5696, %v6841
        %v6843 = vpop.f32.mrb[0].mxu0
        %v6844 = vadd.f32 %v5700, %v6843
        %6845 = vmatprep.mubr.bf16.mxu0 %v5962
        %6846 = vmatmul.mubr.bf16.gmra.mrb[0].mxu0 %v5961
        %v6847 = vpop.f32.mrb[0].mxu0
        %v6848 = vadd.f32 %v5696, %v6847
        %v6849 = vpop.f32.mrb[0].mxu0
        %v6850 = vadd.f32 %v5700, %v6849
        %v6851 = vpop.f32.mrb[0].mxu0
        %v6852 = vadd.f32 %v5696, %v6851
        %v6853 = vpop.f32.mrb[0].mxu0
        %v6854 = vadd.f32 %v5700, %v6853
        %6855 = vmatprep.mubr.bf16.mxu0 %v5966
        %6856 = vmatmul.mubr.bf16.gmra.mrb[0].mxu0 %v5965
        %v6857 = vpop.f32.mrb[0].mxu0
        %v6858 = vadd.f32 %v5696, %v6857
        %v6859 = vpop.f32.mrb[0].mxu0
        %v6860 = vadd.f32 %v5700, %v6859
        %v6861 = vpop.f32.mrb[0].mxu0
        %v6862 = vadd.f32 %v5696, %v6861
        %v6863 = vpop.f32.mrb[0].mxu0
        %v6864 = vadd.f32 %v5700, %v6863
        %6865 = vdwg.mxu0
        %6866 = vmatprep.subr.bf16.mxu0 %v6482
        %6867 = vmatpush1.bf16.msra.mxu0 %v6481
        %6868 = vmatprep.subr.bf16.mxu0 %v6486
        %6869 = vmatpush1.bf16.msra.mxu0 %v6485
        %6870 = vmatprep.subr.bf16.mxu0 %v6490
        %6871 = vmatpush1.bf16.msra.mxu0 %v6489
        %6872 = vmatprep.subr.bf16.mxu0 %v6494
        %6873 = vmatpush1.bf16.msra.mxu0 %v6493
        %6874 = vmatprep.subr.bf16.mxu0 %v6498
        %6875 = vmatpush1.bf16.msra.mxu0 %v6497
        %6876 = vmatprep.subr.bf16.mxu0 %v6502
        %6877 = vmatpush1.bf16.msra.mxu0 %v6501
        %6878 = vmatprep.subr.bf16.mxu0 %v6506
        %6879 = vmatpush1.bf16.msra.mxu0 %v6505
        %6880 = vmatprep.subr.bf16.mxu0 %v6510
        %6881 = vmatpush1.bf16.msra.mxu0 %v6509
        %6882 = vmatprep.subr.bf16.mxu0 %v6514
        %6883 = vmatpush1.bf16.msra.mxu0 %v6513
        %6884 = vmatprep.subr.bf16.mxu0 %v6518
        %6885 = vmatpush1.bf16.msra.mxu0 %v6517
        %6886 = vmatprep.subr.bf16.mxu0 %v6522
        %6887 = vmatpush1.bf16.msra.mxu0 %v6521
        %6888 = vmatprep.subr.bf16.mxu0 %v6526
        %6889 = vmatpush1.bf16.msra.mxu0 %v6525
        %6890 = vmatprep.subr.bf16.mxu0 %v6530
        %6891 = vmatpush1.bf16.msra.mxu0 %v6529
        %6892 = vmatprep.subr.bf16.mxu0 %v6534
        %6893 = vmatpush1.bf16.msra.mxu0 %v6533
        %6894 = vmatprep.subr.bf16.mxu0 %v6538
        %6895 = vmatpush1.bf16.msra.mxu0 %v6537
        %6896 = vmatprep.subr.bf16.mxu0 %v6542
        %6897 = vmatpush1.bf16.msra.mxu0 %v6541
        %6898 = vmatprep.mubr.bf16.mxu0 %v5908
        %6899 = vmatmul.mubr.bf16.gmra.mrb[0].mxu0 %v5907
        %v6900 = vpop.f32.mrb[0].mxu0
        %v6901 = vadd.f32 %v6708, %v6900
        %v6902 = vpop.f32.mrb[0].mxu0
        %v6903 = vadd.f32 %v6710, %v6902
        %v6904 = vpop.f32.mrb[0].mxu0
        %v6905 = vadd.f32 %v6712, %v6904
        %v6906 = vpop.f32.mrb[0].mxu0
        %v6907 = vadd.f32 %v6714, %v6906
        %6908 = vmatprep.mubr.bf16.mxu0 %v5912
        %6909 = vmatmul.mubr.bf16.gmra.mrb[0].mxu0 %v5911
        %v6910 = vpop.f32.mrb[0].mxu0
        %v6911 = vadd.f32 %v6718, %v6910
        %v6912 = vpop.f32.mrb[0].mxu0
        %v6913 = vadd.f32 %v6720, %v6912
        %v6914 = vpop.f32.mrb[0].mxu0
        %v6915 = vadd.f32 %v6722, %v6914
        %v6916 = vpop.f32.mrb[0].mxu0
        %v6917 = vadd.f32 %v6724, %v6916
        %6918 = vmatprep.mubr.bf16.mxu0 %v5916
        %6919 = vmatmul.mubr.bf16.gmra.mrb[0].mxu0 %v5915
        %v6920 = vpop.f32.mrb[0].mxu0
        %v6921 = vadd.f32 %v6728, %v6920
        %v6922 = vpop.f32.mrb[0].mxu0
        %v6923 = vadd.f32 %v6730, %v6922
        %v6924 = vpop.f32.mrb[0].mxu0
        %v6925 = vadd.f32 %v6732, %v6924
        %v6926 = vpop.f32.mrb[0].mxu0
        %v6927 = vadd.f32 %v6734, %v6926
        %6928 = vmatprep.mubr.bf16.mxu0 %v5920
        %6929 = vmatmul.mubr.bf16.gmra.mrb[0].mxu0 %v5919
        %v6930 = vpop.f32.mrb[0].mxu0
        %v6931 = vadd.f32 %v6738, %v6930
        %v6932 = vpop.f32.mrb[0].mxu0
        %v6933 = vadd.f32 %v6740, %v6932
        %v6934 = vpop.f32.mrb[0].mxu0
        %v6935 = vadd.f32 %v6742, %v6934
        %v6936 = vpop.f32.mrb[0].mxu0
        %v6937 = vadd.f32 %v6744, %v6936
        %6938 = vmatprep.mubr.bf16.mxu0 %v5924
        %6939 = vmatmul.mubr.bf16.gmra.mrb[0].mxu0 %v5923
        %v6940 = vpop.f32.mrb[0].mxu0
        %v6941 = vadd.f32 %v6748, %v6940
        %v6942 = vpop.f32.mrb[0].mxu0
        %v6943 = vadd.f32 %v6750, %v6942
        %v6944 = vpop.f32.mrb[0].mxu0
        %v6945 = vadd.f32 %v6752, %v6944
        %v6946 = vpop.f32.mrb[0].mxu0
        %v6947 = vadd.f32 %v6754, %v6946
        %6948 = vmatprep.mubr.bf16.mxu0 %v5928
        %6949 = vmatmul.mubr.bf16.gmra.mrb[0].mxu0 %v5927
        %v6950 = vpop.f32.mrb[0].mxu0
        %v6951 = vadd.f32 %v6758, %v6950
        %v6952 = vpop.f32.mrb[0].mxu0
        %v6953 = vadd.f32 %v6760, %v6952
        %v6954 = vpop.f32.mrb[0].mxu0
        %v6955 = vadd.f32 %v6762, %v6954
        %v6956 = vpop.f32.mrb[0].mxu0
        %v6957 = vadd.f32 %v6764, %v6956
        %6958 = vmatprep.mubr.bf16.mxu0 %v5932
        %6959 = vmatmul.mubr.bf16.gmra.mrb[0].mxu0 %v5931
        %v6960 = vpop.f32.mrb[0].mxu0
        %v6961 = vadd.f32 %v6768, %v6960
        %v6962 = vpop.f32.mrb[0].mxu0
        %v6963 = vadd.f32 %v6770, %v6962
        %v6964 = vpop.f32.mrb[0].mxu0
        %v6965 = vadd.f32 %v6772, %v6964
        %v6966 = vpop.f32.mrb[0].mxu0
        %v6967 = vadd.f32 %v6774, %v6966
        %6968 = vmatprep.mubr.bf16.mxu0 %v5936
        %6969 = vmatmul.mubr.bf16.gmra.mrb[0].mxu0 %v5935
        %v6970 = vpop.f32.mrb[0].mxu0
        %v6971 = vadd.f32 %v6778, %v6970
        %v6972 = vpop.f32.mrb[0].mxu0
        %v6973 = vadd.f32 %v6780, %v6972
        %v6974 = vpop.f32.mrb[0].mxu0
        %v6975 = vadd.f32 %v6782, %v6974
        %v6976 = vpop.f32.mrb[0].mxu0
        %v6977 = vadd.f32 %v6784, %v6976
        %6978 = vmatprep.mubr.bf16.mxu0 %v5940
        %6979 = vmatmul.mubr.bf16.gmra.mrb[0].mxu0 %v5939
        %v6980 = vpop.f32.mrb[0].mxu0
        %v6981 = vadd.f32 %v6788, %v6980
        %v6982 = vpop.f32.mrb[0].mxu0
        %v6983 = vadd.f32 %v6790, %v6982
        %v6984 = vpop.f32.mrb[0].mxu0
        %v6985 = vadd.f32 %v6792, %v6984
        %v6986 = vpop.f32.mrb[0].mxu0
        %v6987 = vadd.f32 %v6794, %v6986
        %6988 = vmatprep.mubr.bf16.mxu0 %v5944
        %6989 = vmatmul.mubr.bf16.gmra.mrb[0].mxu0 %v5943
        %v6990 = vpop.f32.mrb[0].mxu0
        %v6991 = vadd.f32 %v6798, %v6990
        %v6992 = vpop.f32.mrb[0].mxu0
        %v6993 = vadd.f32 %v6800, %v6992
        %v6994 = vpop.f32.mrb[0].mxu0
        %v6995 = vadd.f32 %v6802, %v6994
        %v6996 = vpop.f32.mrb[0].mxu0
        %v6997 = vadd.f32 %v6804, %v6996
        %6998 = vmatprep.mubr.bf16.mxu0 %v5948
        %6999 = vmatmul.mubr.bf16.gmra.mrb[0].mxu0 %v5947
        %v7000 = vpop.f32.mrb[0].mxu0
        %v7001 = vadd.f32 %v6808, %v7000
        %v7002 = vpop.f32.mrb[0].mxu0
        %v7003 = vadd.f32 %v6810, %v7002
        %v7004 = vpop.f32.mrb[0].mxu0
        %v7005 = vadd.f32 %v6812, %v7004
        %v7006 = vpop.f32.mrb[0].mxu0
        %v7007 = vadd.f32 %v6814, %v7006
        %7008 = vmatprep.mubr.bf16.mxu0 %v5952
        %7009 = vmatmul.mubr.bf16.gmra.mrb[0].mxu0 %v5951
        %v7010 = vpop.f32.mrb[0].mxu0
        %v7011 = vadd.f32 %v6818, %v7010
        %v7012 = vpop.f32.mrb[0].mxu0
        %v7013 = vadd.f32 %v6820, %v7012
        %v7014 = vpop.f32.mrb[0].mxu0
        %v7015 = vadd.f32 %v6822, %v7014
        %v7016 = vpop.f32.mrb[0].mxu0
        %v7017 = vadd.f32 %v6824, %v7016
        %7018 = vmatprep.mubr.bf16.mxu0 %v5956
        %7019 = vmatmul.mubr.bf16.gmra.mrb[0].mxu0 %v5955
        %v7020 = vpop.f32.mrb[0].mxu0
        %v7021 = vadd.f32 %v6828, %v7020
        %v7022 = vpop.f32.mrb[0].mxu0
        %v7023 = vadd.f32 %v6830, %v7022
        %v7024 = vpop.f32.mrb[0].mxu0
        %v7025 = vadd.f32 %v6832, %v7024
        %v7026 = vpop.f32.mrb[0].mxu0
        %v7027 = vadd.f32 %v6834, %v7026
        %7028 = vmatprep.mubr.bf16.mxu0 %v5960
        %7029 = vmatmul.mubr.bf16.gmra.mrb[0].mxu0 %v5959
        %v7030 = vpop.f32.mrb[0].mxu0
        %v7031 = vadd.f32 %v6838, %v7030
        %v7032 = vpop.f32.mrb[0].mxu0
        %v7033 = vadd.f32 %v6840, %v7032
        %v7034 = vpop.f32.mrb[0].mxu0
        %v7035 = vadd.f32 %v6842, %v7034
        %v7036 = vpop.f32.mrb[0].mxu0
        %v7037 = vadd.f32 %v6844, %v7036
        %7038 = vmatprep.mubr.bf16.mxu0 %v5964
        %7039 = vmatmul.mubr.bf16.gmra.mrb[0].mxu0 %v5963
        %v7040 = vpop.f32.mrb[0].mxu0
        %v7041 = vadd.f32 %v6848, %v7040
        %v7042 = vpop.f32.mrb[0].mxu0
        %v7043 = vadd.f32 %v6850, %v7042
        %v7044 = vpop.f32.mrb[0].mxu0
        %v7045 = vadd.f32 %v6852, %v7044
        %v7046 = vpop.f32.mrb[0].mxu0
        %v7047 = vadd.f32 %v6854, %v7046
        %7048 = vmatprep.mubr.bf16.mxu0 %v5968
        %7049 = vmatmul.mubr.bf16.gmra.mrb[0].mxu0 %v5967
        %v7050 = vpop.f32.mrb[0].mxu0
        %v7051 = vadd.f32 %v6858, %v7050
        %v7052 = vpop.f32.mrb[0].mxu0
        %v7053 = vadd.f32 %v6860, %v7052
        %v7054 = vpop.f32.mrb[0].mxu0
        %v7055 = vadd.f32 %v6862, %v7054
        %v7056 = vpop.f32.mrb[0].mxu0
        %v7057 = vadd.f32 %v6864, %v7056
        %7058 = vdwg.mxu0
        %7059 = vmatprep.subr.bf16.mxu0 %v6420
        %7060 = vmatpush1.bf16.msra.mxu0 %v6419
        %7061 = vmatprep.subr.bf16.mxu0 %v6424
        %7062 = vmatpush1.bf16.msra.mxu0 %v6423
        %7063 = vmatprep.subr.bf16.mxu0 %v6428
        %7064 = vmatpush1.bf16.msra.mxu0 %v6427
        %7065 = vmatprep.subr.bf16.mxu0 %v6432
        %7066 = vmatpush1.bf16.msra.mxu0 %v6431
        %7067 = vmatprep.subr.bf16.mxu0 %v6436
        %7068 = vmatpush1.bf16.msra.mxu0 %v6435
        %7069 = vmatprep.subr.bf16.mxu0 %v6440
        %7070 = vmatpush1.bf16.msra.mxu0 %v6439
        %7071 = vmatprep.subr.bf16.mxu0 %v6444
        %7072 = vmatpush1.bf16.msra.mxu0 %v6443
        %7073 = vmatprep.subr.bf16.mxu0 %v6448
        %7074 = vmatpush1.bf16.msra.mxu0 %v6447
        %7075 = vmatprep.subr.bf16.mxu0 %v6452
        %7076 = vmatpush1.bf16.msra.mxu0 %v6451
        %7077 = vmatprep.subr.bf16.mxu0 %v6456
        %7078 = vmatpush1.bf16.msra.mxu0 %v6455
        %7079 = vmatprep.subr.bf16.mxu0 %v6460
        %7080 = vmatpush1.bf16.msra.mxu0 %v6459
        %7081 = vmatprep.subr.bf16.mxu0 %v6464
        %7082 = vmatpush1.bf16.msra.mxu0 %v6463
        %7083 = vmatprep.subr.bf16.mxu0 %v6468
        %7084 = vmatpush1.bf16.msra.mxu0 %v6467
        %7085 = vmatprep.subr.bf16.mxu0 %v6472
        %7086 = vmatpush1.bf16.msra.mxu0 %v6471
        %7087 = vmatprep.subr.bf16.mxu0 %v6476
        %7088 = vmatpush1.bf16.msra.mxu0 %v6475
        %7089 = vmatprep.subr.bf16.mxu0 %v6480
        %7090 = vmatpush1.bf16.msra.mxu0 %v6479
        %7091 = vmatprep.mubr.bf16.mxu0 %v5906
        %7092 = vmatmul.mubr.bf16.gmra.mrb[0].mxu0 %v5905
        %v7093 = vpop.f32.mrb[0].mxu0
        %v7094 = vadd.f32 %v5704, %v7093
        %v7095 = vpop.f32.mrb[0].mxu0
        %v7096 = vadd.f32 %v5708, %v7095
        %v7097 = vpop.f32.mrb[0].mxu0
        %v7098 = vadd.f32 %v5704, %v7097
        %v7099 = vpop.f32.mrb[0].mxu0
        %v7100 = vadd.f32 %v5708, %v7099
        %7101 = vmatprep.mubr.bf16.mxu0 %v5910
        %7102 = vmatmul.mubr.bf16.gmra.mrb[0].mxu0 %v5909
        %v7103 = vpop.f32.mrb[0].mxu0
        %v7104 = vadd.f32 %v5704, %v7103
        %v7105 = vpop.f32.mrb[0].mxu0
        %v7106 = vadd.f32 %v5708, %v7105
        %v7107 = vpop.f32.mrb[0].mxu0
        %v7108 = vadd.f32 %v5704, %v7107
        %v7109 = vpop.f32.mrb[0].mxu0
        %v7110 = vadd.f32 %v5708, %v7109
        %7111 = vmatprep.mubr.bf16.mxu0 %v5914
        %7112 = vmatmul.mubr.bf16.gmra.mrb[0].mxu0 %v5913
        %v7113 = vpop.f32.mrb[0].mxu0
        %v7114 = vadd.f32 %v5704, %v7113
        %v7115 = vpop.f32.mrb[0].mxu0
        %v7116 = vadd.f32 %v5708, %v7115
        %v7117 = vpop.f32.mrb[0].mxu0
        %v7118 = vadd.f32 %v5704, %v7117
        %v7119 = vpop.f32.mrb[0].mxu0
        %v7120 = vadd.f32 %v5708, %v7119
        %7121 = vmatprep.mubr.bf16.mxu0 %v5918
        %7122 = vmatmul.mubr.bf16.gmra.mrb[0].mxu0 %v5917
        %v7123 = vpop.f32.mrb[0].mxu0
        %v7124 = vadd.f32 %v5704, %v7123
        %v7125 = vpop.f32.mrb[0].mxu0
        %v7126 = vadd.f32 %v5708, %v7125
        %v7127 = vpop.f32.mrb[0].mxu0
        %v7128 = vadd.f32 %v5704, %v7127
        %v7129 = vpop.f32.mrb[0].mxu0
        %v7130 = vadd.f32 %v5708, %v7129
        %7131 = vmatprep.mubr.bf16.mxu0 %v5922
        %7132 = vmatmul.mubr.bf16.gmra.mrb[0].mxu0 %v5921
        %v7133 = vpop.f32.mrb[0].mxu0
        %v7134 = vadd.f32 %v5704, %v7133
        %v7135 = vpop.f32.mrb[0].mxu0
        %v7136 = vadd.f32 %v5708, %v7135
        %v7137 = vpop.f32.mrb[0].mxu0
        %v7138 = vadd.f32 %v5704, %v7137
        %v7139 = vpop.f32.mrb[0].mxu0
        %v7140 = vadd.f32 %v5708, %v7139
        %7141 = vmatprep.mubr.bf16.mxu0 %v5926
        %7142 = vmatmul.mubr.bf16.gmra.mrb[0].mxu0 %v5925
        %v7143 = vpop.f32.mrb[0].mxu0
        %v7144 = vadd.f32 %v5704, %v7143
        %v7145 = vpop.f32.mrb[0].mxu0
        %v7146 = vadd.f32 %v5708, %v7145
        %v7147 = vpop.f32.mrb[0].mxu0
        %v7148 = vadd.f32 %v5704, %v7147
        %v7149 = vpop.f32.mrb[0].mxu0
        %v7150 = vadd.f32 %v5708, %v7149
        %7151 = vmatprep.mubr.bf16.mxu0 %v5930
        %7152 = vmatmul.mubr.bf16.gmra.mrb[0].mxu0 %v5929
        %v7153 = vpop.f32.mrb[0].mxu0
        %v7154 = vadd.f32 %v5704, %v7153
        %v7155 = vpop.f32.mrb[0].mxu0
        %v7156 = vadd.f32 %v5708, %v7155
        %v7157 = vpop.f32.mrb[0].mxu0
        %v7158 = vadd.f32 %v5704, %v7157
        %v7159 = vpop.f32.mrb[0].mxu0
        %v7160 = vadd.f32 %v5708, %v7159
        %7161 = vmatprep.mubr.bf16.mxu0 %v5934
        %7162 = vmatmul.mubr.bf16.gmra.mrb[0].mxu0 %v5933
        %v7163 = vpop.f32.mrb[0].mxu0
        %v7164 = vadd.f32 %v5704, %v7163
        %v7165 = vpop.f32.mrb[0].mxu0
        %v7166 = vadd.f32 %v5708, %v7165
        %v7167 = vpop.f32.mrb[0].mxu0
        %v7168 = vadd.f32 %v5704, %v7167
        %v7169 = vpop.f32.mrb[0].mxu0
        %v7170 = vadd.f32 %v5708, %v7169
        %7171 = vmatprep.mubr.bf16.mxu0 %v5938
        %7172 = vmatmul.mubr.bf16.gmra.mrb[0].mxu0 %v5937
        %v7173 = vpop.f32.mrb[0].mxu0
        %v7174 = vadd.f32 %v5704, %v7173
        %v7175 = vpop.f32.mrb[0].mxu0
        %v7176 = vadd.f32 %v5708, %v7175
        %v7177 = vpop.f32.mrb[0].mxu0
        %v7178 = vadd.f32 %v5704, %v7177
        %v7179 = vpop.f32.mrb[0].mxu0
        %v7180 = vadd.f32 %v5708, %v7179
        %7181 = vmatprep.mubr.bf16.mxu0 %v5942
        %7182 = vmatmul.mubr.bf16.gmra.mrb[0].mxu0 %v5941
        %v7183 = vpop.f32.mrb[0].mxu0
        %v7184 = vadd.f32 %v5704, %v7183
        %v7185 = vpop.f32.mrb[0].mxu0
        %v7186 = vadd.f32 %v5708, %v7185
        %v7187 = vpop.f32.mrb[0].mxu0
        %v7188 = vadd.f32 %v5704, %v7187
        %v7189 = vpop.f32.mrb[0].mxu0
        %v7190 = vadd.f32 %v5708, %v7189
        %7191 = vmatprep.mubr.bf16.mxu0 %v5946
        %7192 = vmatmul.mubr.bf16.gmra.mrb[0].mxu0 %v5945
        %v7193 = vpop.f32.mrb[0].mxu0
        %v7194 = vadd.f32 %v5704, %v7193
        %v7195 = vpop.f32.mrb[0].mxu0
        %v7196 = vadd.f32 %v5708, %v7195
        %v7197 = vpop.f32.mrb[0].mxu0
        %v7198 = vadd.f32 %v5704, %v7197
        %v7199 = vpop.f32.mrb[0].mxu0
        %v7200 = vadd.f32 %v5708, %v7199
        %7201 = vmatprep.mubr.bf16.mxu0 %v5950
        %7202 = vmatmul.mubr.bf16.gmra.mrb[0].mxu0 %v5949
        %v7203 = vpop.f32.mrb[0].mxu0
        %v7204 = vadd.f32 %v5704, %v7203
        %v7205 = vpop.f32.mrb[0].mxu0
        %v7206 = vadd.f32 %v5708, %v7205
        %v7207 = vpop.f32.mrb[0].mxu0
        %v7208 = vadd.f32 %v5704, %v7207
        %v7209 = vpop.f32.mrb[0].mxu0
        %v7210 = vadd.f32 %v5708, %v7209
        %7211 = vmatprep.mubr.bf16.mxu0 %v5954
        %7212 = vmatmul.mubr.bf16.gmra.mrb[0].mxu0 %v5953
        %v7213 = vpop.f32.mrb[0].mxu0
        %v7214 = vadd.f32 %v5704, %v7213
        %v7215 = vpop.f32.mrb[0].mxu0
        %v7216 = vadd.f32 %v5708, %v7215
        %v7217 = vpop.f32.mrb[0].mxu0
        %v7218 = vadd.f32 %v5704, %v7217
        %v7219 = vpop.f32.mrb[0].mxu0
        %v7220 = vadd.f32 %v5708, %v7219
        %7221 = vmatprep.mubr.bf16.mxu0 %v5958
        %7222 = vmatmul.mubr.bf16.gmra.mrb[0].mxu0 %v5957
        %v7223 = vpop.f32.mrb[0].mxu0
        %v7224 = vadd.f32 %v5704, %v7223
        %v7225 = vpop.f32.mrb[0].mxu0
        %v7226 = vadd.f32 %v5708, %v7225
        %v7227 = vpop.f32.mrb[0].mxu0
        %v7228 = vadd.f32 %v5704, %v7227
        %v7229 = vpop.f32.mrb[0].mxu0
        %v7230 = vadd.f32 %v5708, %v7229
        %7231 = vmatprep.mubr.bf16.mxu0 %v5962
        %7232 = vmatmul.mubr.bf16.gmra.mrb[0].mxu0 %v5961
        %v7233 = vpop.f32.mrb[0].mxu0
        %v7234 = vadd.f32 %v5704, %v7233
        %v7235 = vpop.f32.mrb[0].mxu0
        %v7236 = vadd.f32 %v5708, %v7235
        %v7237 = vpop.f32.mrb[0].mxu0
        %v7238 = vadd.f32 %v5704, %v7237
        %v7239 = vpop.f32.mrb[0].mxu0
        %v7240 = vadd.f32 %v5708, %v7239
        %7241 = vmatprep.mubr.bf16.mxu0 %v5966
        %7242 = vmatmul.mubr.bf16.gmra.mrb[0].mxu0 %v5965
        %v7243 = vpop.f32.mrb[0].mxu0
        %v7244 = vadd.f32 %v5704, %v7243
        %v7245 = vpop.f32.mrb[0].mxu0
        %v7246 = vadd.f32 %v5708, %v7245
        %v7247 = vpop.f32.mrb[0].mxu0
        %v7248 = vadd.f32 %v5704, %v7247
        %v7249 = vpop.f32.mrb[0].mxu0
        %v7250 = vadd.f32 %v5708, %v7249
        %7251 = vdwg.mxu0
        %7252 = vmatprep.subr.bf16.mxu0 %v6484
        %7253 = vmatpush1.bf16.msra.mxu0 %v6483
        %7254 = vmatprep.subr.bf16.mxu0 %v6488
        %7255 = vmatpush1.bf16.msra.mxu0 %v6487
        %7256 = vmatprep.subr.bf16.mxu0 %v6492
        %7257 = vmatpush1.bf16.msra.mxu0 %v6491
        %7258 = vmatprep.subr.bf16.mxu0 %v6496
        %7259 = vmatpush1.bf16.msra.mxu0 %v6495
        %7260 = vmatprep.subr.bf16.mxu0 %v6500
        %7261 = vmatpush1.bf16.msra.mxu0 %v6499
        %7262 = vmatprep.subr.bf16.mxu0 %v6504
        %7263 = vmatpush1.bf16.msra.mxu0 %v6503
        %7264 = vmatprep.subr.bf16.mxu0 %v6508
        %7265 = vmatpush1.bf16.msra.mxu0 %v6507
        %7266 = vmatprep.subr.bf16.mxu0 %v6512
        %7267 = vmatpush1.bf16.msra.mxu0 %v6511
        %7268 = vmatprep.subr.bf16.mxu0 %v6516
        %7269 = vmatpush1.bf16.msra.mxu0 %v6515
        %7270 = vmatprep.subr.bf16.mxu0 %v6520
        %7271 = vmatpush1.bf16.msra.mxu0 %v6519
        %7272 = vmatprep.subr.bf16.mxu0 %v6524
        %7273 = vmatpush1.bf16.msra.mxu0 %v6523
        %7274 = vmatprep.subr.bf16.mxu0 %v6528
        %7275 = vmatpush1.bf16.msra.mxu0 %v6527
        %7276 = vmatprep.subr.bf16.mxu0 %v6532
        %7277 = vmatpush1.bf16.msra.mxu0 %v6531
        %7278 = vmatprep.subr.bf16.mxu0 %v6536
        %7279 = vmatpush1.bf16.msra.mxu0 %v6535
        %7280 = vmatprep.subr.bf16.mxu0 %v6540
        %7281 = vmatpush1.bf16.msra.mxu0 %v6539
        %7282 = vmatprep.subr.bf16.mxu0 %v6544
        %7283 = vmatpush1.bf16.msra.mxu0 %v6543
        %7284 = vmatprep.mubr.bf16.mxu0 %v5908
        %7285 = vmatmul.mubr.bf16.gmra.mrb[0].mxu0 %v5907
        %v7286 = vpop.f32.mrb[0].mxu0
        %v7287 = vadd.f32 %v7094, %v7286
        %v7288 = vpop.f32.mrb[0].mxu0
        %v7289 = vadd.f32 %v7096, %v7288
        %v7290 = vpop.f32.mrb[0].mxu0
        %v7291 = vadd.f32 %v7098, %v7290
        %v7292 = vpop.f32.mrb[0].mxu0
        %v7293 = vadd.f32 %v7100, %v7292
        %7294 = vmatprep.mubr.bf16.mxu0 %v5912
        %7295 = vmatmul.mubr.bf16.gmra.mrb[0].mxu0 %v5911
        %v7296 = vpop.f32.mrb[0].mxu0
        %v7297 = vadd.f32 %v7104, %v7296
        %v7298 = vpop.f32.mrb[0].mxu0
        %v7299 = vadd.f32 %v7106, %v7298
        %v7300 = vpop.f32.mrb[0].mxu0
        %v7301 = vadd.f32 %v7108, %v7300
        %v7302 = vpop.f32.mrb[0].mxu0
        %v7303 = vadd.f32 %v7110, %v7302
        %7304 = vmatprep.mubr.bf16.mxu0 %v5916
        %7305 = vmatmul.mubr.bf16.gmra.mrb[0].mxu0 %v5915
        %v7306 = vpop.f32.mrb[0].mxu0
        %v7307 = vadd.f32 %v7114, %v7306
        %v7308 = vpop.f32.mrb[0].mxu0
        %v7309 = vadd.f32 %v7116, %v7308
        %v7310 = vpop.f32.mrb[0].mxu0
        %v7311 = vadd.f32 %v7118, %v7310
        %v7312 = vpop.f32.mrb[0].mxu0
        %v7313 = vadd.f32 %v7120, %v7312
        %7314 = vmatprep.mubr.bf16.mxu0 %v5920
        %7315 = vmatmul.mubr.bf16.gmra.mrb[0].mxu0 %v5919
        %v7316 = vpop.f32.mrb[0].mxu0
        %v7317 = vadd.f32 %v7124, %v7316
        %v7318 = vpop.f32.mrb[0].mxu0
        %v7319 = vadd.f32 %v7126, %v7318
        %v7320 = vpop.f32.mrb[0].mxu0
        %v7321 = vadd.f32 %v7128, %v7320
        %v7322 = vpop.f32.mrb[0].mxu0
        %v7323 = vadd.f32 %v7130, %v7322
        %7324 = vmatprep.mubr.bf16.mxu0 %v5924
        %7325 = vmatmul.mubr.bf16.gmra.mrb[0].mxu0 %v5923
        %v7326 = vpop.f32.mrb[0].mxu0
        %v7327 = vadd.f32 %v7134, %v7326
        %v7328 = vpop.f32.mrb[0].mxu0
        %v7329 = vadd.f32 %v7136, %v7328
        %v7330 = vpop.f32.mrb[0].mxu0
        %v7331 = vadd.f32 %v7138, %v7330
        %v7332 = vpop.f32.mrb[0].mxu0
        %v7333 = vadd.f32 %v7140, %v7332
        %7334 = vmatprep.mubr.bf16.mxu0 %v5928
        %7335 = vmatmul.mubr.bf16.gmra.mrb[0].mxu0 %v5927
        %v7336 = vpop.f32.mrb[0].mxu0
        %v7337 = vadd.f32 %v7144, %v7336
        %v7338 = vpop.f32.mrb[0].mxu0
        %v7339 = vadd.f32 %v7146, %v7338
        %v7340 = vpop.f32.mrb[0].mxu0
        %v7341 = vadd.f32 %v7148, %v7340
        %v7342 = vpop.f32.mrb[0].mxu0
        %v7343 = vadd.f32 %v7150, %v7342
        %7344 = vmatprep.mubr.bf16.mxu0 %v5932
        %7345 = vmatmul.mubr.bf16.gmra.mrb[0].mxu0 %v5931
        %v7346 = vpop.f32.mrb[0].mxu0
        %v7347 = vadd.f32 %v7154, %v7346
        %v7348 = vpop.f32.mrb[0].mxu0
        %v7349 = vadd.f32 %v7156, %v7348
        %v7350 = vpop.f32.mrb[0].mxu0
        %v7351 = vadd.f32 %v7158, %v7350
        %v7352 = vpop.f32.mrb[0].mxu0
        %v7353 = vadd.f32 %v7160, %v7352
        %7354 = vmatprep.mubr.bf16.mxu0 %v5936
        %7355 = vmatmul.mubr.bf16.gmra.mrb[0].mxu0 %v5935
        %v7356 = vpop.f32.mrb[0].mxu0
        %v7357 = vadd.f32 %v7164, %v7356
        %v7358 = vpop.f32.mrb[0].mxu0
        %v7359 = vadd.f32 %v7166, %v7358
        %v7360 = vpop.f32.mrb[0].mxu0
        %v7361 = vadd.f32 %v7168, %v7360
        %v7362 = vpop.f32.mrb[0].mxu0
        %v7363 = vadd.f32 %v7170, %v7362
        %7364 = vmatprep.mubr.bf16.mxu0 %v5940
        %7365 = vmatmul.mubr.bf16.gmra.mrb[0].mxu0 %v5939
        %v7366 = vpop.f32.mrb[0].mxu0
        %v7367 = vadd.f32 %v7174, %v7366
        %v7368 = vpop.f32.mrb[0].mxu0
        %v7369 = vadd.f32 %v7176, %v7368
        %v7370 = vpop.f32.mrb[0].mxu0
        %v7371 = vadd.f32 %v7178, %v7370
        %v7372 = vpop.f32.mrb[0].mxu0
        %v7373 = vadd.f32 %v7180, %v7372
        %7374 = vmatprep.mubr.bf16.mxu0 %v5944
        %7375 = vmatmul.mubr.bf16.gmra.mrb[0].mxu0 %v5943
        %v7376 = vpop.f32.mrb[0].mxu0
        %v7377 = vadd.f32 %v7184, %v7376
        %v7378 = vpop.f32.mrb[0].mxu0
        %v7379 = vadd.f32 %v7186, %v7378
        %v7380 = vpop.f32.mrb[0].mxu0
        %v7381 = vadd.f32 %v7188, %v7380
        %v7382 = vpop.f32.mrb[0].mxu0
        %v7383 = vadd.f32 %v7190, %v7382
        %7384 = vmatprep.mubr.bf16.mxu0 %v5948
        %7385 = vmatmul.mubr.bf16.gmra.mrb[0].mxu0 %v5947
        %v7386 = vpop.f32.mrb[0].mxu0
        %v7387 = vadd.f32 %v7194, %v7386
        %v7388 = vpop.f32.mrb[0].mxu0
        %v7389 = vadd.f32 %v7196, %v7388
        %v7390 = vpop.f32.mrb[0].mxu0
        %v7391 = vadd.f32 %v7198, %v7390
        %v7392 = vpop.f32.mrb[0].mxu0
        %v7393 = vadd.f32 %v7200, %v7392
        %7394 = vmatprep.mubr.bf16.mxu0 %v5952
        %7395 = vmatmul.mubr.bf16.gmra.mrb[0].mxu0 %v5951
        %v7396 = vpop.f32.mrb[0].mxu0
        %v7397 = vadd.f32 %v7204, %v7396
        %v7398 = vpop.f32.mrb[0].mxu0
        %v7399 = vadd.f32 %v7206, %v7398
        %v7400 = vpop.f32.mrb[0].mxu0
        %v7401 = vadd.f32 %v7208, %v7400
        %v7402 = vpop.f32.mrb[0].mxu0
        %v7403 = vadd.f32 %v7210, %v7402
        %7404 = vmatprep.mubr.bf16.mxu0 %v5956
        %7405 = vmatmul.mubr.bf16.gmra.mrb[0].mxu0 %v5955
        %v7406 = vpop.f32.mrb[0].mxu0
        %v7407 = vadd.f32 %v7214, %v7406
        %v7408 = vpop.f32.mrb[0].mxu0
        %v7409 = vadd.f32 %v7216, %v7408
        %v7410 = vpop.f32.mrb[0].mxu0
        %v7411 = vadd.f32 %v7218, %v7410
        %v7412 = vpop.f32.mrb[0].mxu0
        %v7413 = vadd.f32 %v7220, %v7412
        %7414 = vmatprep.mubr.bf16.mxu0 %v5960
        %7415 = vmatmul.mubr.bf16.gmra.mrb[0].mxu0 %v5959
        %v7416 = vpop.f32.mrb[0].mxu0
        %v7417 = vadd.f32 %v7224, %v7416
        %v7418 = vpop.f32.mrb[0].mxu0
        %v7419 = vadd.f32 %v7226, %v7418
        %v7420 = vpop.f32.mrb[0].mxu0
        %v7421 = vadd.f32 %v7228, %v7420
        %v7422 = vpop.f32.mrb[0].mxu0
        %v7423 = vadd.f32 %v7230, %v7422
        %7424 = vmatprep.mubr.bf16.mxu0 %v5964
        %7425 = vmatmul.mubr.bf16.gmra.mrb[0].mxu0 %v5963
        %v7426 = vpop.f32.mrb[0].mxu0
        %v7427 = vadd.f32 %v7234, %v7426
        %v7428 = vpop.f32.mrb[0].mxu0
        %v7429 = vadd.f32 %v7236, %v7428
        %v7430 = vpop.f32.mrb[0].mxu0
        %v7431 = vadd.f32 %v7238, %v7430
        %v7432 = vpop.f32.mrb[0].mxu0
        %v7433 = vadd.f32 %v7240, %v7432
        %7434 = vmatprep.mubr.bf16.mxu0 %v5968
        %7435 = vmatmul.mubr.bf16.gmra.mrb[0].mxu0 %v5967
        %v7436 = vpop.f32.mrb[0].mxu0
        %v7437 = vadd.f32 %v7244, %v7436
        %v7438 = vpop.f32.mrb[0].mxu0
        %v7439 = vadd.f32 %v7246, %v7438
        %v7440 = vpop.f32.mrb[0].mxu0
        %v7441 = vadd.f32 %v7248, %v7440
        %v7442 = vpop.f32.mrb[0].mxu0
        %v7443 = vadd.f32 %v7250, %v7442
        %7444 = vdwg.mxu0
        %v7445 = vpack.c.bf16 %v6905, %v6901
        %v7446 = vpack.c.bf16 %v6907, %v6903
        %v7447 = vpack.c.bf16 %v7291, %v7287
        %v7448 = vpack.c.bf16 %v7293, %v7289
        %v7449 = vpack.c.bf16 %v6915, %v6911
        %v7450 = vpack.c.bf16 %v6917, %v6913
        %v7451 = vpack.c.bf16 %v7301, %v7297
        %v7452 = vpack.c.bf16 %v7303, %v7299
        %v7453 = vpack.c.bf16 %v6925, %v6921
        %v7454 = vpack.c.bf16 %v6927, %v6923
        %v7455 = vpack.c.bf16 %v7311, %v7307
        %v7456 = vpack.c.bf16 %v7313, %v7309
        %v7457 = vpack.c.bf16 %v6935, %v6931
        %v7458 = vpack.c.bf16 %v6937, %v6933
        %v7459 = vpack.c.bf16 %v7321, %v7317
        %v7460 = vpack.c.bf16 %v7323, %v7319
        %v7461 = vpack.c.bf16 %v6945, %v6941
        %v7462 = vpack.c.bf16 %v6947, %v6943
        %v7463 = vpack.c.bf16 %v7331, %v7327
        %v7464 = vpack.c.bf16 %v7333, %v7329
        %v7465 = vpack.c.bf16 %v6955, %v6951
        %v7466 = vpack.c.bf16 %v6957, %v6953
        %v7467 = vpack.c.bf16 %v7341, %v7337
        %v7468 = vpack.c.bf16 %v7343, %v7339
        %v7469 = vpack.c.bf16 %v6965, %v6961
        %v7470 = vpack.c.bf16 %v6967, %v6963
        %v7471 = vpack.c.bf16 %v7351, %v7347
        %v7472 = vpack.c.bf16 %v7353, %v7349
        %v7473 = vpack.c.bf16 %v6975, %v6971
        %v7474 = vpack.c.bf16 %v6977, %v6973
        %v7475 = vpack.c.bf16 %v7361, %v7357
        %v7476 = vpack.c.bf16 %v7363, %v7359
        %v7477 = vpack.c.bf16 %v6985, %v6981
        %v7478 = vpack.c.bf16 %v6987, %v6983
        %v7479 = vpack.c.bf16 %v7371, %v7367
        %v7480 = vpack.c.bf16 %v7373, %v7369
        %v7481 = vpack.c.bf16 %v6995, %v6991
        %v7482 = vpack.c.bf16 %v6997, %v6993
        %v7483 = vpack.c.bf16 %v7381, %v7377
        %v7484 = vpack.c.bf16 %v7383, %v7379
        %v7485 = vpack.c.bf16 %v7005, %v7001
        %v7486 = vpack.c.bf16 %v7007, %v7003
        %v7487 = vpack.c.bf16 %v7391, %v7387
        %v7488 = vpack.c.bf16 %v7393, %v7389
        %v7489 = vpack.c.bf16 %v7015, %v7011
        %v7490 = vpack.c.bf16 %v7017, %v7013
        %v7491 = vpack.c.bf16 %v7401, %v7397
        %v7492 = vpack.c.bf16 %v7403, %v7399
        %v7493 = vpack.c.bf16 %v7025, %v7021
        %v7494 = vpack.c.bf16 %v7027, %v7023
        %v7495 = vpack.c.bf16 %v7411, %v7407
        %v7496 = vpack.c.bf16 %v7413, %v7409
        %v7497 = vpack.c.bf16 %v7035, %v7031
        %v7498 = vpack.c.bf16 %v7037, %v7033
        %v7499 = vpack.c.bf16 %v7421, %v7417
        %v7500 = vpack.c.bf16 %v7423, %v7419
        %v7501 = vpack.c.bf16 %v7045, %v7041
        %v7502 = vpack.c.bf16 %v7047, %v7043
        %v7503 = vpack.c.bf16 %v7431, %v7427
        %v7504 = vpack.c.bf16 %v7433, %v7429
        %v7505 = vpack.c.bf16 %v7055, %v7051
        %v7506 = vpack.c.bf16 %v7057, %v7053
        %v7507 = vpack.c.bf16 %v7441, %v7437
        %v7508 = vpack.c.bf16 %v7443, %v7439
        %v7573 = vunpack.c.l.b16 %v7445
        %v7574 = vunpack.c.l.b16 %v7446
        %v7575 = vunpack.c.l.b16 %v7447
        %v7576 = vunpack.c.l.b16 %v7448
        %v7577 = vunpack.c.h.b16 %v7445
        %v7578 = vunpack.c.h.b16 %v7446
        %v7579 = vunpack.c.h.b16 %v7447
        %v7580 = vunpack.c.h.b16 %v7448
        %v7581 = vunpack.c.l.b16 %v7449
        %v7582 = vunpack.c.l.b16 %v7450
        %v7583 = vunpack.c.l.b16 %v7451
        %v7584 = vunpack.c.l.b16 %v7452
        %v7585 = vunpack.c.h.b16 %v7449
        %v7586 = vunpack.c.h.b16 %v7450
        %v7587 = vunpack.c.h.b16 %v7451
        %v7588 = vunpack.c.h.b16 %v7452
        %v7589 = vunpack.c.l.b16 %v7453
        %v7590 = vunpack.c.l.b16 %v7454
        %v7591 = vunpack.c.l.b16 %v7455
        %v7592 = vunpack.c.l.b16 %v7456
        %v7593 = vunpack.c.h.b16 %v7453
        %v7594 = vunpack.c.h.b16 %v7454
        %v7595 = vunpack.c.h.b16 %v7455
        %v7596 = vunpack.c.h.b16 %v7456
        %v7597 = vunpack.c.l.b16 %v7457
        %v7598 = vunpack.c.l.b16 %v7458
        %v7599 = vunpack.c.l.b16 %v7459
        %v7600 = vunpack.c.l.b16 %v7460
        %v7601 = vunpack.c.h.b16 %v7457
        %v7602 = vunpack.c.h.b16 %v7458
        %v7603 = vunpack.c.h.b16 %v7459
        %v7604 = vunpack.c.h.b16 %v7460
        %v7605 = vunpack.c.l.b16 %v7461
        %v7606 = vunpack.c.l.b16 %v7462
        %v7607 = vunpack.c.l.b16 %v7463
        %v7608 = vunpack.c.l.b16 %v7464
        %v7609 = vunpack.c.h.b16 %v7461
        %v7610 = vunpack.c.h.b16 %v7462
        %v7611 = vunpack.c.h.b16 %v7463
        %v7612 = vunpack.c.h.b16 %v7464
        %v7613 = vunpack.c.l.b16 %v7465
        %v7614 = vunpack.c.l.b16 %v7466
        %v7615 = vunpack.c.l.b16 %v7467
        %v7616 = vunpack.c.l.b16 %v7468
        %v7617 = vunpack.c.h.b16 %v7465
        %v7618 = vunpack.c.h.b16 %v7466
        %v7619 = vunpack.c.h.b16 %v7467
        %v7620 = vunpack.c.h.b16 %v7468
        %v7621 = vunpack.c.l.b16 %v7469
        %v7622 = vunpack.c.l.b16 %v7470
        %v7623 = vunpack.c.l.b16 %v7471
        %v7624 = vunpack.c.l.b16 %v7472
        %v7625 = vunpack.c.h.b16 %v7469
        %v7626 = vunpack.c.h.b16 %v7470
        %v7627 = vunpack.c.h.b16 %v7471
        %v7628 = vunpack.c.h.b16 %v7472
        %v7629 = vunpack.c.l.b16 %v7473
        %v7630 = vunpack.c.l.b16 %v7474
        %v7631 = vunpack.c.l.b16 %v7475
        %v7632 = vunpack.c.l.b16 %v7476
        %v7633 = vunpack.c.h.b16 %v7473
        %v7634 = vunpack.c.h.b16 %v7474
        %v7635 = vunpack.c.h.b16 %v7475
        %v7636 = vunpack.c.h.b16 %v7476
        %v7637 = vunpack.c.l.b16 %v7477
        %v7638 = vunpack.c.l.b16 %v7478
        %v7639 = vunpack.c.l.b16 %v7479
        %v7640 = vunpack.c.l.b16 %v7480
        %v7641 = vunpack.c.h.b16 %v7477
        %v7642 = vunpack.c.h.b16 %v7478
        %v7643 = vunpack.c.h.b16 %v7479
        %v7644 = vunpack.c.h.b16 %v7480
        %v7645 = vunpack.c.l.b16 %v7481
        %v7646 = vunpack.c.l.b16 %v7482
        %v7647 = vunpack.c.l.b16 %v7483
        %v7648 = vunpack.c.l.b16 %v7484
        %v7649 = vunpack.c.h.b16 %v7481
        %v7650 = vunpack.c.h.b16 %v7482
        %v7651 = vunpack.c.h.b16 %v7483
        %v7652 = vunpack.c.h.b16 %v7484
        %v7653 = vunpack.c.l.b16 %v7485
        %v7654 = vunpack.c.l.b16 %v7486
        %v7655 = vunpack.c.l.b16 %v7487
        %v7656 = vunpack.c.l.b16 %v7488
        %v7657 = vunpack.c.h.b16 %v7485
        %v7658 = vunpack.c.h.b16 %v7486
        %v7659 = vunpack.c.h.b16 %v7487
        %v7660 = vunpack.c.h.b16 %v7488
        %v7661 = vunpack.c.l.b16 %v7489
        %v7662 = vunpack.c.l.b16 %v7490
        %v7663 = vunpack.c.l.b16 %v7491
        %v7664 = vunpack.c.l.b16 %v7492
        %v7665 = vunpack.c.h.b16 %v7489
        %v7666 = vunpack.c.h.b16 %v7490
        %v7667 = vunpack.c.h.b16 %v7491
        %v7668 = vunpack.c.h.b16 %v7492
        %v7669 = vunpack.c.l.b16 %v7493
        %v7670 = vunpack.c.l.b16 %v7494
        %v7671 = vunpack.c.l.b16 %v7495
        %v7672 = vunpack.c.l.b16 %v7496
        %v7673 = vunpack.c.h.b16 %v7493
        %v7674 = vunpack.c.h.b16 %v7494
        %v7675 = vunpack.c.h.b16 %v7495
        %v7676 = vunpack.c.h.b16 %v7496
        %v7677 = vunpack.c.l.b16 %v7497
        %v7678 = vunpack.c.l.b16 %v7498
        %v7679 = vunpack.c.l.b16 %v7499
        %v7680 = vunpack.c.l.b16 %v7500
        %v7681 = vunpack.c.h.b16 %v7497
        %v7682 = vunpack.c.h.b16 %v7498
        %v7683 = vunpack.c.h.b16 %v7499
        %v7684 = vunpack.c.h.b16 %v7500
        %v7685 = vunpack.c.l.b16 %v7501
        %v7686 = vunpack.c.l.b16 %v7502
        %v7687 = vunpack.c.l.b16 %v7503
        %v7688 = vunpack.c.l.b16 %v7504
        %v7689 = vunpack.c.h.b16 %v7501
        %v7690 = vunpack.c.h.b16 %v7502
        %v7691 = vunpack.c.h.b16 %v7503
        %v7692 = vunpack.c.h.b16 %v7504
        %v7693 = vunpack.c.l.b16 %v7505
        %v7694 = vunpack.c.l.b16 %v7506
        %v7695 = vunpack.c.l.b16 %v7507
        %v7696 = vunpack.c.l.b16 %v7508
        %v7697 = vunpack.c.h.b16 %v7505
        %v7698 = vunpack.c.h.b16 %v7506
        %v7699 = vunpack.c.h.b16 %v7507
        %v7700 = vunpack.c.h.b16 %v7508
        %v7701 = vpack.c.b16 %v7574, %v7573
        %v7702 = vpack.c.b16 %v7576, %v7575
        %v7703 = vpack.c.b16 %v7578, %v7577
        %v7704 = vpack.c.b16 %v7580, %v7579
        %v7705 = vpack.c.b16 %v7582, %v7581
        %v7706 = vpack.c.b16 %v7584, %v7583
        %v7707 = vpack.c.b16 %v7586, %v7585
        %v7708 = vpack.c.b16 %v7588, %v7587
        %v7709 = vpack.c.b16 %v7590, %v7589
        %v7710 = vpack.c.b16 %v7592, %v7591
        %v7711 = vpack.c.b16 %v7594, %v7593
        %v7712 = vpack.c.b16 %v7596, %v7595
        %v7713 = vpack.c.b16 %v7598, %v7597
        %v7714 = vpack.c.b16 %v7600, %v7599
        %v7715 = vpack.c.b16 %v7602, %v7601
        %v7716 = vpack.c.b16 %v7604, %v7603
        %v7717 = vpack.c.b16 %v7606, %v7605
        %v7718 = vpack.c.b16 %v7608, %v7607
        %v7719 = vpack.c.b16 %v7610, %v7609
        %v7720 = vpack.c.b16 %v7612, %v7611
        %v7721 = vpack.c.b16 %v7614, %v7613
        %v7722 = vpack.c.b16 %v7616, %v7615
        %v7723 = vpack.c.b16 %v7618, %v7617
        %v7724 = vpack.c.b16 %v7620, %v7619
        %v7725 = vpack.c.b16 %v7622, %v7621
        %v7726 = vpack.c.b16 %v7624, %v7623
        %v7727 = vpack.c.b16 %v7626, %v7625
        %v7728 = vpack.c.b16 %v7628, %v7627
        %v7729 = vpack.c.b16 %v7630, %v7629
        %v7730 = vpack.c.b16 %v7632, %v7631
        %v7731 = vpack.c.b16 %v7634, %v7633
        %v7732 = vpack.c.b16 %v7636, %v7635
        %v7733 = vpack.c.b16 %v7638, %v7637
        %v7734 = vpack.c.b16 %v7640, %v7639
        %v7735 = vpack.c.b16 %v7642, %v7641
        %v7736 = vpack.c.b16 %v7644, %v7643
        %v7737 = vpack.c.b16 %v7646, %v7645
        %v7738 = vpack.c.b16 %v7648, %v7647
        %v7739 = vpack.c.b16 %v7650, %v7649
        %v7740 = vpack.c.b16 %v7652, %v7651
        %v7741 = vpack.c.b16 %v7654, %v7653
        %v7742 = vpack.c.b16 %v7656, %v7655
        %v7743 = vpack.c.b16 %v7658, %v7657
        %v7744 = vpack.c.b16 %v7660, %v7659
        %v7745 = vpack.c.b16 %v7662, %v7661
        %v7746 = vpack.c.b16 %v7664, %v7663
        %v7747 = vpack.c.b16 %v7666, %v7665
        %v7748 = vpack.c.b16 %v7668, %v7667
        %v7749 = vpack.c.b16 %v7670, %v7669
        %v7750 = vpack.c.b16 %v7672, %v7671
        %v7751 = vpack.c.b16 %v7674, %v7673
        %v7752 = vpack.c.b16 %v7676, %v7675
        %v7753 = vpack.c.b16 %v7678, %v7677
        %v7754 = vpack.c.b16 %v7680, %v7679
        %v7755 = vpack.c.b16 %v7682, %v7681
        %v7756 = vpack.c.b16 %v7684, %v7683
        %v7757 = vpack.c.b16 %v7686, %v7685
        %v7758 = vpack.c.b16 %v7688, %v7687
        %v7759 = vpack.c.b16 %v7690, %v7689
        %v7760 = vpack.c.b16 %v7692, %v7691
        %v7761 = vpack.c.b16 %v7694, %v7693
        %v7762 = vpack.c.b16 %v7696, %v7695
        %v7763 = vpack.c.b16 %v7698, %v7697
        %v7764 = vpack.c.b16 %v7700, %v7699
        %7829 = vst [vmem:[%s576] sm:$0xff] %v7701
        %7830 = vst [vmem:[%s576 + $0x8] sm:$0xff] %v7702
        %7831 = vst [vmem:[%s576 + $0x10] sm:$0xff] %v7703
        %7832 = vst [vmem:[%s576 + $0x18] sm:$0xff] %v7704
        %7833 = vst [vmem:[%s576 + $0x20] sm:$0xff] %v7705
        %7834 = vst [vmem:[%s576 + $0x28] sm:$0xff] %v7706
        %7835 = vst [vmem:[%s576 + $0x30] sm:$0xff] %v7707
        %7836 = vst [vmem:[%s576 + $0x38] sm:$0xff] %v7708
        %7837 = vst [vmem:[%s576 + $0x40] sm:$0xff] %v7709
        %7838 = vst [vmem:[%s576 + $0x48] sm:$0xff] %v7710
        %7839 = vst [vmem:[%s576 + $0x50] sm:$0xff] %v7711
        %7840 = vst [vmem:[%s576 + $0x58] sm:$0xff] %v7712
        %7841 = vst [vmem:[%s576 + $0x60] sm:$0xff] %v7713
        %7842 = vst [vmem:[%s576 + $0x68] sm:$0xff] %v7714
        %7843 = vst [vmem:[%s576 + $0x70] sm:$0xff] %v7715
        %7844 = vst [vmem:[%s576 + $0x78] sm:$0xff] %v7716
        %7845 = vst [vmem:[%s576 + $0x80] sm:$0xff] %v7717
        %7846 = vst [vmem:[%s576 + $0x88] sm:$0xff] %v7718
        %7847 = vst [vmem:[%s576 + $0x90] sm:$0xff] %v7719
        %7848 = vst [vmem:[%s576 + $0x98] sm:$0xff] %v7720
        %7849 = vst [vmem:[%s576 + $0xa0] sm:$0xff] %v7721
        %7850 = vst [vmem:[%s576 + $0xa8] sm:$0xff] %v7722
        %7851 = vst [vmem:[%s576 + $0xb0] sm:$0xff] %v7723
        %7852 = vst [vmem:[%s576 + $0xb8] sm:$0xff] %v7724
        %7853 = vst [vmem:[%s576 + $0xc0] sm:$0xff] %v7725
        %7854 = vst [vmem:[%s576 + $0xc8] sm:$0xff] %v7726
        %7855 = vst [vmem:[%s576 + $0xd0] sm:$0xff] %v7727
        %7856 = vst [vmem:[%s576 + $0xd8] sm:$0xff] %v7728
        %7857 = vst [vmem:[%s576 + $0xe0] sm:$0xff] %v7729
        %7858 = vst [vmem:[%s576 + $0xe8] sm:$0xff] %v7730
        %7859 = vst [vmem:[%s576 + $0xf0] sm:$0xff] %v7731
        %7860 = vst [vmem:[%s576 + $0xf8] sm:$0xff] %v7732
        %7861 = vst [vmem:[%s576 + $0x100] sm:$0xff] %v7733
        %7862 = vst [vmem:[%s576 + $0x108] sm:$0xff] %v7734
        %7863 = vst [vmem:[%s576 + $0x110] sm:$0xff] %v7735
        %7864 = vst [vmem:[%s576 + $0x118] sm:$0xff] %v7736
        %7865 = vst [vmem:[%s576 + $0x120] sm:$0xff] %v7737
        %7866 = vst [vmem:[%s576 + $0x128] sm:$0xff] %v7738
        %7867 = vst [vmem:[%s576 + $0x130] sm:$0xff] %v7739
        %7868 = vst [vmem:[%s576 + $0x138] sm:$0xff] %v7740
        %7869 = vst [vmem:[%s576 + $0x140] sm:$0xff] %v7741
        %7870 = vst [vmem:[%s576 + $0x148] sm:$0xff] %v7742
        %7871 = vst [vmem:[%s576 + $0x150] sm:$0xff] %v7743
        %7872 = vst [vmem:[%s576 + $0x158] sm:$0xff] %v7744
        %7873 = vst [vmem:[%s576 + $0x160] sm:$0xff] %v7745
        %7874 = vst [vmem:[%s576 + $0x168] sm:$0xff] %v7746
        %7875 = vst [vmem:[%s576 + $0x170] sm:$0xff] %v7747
        %7876 = vst [vmem:[%s576 + $0x178] sm:$0xff] %v7748
        %7877 = vst [vmem:[%s576 + $0x180] sm:$0xff] %v7749
        %7878 = vst [vmem:[%s576 + $0x188] sm:$0xff] %v7750
        %7879 = vst [vmem:[%s576 + $0x190] sm:$0xff] %v7751
        %7880 = vst [vmem:[%s576 + $0x198] sm:$0xff] %v7752
        %7881 = vst [vmem:[%s576 + $0x1a0] sm:$0xff] %v7753
        %7882 = vst [vmem:[%s576 + $0x1a8] sm:$0xff] %v7754
        %7883 = vst [vmem:[%s576 + $0x1b0] sm:$0xff] %v7755
        %7884 = vst [vmem:[%s576 + $0x1b8] sm:$0xff] %v7756
        %7885 = vst [vmem:[%s576 + $0x1c0] sm:$0xff] %v7757
        %7886 = vst [vmem:[%s576 + $0x1c8] sm:$0xff] %v7758
        %7887 = vst [vmem:[%s576 + $0x1d0] sm:$0xff] %v7759
        %7888 = vst [vmem:[%s576 + $0x1d8] sm:$0xff] %v7760
        %7889 = vst [vmem:[%s576 + $0x1e0] sm:$0xff] %v7761
        %7890 = vst [vmem:[%s576 + $0x1e8] sm:$0xff] %v7762
        %7891 = vst [vmem:[%s576 + $0x1f0] sm:$0xff] %v7763
        %7892 = vst [vmem:[%s576 + $0x1f8] sm:$0xff] %v7764
        %s7893 = sand.u32 %s269, 1
        %s7894 = scalar_lea.sflag [#allocation4], %s7893
        %s7895 = sand.u32 %s269, 1
        %s7896 = smul.addr %s7895, 512
        %s7897 = scalar_lea.vmem [#allocation13], %s7896
        %s7898 = sand.u32 %s37, 1
        %s7899 = scalar_lea.sflag [#allocation15], %s7898
        %s7900 = sand.u32 %s297, 1
        %s7901 = smul.addr %s7900, 512
        %s7902 = scalar_lea.vmem [#allocation14], %s7901
        %s7903 = sand.u32 %s37, 1
        %s7904 = scalar_lea.sflag [#allocation15], %s7903
        %s7905 = sand.u32 %s325, 1
        %s7906 = smul.addr %s7905, 512
        %s7907 = scalar_lea.vmem [#allocation16], %s7906
        // Predicated region
        $region81: #{tpu_custom_call.1} parent=55 // pred_check
          %p7908 = pneg %p279
        $region82: #{tpu_custom_call.1} parent=55 // pred_check_branch
          %7910 = sbr.rel (%p7908) target = $region84
        $region83: #{tpu_custom_call.1} parent=55 // pred_region
          %s7911 = smul.u32 32, %s42
          %s7913 = ssub.s32 8192, 8192
          %7914 = vsyncadd %s7894, %s7913
          %s7915 = smul.addr %s7911, 4
          %s7916 = smul.addr %s41, 256
          %s7917 = sadd.s32 %s7915, %s7916
          %s7918 = smul.addr %s7917, 64
          %s7919 = scalar_lea.hbm %s9, %s7918
          %s7920 = sshll.u32 %s7897, 4
          %s7921 = int_to_ptr.vmem [resolvable:$true] %s7920
          %7926 = dma.vmem_to_hbm [thread:$0]  %s7921, 8192, %s7919, %s7894, 256, 256, 16
        $region84: #{tpu_custom_call.1} parent=55 // pred_fallthru
          _
        // Predicated region
        $region85: #{tpu_custom_call.1} parent=55 // pred_check
          %p7927 = pneg %p307
        $region86: #{tpu_custom_call.1} parent=55 // pred_check_branch
          %7929 = sbr.rel (%p7927) target = $region88
        $region87: #{tpu_custom_call.1} parent=55 // pred_region
          %s7930 = smul.u32 32, %s42
          %s7932 = ssub.s32 8192, 8192
          %7933 = vsyncadd %s7899, %s7932
          %s7934 = smul.addr %s7930, 4
          %s7935 = smul.addr %s41, 256
          %s7936 = sadd.s32 %s7934, %s7935
          %s7937 = smul.addr %s7936, 64
          %s7938 = scalar_lea.hbm %s10, %s7937
          %s7939 = sshll.u32 %s7902, 4
          %s7940 = int_to_ptr.vmem [resolvable:$true] %s7939
          %7945 = dma.vmem_to_hbm [thread:$0]  %s7940, 8192, %s7938, %s7899, 256, 256, 16
        $region88: #{tpu_custom_call.1} parent=55 // pred_fallthru
          _
        // Predicated region
        $region89: #{tpu_custom_call.1} parent=55 // pred_check
          %p7946 = pneg %p335
        $region90: #{tpu_custom_call.1} parent=55 // pred_check_branch
          %7948 = sbr.rel (%p7946) target = $region92
        $region91: #{tpu_custom_call.1} parent=55 // pred_region
          %s7949 = smul.u32 32, %s42
          %s7951 = ssub.s32 8192, 8192
          %7952 = vsyncadd %s7904, %s7951
          %s7953 = smul.addr %s7949, 4
          %s7954 = smul.addr %s41, 256
          %s7955 = sadd.s32 %s7953, %s7954
          %s7956 = smul.addr %s7955, 64
          %s7957 = scalar_lea.hbm %s11, %s7956
          %s7958 = sshll.u32 %s7907, 4
          %s7959 = int_to_ptr.vmem [resolvable:$true] %s7958
          %7964 = dma.vmem_to_hbm [thread:$0]  %s7959, 8192, %s7957, %s7904, 256, 256, 16
        $region92: #{tpu_custom_call.1} parent=55 // pred_fallthru
          _
      $region56: #{tpu_custom_call.1} parent=5 // pred_fallthru
        _
      %p7965 = scmp.le.s32.totalorder 2, %s32
      // Predicated region
      $region93: #{tpu_custom_call.1} parent=5 // pred_check
        %p7966 = pneg %p7965
      $region94: #{tpu_custom_call.1} parent=5 // pred_check_branch
        %7968 = sbr.rel (%p7966) target = $region96
      $region95: #{tpu_custom_call.1} parent=5 // pred_region
        %s7969 = ssub.s32 %s32, 2
        // Predicated region
        $region97: #{tpu_custom_call.1} parent=95 // pred_check
          %p7970 = pneg %p285
        $region98: #{tpu_custom_call.1} parent=95 // pred_check_branch
          %7972 = sbr.rel (%p7970) target = $region100
        $region99: #{tpu_custom_call.1} parent=95 // pred_region
          %s7973 = sand.u32 %s270, 1
          %s7974 = scalar_lea.sflag [#allocation4], %s7973
          %s7975 = sand.u32 %s270, 1
          %s7976 = smul.addr %s7975, 512
          %s7977 = scalar_lea.vmem [#allocation13], %s7976
          %7978 = dma.done %s7974, 8192
        $region100: #{tpu_custom_call.1} parent=95 // pred_fallthru
          _
        // Predicated region
        $region101: #{tpu_custom_call.1} parent=95 // pred_check
          %p7979 = pneg %p313
        $region102: #{tpu_custom_call.1} parent=95 // pred_check_branch
          %7981 = sbr.rel (%p7979) target = $region104
        $region103: #{tpu_custom_call.1} parent=95 // pred_region
          %s7982 = sand.u32 %s38, 1
          %s7983 = scalar_lea.sflag [#allocation15], %s7982
          %s7984 = sand.u32 %s298, 1
          %s7985 = smul.addr %s7984, 512
          %s7986 = scalar_lea.vmem [#allocation14], %s7985
          %7987 = dma.done %s7983, 8192
        $region104: #{tpu_custom_call.1} parent=95 // pred_fallthru
          _
        // Predicated region
        $region105: #{tpu_custom_call.1} parent=95 // pred_check
          %p7988 = pneg %p341
        $region106: #{tpu_custom_call.1} parent=95 // pred_check_branch
          %7990 = sbr.rel (%p7988) target = $region108
        $region107: #{tpu_custom_call.1} parent=95 // pred_region
          %s7991 = sand.u32 %s38, 1
          %s7992 = scalar_lea.sflag [#allocation15], %s7991
          %s7993 = sand.u32 %s326, 1
          %s7994 = smul.addr %s7993, 512
          %s7995 = scalar_lea.vmem [#allocation16], %s7994
          %7996 = dma.done %s7992, 8192
        $region108: #{tpu_custom_call.1} parent=95 // pred_fallthru
          _
      $region96: #{tpu_custom_call.1} parent=5 // pred_fallthru
        _
    $region6: #{tpu_custom_call.1} parent=1 // loop_footer
      %s36 = sadd.s32 1, %s32
    $region7: #{tpu_custom_call.1} parent=1 // loop_footer_branch
      %31 = sbr.rel target = $region3
    $region8: #{tpu_custom_call.1} parent=1 // loop_exit
      _
    %7997 = vsyncpa [#allocation3], 1
    %s7998 = scalar_lea.sflag [#allocation3], 1
    %7999 = vsyncpa %s7998, 1
    %8000 = vsyncpa [#allocation6], 1
    %s8001 = scalar_lea.sflag [#allocation6], 1
    %8002 = vsyncpa %s8001, 1
    %8003 = vsyncpa [#allocation9], 1
    %8004 = vsyncpa [#allocation12], 1
    %8005 = vsyncpa [#allocation4], 1
    %s8006 = scalar_lea.sflag [#allocation4], 1
    %8007 = vsyncpa %s8006, 1
    %8008 = vsyncpa [#allocation15], 1
    %s8009 = scalar_lea.sflag [#allocation15], 1
    %8010 = vsyncpa %s8009, 1

</llo_original>
